<compile_context>
chip_gen: v7x
topology: tpu7x:2x2x1
jax: 0.10.0
libtpu: 0.0.40
codegen_flags: <defaults>
</compile_context>

<pallas_src>
import jax
import jax.numpy as jnp
import numpy as np
from jax import lax
from jax.experimental import pallas as pl
from jax.experimental.pallas import tpu as pltpu

SRC_LEN, TRG_LEN = 10, 8
BATCH = 2
SRC_VOCAB, TRG_VOCAB = 24, 32     # TRG_VOCAB == decoder.output_dim
EMB, HID = 16, 32
TEACHER_FORCING_RATIO = 0.5


def seq2seq_kernel(tf_ref,                                  # SMEM [TRG_LEN] int32 (scalar prefetch)
                   src_ref,                                 # [S*B, EMB]
                   trg_ref,                                 # [T*B, V] one-hot targets
                   w_ih_e_ref, w_hh_e_ref, b_e_ref,         # encoder LSTM (gate order i,f,o,g)
                   w_comb_ref,                              # fused decoder weight [V+2H, 4H+V]
                   w_out_h_ref,                             # [H, V] (h_new -> logits)
                   out_ref,                                 # [T*B, V]
                   enc_ref):                                # VMEM scratch [B, S, H]
    B, S, H = enc_ref.shape
    V = out_ref.shape[1]
    T = out_ref.shape[0] // B
    H3, H4 = 3 * H, 4 * H

    # Hoist weight loads out of the time loops (biases are already folded into them).
    w_hh_e = w_hh_e_ref[...]
    w_comb = w_comb_ref[...]
    w_out_h = w_out_h_ref[...]

    def lstm_step(gates, c):
        # Gate columns permuted to (i, f, o, g) in the wrapper:
        # one contiguous sigmoid over 3H and one tanh over the last H.
        sig = jax.nn.sigmoid(gates[:, :H3])
        g = jnp.tanh(gates[:, H3:H4])
        i_g = sig[:, :H]
        f_g = sig[:, H:2 * H]
        o_g = sig[:, 2 * H:H3]
        c_n = f_g * c + i_g * g
        h_n = o_g * jnp.tanh(c_n)
        return h_n, c_n

    # ---------------- encoder ----------------
    # Input projection for ALL timesteps in one MXU pass, bias added once (off the chain).
    pre = (jnp.dot(src_ref[...], w_ih_e_ref[...], preferred_element_type=jnp.float32)
           + b_e_ref[...])                                   # [S*B, 4H]

    h = jnp.zeros((B, H), jnp.float32)
    c = jnp.zeros((B, H), jnp.float32)
    for t in range(S):                                       # fully unrolled
        gates = pre[t * B:(t + 1) * B, :] + jnp.dot(h, w_hh_e,
                                                    preferred_element_type=jnp.float32)
        h, c = lstm_step(gates, c)
        enc_ref[:, t:t + 1, :] = h[:, None, :]               # VMEM-resident encoder outputs

    enc = enc_ref[...]                                       # [B, S, H]

    # ---------------- decoder ----------------
    out_ref[0:B, :] = jnp.zeros((B, V), jnp.float32)         # outputs[0] stays zero
    iota_v = lax.broadcasted_iota(jnp.int32, (B, V), 1)
    inp = trg_ref[0:B, :]                                    # one-hot trg[0]

    for t in range(1, T):                                    # fully unrolled
        # dot-product attention on the MXU (batched einsums, flash-attention pattern)
        q = h[:, None, :]                                    # [B,1,H]
        s3 = jnp.einsum('bqh,bsh->bqs', q, enc,
                        preferred_element_type=jnp.float32)  # [B,1,S]
        s3 = s3 - jnp.max(s3, axis=-1, keepdims=True)
        e3 = jnp.exp(s3)
        a3 = e3 / jnp.sum(e3, axis=-1, keepdims=True)        # [B,1,S]
        context = jnp.einsum('bqs,bsh->bqh', a3, enc,
                             preferred_element_type=jnp.float32)[:, 0, :]   # [B,H]

        # ONE fused MXU pass: [inp | context | h_prev] @ [V+2H, 4H+V]
        #   columns 0..4H   -> LSTM gates (biases folded)
        #   columns 4H..4H+V -> h-independent logits partial (zero rows for h_prev)
        x = jnp.concatenate([inp, context, h], axis=1)       # [B, V+2H]
        fused = jnp.dot(x, w_comb, preferred_element_type=jnp.float32)      # [B, 4H+V]

        h, c = lstm_step(fused[:, :H4], c)
        logits = fused[:, H4:] + jnp.dot(h, w_out_h,
                                         preferred_element_type=jnp.float32)

        out_ref[t * B:(t + 1) * B, :] = logits               # per-step store, off the chain

        # top1 = output.argmax(1) (first-max tie rule) as a one-hot next input.
        m = jnp.max(logits, axis=1, keepdims=True)
        idx = jnp.min(jnp.where(logits == m, iota_v, V), axis=1, keepdims=True)
        greedy = (iota_v == idx).astype(jnp.float32)
        teacher = trg_ref[t * B:(t + 1) * B, :]
        inp = jnp.where(tf_ref[t] == 1, teacher, greedy)


def _permute_gate_cols(w):
    """Reorder LSTM gate columns (i,f,g,o) -> (i,f,o,g) so activations are contiguous."""
    H = HID
    return jnp.concatenate([w[..., :2 * H], w[..., 3 * H:4 * H], w[..., 2 * H:3 * H]], axis=-1)


def _prepare_fused(weights):
    (w_ih_e, w_hh_e, b_e, emb_dec, w_ih_de, w_ih_dc, w_hh_d, b_d,
     w_out_h, w_out_c, w_out_e, b_out) = weights

    w_ih_e_p = _permute_gate_cols(w_ih_e)                    # [EMB, 4H]
    w_hh_e_p = _permute_gate_cols(w_hh_e)                    # [H, 4H]
    b_e_p = _permute_gate_cols(b_e)                          # [1, 4H] (added once to `pre`)

    # Decoder gate block for operand [inp_onehot | context | h_prev]; decoder embedding
    # folded (inp @ (emb_dec @ W)); b_d folded into the one-hot rows (inp rows sum to 1).
    gate_block = jnp.concatenate([emb_dec @ w_ih_de + b_d, w_ih_dc, w_hh_d], axis=0)  # [V+2H,4H]
    gate_block = _permute_gate_cols(gate_block)

    # h-independent logits block: b_out folded into the one-hot rows, ZERO rows for h_prev,
    # so a single [B,V+2H]@[V+2H,4H+V] matmul yields gates | logits_base.
    out_block = jnp.concatenate(
        [emb_dec @ w_out_e + b_out, w_out_c, jnp.zeros((HID, TRG_VOCAB), jnp.float32)],
        axis=0)                                              # [V+2H, V]

    w_comb = jnp.concatenate([gate_block, out_block], axis=1)  # [V+2H, 4H+V] = [96, 160]
    return (w_ih_e_p, w_hh_e_p, b_e_p, w_comb, w_out_h)


def seq2seq_forward(tf_flags, src_emb, trg_onehot, weights):
    fused = _prepare_fused(weights)
    src_flat = src_emb.reshape(SRC_LEN * BATCH, EMB)
    trg_flat = trg_onehot.reshape(TRG_LEN * BATCH, TRG_VOCAB)
    ins = (src_flat, trg_flat) + fused

    out_shape = jax.ShapeDtypeStruct((TRG_LEN * BATCH, TRG_VOCAB), jnp.float32)
    grid_spec = pltpu.PrefetchScalarGridSpec(
        num_scalar_prefetch=1,
        grid=(1,),
        in_specs=[pl.BlockSpec(a.shape, lambda i, tf: (0, 0)) for a in ins],
        out_specs=pl.BlockSpec((TRG_LEN * BATCH, TRG_VOCAB), lambda i, tf: (0, 0)),
        scratch_shapes=[pltpu.VMEM((BATCH, SRC_LEN, HID), jnp.float32)],
    )
    # TODO(synk): with only B=2 sequences a second v7x TensorCore has nothing to do; a
    # parallel grid axis over sequence tiles would be added for larger batches.
    out_flat = pl.pallas_call(
        seq2seq_kernel,
        out_shape=out_shape,
        grid_spec=grid_spec,
        compiler_params=pltpu.CompilerParams(dimension_semantics=("arbitrary",)),
    )(tf_flags, *ins)
    return out_flat.reshape(TRG_LEN, BATCH, TRG_VOCAB)


def make_params(key):
    ks = jax.random.split(key, 16)

    def init(k, shape, fan_in):
        return (jax.random.normal(k, shape, jnp.float32) / np.sqrt(fan_in)).astype(jnp.float32)

    emb_enc = init(ks[0], (SRC_VOCAB, EMB), EMB)
    w_ih_e = init(ks[1], (EMB, 4 * HID), EMB)
    w_hh_e = init(ks[2], (HID, 4 * HID), HID)
    b_e = init(ks[3], (1, 4 * HID), HID)
    emb_dec = init(ks[4], (TRG_VOCAB, EMB), EMB)
    w_ih_de = init(ks[5], (EMB, 4 * HID), EMB + HID)
    w_ih_dc = init(ks[6], (HID, 4 * HID), EMB + HID)
    w_hh_d = init(ks[7], (HID, 4 * HID), HID)
    b_d = init(ks[8], (1, 4 * HID), HID)
    w_out_h = init(ks[9], (HID, TRG_VOCAB), 2 * HID + EMB)
    w_out_c = init(ks[10], (HID, TRG_VOCAB), 2 * HID + EMB)
    w_out_e = init(ks[11], (EMB, TRG_VOCAB), 2 * HID + EMB)
    b_out = init(ks[12], (1, TRG_VOCAB), 2 * HID + EMB)
    weights = (w_ih_e, w_hh_e, b_e, emb_dec, w_ih_de, w_ih_dc, w_hh_d, b_d,
               w_out_h, w_out_c, w_out_e, b_out)
    return emb_enc, weights, ks[13], ks[14], ks[15]


def reference(tf_flags, src_emb, trg_onehot, weights):
    # Pure-JAX reference using the ORIGINAL (unfused, i/f/g/o-ordered) weights.
    (w_ih_e, w_hh_e, b_e, emb_dec, w_ih_de, w_ih_dc, w_hh_d, b_d,
     w_out_h, w_out_c, w_out_e, b_out) = weights
    H = HID

    def lstm(gates, c):
        i = jax.nn.sigmoid(gates[:, :H]); f = jax.nn.sigmoid(gates[:, H:2 * H])
        g = jnp.tanh(gates[:, 2 * H:3 * H]); o = jax.nn.sigmoid(gates[:, 3 * H:])
        c = f * c + i * g
        return o * jnp.tanh(c), c

    h = jnp.zeros((BATCH, HID)); c = jnp.zeros((BATCH, HID))
    enc = []
    for t in range(SRC_LEN):
        h, c = lstm(src_emb[t] @ w_ih_e + h @ w_hh_e + b_e, c)
        enc.append(h)
    enc = jnp.stack(enc)
    outputs = jnp.zeros((TRG_LEN, BATCH, TRG_VOCAB))
    inp = trg_onehot[0]
    for t in range(1, TRG_LEN):
        emb = inp @ emb_dec
        scores = jnp.sum(enc * h[None], axis=2)
        scores = scores - jnp.max(scores, axis=0, keepdims=True)
        w = jnp.exp(scores)
        attn = w / jnp.sum(w, axis=0, keepdims=True)
        context = jnp.sum(attn[:, :, None] * enc, axis=0)
        h, c = lstm(emb @ w_ih_de + context @ w_ih_dc + h @ w_hh_d + b_d, c)
        logits = h @ w_out_h + context @ w_out_c + emb @ w_out_e + b_out
        outputs = outputs.at[t].set(logits)
        greedy = jax.nn.one_hot(jnp.argmax(logits, axis=1), TRG_VOCAB)
        inp = jnp.where(tf_flags[t] == 1, trg_onehot[t], greedy)
    return outputs


if __name__ == "__main__":
    key = jax.random.PRNGKey(0)
    emb_enc, weights, k_src, k_trg, k_tf = make_params(key)

    src_tokens = jax.random.randint(k_src, (SRC_LEN, BATCH), 0, SRC_VOCAB)
    trg_tokens = jax.random.randint(k_trg, (TRG_LEN, BATCH), 0, TRG_VOCAB)

    # Glue: encoder embedding lookup + target one-hots (decoder embedding is folded
    # into the fused in-kernel weights because the decoder input is data-dependent).
    src_emb = jnp.take(emb_enc, src_tokens, axis=0).astype(jnp.float32)       # [S, B, EMB]
    trg_onehot = jax.nn.one_hot(trg_tokens, TRG_VOCAB, dtype=jnp.float32)     # [T, B, V]

    # random.random() < teacher_forcing_ratio, made deterministic via seeded JAX PRNG.
    tf_flags = (jax.random.uniform(k_tf, (TRG_LEN,)) < TEACHER_FORCING_RATIO).astype(jnp.int32)

    out = seq2seq_forward(tf_flags, src_emb, trg_onehot, weights)
    out = jax.block_until_ready(out)

    ref = reference(tf_flags, src_emb, trg_onehot, weights)
    assert out.shape == (TRG_LEN, BATCH, TRG_VOCAB)
    assert np.allclose(np.asarray(out), np.asarray(ref), rtol=1e-3, atol=1e-3)

    # TODO(synk): reference Seq2Seq leaves encoder/decoder internals unspecified; a
    # single-layer LSTM encoder + dot-product-attention LSTM decoder is assumed here.
    print("KERNEL_OK")
</pallas_src>

<mosaic_0001>
module attributes {stable_mosaic.version = 11 : i64} {
  func.func @seq2seq_kernel(%arg0: i32, %arg1: memref<8xi32, #tpu.memory_space<smem>>, %arg2: memref<20x16xf32, #tpu.memory_space<vmem>>, %arg3: memref<16x32xf32, #tpu.memory_space<vmem>>, %arg4: memref<16x128xf32, #tpu.memory_space<vmem>>, %arg5: memref<32x128xf32, #tpu.memory_space<vmem>>, %arg6: memref<1x128xf32, #tpu.memory_space<vmem>>, %arg7: memref<96x160xf32, #tpu.memory_space<vmem>>, %arg8: memref<32x32xf32, #tpu.memory_space<vmem>>, %arg9: memref<16x32xf32, #tpu.memory_space<vmem>>, %arg10: memref<2x10x32xf32, #tpu.memory_space<vmem>>) attributes {dimension_semantics = [#tpu.dimension_semantics<arbitrary>], iteration_bounds = array<i64: 1>, scalar_prefetch = 1 : i64, scratch_operands = 1 : i64, tpu.core_type = #tpu.core_type<tc>, window_params = [{pipeline_mode = #tpu.pipeline_mode<synchronous>, transform_indices = @transform_0, window_bounds = array<i64: 20, 16>}, {pipeline_mode = #tpu.pipeline_mode<synchronous>, transform_indices = @transform_1, window_bounds = array<i64: 16, 32>}, {pipeline_mode = #tpu.pipeline_mode<synchronous>, transform_indices = @transform_2, window_bounds = array<i64: 16, 128>}, {pipeline_mode = #tpu.pipeline_mode<synchronous>, transform_indices = @transform_3, window_bounds = array<i64: 32, 128>}, {pipeline_mode = #tpu.pipeline_mode<synchronous>, transform_indices = @transform_4, window_bounds = array<i64: 1, 128>}, {pipeline_mode = #tpu.pipeline_mode<synchronous>, transform_indices = @transform_5, window_bounds = array<i64: 96, 160>}, {pipeline_mode = #tpu.pipeline_mode<synchronous>, transform_indices = @transform_6, window_bounds = array<i64: 32, 32>}, {pipeline_mode = #tpu.pipeline_mode<synchronous>, transform_indices = @transform_7, window_bounds = array<i64: 16, 32>}]} {
    %c0 = arith.constant 0 : index
    %c0_0 = arith.constant 0 : index
    %0 = vector.load %arg5[%c0, %c0_0] : memref<32x128xf32, #tpu.memory_space<vmem>>, vector<32x128xf32>
    %c0_1 = arith.constant 0 : index
    %c0_2 = arith.constant 0 : index
    %1 = vector.load %arg7[%c0_1, %c0_2] : memref<96x160xf32, #tpu.memory_space<vmem>>, vector<96x160xf32>
    %c0_3 = arith.constant 0 : index
    %c0_4 = arith.constant 0 : index
    %2 = vector.load %arg8[%c0_3, %c0_4] : memref<32x32xf32, #tpu.memory_space<vmem>>, vector<32x32xf32>
    %c0_5 = arith.constant 0 : index
    %c0_6 = arith.constant 0 : index
    %3 = vector.load %arg2[%c0_5, %c0_6] : memref<20x16xf32, #tpu.memory_space<vmem>>, vector<20x16xf32>
    %c0_7 = arith.constant 0 : index
    %c0_8 = arith.constant 0 : index
    %4 = vector.load %arg4[%c0_7, %c0_8] : memref<16x128xf32, #tpu.memory_space<vmem>>, vector<16x128xf32>
    %cst = arith.constant dense<0.000000e+00> : vector<20x128xf32>
    %5 = tpu.matmul %3, %4, %cst {dimension_numbers = #tpu.dot_dimension_numbers<[1], [0], [0], [1], [0, 0, 1, 1], [], []>} : vector<20x16xf32>, vector<16x128xf32>, vector<20x128xf32> -> vector<20x128xf32>
    %c0_9 = arith.constant 0 : index
    %c0_10 = arith.constant 0 : index
    %6 = vector.load %arg6[%c0_9, %c0_10] : memref<1x128xf32, #tpu.memory_space<vmem>>, vector<1x128xf32>
    %7 = vector.broadcast %6 : vector<1x128xf32> to vector<20x128xf32>
    %8 = arith.addf %5, %7 : vector<20x128xf32>
    %cst_11 = arith.constant 0.000000e+00 : f32
    %9 = vector.broadcast %cst_11 : f32 to vector<2x32xf32>
    %cst_12 = arith.constant 0.000000e+00 : f32
    %10 = vector.broadcast %cst_12 : f32 to vector<2x32xf32>
    %11 = vector.extract_strided_slice %8 {offsets = [0, 0], sizes = [2, 128], strides = [1, 1]} : vector<20x128xf32> to vector<2x128xf32>
    %cst_13 = arith.constant dense<0.000000e+00> : vector<2x128xf32>
    %12 = tpu.matmul %9, %0, %cst_13 {dimension_numbers = #tpu.dot_dimension_numbers<[1], [0], [0], [1], [0, 0, 1, 1], [], []>} : vector<2x32xf32>, vector<32x128xf32>, vector<2x128xf32> -> vector<2x128xf32>
    %13 = arith.addf %11, %12 : vector<2x128xf32>
    %14 = vector.extract_strided_slice %13 {offsets = [0, 0], sizes = [2, 96], strides = [1, 1]} : vector<2x128xf32> to vector<2x96xf32>
    %15 = arith.negf %14 : vector<2x96xf32>
    %16 = math.exp %15 : vector<2x96xf32>
    %cst_14 = arith.constant 1.000000e+00 : f32
    %17 = vector.broadcast %cst_14 : f32 to vector<2x96xf32>
    %18 = arith.addf %17, %16 : vector<2x96xf32>
    %19 = arith.divf %17, %18 : vector<2x96xf32>
    %20 = vector.extract_strided_slice %13 {offsets = [0, 96], sizes = [2, 32], strides = [1, 1]} : vector<2x128xf32> to vector<2x32xf32>
    %21 = math.tanh %20 : vector<2x32xf32>
    %22 = vector.extract_strided_slice %19 {offsets = [0, 0], sizes = [2, 32], strides = [1, 1]} : vector<2x96xf32> to vector<2x32xf32>
    %23 = vector.extract_strided_slice %19 {offsets = [0, 32], sizes = [2, 32], strides = [1, 1]} : vector<2x96xf32> to vector<2x32xf32>
    %24 = vector.extract_strided_slice %19 {offsets = [0, 64], sizes = [2, 32], strides = [1, 1]} : vector<2x96xf32> to vector<2x32xf32>
    %25 = arith.mulf %23, %10 : vector<2x32xf32>
    %26 = arith.mulf %22, %21 : vector<2x32xf32>
    %27 = arith.addf %25, %26 : vector<2x32xf32>
    %28 = math.tanh %27 : vector<2x32xf32>
    %29 = arith.mulf %24, %28 : vector<2x32xf32>
    %30 = vector.shape_cast %29 : vector<2x32xf32> to vector<2x1x32xf32>
    %c0_15 = arith.constant 0 : index
    %c0_16 = arith.constant 0 : index
    %c0_17 = arith.constant 0 : index
    %31 = vector.load %arg10[%c0_15, %c0_16, %c0_17] : memref<2x10x32xf32, #tpu.memory_space<vmem>>, vector<2x1x32xf32>
    tpu.vector_store %arg10[%c0_15, %c0_16, %c0_17], %30 {strides = array<i32>} : memref<2x10x32xf32, #tpu.memory_space<vmem>>, vector<2x1x32xf32>,
    %32 = vector.extract_strided_slice %8 {offsets = [2, 0], sizes = [2, 128], strides = [1, 1]} : vector<20x128xf32> to vector<2x128xf32>
    %cst_18 = arith.constant dense<0.000000e+00> : vector<2x128xf32>
    %33 = tpu.matmul %29, %0, %cst_18 {dimension_numbers = #tpu.dot_dimension_numbers<[1], [0], [0], [1], [0, 0, 1, 1], [], []>} : vector<2x32xf32>, vector<32x128xf32>, vector<2x128xf32> -> vector<2x128xf32>
    %34 = arith.addf %32, %33 : vector<2x128xf32>
    %35 = vector.extract_strided_slice %34 {offsets = [0, 0], sizes = [2, 96], strides = [1, 1]} : vector<2x128xf32> to vector<2x96xf32>
    %36 = arith.negf %35 : vector<2x96xf32>
    %37 = math.exp %36 : vector<2x96xf32>
    %cst_19 = arith.constant 1.000000e+00 : f32
    %38 = vector.broadcast %cst_19 : f32 to vector<2x96xf32>
    %39 = arith.addf %38, %37 : vector<2x96xf32>
    %40 = arith.divf %38, %39 : vector<2x96xf32>
    %41 = vector.extract_strided_slice %34 {offsets = [0, 96], sizes = [2, 32], strides = [1, 1]} : vector<2x128xf32> to vector<2x32xf32>
    %42 = math.tanh %41 : vector<2x32xf32>
    %43 = vector.extract_strided_slice %40 {offsets = [0, 0], sizes = [2, 32], strides = [1, 1]} : vector<2x96xf32> to vector<2x32xf32>
    %44 = vector.extract_strided_slice %40 {offsets = [0, 32], sizes = [2, 32], strides = [1, 1]} : vector<2x96xf32> to vector<2x32xf32>
    %45 = vector.extract_strided_slice %40 {offsets = [0, 64], sizes = [2, 32], strides = [1, 1]} : vector<2x96xf32> to vector<2x32xf32>
    %46 = arith.mulf %44, %27 : vector<2x32xf32>
    %47 = arith.mulf %43, %42 : vector<2x32xf32>
    %48 = arith.addf %46, %47 : vector<2x32xf32>
    %49 = math.tanh %48 : vector<2x32xf32>
    %50 = arith.mulf %45, %49 : vector<2x32xf32>
    %51 = vector.shape_cast %50 : vector<2x32xf32> to vector<2x1x32xf32>
    %c0_20 = arith.constant 0 : index
    %c1 = arith.constant 1 : index
    %c0_21 = arith.constant 0 : index
    %52 = vector.load %arg10[%c0_20, %c1, %c0_21] : memref<2x10x32xf32, #tpu.memory_space<vmem>>, vector<2x1x32xf32>
    tpu.vector_store %arg10[%c0_20, %c1, %c0_21], %51 {strides = array<i32>} : memref<2x10x32xf32, #tpu.memory_space<vmem>>, vector<2x1x32xf32>,
    %53 = vector.extract_strided_slice %8 {offsets = [4, 0], sizes = [2, 128], strides = [1, 1]} : vector<20x128xf32> to vector<2x128xf32>
    %cst_22 = arith.constant dense<0.000000e+00> : vector<2x128xf32>
    %54 = tpu.matmul %50, %0, %cst_22 {dimension_numbers = #tpu.dot_dimension_numbers<[1], [0], [0], [1], [0, 0, 1, 1], [], []>} : vector<2x32xf32>, vector<32x128xf32>, vector<2x128xf32> -> vector<2x128xf32>
    %55 = arith.addf %53, %54 : vector<2x128xf32>
    %56 = vector.extract_strided_slice %55 {offsets = [0, 0], sizes = [2, 96], strides = [1, 1]} : vector<2x128xf32> to vector<2x96xf32>
    %57 = arith.negf %56 : vector<2x96xf32>
    %58 = math.exp %57 : vector<2x96xf32>
    %cst_23 = arith.constant 1.000000e+00 : f32
    %59 = vector.broadcast %cst_23 : f32 to vector<2x96xf32>
    %60 = arith.addf %59, %58 : vector<2x96xf32>
    %61 = arith.divf %59, %60 : vector<2x96xf32>
    %62 = vector.extract_strided_slice %55 {offsets = [0, 96], sizes = [2, 32], strides = [1, 1]} : vector<2x128xf32> to vector<2x32xf32>
    %63 = math.tanh %62 : vector<2x32xf32>
    %64 = vector.extract_strided_slice %61 {offsets = [0, 0], sizes = [2, 32], strides = [1, 1]} : vector<2x96xf32> to vector<2x32xf32>
    %65 = vector.extract_strided_slice %61 {offsets = [0, 32], sizes = [2, 32], strides = [1, 1]} : vector<2x96xf32> to vector<2x32xf32>
    %66 = vector.extract_strided_slice %61 {offsets = [0, 64], sizes = [2, 32], strides = [1, 1]} : vector<2x96xf32> to vector<2x32xf32>
    %67 = arith.mulf %65, %48 : vector<2x32xf32>
    %68 = arith.mulf %64, %63 : vector<2x32xf32>
    %69 = arith.addf %67, %68 : vector<2x32xf32>
    %70 = math.tanh %69 : vector<2x32xf32>
    %71 = arith.mulf %66, %70 : vector<2x32xf32>
    %72 = vector.shape_cast %71 : vector<2x32xf32> to vector<2x1x32xf32>
    %c0_24 = arith.constant 0 : index
    %c2 = arith.constant 2 : index
    %c0_25 = arith.constant 0 : index
    %73 = vector.load %arg10[%c0_24, %c2, %c0_25] : memref<2x10x32xf32, #tpu.memory_space<vmem>>, vector<2x1x32xf32>
    tpu.vector_store %arg10[%c0_24, %c2, %c0_25], %72 {strides = array<i32>} : memref<2x10x32xf32, #tpu.memory_space<vmem>>, vector<2x1x32xf32>,
    %74 = vector.extract_strided_slice %8 {offsets = [6, 0], sizes = [2, 128], strides = [1, 1]} : vector<20x128xf32> to vector<2x128xf32>
    %cst_26 = arith.constant dense<0.000000e+00> : vector<2x128xf32>
    %75 = tpu.matmul %71, %0, %cst_26 {dimension_numbers = #tpu.dot_dimension_numbers<[1], [0], [0], [1], [0, 0, 1, 1], [], []>} : vector<2x32xf32>, vector<32x128xf32>, vector<2x128xf32> -> vector<2x128xf32>
    %76 = arith.addf %74, %75 : vector<2x128xf32>
    %77 = vector.extract_strided_slice %76 {offsets = [0, 0], sizes = [2, 96], strides = [1, 1]} : vector<2x128xf32> to vector<2x96xf32>
    %78 = arith.negf %77 : vector<2x96xf32>
    %79 = math.exp %78 : vector<2x96xf32>
    %cst_27 = arith.constant 1.000000e+00 : f32
    %80 = vector.broadcast %cst_27 : f32 to vector<2x96xf32>
    %81 = arith.addf %80, %79 : vector<2x96xf32>
    %82 = arith.divf %80, %81 : vector<2x96xf32>
    %83 = vector.extract_strided_slice %76 {offsets = [0, 96], sizes = [2, 32], strides = [1, 1]} : vector<2x128xf32> to vector<2x32xf32>
    %84 = math.tanh %83 : vector<2x32xf32>
    %85 = vector.extract_strided_slice %82 {offsets = [0, 0], sizes = [2, 32], strides = [1, 1]} : vector<2x96xf32> to vector<2x32xf32>
    %86 = vector.extract_strided_slice %82 {offsets = [0, 32], sizes = [2, 32], strides = [1, 1]} : vector<2x96xf32> to vector<2x32xf32>
    %87 = vector.extract_strided_slice %82 {offsets = [0, 64], sizes = [2, 32], strides = [1, 1]} : vector<2x96xf32> to vector<2x32xf32>
    %88 = arith.mulf %86, %69 : vector<2x32xf32>
    %89 = arith.mulf %85, %84 : vector<2x32xf32>
    %90 = arith.addf %88, %89 : vector<2x32xf32>
    %91 = math.tanh %90 : vector<2x32xf32>
    %92 = arith.mulf %87, %91 : vector<2x32xf32>
    %93 = vector.shape_cast %92 : vector<2x32xf32> to vector<2x1x32xf32>
    %c0_28 = arith.constant 0 : index
    %c3 = arith.constant 3 : index
    %c0_29 = arith.constant 0 : index
    %94 = vector.load %arg10[%c0_28, %c3, %c0_29] : memref<2x10x32xf32, #tpu.memory_space<vmem>>, vector<2x1x32xf32>
    tpu.vector_store %arg10[%c0_28, %c3, %c0_29], %93 {strides = array<i32>} : memref<2x10x32xf32, #tpu.memory_space<vmem>>, vector<2x1x32xf32>,
    %95 = vector.extract_strided_slice %8 {offsets = [8, 0], sizes = [2, 128], strides = [1, 1]} : vector<20x128xf32> to vector<2x128xf32>
    %cst_30 = arith.constant dense<0.000000e+00> : vector<2x128xf32>
    %96 = tpu.matmul %92, %0, %cst_30 {dimension_numbers = #tpu.dot_dimension_numbers<[1], [0], [0], [1], [0, 0, 1, 1], [], []>} : vector<2x32xf32>, vector<32x128xf32>, vector<2x128xf32> -> vector<2x128xf32>
    %97 = arith.addf %95, %96 : vector<2x128xf32>
    %98 = vector.extract_strided_slice %97 {offsets = [0, 0], sizes = [2, 96], strides = [1, 1]} : vector<2x128xf32> to vector<2x96xf32>
    %99 = arith.negf %98 : vector<2x96xf32>
    %100 = math.exp %99 : vector<2x96xf32>
    %cst_31 = arith.constant 1.000000e+00 : f32
    %101 = vector.broadcast %cst_31 : f32 to vector<2x96xf32>
    %102 = arith.addf %101, %100 : vector<2x96xf32>
    %103 = arith.divf %101, %102 : vector<2x96xf32>
    %104 = vector.extract_strided_slice %97 {offsets = [0, 96], sizes = [2, 32], strides = [1, 1]} : vector<2x128xf32> to vector<2x32xf32>
    %105 = math.tanh %104 : vector<2x32xf32>
    %106 = vector.extract_strided_slice %103 {offsets = [0, 0], sizes = [2, 32], strides = [1, 1]} : vector<2x96xf32> to vector<2x32xf32>
    %107 = vector.extract_strided_slice %103 {offsets = [0, 32], sizes = [2, 32], strides = [1, 1]} : vector<2x96xf32> to vector<2x32xf32>
    %108 = vector.extract_strided_slice %103 {offsets = [0, 64], sizes = [2, 32], strides = [1, 1]} : vector<2x96xf32> to vector<2x32xf32>
    %109 = arith.mulf %107, %90 : vector<2x32xf32>
    %110 = arith.mulf %106, %105 : vector<2x32xf32>
    %111 = arith.addf %109, %110 : vector<2x32xf32>
    %112 = math.tanh %111 : vector<2x32xf32>
    %113 = arith.mulf %108, %112 : vector<2x32xf32>
    %114 = vector.shape_cast %113 : vector<2x32xf32> to vector<2x1x32xf32>
    %c0_32 = arith.constant 0 : index
    %c4 = arith.constant 4 : index
    %c0_33 = arith.constant 0 : index
    %115 = vector.load %arg10[%c0_32, %c4, %c0_33] : memref<2x10x32xf32, #tpu.memory_space<vmem>>, vector<2x1x32xf32>
    tpu.vector_store %arg10[%c0_32, %c4, %c0_33], %114 {strides = array<i32>} : memref<2x10x32xf32, #tpu.memory_space<vmem>>, vector<2x1x32xf32>,
    %116 = vector.extract_strided_slice %8 {offsets = [10, 0], sizes = [2, 128], strides = [1, 1]} : vector<20x128xf32> to vector<2x128xf32>
    %cst_34 = arith.constant dense<0.000000e+00> : vector<2x128xf32>
    %117 = tpu.matmul %113, %0, %cst_34 {dimension_numbers = #tpu.dot_dimension_numbers<[1], [0], [0], [1], [0, 0, 1, 1], [], []>} : vector<2x32xf32>, vector<32x128xf32>, vector<2x128xf32> -> vector<2x128xf32>
    %118 = arith.addf %116, %117 : vector<2x128xf32>
    %119 = vector.extract_strided_slice %118 {offsets = [0, 0], sizes = [2, 96], strides = [1, 1]} : vector<2x128xf32> to vector<2x96xf32>
    %120 = arith.negf %119 : vector<2x96xf32>
    %121 = math.exp %120 : vector<2x96xf32>
    %cst_35 = arith.constant 1.000000e+00 : f32
    %122 = vector.broadcast %cst_35 : f32 to vector<2x96xf32>
    %123 = arith.addf %122, %121 : vector<2x96xf32>
    %124 = arith.divf %122, %123 : vector<2x96xf32>
    %125 = vector.extract_strided_slice %118 {offsets = [0, 96], sizes = [2, 32], strides = [1, 1]} : vector<2x128xf32> to vector<2x32xf32>
    %126 = math.tanh %125 : vector<2x32xf32>
    %127 = vector.extract_strided_slice %124 {offsets = [0, 0], sizes = [2, 32], strides = [1, 1]} : vector<2x96xf32> to vector<2x32xf32>
    %128 = vector.extract_strided_slice %124 {offsets = [0, 32], sizes = [2, 32], strides = [1, 1]} : vector<2x96xf32> to vector<2x32xf32>
    %129 = vector.extract_strided_slice %124 {offsets = [0, 64], sizes = [2, 32], strides = [1, 1]} : vector<2x96xf32> to vector<2x32xf32>
    %130 = arith.mulf %128, %111 : vector<2x32xf32>
    %131 = arith.mulf %127, %126 : vector<2x32xf32>
    %132 = arith.addf %130, %131 : vector<2x32xf32>
    %133 = math.tanh %132 : vector<2x32xf32>
    %134 = arith.mulf %129, %133 : vector<2x32xf32>
    %135 = vector.shape_cast %134 : vector<2x32xf32> to vector<2x1x32xf32>
    %c0_36 = arith.constant 0 : index
    %c5 = arith.constant 5 : index
    %c0_37 = arith.constant 0 : index
    %136 = vector.load %arg10[%c0_36, %c5, %c0_37] : memref<2x10x32xf32, #tpu.memory_space<vmem>>, vector<2x1x32xf32>
    tpu.vector_store %arg10[%c0_36, %c5, %c0_37], %135 {strides = array<i32>} : memref<2x10x32xf32, #tpu.memory_space<vmem>>, vector<2x1x32xf32>,
    %137 = vector.extract_strided_slice %8 {offsets = [12, 0], sizes = [2, 128], strides = [1, 1]} : vector<20x128xf32> to vector<2x128xf32>
    %cst_38 = arith.constant dense<0.000000e+00> : vector<2x128xf32>
    %138 = tpu.matmul %134, %0, %cst_38 {dimension_numbers = #tpu.dot_dimension_numbers<[1], [0], [0], [1], [0, 0, 1, 1], [], []>} : vector<2x32xf32>, vector<32x128xf32>, vector<2x128xf32> -> vector<2x128xf32>
    %139 = arith.addf %137, %138 : vector<2x128xf32>
    %140 = vector.extract_strided_slice %139 {offsets = [0, 0], sizes = [2, 96], strides = [1, 1]} : vector<2x128xf32> to vector<2x96xf32>
    %141 = arith.negf %140 : vector<2x96xf32>
    %142 = math.exp %141 : vector<2x96xf32>
    %cst_39 = arith.constant 1.000000e+00 : f32
    %143 = vector.broadcast %cst_39 : f32 to vector<2x96xf32>
    %144 = arith.addf %143, %142 : vector<2x96xf32>
    %145 = arith.divf %143, %144 : vector<2x96xf32>
    %146 = vector.extract_strided_slice %139 {offsets = [0, 96], sizes = [2, 32], strides = [1, 1]} : vector<2x128xf32> to vector<2x32xf32>
    %147 = math.tanh %146 : vector<2x32xf32>
    %148 = vector.extract_strided_slice %145 {offsets = [0, 0], sizes = [2, 32], strides = [1, 1]} : vector<2x96xf32> to vector<2x32xf32>
    %149 = vector.extract_strided_slice %145 {offsets = [0, 32], sizes = [2, 32], strides = [1, 1]} : vector<2x96xf32> to vector<2x32xf32>
    %150 = vector.extract_strided_slice %145 {offsets = [0, 64], sizes = [2, 32], strides = [1, 1]} : vector<2x96xf32> to vector<2x32xf32>
    %151 = arith.mulf %149, %132 : vector<2x32xf32>
    %152 = arith.mulf %148, %147 : vector<2x32xf32>
    %153 = arith.addf %151, %152 : vector<2x32xf32>
    %154 = math.tanh %153 : vector<2x32xf32>
    %155 = arith.mulf %150, %154 : vector<2x32xf32>
    %156 = vector.shape_cast %155 : vector<2x32xf32> to vector<2x1x32xf32>
    %c0_40 = arith.constant 0 : index
    %c6 = arith.constant 6 : index
    %c0_41 = arith.constant 0 : index
    %157 = vector.load %arg10[%c0_40, %c6, %c0_41] : memref<2x10x32xf32, #tpu.memory_space<vmem>>, vector<2x1x32xf32>
    tpu.vector_store %arg10[%c0_40, %c6, %c0_41], %156 {strides = array<i32>} : memref<2x10x32xf32, #tpu.memory_space<vmem>>, vector<2x1x32xf32>,
    %158 = vector.extract_strided_slice %8 {offsets = [14, 0], sizes = [2, 128], strides = [1, 1]} : vector<20x128xf32> to vector<2x128xf32>
    %cst_42 = arith.constant dense<0.000000e+00> : vector<2x128xf32>
    %159 = tpu.matmul %155, %0, %cst_42 {dimension_numbers = #tpu.dot_dimension_numbers<[1], [0], [0], [1], [0, 0, 1, 1], [], []>} : vector<2x32xf32>, vector<32x128xf32>, vector<2x128xf32> -> vector<2x128xf32>
    %160 = arith.addf %158, %159 : vector<2x128xf32>
    %161 = vector.extract_strided_slice %160 {offsets = [0, 0], sizes = [2, 96], strides = [1, 1]} : vector<2x128xf32> to vector<2x96xf32>
    %162 = arith.negf %161 : vector<2x96xf32>
    %163 = math.exp %162 : vector<2x96xf32>
    %cst_43 = arith.constant 1.000000e+00 : f32
    %164 = vector.broadcast %cst_43 : f32 to vector<2x96xf32>
    %165 = arith.addf %164, %163 : vector<2x96xf32>
    %166 = arith.divf %164, %165 : vector<2x96xf32>
    %167 = vector.extract_strided_slice %160 {offsets = [0, 96], sizes = [2, 32], strides = [1, 1]} : vector<2x128xf32> to vector<2x32xf32>
    %168 = math.tanh %167 : vector<2x32xf32>
    %169 = vector.extract_strided_slice %166 {offsets = [0, 0], sizes = [2, 32], strides = [1, 1]} : vector<2x96xf32> to vector<2x32xf32>
    %170 = vector.extract_strided_slice %166 {offsets = [0, 32], sizes = [2, 32], strides = [1, 1]} : vector<2x96xf32> to vector<2x32xf32>
    %171 = vector.extract_strided_slice %166 {offsets = [0, 64], sizes = [2, 32], strides = [1, 1]} : vector<2x96xf32> to vector<2x32xf32>
    %172 = arith.mulf %170, %153 : vector<2x32xf32>
    %173 = arith.mulf %169, %168 : vector<2x32xf32>
    %174 = arith.addf %172, %173 : vector<2x32xf32>
    %175 = math.tanh %174 : vector<2x32xf32>
    %176 = arith.mulf %171, %175 : vector<2x32xf32>
    %177 = vector.shape_cast %176 : vector<2x32xf32> to vector<2x1x32xf32>
    %c0_44 = arith.constant 0 : index
    %c7 = arith.constant 7 : index
    %c0_45 = arith.constant 0 : index
    %178 = vector.load %arg10[%c0_44, %c7, %c0_45] : memref<2x10x32xf32, #tpu.memory_space<vmem>>, vector<2x1x32xf32>
    tpu.vector_store %arg10[%c0_44, %c7, %c0_45], %177 {strides = array<i32>} : memref<2x10x32xf32, #tpu.memory_space<vmem>>, vector<2x1x32xf32>,
    %179 = vector.extract_strided_slice %8 {offsets = [16, 0], sizes = [2, 128], strides = [1, 1]} : vector<20x128xf32> to vector<2x128xf32>
    %cst_46 = arith.constant dense<0.000000e+00> : vector<2x128xf32>
    %180 = tpu.matmul %176, %0, %cst_46 {dimension_numbers = #tpu.dot_dimension_numbers<[1], [0], [0], [1], [0, 0, 1, 1], [], []>} : vector<2x32xf32>, vector<32x128xf32>, vector<2x128xf32> -> vector<2x128xf32>
    %181 = arith.addf %179, %180 : vector<2x128xf32>
    %182 = vector.extract_strided_slice %181 {offsets = [0, 0], sizes = [2, 96], strides = [1, 1]} : vector<2x128xf32> to vector<2x96xf32>
    %183 = arith.negf %182 : vector<2x96xf32>
    %184 = math.exp %183 : vector<2x96xf32>
    %cst_47 = arith.constant 1.000000e+00 : f32
    %185 = vector.broadcast %cst_47 : f32 to vector<2x96xf32>
    %186 = arith.addf %185, %184 : vector<2x96xf32>
    %187 = arith.divf %185, %186 : vector<2x96xf32>
    %188 = vector.extract_strided_slice %181 {offsets = [0, 96], sizes = [2, 32], strides = [1, 1]} : vector<2x128xf32> to vector<2x32xf32>
    %189 = math.tanh %188 : vector<2x32xf32>
    %190 = vector.extract_strided_slice %187 {offsets = [0, 0], sizes = [2, 32], strides = [1, 1]} : vector<2x96xf32> to vector<2x32xf32>
    %191 = vector.extract_strided_slice %187 {offsets = [0, 32], sizes = [2, 32], strides = [1, 1]} : vector<2x96xf32> to vector<2x32xf32>
    %192 = vector.extract_strided_slice %187 {offsets = [0, 64], sizes = [2, 32], strides = [1, 1]} : vector<2x96xf32> to vector<2x32xf32>
    %193 = arith.mulf %191, %174 : vector<2x32xf32>
    %194 = arith.mulf %190, %189 : vector<2x32xf32>
    %195 = arith.addf %193, %194 : vector<2x32xf32>
    %196 = math.tanh %195 : vector<2x32xf32>
    %197 = arith.mulf %192, %196 : vector<2x32xf32>
    %198 = vector.shape_cast %197 : vector<2x32xf32> to vector<2x1x32xf32>
    %c0_48 = arith.constant 0 : index
    %c8 = arith.constant 8 : index
    %c0_49 = arith.constant 0 : index
    %199 = vector.load %arg10[%c0_48, %c8, %c0_49] : memref<2x10x32xf32, #tpu.memory_space<vmem>>, vector<2x1x32xf32>
    tpu.vector_store %arg10[%c0_48, %c8, %c0_49], %198 {strides = array<i32>} : memref<2x10x32xf32, #tpu.memory_space<vmem>>, vector<2x1x32xf32>,
    %200 = vector.extract_strided_slice %8 {offsets = [18, 0], sizes = [2, 128], strides = [1, 1]} : vector<20x128xf32> to vector<2x128xf32>
    %cst_50 = arith.constant dense<0.000000e+00> : vector<2x128xf32>
    %201 = tpu.matmul %197, %0, %cst_50 {dimension_numbers = #tpu.dot_dimension_numbers<[1], [0], [0], [1], [0, 0, 1, 1], [], []>} : vector<2x32xf32>, vector<32x128xf32>, vector<2x128xf32> -> vector<2x128xf32>
    %202 = arith.addf %200, %201 : vector<2x128xf32>
    %203 = vector.extract_strided_slice %202 {offsets = [0, 0], sizes = [2, 96], strides = [1, 1]} : vector<2x128xf32> to vector<2x96xf32>
    %204 = arith.negf %203 : vector<2x96xf32>
    %205 = math.exp %204 : vector<2x96xf32>
    %cst_51 = arith.constant 1.000000e+00 : f32
    %206 = vector.broadcast %cst_51 : f32 to vector<2x96xf32>
    %207 = arith.addf %206, %205 : vector<2x96xf32>
    %208 = arith.divf %206, %207 : vector<2x96xf32>
    %209 = vector.extract_strided_slice %202 {offsets = [0, 96], sizes = [2, 32], strides = [1, 1]} : vector<2x128xf32> to vector<2x32xf32>
    %210 = math.tanh %209 : vector<2x32xf32>
    %211 = vector.extract_strided_slice %208 {offsets = [0, 0], sizes = [2, 32], strides = [1, 1]} : vector<2x96xf32> to vector<2x32xf32>
    %212 = vector.extract_strided_slice %208 {offsets = [0, 32], sizes = [2, 32], strides = [1, 1]} : vector<2x96xf32> to vector<2x32xf32>
    %213 = vector.extract_strided_slice %208 {offsets = [0, 64], sizes = [2, 32], strides = [1, 1]} : vector<2x96xf32> to vector<2x32xf32>
    %214 = arith.mulf %212, %195 : vector<2x32xf32>
    %215 = arith.mulf %211, %210 : vector<2x32xf32>
    %216 = arith.addf %214, %215 : vector<2x32xf32>
    %217 = math.tanh %216 : vector<2x32xf32>
    %218 = arith.mulf %213, %217 : vector<2x32xf32>
    %219 = vector.shape_cast %218 : vector<2x32xf32> to vector<2x1x32xf32>
    %c0_52 = arith.constant 0 : index
    %c9 = arith.constant 9 : index
    %c0_53 = arith.constant 0 : index
    %220 = vector.load %arg10[%c0_52, %c9, %c0_53] : memref<2x10x32xf32, #tpu.memory_space<vmem>>, vector<2x1x32xf32>
    tpu.vector_store %arg10[%c0_52, %c9, %c0_53], %219 {strides = array<i32>} : memref<2x10x32xf32, #tpu.memory_space<vmem>>, vector<2x1x32xf32>,
    %c0_54 = arith.constant 0 : index
    %c0_55 = arith.constant 0 : index
    %c0_56 = arith.constant 0 : index
    %221 = vector.load %arg10[%c0_54, %c0_55, %c0_56] : memref<2x10x32xf32, #tpu.memory_space<vmem>>, vector<2x10x32xf32>
    %cst_57 = arith.constant 0.000000e+00 : f32
    %222 = vector.broadcast %cst_57 : f32 to vector<2x32xf32>
    %c0_58 = arith.constant 0 : index
    %c0_59 = arith.constant 0 : index
    %223 = vector.load %arg9[%c0_58, %c0_59] : memref<16x32xf32, #tpu.memory_space<vmem>>, vector<2x32xf32>
    tpu.vector_store %arg9[%c0_58, %c0_59], %222 {strides = array<i32>} : memref<16x32xf32, #tpu.memory_space<vmem>>, vector<2x32xf32>,
    %224 = tpu.iota {dimensions = array<i32: 1>} : vector<2x32xi32>
    %c0_60 = arith.constant 0 : index
    %c0_61 = arith.constant 0 : index
    %225 = vector.load %arg3[%c0_60, %c0_61] : memref<16x32xf32, #tpu.memory_space<vmem>>, vector<2x32xf32>
    %226 = vector.shape_cast %218 : vector<2x32xf32> to vector<2x1x32xf32>
    "tpu.trace_start"() <{level = 10 : i32, message = "bqh,bsh->bqs"}> : () -> ()
    %cst_62 = arith.constant dense<0.000000e+00> : vector<2x1x10xf32>
    %227 = tpu.matmul %226, %221, %cst_62 {dimension_numbers = #tpu.dot_dimension_numbers<[2], [2], [1], [1], [0, 0, 0, 1, 1, 1], [0], [0]>} : vector<2x1x32xf32>, vector<2x10x32xf32>, vector<2x1x10xf32> -> vector<2x1x10xf32>
    "tpu.trace_stop"() : () -> ()
    %cst_63 = arith.constant dense<0xFF800000> : vector<2x1xf32>
    %228 = vector.multi_reduction <maximumf>, %227, %cst_63 [2] : vector<2x1x10xf32> to vector<2x1xf32>
    %229 = vector.shape_cast %228 : vector<2x1xf32> to vector<2x1x1xf32>
    %230 = vector.broadcast %229 : vector<2x1x1xf32> to vector<2x1x10xf32>
    %231 = arith.subf %227, %230 : vector<2x1x10xf32>
    %232 = math.exp %231 : vector<2x1x10xf32>
    %cst_64 = arith.constant dense<0.000000e+00> : vector<2x1xf32>
    %233 = vector.multi_reduction <add>, %232, %cst_64 [2] : vector<2x1x10xf32> to vector<2x1xf32>
    %234 = vector.shape_cast %233 : vector<2x1xf32> to vector<2x1x1xf32>
    %235 = vector.broadcast %234 : vector<2x1x1xf32> to vector<2x1x10xf32>
    %236 = arith.divf %232, %235 : vector<2x1x10xf32>
    "tpu.trace_start"() <{level = 10 : i32, message = "bqs,bsh->bqh"}> : () -> ()
    %cst_65 = arith.constant dense<0.000000e+00> : vector<2x1x32xf32>
    %237 = tpu.matmul %236, %221, %cst_65 {dimension_numbers = #tpu.dot_dimension_numbers<[2], [1], [1], [2], [0, 0, 0, 1, 1, 2], [0], [0]>} : vector<2x1x10xf32>, vector<2x10x32xf32>, vector<2x1x32xf32> -> vector<2x1x32xf32>
    "tpu.trace_stop"() : () -> ()
    %238 = vector.shape_cast %237 : vector<2x1x32xf32> to vector<2x32xf32>
    %239 = tpu.concatenate %225, %238, %218 in 1 : vector<2x32xf32>, vector<2x32xf32>, vector<2x32xf32> -> vector<2x96xf32>
    %cst_66 = arith.constant dense<0.000000e+00> : vector<2x160xf32>
    %240 = tpu.matmul %239, %1, %cst_66 {dimension_numbers = #tpu.dot_dimension_numbers<[1], [0], [0], [1], [0, 0, 1, 1], [], []>} : vector<2x96xf32>, vector<96x160xf32>, vector<2x160xf32> -> vector<2x160xf32>
    %241 = vector.extract_strided_slice %240 {offsets = [0, 0], sizes = [2, 128], strides = [1, 1]} : vector<2x160xf32> to vector<2x128xf32>
    %242 = vector.extract_strided_slice %241 {offsets = [0, 0], sizes = [2, 96], strides = [1, 1]} : vector<2x128xf32> to vector<2x96xf32>
    %243 = arith.negf %242 : vector<2x96xf32>
    %244 = math.exp %243 : vector<2x96xf32>
    %cst_67 = arith.constant 1.000000e+00 : f32
    %245 = vector.broadcast %cst_67 : f32 to vector<2x96xf32>
    %246 = arith.addf %245, %244 : vector<2x96xf32>
    %247 = arith.divf %245, %246 : vector<2x96xf32>
    %248 = vector.extract_strided_slice %241 {offsets = [0, 96], sizes = [2, 32], strides = [1, 1]} : vector<2x128xf32> to vector<2x32xf32>
    %249 = math.tanh %248 : vector<2x32xf32>
    %250 = vector.extract_strided_slice %247 {offsets = [0, 0], sizes = [2, 32], strides = [1, 1]} : vector<2x96xf32> to vector<2x32xf32>
    %251 = vector.extract_strided_slice %247 {offsets = [0, 32], sizes = [2, 32], strides = [1, 1]} : vector<2x96xf32> to vector<2x32xf32>
    %252 = vector.extract_strided_slice %247 {offsets = [0, 64], sizes = [2, 32], strides = [1, 1]} : vector<2x96xf32> to vector<2x32xf32>
    %253 = arith.mulf %251, %216 : vector<2x32xf32>
    %254 = arith.mulf %250, %249 : vector<2x32xf32>
    %255 = arith.addf %253, %254 : vector<2x32xf32>
    %256 = math.tanh %255 : vector<2x32xf32>
    %257 = arith.mulf %252, %256 : vector<2x32xf32>
    %258 = vector.extract_strided_slice %240 {offsets = [0, 128], sizes = [2, 32], strides = [1, 1]} : vector<2x160xf32> to vector<2x32xf32>
    %cst_68 = arith.constant dense<0.000000e+00> : vector<2x32xf32>
    %259 = tpu.matmul %257, %2, %cst_68 {dimension_numbers = #tpu.dot_dimension_numbers<[1], [0], [0], [1], [0, 0, 1, 1], [], []>} : vector<2x32xf32>, vector<32x32xf32>, vector<2x32xf32> -> vector<2x32xf32>
    %260 = arith.addf %258, %259 : vector<2x32xf32>
    %c2_69 = arith.constant 2 : index
    %c0_70 = arith.constant 0 : index
    %261 = vector.load %arg9[%c2_69, %c0_70] : memref<16x32xf32, #tpu.memory_space<vmem>>, vector<2x32xf32>
    tpu.vector_store %arg9[%c2_69, %c0_70], %260 {strides = array<i32>} : memref<16x32xf32, #tpu.memory_space<vmem>>, vector<2x32xf32>,
    %cst_71 = arith.constant dense<0xFF800000> : vector<2xf32>
    %262 = vector.multi_reduction <maximumf>, %260, %cst_71 [1] : vector<2x32xf32> to vector<2xf32>
    %263 = vector.shape_cast %262 : vector<2xf32> to vector<2x1xf32>
    %264 = vector.broadcast %263 : vector<2x1xf32> to vector<2x32xf32>
    %265 = arith.cmpf oeq, %260, %264 : vector<2x32xf32>
    %c32_i32 = arith.constant 32 : i32
    %266 = vector.broadcast %c32_i32 : i32 to vector<2x32xi32>
    %267 = arith.select %265, %224, %266 : vector<2x32xi1>, vector<2x32xi32>
    %cst_72 = arith.constant dense<2147483647> : vector<2xi32>
    %268 = vector.multi_reduction <minsi>, %267, %cst_72 [1] : vector<2x32xi32> to vector<2xi32>
    %269 = vector.shape_cast %268 : vector<2xi32> to vector<2x1xi32>
    %270 = vector.broadcast %269 : vector<2x1xi32> to vector<2x32xi32>
    %271 = arith.cmpi eq, %224, %270 : vector<2x32xi32>
    %272 = arith.extui %271 : vector<2x32xi1> to vector<2x32xi32>
    %273 = arith.sitofp %272 : vector<2x32xi32> to vector<2x32xf32>
    %c2_73 = arith.constant 2 : index
    %c0_74 = arith.constant 0 : index
    %274 = vector.load %arg3[%c2_73, %c0_74] : memref<16x32xf32, #tpu.memory_space<vmem>>, vector<2x32xf32>
    %c1_75 = arith.constant 1 : index
    %275 = memref.load %arg1[%c1_75] : memref<8xi32, #tpu.memory_space<smem>>
    %c1_i32 = arith.constant 1 : i32
    %276 = arith.cmpi eq, %275, %c1_i32 : i32
    %277 = arith.select %276, %274, %273 : vector<2x32xf32>
    %278 = vector.shape_cast %257 : vector<2x32xf32> to vector<2x1x32xf32>
    "tpu.trace_start"() <{level = 10 : i32, message = "bqh,bsh->bqs"}> : () -> ()
    %cst_76 = arith.constant dense<0.000000e+00> : vector<2x1x10xf32>
    %279 = tpu.matmul %278, %221, %cst_76 {dimension_numbers = #tpu.dot_dimension_numbers<[2], [2], [1], [1], [0, 0, 0, 1, 1, 1], [0], [0]>} : vector<2x1x32xf32>, vector<2x10x32xf32>, vector<2x1x10xf32> -> vector<2x1x10xf32>
    "tpu.trace_stop"() : () -> ()
    %cst_77 = arith.constant dense<0xFF800000> : vector<2x1xf32>
    %280 = vector.multi_reduction <maximumf>, %279, %cst_77 [2] : vector<2x1x10xf32> to vector<2x1xf32>
    %281 = vector.shape_cast %280 : vector<2x1xf32> to vector<2x1x1xf32>
    %282 = vector.broadcast %281 : vector<2x1x1xf32> to vector<2x1x10xf32>
    %283 = arith.subf %279, %282 : vector<2x1x10xf32>
    %284 = math.exp %283 : vector<2x1x10xf32>
    %cst_78 = arith.constant dense<0.000000e+00> : vector<2x1xf32>
    %285 = vector.multi_reduction <add>, %284, %cst_78 [2] : vector<2x1x10xf32> to vector<2x1xf32>
    %286 = vector.shape_cast %285 : vector<2x1xf32> to vector<2x1x1xf32>
    %287 = vector.broadcast %286 : vector<2x1x1xf32> to vector<2x1x10xf32>
    %288 = arith.divf %284, %287 : vector<2x1x10xf32>
    "tpu.trace_start"() <{level = 10 : i32, message = "bqs,bsh->bqh"}> : () -> ()
    %cst_79 = arith.constant dense<0.000000e+00> : vector<2x1x32xf32>
    %289 = tpu.matmul %288, %221, %cst_79 {dimension_numbers = #tpu.dot_dimension_numbers<[2], [1], [1], [2], [0, 0, 0, 1, 1, 2], [0], [0]>} : vector<2x1x10xf32>, vector<2x10x32xf32>, vector<2x1x32xf32> -> vector<2x1x32xf32>
    "tpu.trace_stop"() : () -> ()
    %290 = vector.shape_cast %289 : vector<2x1x32xf32> to vector<2x32xf32>
    %291 = tpu.concatenate %277, %290, %257 in 1 : vector<2x32xf32>, vector<2x32xf32>, vector<2x32xf32> -> vector<2x96xf32>
    %cst_80 = arith.constant dense<0.000000e+00> : vector<2x160xf32>
    %292 = tpu.matmul %291, %1, %cst_80 {dimension_numbers = #tpu.dot_dimension_numbers<[1], [0], [0], [1], [0, 0, 1, 1], [], []>} : vector<2x96xf32>, vector<96x160xf32>, vector<2x160xf32> -> vector<2x160xf32>
    %293 = vector.extract_strided_slice %292 {offsets = [0, 0], sizes = [2, 128], strides = [1, 1]} : vector<2x160xf32> to vector<2x128xf32>
    %294 = vector.extract_strided_slice %293 {offsets = [0, 0], sizes = [2, 96], strides = [1, 1]} : vector<2x128xf32> to vector<2x96xf32>
    %295 = arith.negf %294 : vector<2x96xf32>
    %296 = math.exp %295 : vector<2x96xf32>
    %cst_81 = arith.constant 1.000000e+00 : f32
    %297 = vector.broadcast %cst_81 : f32 to vector<2x96xf32>
    %298 = arith.addf %297, %296 : vector<2x96xf32>
    %299 = arith.divf %297, %298 : vector<2x96xf32>
    %300 = vector.extract_strided_slice %293 {offsets = [0, 96], sizes = [2, 32], strides = [1, 1]} : vector<2x128xf32> to vector<2x32xf32>
    %301 = math.tanh %300 : vector<2x32xf32>
    %302 = vector.extract_strided_slice %299 {offsets = [0, 0], sizes = [2, 32], strides = [1, 1]} : vector<2x96xf32> to vector<2x32xf32>
    %303 = vector.extract_strided_slice %299 {offsets = [0, 32], sizes = [2, 32], strides = [1, 1]} : vector<2x96xf32> to vector<2x32xf32>
    %304 = vector.extract_strided_slice %299 {offsets = [0, 64], sizes = [2, 32], strides = [1, 1]} : vector<2x96xf32> to vector<2x32xf32>
    %305 = arith.mulf %303, %255 : vector<2x32xf32>
    %306 = arith.mulf %302, %301 : vector<2x32xf32>
    %307 = arith.addf %305, %306 : vector<2x32xf32>
    %308 = math.tanh %307 : vector<2x32xf32>
    %309 = arith.mulf %304, %308 : vector<2x32xf32>
    %310 = vector.extract_strided_slice %292 {offsets = [0, 128], sizes = [2, 32], strides = [1, 1]} : vector<2x160xf32> to vector<2x32xf32>
    %cst_82 = arith.constant dense<0.000000e+00> : vector<2x32xf32>
    %311 = tpu.matmul %309, %2, %cst_82 {dimension_numbers = #tpu.dot_dimension_numbers<[1], [0], [0], [1], [0, 0, 1, 1], [], []>} : vector<2x32xf32>, vector<32x32xf32>, vector<2x32xf32> -> vector<2x32xf32>
    %312 = arith.addf %310, %311 : vector<2x32xf32>
    %c4_83 = arith.constant 4 : index
    %c0_84 = arith.constant 0 : index
    %313 = vector.load %arg9[%c4_83, %c0_84] : memref<16x32xf32, #tpu.memory_space<vmem>>, vector<2x32xf32>
    tpu.vector_store %arg9[%c4_83, %c0_84], %312 {strides = array<i32>} : memref<16x32xf32, #tpu.memory_space<vmem>>, vector<2x32xf32>,
    %cst_85 = arith.constant dense<0xFF800000> : vector<2xf32>
    %314 = vector.multi_reduction <maximumf>, %312, %cst_85 [1] : vector<2x32xf32> to vector<2xf32>
    %315 = vector.shape_cast %314 : vector<2xf32> to vector<2x1xf32>
    %316 = vector.broadcast %315 : vector<2x1xf32> to vector<2x32xf32>
    %317 = arith.cmpf oeq, %312, %316 : vector<2x32xf32>
    %c32_i32_86 = arith.constant 32 : i32
    %318 = vector.broadcast %c32_i32_86 : i32 to vector<2x32xi32>
    %319 = arith.select %317, %224, %318 : vector<2x32xi1>, vector<2x32xi32>
    %cst_87 = arith.constant dense<2147483647> : vector<2xi32>
    %320 = vector.multi_reduction <minsi>, %319, %cst_87 [1] : vector<2x32xi32> to vector<2xi32>
    %321 = vector.shape_cast %320 : vector<2xi32> to vector<2x1xi32>
    %322 = vector.broadcast %321 : vector<2x1xi32> to vector<2x32xi32>
    %323 = arith.cmpi eq, %224, %322 : vector<2x32xi32>
    %324 = arith.extui %323 : vector<2x32xi1> to vector<2x32xi32>
    %325 = arith.sitofp %324 : vector<2x32xi32> to vector<2x32xf32>
    %c4_88 = arith.constant 4 : index
    %c0_89 = arith.constant 0 : index
    %326 = vector.load %arg3[%c4_88, %c0_89] : memref<16x32xf32, #tpu.memory_space<vmem>>, vector<2x32xf32>
    %c2_90 = arith.constant 2 : index
    %327 = memref.load %arg1[%c2_90] : memref<8xi32, #tpu.memory_space<smem>>
    %c1_i32_91 = arith.constant 1 : i32
    %328 = arith.cmpi eq, %327, %c1_i32_91 : i32
    %329 = arith.select %328, %326, %325 : vector<2x32xf32>
    %330 = vector.shape_cast %309 : vector<2x32xf32> to vector<2x1x32xf32>
    "tpu.trace_start"() <{level = 10 : i32, message = "bqh,bsh->bqs"}> : () -> ()
    %cst_92 = arith.constant dense<0.000000e+00> : vector<2x1x10xf32>
    %331 = tpu.matmul %330, %221, %cst_92 {dimension_numbers = #tpu.dot_dimension_numbers<[2], [2], [1], [1], [0, 0, 0, 1, 1, 1], [0], [0]>} : vector<2x1x32xf32>, vector<2x10x32xf32>, vector<2x1x10xf32> -> vector<2x1x10xf32>
    "tpu.trace_stop"() : () -> ()
    %cst_93 = arith.constant dense<0xFF800000> : vector<2x1xf32>
    %332 = vector.multi_reduction <maximumf>, %331, %cst_93 [2] : vector<2x1x10xf32> to vector<2x1xf32>
    %333 = vector.shape_cast %332 : vector<2x1xf32> to vector<2x1x1xf32>
    %334 = vector.broadcast %333 : vector<2x1x1xf32> to vector<2x1x10xf32>
    %335 = arith.subf %331, %334 : vector<2x1x10xf32>
    %336 = math.exp %335 : vector<2x1x10xf32>
    %cst_94 = arith.constant dense<0.000000e+00> : vector<2x1xf32>
    %337 = vector.multi_reduction <add>, %336, %cst_94 [2] : vector<2x1x10xf32> to vector<2x1xf32>
    %338 = vector.shape_cast %337 : vector<2x1xf32> to vector<2x1x1xf32>
    %339 = vector.broadcast %338 : vector<2x1x1xf32> to vector<2x1x10xf32>
    %340 = arith.divf %336, %339 : vector<2x1x10xf32>
    "tpu.trace_start"() <{level = 10 : i32, message = "bqs,bsh->bqh"}> : () -> ()
    %cst_95 = arith.constant dense<0.000000e+00> : vector<2x1x32xf32>
    %341 = tpu.matmul %340, %221, %cst_95 {dimension_numbers = #tpu.dot_dimension_numbers<[2], [1], [1], [2], [0, 0, 0, 1, 1, 2], [0], [0]>} : vector<2x1x10xf32>, vector<2x10x32xf32>, vector<2x1x32xf32> -> vector<2x1x32xf32>
    "tpu.trace_stop"() : () -> ()
    %342 = vector.shape_cast %341 : vector<2x1x32xf32> to vector<2x32xf32>
    %343 = tpu.concatenate %329, %342, %309 in 1 : vector<2x32xf32>, vector<2x32xf32>, vector<2x32xf32> -> vector<2x96xf32>
    %cst_96 = arith.constant dense<0.000000e+00> : vector<2x160xf32>
    %344 = tpu.matmul %343, %1, %cst_96 {dimension_numbers = #tpu.dot_dimension_numbers<[1], [0], [0], [1], [0, 0, 1, 1], [], []>} : vector<2x96xf32>, vector<96x160xf32>, vector<2x160xf32> -> vector<2x160xf32>
    %345 = vector.extract_strided_slice %344 {offsets = [0, 0], sizes = [2, 128], strides = [1, 1]} : vector<2x160xf32> to vector<2x128xf32>
    %346 = vector.extract_strided_slice %345 {offsets = [0, 0], sizes = [2, 96], strides = [1, 1]} : vector<2x128xf32> to vector<2x96xf32>
    %347 = arith.negf %346 : vector<2x96xf32>
    %348 = math.exp %347 : vector<2x96xf32>
    %cst_97 = arith.constant 1.000000e+00 : f32
    %349 = vector.broadcast %cst_97 : f32 to vector<2x96xf32>
    %350 = arith.addf %349, %348 : vector<2x96xf32>
    %351 = arith.divf %349, %350 : vector<2x96xf32>
    %352 = vector.extract_strided_slice %345 {offsets = [0, 96], sizes = [2, 32], strides = [1, 1]} : vector<2x128xf32> to vector<2x32xf32>
    %353 = math.tanh %352 : vector<2x32xf32>
    %354 = vector.extract_strided_slice %351 {offsets = [0, 0], sizes = [2, 32], strides = [1, 1]} : vector<2x96xf32> to vector<2x32xf32>
    %355 = vector.extract_strided_slice %351 {offsets = [0, 32], sizes = [2, 32], strides = [1, 1]} : vector<2x96xf32> to vector<2x32xf32>
    %356 = vector.extract_strided_slice %351 {offsets = [0, 64], sizes = [2, 32], strides = [1, 1]} : vector<2x96xf32> to vector<2x32xf32>
    %357 = arith.mulf %355, %307 : vector<2x32xf32>
    %358 = arith.mulf %354, %353 : vector<2x32xf32>
    %359 = arith.addf %357, %358 : vector<2x32xf32>
    %360 = math.tanh %359 : vector<2x32xf32>
    %361 = arith.mulf %356, %360 : vector<2x32xf32>
    %362 = vector.extract_strided_slice %344 {offsets = [0, 128], sizes = [2, 32], strides = [1, 1]} : vector<2x160xf32> to vector<2x32xf32>
    %cst_98 = arith.constant dense<0.000000e+00> : vector<2x32xf32>
    %363 = tpu.matmul %361, %2, %cst_98 {dimension_numbers = #tpu.dot_dimension_numbers<[1], [0], [0], [1], [0, 0, 1, 1], [], []>} : vector<2x32xf32>, vector<32x32xf32>, vector<2x32xf32> -> vector<2x32xf32>
    %364 = arith.addf %362, %363 : vector<2x32xf32>
    %c6_99 = arith.constant 6 : index
    %c0_100 = arith.constant 0 : index
    %365 = vector.load %arg9[%c6_99, %c0_100] : memref<16x32xf32, #tpu.memory_space<vmem>>, vector<2x32xf32>
    tpu.vector_store %arg9[%c6_99, %c0_100], %364 {strides = array<i32>} : memref<16x32xf32, #tpu.memory_space<vmem>>, vector<2x32xf32>,
    %cst_101 = arith.constant dense<0xFF800000> : vector<2xf32>
    %366 = vector.multi_reduction <maximumf>, %364, %cst_101 [1] : vector<2x32xf32> to vector<2xf32>
    %367 = vector.shape_cast %366 : vector<2xf32> to vector<2x1xf32>
    %368 = vector.broadcast %367 : vector<2x1xf32> to vector<2x32xf32>
    %369 = arith.cmpf oeq, %364, %368 : vector<2x32xf32>
    %c32_i32_102 = arith.constant 32 : i32
    %370 = vector.broadcast %c32_i32_102 : i32 to vector<2x32xi32>
    %371 = arith.select %369, %224, %370 : vector<2x32xi1>, vector<2x32xi32>
    %cst_103 = arith.constant dense<2147483647> : vector<2xi32>
    %372 = vector.multi_reduction <minsi>, %371, %cst_103 [1] : vector<2x32xi32> to vector<2xi32>
    %373 = vector.shape_cast %372 : vector<2xi32> to vector<2x1xi32>
    %374 = vector.broadcast %373 : vector<2x1xi32> to vector<2x32xi32>
    %375 = arith.cmpi eq, %224, %374 : vector<2x32xi32>
    %376 = arith.extui %375 : vector<2x32xi1> to vector<2x32xi32>
    %377 = arith.sitofp %376 : vector<2x32xi32> to vector<2x32xf32>
    %c6_104 = arith.constant 6 : index
    %c0_105 = arith.constant 0 : index
    %378 = vector.load %arg3[%c6_104, %c0_105] : memref<16x32xf32, #tpu.memory_space<vmem>>, vector<2x32xf32>
    %c3_106 = arith.constant 3 : index
    %379 = memref.load %arg1[%c3_106] : memref<8xi32, #tpu.memory_space<smem>>
    %c1_i32_107 = arith.constant 1 : i32
    %380 = arith.cmpi eq, %379, %c1_i32_107 : i32
    %381 = arith.select %380, %378, %377 : vector<2x32xf32>
    %382 = vector.shape_cast %361 : vector<2x32xf32> to vector<2x1x32xf32>
    "tpu.trace_start"() <{level = 10 : i32, message = "bqh,bsh->bqs"}> : () -> ()
    %cst_108 = arith.constant dense<0.000000e+00> : vector<2x1x10xf32>
    %383 = tpu.matmul %382, %221, %cst_108 {dimension_numbers = #tpu.dot_dimension_numbers<[2], [2], [1], [1], [0, 0, 0, 1, 1, 1], [0], [0]>} : vector<2x1x32xf32>, vector<2x10x32xf32>, vector<2x1x10xf32> -> vector<2x1x10xf32>
    "tpu.trace_stop"() : () -> ()
    %cst_109 = arith.constant dense<0xFF800000> : vector<2x1xf32>
    %384 = vector.multi_reduction <maximumf>, %383, %cst_109 [2] : vector<2x1x10xf32> to vector<2x1xf32>
    %385 = vector.shape_cast %384 : vector<2x1xf32> to vector<2x1x1xf32>
    %386 = vector.broadcast %385 : vector<2x1x1xf32> to vector<2x1x10xf32>
    %387 = arith.subf %383, %386 : vector<2x1x10xf32>
    %388 = math.exp %387 : vector<2x1x10xf32>
    %cst_110 = arith.constant dense<0.000000e+00> : vector<2x1xf32>
    %389 = vector.multi_reduction <add>, %388, %cst_110 [2] : vector<2x1x10xf32> to vector<2x1xf32>
    %390 = vector.shape_cast %389 : vector<2x1xf32> to vector<2x1x1xf32>
    %391 = vector.broadcast %390 : vector<2x1x1xf32> to vector<2x1x10xf32>
    %392 = arith.divf %388, %391 : vector<2x1x10xf32>
    "tpu.trace_start"() <{level = 10 : i32, message = "bqs,bsh->bqh"}> : () -> ()
    %cst_111 = arith.constant dense<0.000000e+00> : vector<2x1x32xf32>
    %393 = tpu.matmul %392, %221, %cst_111 {dimension_numbers = #tpu.dot_dimension_numbers<[2], [1], [1], [2], [0, 0, 0, 1, 1, 2], [0], [0]>} : vector<2x1x10xf32>, vector<2x10x32xf32>, vector<2x1x32xf32> -> vector<2x1x32xf32>
    "tpu.trace_stop"() : () -> ()
    %394 = vector.shape_cast %393 : vector<2x1x32xf32> to vector<2x32xf32>
    %395 = tpu.concatenate %381, %394, %361 in 1 : vector<2x32xf32>, vector<2x32xf32>, vector<2x32xf32> -> vector<2x96xf32>
    %cst_112 = arith.constant dense<0.000000e+00> : vector<2x160xf32>
    %396 = tpu.matmul %395, %1, %cst_112 {dimension_numbers = #tpu.dot_dimension_numbers<[1], [0], [0], [1], [0, 0, 1, 1], [], []>} : vector<2x96xf32>, vector<96x160xf32>, vector<2x160xf32> -> vector<2x160xf32>
    %397 = vector.extract_strided_slice %396 {offsets = [0, 0], sizes = [2, 128], strides = [1, 1]} : vector<2x160xf32> to vector<2x128xf32>
    %398 = vector.extract_strided_slice %397 {offsets = [0, 0], sizes = [2, 96], strides = [1, 1]} : vector<2x128xf32> to vector<2x96xf32>
    %399 = arith.negf %398 : vector<2x96xf32>
    %400 = math.exp %399 : vector<2x96xf32>
    %cst_113 = arith.constant 1.000000e+00 : f32
    %401 = vector.broadcast %cst_113 : f32 to vector<2x96xf32>
    %402 = arith.addf %401, %400 : vector<2x96xf32>
    %403 = arith.divf %401, %402 : vector<2x96xf32>
    %404 = vector.extract_strided_slice %397 {offsets = [0, 96], sizes = [2, 32], strides = [1, 1]} : vector<2x128xf32> to vector<2x32xf32>
    %405 = math.tanh %404 : vector<2x32xf32>
    %406 = vector.extract_strided_slice %403 {offsets = [0, 0], sizes = [2, 32], strides = [1, 1]} : vector<2x96xf32> to vector<2x32xf32>
    %407 = vector.extract_strided_slice %403 {offsets = [0, 32], sizes = [2, 32], strides = [1, 1]} : vector<2x96xf32> to vector<2x32xf32>
    %408 = vector.extract_strided_slice %403 {offsets = [0, 64], sizes = [2, 32], strides = [1, 1]} : vector<2x96xf32> to vector<2x32xf32>
    %409 = arith.mulf %407, %359 : vector<2x32xf32>
    %410 = arith.mulf %406, %405 : vector<2x32xf32>
    %411 = arith.addf %409, %410 : vector<2x32xf32>
    %412 = math.tanh %411 : vector<2x32xf32>
    %413 = arith.mulf %408, %412 : vector<2x32xf32>
    %414 = vector.extract_strided_slice %396 {offsets = [0, 128], sizes = [2, 32], strides = [1, 1]} : vector<2x160xf32> to vector<2x32xf32>
    %cst_114 = arith.constant dense<0.000000e+00> : vector<2x32xf32>
    %415 = tpu.matmul %413, %2, %cst_114 {dimension_numbers = #tpu.dot_dimension_numbers<[1], [0], [0], [1], [0, 0, 1, 1], [], []>} : vector<2x32xf32>, vector<32x32xf32>, vector<2x32xf32> -> vector<2x32xf32>
    %416 = arith.addf %414, %415 : vector<2x32xf32>
    %c8_115 = arith.constant 8 : index
    %c0_116 = arith.constant 0 : index
    %417 = vector.load %arg9[%c8_115, %c0_116] : memref<16x32xf32, #tpu.memory_space<vmem>>, vector<2x32xf32>
    tpu.vector_store %arg9[%c8_115, %c0_116], %416 {strides = array<i32>} : memref<16x32xf32, #tpu.memory_space<vmem>>, vector<2x32xf32>,
    %cst_117 = arith.constant dense<0xFF800000> : vector<2xf32>
    %418 = vector.multi_reduction <maximumf>, %416, %cst_117 [1] : vector<2x32xf32> to vector<2xf32>
    %419 = vector.shape_cast %418 : vector<2xf32> to vector<2x1xf32>
    %420 = vector.broadcast %419 : vector<2x1xf32> to vector<2x32xf32>
    %421 = arith.cmpf oeq, %416, %420 : vector<2x32xf32>
    %c32_i32_118 = arith.constant 32 : i32
    %422 = vector.broadcast %c32_i32_118 : i32 to vector<2x32xi32>
    %423 = arith.select %421, %224, %422 : vector<2x32xi1>, vector<2x32xi32>
    %cst_119 = arith.constant dense<2147483647> : vector<2xi32>
    %424 = vector.multi_reduction <minsi>, %423, %cst_119 [1] : vector<2x32xi32> to vector<2xi32>
    %425 = vector.shape_cast %424 : vector<2xi32> to vector<2x1xi32>
    %426 = vector.broadcast %425 : vector<2x1xi32> to vector<2x32xi32>
    %427 = arith.cmpi eq, %224, %426 : vector<2x32xi32>
    %428 = arith.extui %427 : vector<2x32xi1> to vector<2x32xi32>
    %429 = arith.sitofp %428 : vector<2x32xi32> to vector<2x32xf32>
    %c8_120 = arith.constant 8 : index
    %c0_121 = arith.constant 0 : index
    %430 = vector.load %arg3[%c8_120, %c0_121] : memref<16x32xf32, #tpu.memory_space<vmem>>, vector<2x32xf32>
    %c4_122 = arith.constant 4 : index
    %431 = memref.load %arg1[%c4_122] : memref<8xi32, #tpu.memory_space<smem>>
    %c1_i32_123 = arith.constant 1 : i32
    %432 = arith.cmpi eq, %431, %c1_i32_123 : i32
    %433 = arith.select %432, %430, %429 : vector<2x32xf32>
    %434 = vector.shape_cast %413 : vector<2x32xf32> to vector<2x1x32xf32>
    "tpu.trace_start"() <{level = 10 : i32, message = "bqh,bsh->bqs"}> : () -> ()
    %cst_124 = arith.constant dense<0.000000e+00> : vector<2x1x10xf32>
    %435 = tpu.matmul %434, %221, %cst_124 {dimension_numbers = #tpu.dot_dimension_numbers<[2], [2], [1], [1], [0, 0, 0, 1, 1, 1], [0], [0]>} : vector<2x1x32xf32>, vector<2x10x32xf32>, vector<2x1x10xf32> -> vector<2x1x10xf32>
    "tpu.trace_stop"() : () -> ()
    %cst_125 = arith.constant dense<0xFF800000> : vector<2x1xf32>
    %436 = vector.multi_reduction <maximumf>, %435, %cst_125 [2] : vector<2x1x10xf32> to vector<2x1xf32>
    %437 = vector.shape_cast %436 : vector<2x1xf32> to vector<2x1x1xf32>
    %438 = vector.broadcast %437 : vector<2x1x1xf32> to vector<2x1x10xf32>
    %439 = arith.subf %435, %438 : vector<2x1x10xf32>
    %440 = math.exp %439 : vector<2x1x10xf32>
    %cst_126 = arith.constant dense<0.000000e+00> : vector<2x1xf32>
    %441 = vector.multi_reduction <add>, %440, %cst_126 [2] : vector<2x1x10xf32> to vector<2x1xf32>
    %442 = vector.shape_cast %441 : vector<2x1xf32> to vector<2x1x1xf32>
    %443 = vector.broadcast %442 : vector<2x1x1xf32> to vector<2x1x10xf32>
    %444 = arith.divf %440, %443 : vector<2x1x10xf32>
    "tpu.trace_start"() <{level = 10 : i32, message = "bqs,bsh->bqh"}> : () -> ()
    %cst_127 = arith.constant dense<0.000000e+00> : vector<2x1x32xf32>
    %445 = tpu.matmul %444, %221, %cst_127 {dimension_numbers = #tpu.dot_dimension_numbers<[2], [1], [1], [2], [0, 0, 0, 1, 1, 2], [0], [0]>} : vector<2x1x10xf32>, vector<2x10x32xf32>, vector<2x1x32xf32> -> vector<2x1x32xf32>
    "tpu.trace_stop"() : () -> ()
    %446 = vector.shape_cast %445 : vector<2x1x32xf32> to vector<2x32xf32>
    %447 = tpu.concatenate %433, %446, %413 in 1 : vector<2x32xf32>, vector<2x32xf32>, vector<2x32xf32> -> vector<2x96xf32>
    %cst_128 = arith.constant dense<0.000000e+00> : vector<2x160xf32>
    %448 = tpu.matmul %447, %1, %cst_128 {dimension_numbers = #tpu.dot_dimension_numbers<[1], [0], [0], [1], [0, 0, 1, 1], [], []>} : vector<2x96xf32>, vector<96x160xf32>, vector<2x160xf32> -> vector<2x160xf32>
    %449 = vector.extract_strided_slice %448 {offsets = [0, 0], sizes = [2, 128], strides = [1, 1]} : vector<2x160xf32> to vector<2x128xf32>
    %450 = vector.extract_strided_slice %449 {offsets = [0, 0], sizes = [2, 96], strides = [1, 1]} : vector<2x128xf32> to vector<2x96xf32>
    %451 = arith.negf %450 : vector<2x96xf32>
    %452 = math.exp %451 : vector<2x96xf32>
    %cst_129 = arith.constant 1.000000e+00 : f32
    %453 = vector.broadcast %cst_129 : f32 to vector<2x96xf32>
    %454 = arith.addf %453, %452 : vector<2x96xf32>
    %455 = arith.divf %453, %454 : vector<2x96xf32>
    %456 = vector.extract_strided_slice %449 {offsets = [0, 96], sizes = [2, 32], strides = [1, 1]} : vector<2x128xf32> to vector<2x32xf32>
    %457 = math.tanh %456 : vector<2x32xf32>
    %458 = vector.extract_strided_slice %455 {offsets = [0, 0], sizes = [2, 32], strides = [1, 1]} : vector<2x96xf32> to vector<2x32xf32>
    %459 = vector.extract_strided_slice %455 {offsets = [0, 32], sizes = [2, 32], strides = [1, 1]} : vector<2x96xf32> to vector<2x32xf32>
    %460 = vector.extract_strided_slice %455 {offsets = [0, 64], sizes = [2, 32], strides = [1, 1]} : vector<2x96xf32> to vector<2x32xf32>
    %461 = arith.mulf %459, %411 : vector<2x32xf32>
    %462 = arith.mulf %458, %457 : vector<2x32xf32>
    %463 = arith.addf %461, %462 : vector<2x32xf32>
    %464 = math.tanh %463 : vector<2x32xf32>
    %465 = arith.mulf %460, %464 : vector<2x32xf32>
    %466 = vector.extract_strided_slice %448 {offsets = [0, 128], sizes = [2, 32], strides = [1, 1]} : vector<2x160xf32> to vector<2x32xf32>
    %cst_130 = arith.constant dense<0.000000e+00> : vector<2x32xf32>
    %467 = tpu.matmul %465, %2, %cst_130 {dimension_numbers = #tpu.dot_dimension_numbers<[1], [0], [0], [1], [0, 0, 1, 1], [], []>} : vector<2x32xf32>, vector<32x32xf32>, vector<2x32xf32> -> vector<2x32xf32>
    %468 = arith.addf %466, %467 : vector<2x32xf32>
    %c10 = arith.constant 10 : index
    %c0_131 = arith.constant 0 : index
    %469 = vector.load %arg9[%c10, %c0_131] : memref<16x32xf32, #tpu.memory_space<vmem>>, vector<2x32xf32>
    tpu.vector_store %arg9[%c10, %c0_131], %468 {strides = array<i32>} : memref<16x32xf32, #tpu.memory_space<vmem>>, vector<2x32xf32>,
    %cst_132 = arith.constant dense<0xFF800000> : vector<2xf32>
    %470 = vector.multi_reduction <maximumf>, %468, %cst_132 [1] : vector<2x32xf32> to vector<2xf32>
    %471 = vector.shape_cast %470 : vector<2xf32> to vector<2x1xf32>
    %472 = vector.broadcast %471 : vector<2x1xf32> to vector<2x32xf32>
    %473 = arith.cmpf oeq, %468, %472 : vector<2x32xf32>
    %c32_i32_133 = arith.constant 32 : i32
    %474 = vector.broadcast %c32_i32_133 : i32 to vector<2x32xi32>
    %475 = arith.select %473, %224, %474 : vector<2x32xi1>, vector<2x32xi32>
    %cst_134 = arith.constant dense<2147483647> : vector<2xi32>
    %476 = vector.multi_reduction <minsi>, %475, %cst_134 [1] : vector<2x32xi32> to vector<2xi32>
    %477 = vector.shape_cast %476 : vector<2xi32> to vector<2x1xi32>
    %478 = vector.broadcast %477 : vector<2x1xi32> to vector<2x32xi32>
    %479 = arith.cmpi eq, %224, %478 : vector<2x32xi32>
    %480 = arith.extui %479 : vector<2x32xi1> to vector<2x32xi32>
    %481 = arith.sitofp %480 : vector<2x32xi32> to vector<2x32xf32>
    %c10_135 = arith.constant 10 : index
    %c0_136 = arith.constant 0 : index
    %482 = vector.load %arg3[%c10_135, %c0_136] : memref<16x32xf32, #tpu.memory_space<vmem>>, vector<2x32xf32>
    %c5_137 = arith.constant 5 : index
    %483 = memref.load %arg1[%c5_137] : memref<8xi32, #tpu.memory_space<smem>>
    %c1_i32_138 = arith.constant 1 : i32
    %484 = arith.cmpi eq, %483, %c1_i32_138 : i32
    %485 = arith.select %484, %482, %481 : vector<2x32xf32>
    %486 = vector.shape_cast %465 : vector<2x32xf32> to vector<2x1x32xf32>
    "tpu.trace_start"() <{level = 10 : i32, message = "bqh,bsh->bqs"}> : () -> ()
    %cst_139 = arith.constant dense<0.000000e+00> : vector<2x1x10xf32>
    %487 = tpu.matmul %486, %221, %cst_139 {dimension_numbers = #tpu.dot_dimension_numbers<[2], [2], [1], [1], [0, 0, 0, 1, 1, 1], [0], [0]>} : vector<2x1x32xf32>, vector<2x10x32xf32>, vector<2x1x10xf32> -> vector<2x1x10xf32>
    "tpu.trace_stop"() : () -> ()
    %cst_140 = arith.constant dense<0xFF800000> : vector<2x1xf32>
    %488 = vector.multi_reduction <maximumf>, %487, %cst_140 [2] : vector<2x1x10xf32> to vector<2x1xf32>
    %489 = vector.shape_cast %488 : vector<2x1xf32> to vector<2x1x1xf32>
    %490 = vector.broadcast %489 : vector<2x1x1xf32> to vector<2x1x10xf32>
    %491 = arith.subf %487, %490 : vector<2x1x10xf32>
    %492 = math.exp %491 : vector<2x1x10xf32>
    %cst_141 = arith.constant dense<0.000000e+00> : vector<2x1xf32>
    %493 = vector.multi_reduction <add>, %492, %cst_141 [2] : vector<2x1x10xf32> to vector<2x1xf32>
    %494 = vector.shape_cast %493 : vector<2x1xf32> to vector<2x1x1xf32>
    %495 = vector.broadcast %494 : vector<2x1x1xf32> to vector<2x1x10xf32>
    %496 = arith.divf %492, %495 : vector<2x1x10xf32>
    "tpu.trace_start"() <{level = 10 : i32, message = "bqs,bsh->bqh"}> : () -> ()
    %cst_142 = arith.constant dense<0.000000e+00> : vector<2x1x32xf32>
    %497 = tpu.matmul %496, %221, %cst_142 {dimension_numbers = #tpu.dot_dimension_numbers<[2], [1], [1], [2], [0, 0, 0, 1, 1, 2], [0], [0]>} : vector<2x1x10xf32>, vector<2x10x32xf32>, vector<2x1x32xf32> -> vector<2x1x32xf32>
    "tpu.trace_stop"() : () -> ()
    %498 = vector.shape_cast %497 : vector<2x1x32xf32> to vector<2x32xf32>
    %499 = tpu.concatenate %485, %498, %465 in 1 : vector<2x32xf32>, vector<2x32xf32>, vector<2x32xf32> -> vector<2x96xf32>
    %cst_143 = arith.constant dense<0.000000e+00> : vector<2x160xf32>
    %500 = tpu.matmul %499, %1, %cst_143 {dimension_numbers = #tpu.dot_dimension_numbers<[1], [0], [0], [1], [0, 0, 1, 1], [], []>} : vector<2x96xf32>, vector<96x160xf32>, vector<2x160xf32> -> vector<2x160xf32>
    %501 = vector.extract_strided_slice %500 {offsets = [0, 0], sizes = [2, 128], strides = [1, 1]} : vector<2x160xf32> to vector<2x128xf32>
    %502 = vector.extract_strided_slice %501 {offsets = [0, 0], sizes = [2, 96], strides = [1, 1]} : vector<2x128xf32> to vector<2x96xf32>
    %503 = arith.negf %502 : vector<2x96xf32>
    %504 = math.exp %503 : vector<2x96xf32>
    %cst_144 = arith.constant 1.000000e+00 : f32
    %505 = vector.broadcast %cst_144 : f32 to vector<2x96xf32>
    %506 = arith.addf %505, %504 : vector<2x96xf32>
    %507 = arith.divf %505, %506 : vector<2x96xf32>
    %508 = vector.extract_strided_slice %501 {offsets = [0, 96], sizes = [2, 32], strides = [1, 1]} : vector<2x128xf32> to vector<2x32xf32>
    %509 = math.tanh %508 : vector<2x32xf32>
    %510 = vector.extract_strided_slice %507 {offsets = [0, 0], sizes = [2, 32], strides = [1, 1]} : vector<2x96xf32> to vector<2x32xf32>
    %511 = vector.extract_strided_slice %507 {offsets = [0, 32], sizes = [2, 32], strides = [1, 1]} : vector<2x96xf32> to vector<2x32xf32>
    %512 = vector.extract_strided_slice %507 {offsets = [0, 64], sizes = [2, 32], strides = [1, 1]} : vector<2x96xf32> to vector<2x32xf32>
    %513 = arith.mulf %511, %463 : vector<2x32xf32>
    %514 = arith.mulf %510, %509 : vector<2x32xf32>
    %515 = arith.addf %513, %514 : vector<2x32xf32>
    %516 = math.tanh %515 : vector<2x32xf32>
    %517 = arith.mulf %512, %516 : vector<2x32xf32>
    %518 = vector.extract_strided_slice %500 {offsets = [0, 128], sizes = [2, 32], strides = [1, 1]} : vector<2x160xf32> to vector<2x32xf32>
    %cst_145 = arith.constant dense<0.000000e+00> : vector<2x32xf32>
    %519 = tpu.matmul %517, %2, %cst_145 {dimension_numbers = #tpu.dot_dimension_numbers<[1], [0], [0], [1], [0, 0, 1, 1], [], []>} : vector<2x32xf32>, vector<32x32xf32>, vector<2x32xf32> -> vector<2x32xf32>
    %520 = arith.addf %518, %519 : vector<2x32xf32>
    %c12 = arith.constant 12 : index
    %c0_146 = arith.constant 0 : index
    %521 = vector.load %arg9[%c12, %c0_146] : memref<16x32xf32, #tpu.memory_space<vmem>>, vector<2x32xf32>
    tpu.vector_store %arg9[%c12, %c0_146], %520 {strides = array<i32>} : memref<16x32xf32, #tpu.memory_space<vmem>>, vector<2x32xf32>,
    %cst_147 = arith.constant dense<0xFF800000> : vector<2xf32>
    %522 = vector.multi_reduction <maximumf>, %520, %cst_147 [1] : vector<2x32xf32> to vector<2xf32>
    %523 = vector.shape_cast %522 : vector<2xf32> to vector<2x1xf32>
    %524 = vector.broadcast %523 : vector<2x1xf32> to vector<2x32xf32>
    %525 = arith.cmpf oeq, %520, %524 : vector<2x32xf32>
    %c32_i32_148 = arith.constant 32 : i32
    %526 = vector.broadcast %c32_i32_148 : i32 to vector<2x32xi32>
    %527 = arith.select %525, %224, %526 : vector<2x32xi1>, vector<2x32xi32>
    %cst_149 = arith.constant dense<2147483647> : vector<2xi32>
    %528 = vector.multi_reduction <minsi>, %527, %cst_149 [1] : vector<2x32xi32> to vector<2xi32>
    %529 = vector.shape_cast %528 : vector<2xi32> to vector<2x1xi32>
    %530 = vector.broadcast %529 : vector<2x1xi32> to vector<2x32xi32>
    %531 = arith.cmpi eq, %224, %530 : vector<2x32xi32>
    %532 = arith.extui %531 : vector<2x32xi1> to vector<2x32xi32>
    %533 = arith.sitofp %532 : vector<2x32xi32> to vector<2x32xf32>
    %c12_150 = arith.constant 12 : index
    %c0_151 = arith.constant 0 : index
    %534 = vector.load %arg3[%c12_150, %c0_151] : memref<16x32xf32, #tpu.memory_space<vmem>>, vector<2x32xf32>
    %c6_152 = arith.constant 6 : index
    %535 = memref.load %arg1[%c6_152] : memref<8xi32, #tpu.memory_space<smem>>
    %c1_i32_153 = arith.constant 1 : i32
    %536 = arith.cmpi eq, %535, %c1_i32_153 : i32
    %537 = arith.select %536, %534, %533 : vector<2x32xf32>
    %538 = vector.shape_cast %517 : vector<2x32xf32> to vector<2x1x32xf32>
    "tpu.trace_start"() <{level = 10 : i32, message = "bqh,bsh->bqs"}> : () -> ()
    %cst_154 = arith.constant dense<0.000000e+00> : vector<2x1x10xf32>
    %539 = tpu.matmul %538, %221, %cst_154 {dimension_numbers = #tpu.dot_dimension_numbers<[2], [2], [1], [1], [0, 0, 0, 1, 1, 1], [0], [0]>} : vector<2x1x32xf32>, vector<2x10x32xf32>, vector<2x1x10xf32> -> vector<2x1x10xf32>
    "tpu.trace_stop"() : () -> ()
    %cst_155 = arith.constant dense<0xFF800000> : vector<2x1xf32>
    %540 = vector.multi_reduction <maximumf>, %539, %cst_155 [2] : vector<2x1x10xf32> to vector<2x1xf32>
    %541 = vector.shape_cast %540 : vector<2x1xf32> to vector<2x1x1xf32>
    %542 = vector.broadcast %541 : vector<2x1x1xf32> to vector<2x1x10xf32>
    %543 = arith.subf %539, %542 : vector<2x1x10xf32>
    %544 = math.exp %543 : vector<2x1x10xf32>
    %cst_156 = arith.constant dense<0.000000e+00> : vector<2x1xf32>
    %545 = vector.multi_reduction <add>, %544, %cst_156 [2] : vector<2x1x10xf32> to vector<2x1xf32>
    %546 = vector.shape_cast %545 : vector<2x1xf32> to vector<2x1x1xf32>
    %547 = vector.broadcast %546 : vector<2x1x1xf32> to vector<2x1x10xf32>
    %548 = arith.divf %544, %547 : vector<2x1x10xf32>
    "tpu.trace_start"() <{level = 10 : i32, message = "bqs,bsh->bqh"}> : () -> ()
    %cst_157 = arith.constant dense<0.000000e+00> : vector<2x1x32xf32>
    %549 = tpu.matmul %548, %221, %cst_157 {dimension_numbers = #tpu.dot_dimension_numbers<[2], [1], [1], [2], [0, 0, 0, 1, 1, 2], [0], [0]>} : vector<2x1x10xf32>, vector<2x10x32xf32>, vector<2x1x32xf32> -> vector<2x1x32xf32>
    "tpu.trace_stop"() : () -> ()
    %550 = vector.shape_cast %549 : vector<2x1x32xf32> to vector<2x32xf32>
    %551 = tpu.concatenate %537, %550, %517 in 1 : vector<2x32xf32>, vector<2x32xf32>, vector<2x32xf32> -> vector<2x96xf32>
    %cst_158 = arith.constant dense<0.000000e+00> : vector<2x160xf32>
    %552 = tpu.matmul %551, %1, %cst_158 {dimension_numbers = #tpu.dot_dimension_numbers<[1], [0], [0], [1], [0, 0, 1, 1], [], []>} : vector<2x96xf32>, vector<96x160xf32>, vector<2x160xf32> -> vector<2x160xf32>
    %553 = vector.extract_strided_slice %552 {offsets = [0, 0], sizes = [2, 128], strides = [1, 1]} : vector<2x160xf32> to vector<2x128xf32>
    %554 = vector.extract_strided_slice %553 {offsets = [0, 0], sizes = [2, 96], strides = [1, 1]} : vector<2x128xf32> to vector<2x96xf32>
    %555 = arith.negf %554 : vector<2x96xf32>
    %556 = math.exp %555 : vector<2x96xf32>
    %cst_159 = arith.constant 1.000000e+00 : f32
    %557 = vector.broadcast %cst_159 : f32 to vector<2x96xf32>
    %558 = arith.addf %557, %556 : vector<2x96xf32>
    %559 = arith.divf %557, %558 : vector<2x96xf32>
    %560 = vector.extract_strided_slice %553 {offsets = [0, 96], sizes = [2, 32], strides = [1, 1]} : vector<2x128xf32> to vector<2x32xf32>
    %561 = math.tanh %560 : vector<2x32xf32>
    %562 = vector.extract_strided_slice %559 {offsets = [0, 0], sizes = [2, 32], strides = [1, 1]} : vector<2x96xf32> to vector<2x32xf32>
    %563 = vector.extract_strided_slice %559 {offsets = [0, 32], sizes = [2, 32], strides = [1, 1]} : vector<2x96xf32> to vector<2x32xf32>
    %564 = vector.extract_strided_slice %559 {offsets = [0, 64], sizes = [2, 32], strides = [1, 1]} : vector<2x96xf32> to vector<2x32xf32>
    %565 = arith.mulf %563, %515 : vector<2x32xf32>
    %566 = arith.mulf %562, %561 : vector<2x32xf32>
    %567 = arith.addf %565, %566 : vector<2x32xf32>
    %568 = math.tanh %567 : vector<2x32xf32>
    %569 = arith.mulf %564, %568 : vector<2x32xf32>
    %570 = vector.extract_strided_slice %552 {offsets = [0, 128], sizes = [2, 32], strides = [1, 1]} : vector<2x160xf32> to vector<2x32xf32>
    %cst_160 = arith.constant dense<0.000000e+00> : vector<2x32xf32>
    %571 = tpu.matmul %569, %2, %cst_160 {dimension_numbers = #tpu.dot_dimension_numbers<[1], [0], [0], [1], [0, 0, 1, 1], [], []>} : vector<2x32xf32>, vector<32x32xf32>, vector<2x32xf32> -> vector<2x32xf32>
    %572 = arith.addf %570, %571 : vector<2x32xf32>
    %c14 = arith.constant 14 : index
    %c0_161 = arith.constant 0 : index
    %573 = vector.load %arg9[%c14, %c0_161] : memref<16x32xf32, #tpu.memory_space<vmem>>, vector<2x32xf32>
    tpu.vector_store %arg9[%c14, %c0_161], %572 {strides = array<i32>} : memref<16x32xf32, #tpu.memory_space<vmem>>, vector<2x32xf32>,
    return
  }
  func.func @transform_0(%arg0: i32, %arg1: memref<8xi32, #tpu.memory_space<smem>>) -> (i32, i32) {
    %c0_i32 = arith.constant 0 : i32
    %c0_i32_0 = arith.constant 0 : i32
    %c0_i32_1 = arith.constant 0 : i32
    return %c0_i32, %c0_i32_0 : i32, i32
  }
  func.func @transform_1(%arg0: i32, %arg1: memref<8xi32, #tpu.memory_space<smem>>) -> (i32, i32) {
    %c0_i32 = arith.constant 0 : i32
    %c0_i32_0 = arith.constant 0 : i32
    %c0_i32_1 = arith.constant 0 : i32
    return %c0_i32, %c0_i32_0 : i32, i32
  }
  func.func @transform_2(%arg0: i32, %arg1: memref<8xi32, #tpu.memory_space<smem>>) -> (i32, i32) {
    %c0_i32 = arith.constant 0 : i32
    %c0_i32_0 = arith.constant 0 : i32
    %c0_i32_1 = arith.constant 0 : i32
    return %c0_i32, %c0_i32_0 : i32, i32
  }
  func.func @transform_3(%arg0: i32, %arg1: memref<8xi32, #tpu.memory_space<smem>>) -> (i32, i32) {
    %c0_i32 = arith.constant 0 : i32
    %c0_i32_0 = arith.constant 0 : i32
    %c0_i32_1 = arith.constant 0 : i32
    return %c0_i32, %c0_i32_0 : i32, i32
  }
  func.func @transform_4(%arg0: i32, %arg1: memref<8xi32, #tpu.memory_space<smem>>) -> (i32, i32) {
    %c0_i32 = arith.constant 0 : i32
    %c0_i32_0 = arith.constant 0 : i32
    %c0_i32_1 = arith.constant 0 : i32
    return %c0_i32, %c0_i32_0 : i32, i32
  }
  func.func @transform_5(%arg0: i32, %arg1: memref<8xi32, #tpu.memory_space<smem>>) -> (i32, i32) {
    %c0_i32 = arith.constant 0 : i32
    %c0_i32_0 = arith.constant 0 : i32
    %c0_i32_1 = arith.constant 0 : i32
    return %c0_i32, %c0_i32_0 : i32, i32
  }
  func.func @transform_6(%arg0: i32, %arg1: memref<8xi32, #tpu.memory_space<smem>>) -> (i32, i32) {
    %c0_i32 = arith.constant 0 : i32
    %c0_i32_0 = arith.constant 0 : i32
    %c0_i32_1 = arith.constant 0 : i32
    return %c0_i32, %c0_i32_0 : i32, i32
  }
  func.func @transform_7(%arg0: i32, %arg1: memref<8xi32, #tpu.memory_space<smem>>) -> (i32, i32) {
    %c0_i32 = arith.constant 0 : i32
    %c0_i32_0 = arith.constant 0 : i32
    %c0_i32_1 = arith.constant 0 : i32
    return %c0_i32, %c0_i32_0 : i32, i32
  }
}

</mosaic_0001>

<llo_original>
// kernel: tpu_custom_call.1
$region0: #{tpu_custom_call.1}
  #allocation0 [shape = 'u32[]', space=smem, size = 0x4, offset = 0x4, fixed_abs, tag = 'smem constant byte address 0x4 - core index']
  #allocation1 [shape = 'u32[144,128]{1,0:T(1,128)}', space=vmem, size = 0x12000, scoped, tag = 'internal scratch']
  #allocation2 [shape = 'f32[2,10,32]{2,1,0:T(8,128)}', space=vmem, size = 0x4000, scoped, tag = 'scratch operand']
  #allocation3 [shape = 's32[1]{0}', space=sflag, size = 0x4, scoped, tag = 'scoped memory for tpu_custom_call.1']
  #allocation4 [shape = 'u8[512]{0}', space=smem, size = 0x200, scoped, tag = 'prefetched SMEM operand 0']
  %s0 = inlined_call_operand.vmem [shape: s32[8], index: 0, kind: input, shape index: {}]
  %s1 = inlined_call_operand.vmem [shape: f32[20,16], index: 1, kind: input, shape index: {}]
  %s2 = inlined_call_operand.vmem [shape: f32[16,32], index: 2, kind: input, shape index: {}]
  %s3 = inlined_call_operand.vmem [shape: f32[16,128], index: 3, kind: input, shape index: {}]
  %s4 = inlined_call_operand.vmem [shape: f32[32,128], index: 4, kind: input, shape index: {}]
  %s5 = inlined_call_operand.vmem [shape: f32[1,128], index: 5, kind: input, shape index: {}]
  %s6 = inlined_call_operand.vmem [shape: f32[96,160], index: 6, kind: input, shape index: {}]
  %s7 = inlined_call_operand.vmem [shape: f32[32,32], index: 7, kind: input, shape index: {}]
  %s8 = inlined_call_operand.hbm [shape: f32[16,32], index: 8, kind: output, shape index: {}]
  %s9 = sld [smem:[#allocation0]]
  $region38: #{tpu_custom_call.1} parent=0
    _
  %s11 = ssub.s32 1, %s9
  %s12 = scalar_select 0, %s11, %s9
  %s13 = sshll.u32 %s0, 4
  %s14 = int_to_ptr.vmem [resolvable:$true] %s13
  %16 = dma.vmem_to_smem %s14, 16, [#allocation4], [#allocation3]
  %17 = dma.done [#allocation3], 16
  %18 = sfence
  $region1: #{tpu_custom_call.1} parent=0
    #allocation5 [shape = 'u8[8192]{0}', space=vmem, size = 0x2000, scoped, tag = 'output window, operand 0, single buffered']
    #allocation6 [shape = 's32[1]{0}', space=sflag, size = 0x4, scoped, tag = 'scoped memory for tpu_custom_call.1']
    %19 = vsyncpa [#allocation6], 0
    // Predicated region
    $region2: #{tpu_custom_call.1} parent=1 // pred_check
      _
    $region3: #{tpu_custom_call.1} parent=1 // pred_check_branch
      %21 = sbr.rel (0) target = $region5
    $region4: #{tpu_custom_call.1} parent=1 // pred_region
      _
    $region5: #{tpu_custom_call.1} parent=1 // pred_fallthru
      _
    // Predicated region
    $region6: #{tpu_custom_call.1} parent=1 // pred_check
      _
    $region7: #{tpu_custom_call.1} parent=1 // pred_check_branch
      %23 = sbr.rel (0) target = $region9
    $region8: #{tpu_custom_call.1} parent=1 // pred_region
      _
    $region9: #{tpu_custom_call.1} parent=1 // pred_fallthru
      _
    // Predicated region
    $region10: #{tpu_custom_call.1} parent=1 // pred_check
      _
    $region11: #{tpu_custom_call.1} parent=1 // pred_check_branch
      %25 = sbr.rel (0) target = $region13
    $region12: #{tpu_custom_call.1} parent=1 // pred_region
      _
    $region13: #{tpu_custom_call.1} parent=1 // pred_fallthru
      _
    // Predicated region
    $region14: #{tpu_custom_call.1} parent=1 // pred_check
      _
    $region15: #{tpu_custom_call.1} parent=1 // pred_check_branch
      %27 = sbr.rel (0) target = $region17
    $region16: #{tpu_custom_call.1} parent=1 // pred_region
      _
    $region17: #{tpu_custom_call.1} parent=1 // pred_fallthru
      _
    // Predicated region
    $region18: #{tpu_custom_call.1} parent=1 // pred_check
      _
    $region19: #{tpu_custom_call.1} parent=1 // pred_check_branch
      %29 = sbr.rel (0) target = $region21
    $region20: #{tpu_custom_call.1} parent=1 // pred_region
      _
    $region21: #{tpu_custom_call.1} parent=1 // pred_fallthru
      _
    // Predicated region
    $region22: #{tpu_custom_call.1} parent=1 // pred_check
      _
    $region23: #{tpu_custom_call.1} parent=1 // pred_check_branch
      %31 = sbr.rel (0) target = $region25
    $region24: #{tpu_custom_call.1} parent=1 // pred_region
      _
    $region25: #{tpu_custom_call.1} parent=1 // pred_fallthru
      _
    // Predicated region
    $region26: #{tpu_custom_call.1} parent=1 // pred_check
      _
    $region27: #{tpu_custom_call.1} parent=1 // pred_check_branch
      %33 = sbr.rel (0) target = $region29
    $region28: #{tpu_custom_call.1} parent=1 // pred_region
      _
    $region29: #{tpu_custom_call.1} parent=1 // pred_fallthru
      _
    %v34 = vld [vmem:[%s4] sm:$0xff]
    %v35 = vld [vmem:[%s4 + $0x8] sm:$0xff]
    %v36 = vld [vmem:[%s4 + $0x10] sm:$0xff]
    %v37 = vld [vmem:[%s4 + $0x18] sm:$0xff]
    %v38 = vld [vmem:[%s6] sm:$0xff]
    %v39 = vld [vmem:[%s6 + $0x8] sm:$0xff]
    %v40 = vld [vmem:[%s6 + $0x10] sm:$0xff]
    %v41 = vld [vmem:[%s6 + $0x18] sm:$0xff]
    %v42 = vld [vmem:[%s6 + $0x20] sm:$0xff]
    %v43 = vld [vmem:[%s6 + $0x28] sm:$0xff]
    %v44 = vld [vmem:[%s6 + $0x30] sm:$0xff]
    %v45 = vld [vmem:[%s6 + $0x38] sm:$0xff]
    %v46 = vld [vmem:[%s6 + $0x40] sm:$0xff]
    %v47 = vld [vmem:[%s6 + $0x48] sm:$0xff]
    %v48 = vld [vmem:[%s6 + $0x50] sm:$0xff]
    %v49 = vld [vmem:[%s6 + $0x58] sm:$0xff]
    %v50 = vld [vmem:[%s6 + $0x60] sm:$0xff]
    %v51 = vld [vmem:[%s6 + $0x68] sm:$0xff]
    %v52 = vld [vmem:[%s6 + $0x70] sm:$0xff]
    %v53 = vld [vmem:[%s6 + $0x78] sm:$0xff]
    %v54 = vld [vmem:[%s6 + $0x80] sm:$0xff]
    %v55 = vld [vmem:[%s6 + $0x88] sm:$0xff]
    %v56 = vld [vmem:[%s6 + $0x90] sm:$0xff]
    %v57 = vld [vmem:[%s6 + $0x98] sm:$0xff]
    %v58 = vld [vmem:[%s6 + $0xa0] sm:$0xff]
    %v59 = vld [vmem:[%s6 + $0xa8] sm:$0xff]
    %v60 = vld [vmem:[%s6 + $0xb0] sm:$0xff]
    %v61 = vld [vmem:[%s6 + $0xb8] sm:$0xff]
    %v62 = vld [vmem:[%s7] sm:$0xff]
    %v63 = vld [vmem:[%s7 + $0x8] sm:$0xff]
    %v64 = vld [vmem:[%s7 + $0x10] sm:$0xff]
    %v65 = vld [vmem:[%s7 + $0x18] sm:$0xff]
    %v66 = vld [vmem:[%s1] sm:$0xff]
    %v67 = vld [vmem:[%s1 + $0x8] sm:$0xff]
    %v68 = vld [vmem:[%s1 + $0x10] sm:$0xf]
    %v69 = vld [vmem:[%s3] sm:$0xff]
    %v70 = vld [vmem:[%s3 + $0x8] sm:$0xff]
    %v71 = vld [vmem:[%s5] sm:$0x1]
    %v73 = vlaneseq
    %v74 = vshrl.u32 %v73, 7
    %v75 = vsub.s32 0, %v74
    %v76 = vrot.slane %v71, %v75
    %vm78 = vcmask 130048
    %v80 = vsel %vm78, %v66, 0
    %v83 = vsel %vm78, %v67, 0
    %v86 = vsel %vm78, %v68, 0
    %88 = vmatprep.subr.mxu0 0.0
    %89 = vmatpush1.msra.mxu0 %v69
    %90 = vmatprep.subr.mxu0 0.0
    %91 = vmatpush1.msra.mxu0 %v70
    %92 = vmatprep.subr.mxu0 0.0
    %93 = vmatpush1.msra.mxu0 0.0
    %94 = vmatprep.subr.mxu0 0.0
    %95 = vmatpush1.msra.mxu0 0.0
    %96 = vmatprep.subr.mxu0 0.0
    %97 = vmatpush1.msra.mxu0 0.0
    %98 = vmatprep.subr.mxu0 0.0
    %99 = vmatpush1.msra.mxu0 0.0
    %100 = vmatprep.subr.mxu0 0.0
    %101 = vmatpush1.msra.mxu0 0.0
    %102 = vmatprep.subr.mxu0 0.0
    %103 = vmatpush1.msra.mxu0 0.0
    %104 = vmatprep.subr.mxu0 0.0
    %105 = vmatpush1.msra.mxu0 0.0
    %106 = vmatprep.subr.mxu0 0.0
    %107 = vmatpush1.msra.mxu0 0.0
    %108 = vmatprep.subr.mxu0 0.0
    %109 = vmatpush1.msra.mxu0 0.0
    %110 = vmatprep.subr.mxu0 0.0
    %111 = vmatpush1.msra.mxu0 0.0
    %112 = vmatprep.subr.mxu0 0.0
    %113 = vmatpush1.msra.mxu0 0.0
    %114 = vmatprep.subr.mxu0 0.0
    %115 = vmatpush1.msra.mxu0 0.0
    %116 = vmatprep.subr.mxu0 0.0
    %117 = vmatpush1.msra.mxu0 0.0
    %118 = vmatprep.subr.mxu0 0.0
    %119 = vmatpush1.msra.mxu0 0.0
    %120 = vmatprep.subr.mxu0 0.0
    %121 = vmatpush1.msra.mxu0 0.0
    %122 = vmatprep.subr.mxu0 0.0
    %123 = vmatpush1.msra.mxu0 0.0
    %124 = vmatprep.subr.mxu0 0.0
    %125 = vmatpush1.msra.mxu0 0.0
    %126 = vmatprep.subr.mxu0 0.0
    %127 = vmatpush1.msra.mxu0 0.0
    %128 = vmatprep.subr.mxu0 0.0
    %129 = vmatpush1.msra.mxu0 0.0
    %130 = vmatprep.subr.mxu0 0.0
    %131 = vmatpush1.msra.mxu0 0.0
    %132 = vmatprep.subr.mxu0 0.0
    %133 = vmatpush1.msra.mxu0 0.0
    %134 = vmatprep.subr.mxu0 0.0
    %135 = vmatpush1.msra.mxu0 0.0
    %136 = vmatprep.subr.mxu0 0.0
    %137 = vmatpush1.msra.mxu0 0.0
    %138 = vmatprep.subr.mxu0 0.0
    %139 = vmatpush1.msra.mxu0 0.0
    %140 = vmatprep.subr.mxu0 0.0
    %141 = vmatpush1.msra.mxu0 0.0
    %142 = vmatprep.subr.mxu0 0.0
    %143 = vmatpush1.msra.mxu0 0.0
    %144 = vmatprep.subr.mxu0 0.0
    %145 = vmatpush1.msra.mxu0 0.0
    %146 = vmatprep.subr.mxu0 0.0
    %147 = vmatpush1.msra.mxu0 0.0
    %148 = vmatprep.subr.mxu0 0.0
    %149 = vmatpush1.msra.mxu0 0.0
    %150 = vmatprep.subr.mxu0 0.0
    %151 = vmatpush1.msra.mxu0 0.0
    %152 = vmatprep.mubr.f32.mxu0 0.0
    %153 = vmatmul.mubr.f32.gmra.mrb[0].mxu0 %v80
    %v154 = vpop.f32.mrb[0].mxu0
    %v155 = vadd.f32 %v76, %v154
    %v156 = vpop.f32.mrb[0].mxu0
    %157 = vmatprep.mubr.f32.mxu0 0.0
    %158 = vmatmul.mubr.f32.gmra.mrb[0].mxu0 %v83
    %v159 = vpop.f32.mrb[0].mxu0
    %v160 = vadd.f32 %v76, %v159
    %v161 = vpop.f32.mrb[0].mxu0
    %162 = vmatprep.mubr.f32.mxu0 0.0
    %163 = vmatmul.mubr.f32.gmra.mrb[0].mxu0 %v86
    %v164 = vpop.f32.mrb[0].mxu0
    %v165 = vadd.f32 %v76, %v164
    %v166 = vpop.f32.mrb[0].mxu0
    %167 = vdwg.mxu0
    %vm168 = vcmask 261120
    %v170 = vsel %vm168, 0.0, 0
    %172 = vmatprep.subr.mxu0 0.0
    %173 = vmatpush1.msra.mxu0 %v34
    %174 = vmatprep.subr.mxu0 0.0
    %175 = vmatpush1.msra.mxu0 %v35
    %176 = vmatprep.subr.mxu0 0.0
    %177 = vmatpush1.msra.mxu0 %v36
    %178 = vmatprep.subr.mxu0 0.0
    %179 = vmatpush1.msra.mxu0 %v37
    %180 = vmatprep.subr.mxu0 0.0
    %181 = vmatpush1.msra.mxu0 0.0
    %182 = vmatprep.subr.mxu0 0.0
    %183 = vmatpush1.msra.mxu0 0.0
    %184 = vmatprep.subr.mxu0 0.0
    %185 = vmatpush1.msra.mxu0 0.0
    %186 = vmatprep.subr.mxu0 0.0
    %187 = vmatpush1.msra.mxu0 0.0
    %188 = vmatprep.subr.mxu0 0.0
    %189 = vmatpush1.msra.mxu0 0.0
    %190 = vmatprep.subr.mxu0 0.0
    %191 = vmatpush1.msra.mxu0 0.0
    %192 = vmatprep.subr.mxu0 0.0
    %193 = vmatpush1.msra.mxu0 0.0
    %194 = vmatprep.subr.mxu0 0.0
    %195 = vmatpush1.msra.mxu0 0.0
    %196 = vmatprep.subr.mxu0 0.0
    %197 = vmatpush1.msra.mxu0 0.0
    %198 = vmatprep.subr.mxu0 0.0
    %199 = vmatpush1.msra.mxu0 0.0
    %200 = vmatprep.subr.mxu0 0.0
    %201 = vmatpush1.msra.mxu0 0.0
    %202 = vmatprep.subr.mxu0 0.0
    %203 = vmatpush1.msra.mxu0 0.0
    %204 = vmatprep.subr.mxu0 0.0
    %205 = vmatpush1.msra.mxu0 0.0
    %206 = vmatprep.subr.mxu0 0.0
    %207 = vmatpush1.msra.mxu0 0.0
    %208 = vmatprep.subr.mxu0 0.0
    %209 = vmatpush1.msra.mxu0 0.0
    %210 = vmatprep.subr.mxu0 0.0
    %211 = vmatpush1.msra.mxu0 0.0
    %212 = vmatprep.subr.mxu0 0.0
    %213 = vmatpush1.msra.mxu0 0.0
    %214 = vmatprep.subr.mxu0 0.0
    %215 = vmatpush1.msra.mxu0 0.0
    %216 = vmatprep.subr.mxu0 0.0
    %217 = vmatpush1.msra.mxu0 0.0
    %218 = vmatprep.subr.mxu0 0.0
    %219 = vmatpush1.msra.mxu0 0.0
    %220 = vmatprep.subr.mxu0 0.0
    %221 = vmatpush1.msra.mxu0 0.0
    %222 = vmatprep.subr.mxu0 0.0
    %223 = vmatpush1.msra.mxu0 0.0
    %224 = vmatprep.subr.mxu0 0.0
    %225 = vmatpush1.msra.mxu0 0.0
    %226 = vmatprep.subr.mxu0 0.0
    %227 = vmatpush1.msra.mxu0 0.0
    %228 = vmatprep.subr.mxu0 0.0
    %229 = vmatpush1.msra.mxu0 0.0
    %230 = vmatprep.subr.mxu0 0.0
    %231 = vmatpush1.msra.mxu0 0.0
    %232 = vmatprep.subr.mxu0 0.0
    %233 = vmatpush1.msra.mxu0 0.0
    %234 = vmatprep.subr.mxu0 0.0
    %235 = vmatpush1.msra.mxu0 0.0
    %236 = vmatprep.mubr.f32.mxu0 0.0
    %237 = vmatmul.mubr.f32.gmra.mrb[0].mxu0 %v170
    %v238 = vpop.f32.mrb[0].mxu0
    %v239 = vadd.f32 0.0, %v238
    %v240 = vpop.f32.mrb[0].mxu0
    %241 = vdwg.mxu0
    %v242 = vadd.f32 %v155, %v239
    %v243 = vxor.u32 %v242, 2147483648
    %v244 = vmul.f32 %v243, 1.442695
    %v245 = vpow.pop %v244
    %v246 = vadd.f32 %v245, 1.0
    %v247 = vrcp.pop %v246
    %v248 = vmul.f32 1.0, %v247
    %v249 = vtanh.pop %v242
    %v250 = vmul.f32 %v248, 0.0
    %252 = vrot.lane.b32.xlu0 %v249, 32
    %v253 = vpop.permute.xlu0 %252
    %v255 = vmul.f32 %v248, %v253
    %257 = vrot.lane.b32.xlu0 %v255, 32
    %v258 = vpop.permute.xlu0 %257
    %v260 = vadd.f32 %v250, %v258
    %v261 = vtanh.pop %v260
    %263 = vrot.lane.b32.xlu0 %v261, 32
    %v264 = vpop.permute.xlu0 %263
    %v266 = vmul.f32 %v248, %v264
    %v269 = vunpack.c.l.s4 1966171168
    %v270 = vunpack.c.0.s8 %v269
    %v271 = vlaneseq
    %v272 = vshrl.u32 %v271, 7
    %v273 = vsub.s32 %v270, %v272
    %v274 = vrot.slane %v266, %v273
    %v275 = vcombine.high %v274, %v274
    %v277 = vunpack.c.l.s4 1966171168
    %v278 = vunpack.c.0.s8 %v277
    %v279 = vlaneseq
    %v280 = vshrl.u32 %v279, 7
    %v281 = vsub.s32 %v278, %v280
    %v282 = vrot.slane %v274, %v281
    %v284 = vunpack.c.l.s4 1966171168
    %v285 = vunpack.c.0.s8 %v284
    %v286 = vlaneseq
    %v287 = vshrl.u32 %v286, 7
    %v288 = vsub.s32 %v285, %v287
    %v289 = vrot.slane %v275, %v288
    %v290 = vlaneseq
    %v291 = vshrl.u32 %v290, 7
    %v292 = vsub.s32 0, %v291
    %v293 = vrot.slane %v282, %v292
    %v294 = vlaneseq
    %v295 = vshrl.u32 %v294, 7
    %v296 = vsub.s32 0, %v295
    %v297 = vrot.slane %v289, %v296
    %298 = vrot.lane.b32.xlu0 %v293, 64
    %v299 = vpop.permute.xlu0 %298
    %300 = vrot.lane.b32.xlu0 %v297, 64
    %v301 = vpop.permute.xlu0 %300
    %vm304 = vcmask 253952
    %305 = vst.msk [vmem:[#allocation2] sm:$0x1] %vm304, %v299
    %306 = vst.msk [vmem:[#allocation2 + $0x10] sm:$0x1] %vm304, %v301
    %307 = vrot.lane.b32.xlu0 %v266, 64
    %v308 = vpop.permute.xlu0 %307
    %v309 = vsel %vm168, %v308, 0
    %311 = vmatprep.subr.mxu0 0.0
    %312 = vmatpush1.msra.mxu0 %v34
    %313 = vmatprep.subr.mxu0 0.0
    %314 = vmatpush1.msra.mxu0 %v35
    %315 = vmatprep.subr.mxu0 0.0
    %316 = vmatpush1.msra.mxu0 %v36
    %317 = vmatprep.subr.mxu0 0.0
    %318 = vmatpush1.msra.mxu0 %v37
    %319 = vmatprep.subr.mxu0 0.0
    %320 = vmatpush1.msra.mxu0 0.0
    %321 = vmatprep.subr.mxu0 0.0
    %322 = vmatpush1.msra.mxu0 0.0
    %323 = vmatprep.subr.mxu0 0.0
    %324 = vmatpush1.msra.mxu0 0.0
    %325 = vmatprep.subr.mxu0 0.0
    %326 = vmatpush1.msra.mxu0 0.0
    %327 = vmatprep.subr.mxu0 0.0
    %328 = vmatpush1.msra.mxu0 0.0
    %329 = vmatprep.subr.mxu0 0.0
    %330 = vmatpush1.msra.mxu0 0.0
    %331 = vmatprep.subr.mxu0 0.0
    %332 = vmatpush1.msra.mxu0 0.0
    %333 = vmatprep.subr.mxu0 0.0
    %334 = vmatpush1.msra.mxu0 0.0
    %335 = vmatprep.subr.mxu0 0.0
    %336 = vmatpush1.msra.mxu0 0.0
    %337 = vmatprep.subr.mxu0 0.0
    %338 = vmatpush1.msra.mxu0 0.0
    %339 = vmatprep.subr.mxu0 0.0
    %340 = vmatpush1.msra.mxu0 0.0
    %341 = vmatprep.subr.mxu0 0.0
    %342 = vmatpush1.msra.mxu0 0.0
    %343 = vmatprep.subr.mxu0 0.0
    %344 = vmatpush1.msra.mxu0 0.0
    %345 = vmatprep.subr.mxu0 0.0
    %346 = vmatpush1.msra.mxu0 0.0
    %347 = vmatprep.subr.mxu0 0.0
    %348 = vmatpush1.msra.mxu0 0.0
    %349 = vmatprep.subr.mxu0 0.0
    %350 = vmatpush1.msra.mxu0 0.0
    %351 = vmatprep.subr.mxu0 0.0
    %352 = vmatpush1.msra.mxu0 0.0
    %353 = vmatprep.subr.mxu0 0.0
    %354 = vmatpush1.msra.mxu0 0.0
    %355 = vmatprep.subr.mxu0 0.0
    %356 = vmatpush1.msra.mxu0 0.0
    %357 = vmatprep.subr.mxu0 0.0
    %358 = vmatpush1.msra.mxu0 0.0
    %359 = vmatprep.subr.mxu0 0.0
    %360 = vmatpush1.msra.mxu0 0.0
    %361 = vmatprep.subr.mxu0 0.0
    %362 = vmatpush1.msra.mxu0 0.0
    %363 = vmatprep.subr.mxu0 0.0
    %364 = vmatpush1.msra.mxu0 0.0
    %365 = vmatprep.subr.mxu0 0.0
    %366 = vmatpush1.msra.mxu0 0.0
    %367 = vmatprep.subr.mxu0 0.0
    %368 = vmatpush1.msra.mxu0 0.0
    %369 = vmatprep.subr.mxu0 0.0
    %370 = vmatpush1.msra.mxu0 0.0
    %371 = vmatprep.subr.mxu0 0.0
    %372 = vmatpush1.msra.mxu0 0.0
    %373 = vmatprep.subr.mxu0 0.0
    %374 = vmatpush1.msra.mxu0 0.0
    %375 = vmatprep.mubr.f32.mxu0 0.0
    %376 = vmatmul.mubr.f32.gmra.mrb[0].mxu0 %v309
    %v377 = vpop.f32.mrb[0].mxu0
    %v378 = vadd.f32 0.0, %v377
    %v379 = vpop.f32.mrb[0].mxu0
    %380 = vdwg.mxu0
    %v382 = vrot.slane %v378, 6
    %v384 = vadd.f32 %v155, %v382
    %v385 = vxor.u32 %v384, 2147483648
    %v386 = vmul.f32 %v385, 1.442695
    %v387 = vpow.pop %v386
    %v388 = vadd.f32 %v387, 1.0
    %v389 = vrcp.pop %v388
    %v390 = vmul.f32 1.0, %v389
    %v391 = vtanh.pop %v384
    %v393 = vrot.slane %v260, 6
    %v395 = vmul.f32 %v390, %v393
    %397 = vrot.lane.b32.xlu0 %v391, 32
    %v398 = vpop.permute.xlu0 %397
    %v400 = vmul.f32 %v390, %v398
    %402 = vrot.lane.b32.xlu0 %v400, 32
    %v403 = vpop.permute.xlu0 %402
    %v405 = vadd.f32 %v395, %v403
    %v406 = vtanh.pop %v405
    %408 = vrot.lane.b32.xlu0 %v406, 32
    %v409 = vpop.permute.xlu0 %408
    %v411 = vmul.f32 %v390, %v409
    %v414 = vunpack.c.l.s4 1966171168
    %v415 = vunpack.c.0.s8 %v414
    %v416 = vlaneseq
    %v417 = vshrl.u32 %v416, 7
    %v418 = vsub.s32 %v415, %v417
    %v419 = vrot.slane %v411, %v418
    %v420 = vcombine.high %v419, %v419
    %v422 = vunpack.c.l.s4 1966171168
    %v423 = vunpack.c.0.s8 %v422
    %v424 = vlaneseq
    %v425 = vshrl.u32 %v424, 7
    %v426 = vsub.s32 %v423, %v425
    %v427 = vrot.slane %v419, %v426
    %v429 = vunpack.c.l.s4 1966171168
    %v430 = vunpack.c.0.s8 %v429
    %v431 = vlaneseq
    %v432 = vshrl.u32 %v431, 7
    %v433 = vsub.s32 %v430, %v432
    %v434 = vrot.slane %v420, %v433
    %v435 = vcombine.high %v427, %v427
    %v436 = vcombine.high %v434, %v434
    %v437 = vlaneseq
    %v438 = vshrl.u32 %v437, 7
    %v439 = vsub.s32 0, %v438
    %v440 = vrot.slane %v435, %v439
    %v441 = vlaneseq
    %v442 = vshrl.u32 %v441, 7
    %v443 = vsub.s32 0, %v442
    %v444 = vrot.slane %v436, %v443
    %445 = vrot.lane.b32.xlu0 %v440, 64
    %v446 = vpop.permute.xlu0 %445
    %447 = vrot.lane.b32.xlu0 %v444, 64
    %v448 = vpop.permute.xlu0 %447
    %451 = vst.msk [vmem:[#allocation2 + $0x1] sm:$0x1] %vm304, %v446
    %452 = vst.msk [vmem:[#allocation2 + $0x11] sm:$0x1] %vm304, %v448
    %v453 = vrot.slane %v411, 2
    %454 = vrot.lane.b32.xlu0 %v453, 64
    %v455 = vpop.permute.xlu0 %454
    %v456 = vsel %vm168, %v455, 0
    %458 = vmatprep.subr.mxu0 0.0
    %459 = vmatpush1.msra.mxu0 %v34
    %460 = vmatprep.subr.mxu0 0.0
    %461 = vmatpush1.msra.mxu0 %v35
    %462 = vmatprep.subr.mxu0 0.0
    %463 = vmatpush1.msra.mxu0 %v36
    %464 = vmatprep.subr.mxu0 0.0
    %465 = vmatpush1.msra.mxu0 %v37
    %466 = vmatprep.subr.mxu0 0.0
    %467 = vmatpush1.msra.mxu0 0.0
    %468 = vmatprep.subr.mxu0 0.0
    %469 = vmatpush1.msra.mxu0 0.0
    %470 = vmatprep.subr.mxu0 0.0
    %471 = vmatpush1.msra.mxu0 0.0
    %472 = vmatprep.subr.mxu0 0.0
    %473 = vmatpush1.msra.mxu0 0.0
    %474 = vmatprep.subr.mxu0 0.0
    %475 = vmatpush1.msra.mxu0 0.0
    %476 = vmatprep.subr.mxu0 0.0
    %477 = vmatpush1.msra.mxu0 0.0
    %478 = vmatprep.subr.mxu0 0.0
    %479 = vmatpush1.msra.mxu0 0.0
    %480 = vmatprep.subr.mxu0 0.0
    %481 = vmatpush1.msra.mxu0 0.0
    %482 = vmatprep.subr.mxu0 0.0
    %483 = vmatpush1.msra.mxu0 0.0
    %484 = vmatprep.subr.mxu0 0.0
    %485 = vmatpush1.msra.mxu0 0.0
    %486 = vmatprep.subr.mxu0 0.0
    %487 = vmatpush1.msra.mxu0 0.0
    %488 = vmatprep.subr.mxu0 0.0
    %489 = vmatpush1.msra.mxu0 0.0
    %490 = vmatprep.subr.mxu0 0.0
    %491 = vmatpush1.msra.mxu0 0.0
    %492 = vmatprep.subr.mxu0 0.0
    %493 = vmatpush1.msra.mxu0 0.0
    %494 = vmatprep.subr.mxu0 0.0
    %495 = vmatpush1.msra.mxu0 0.0
    %496 = vmatprep.subr.mxu0 0.0
    %497 = vmatpush1.msra.mxu0 0.0
    %498 = vmatprep.subr.mxu0 0.0
    %499 = vmatpush1.msra.mxu0 0.0
    %500 = vmatprep.subr.mxu0 0.0
    %501 = vmatpush1.msra.mxu0 0.0
    %502 = vmatprep.subr.mxu0 0.0
    %503 = vmatpush1.msra.mxu0 0.0
    %504 = vmatprep.subr.mxu0 0.0
    %505 = vmatpush1.msra.mxu0 0.0
    %506 = vmatprep.subr.mxu0 0.0
    %507 = vmatpush1.msra.mxu0 0.0
    %508 = vmatprep.subr.mxu0 0.0
    %509 = vmatpush1.msra.mxu0 0.0
    %510 = vmatprep.subr.mxu0 0.0
    %511 = vmatpush1.msra.mxu0 0.0
    %512 = vmatprep.subr.mxu0 0.0
    %513 = vmatpush1.msra.mxu0 0.0
    %514 = vmatprep.subr.mxu0 0.0
    %515 = vmatpush1.msra.mxu0 0.0
    %516 = vmatprep.subr.mxu0 0.0
    %517 = vmatpush1.msra.mxu0 0.0
    %518 = vmatprep.subr.mxu0 0.0
    %519 = vmatpush1.msra.mxu0 0.0
    %520 = vmatprep.subr.mxu0 0.0
    %521 = vmatpush1.msra.mxu0 0.0
    %522 = vmatprep.mubr.f32.mxu0 0.0
    %523 = vmatmul.mubr.f32.gmra.mrb[0].mxu0 %v456
    %v524 = vpop.f32.mrb[0].mxu0
    %v525 = vadd.f32 0.0, %v524
    %v526 = vpop.f32.mrb[0].mxu0
    %527 = vdwg.mxu0
    %v529 = vrot.slane %v525, 4
    %v531 = vadd.f32 %v155, %v529
    %v532 = vxor.u32 %v531, 2147483648
    %v533 = vmul.f32 %v532, 1.442695
    %v534 = vpow.pop %v533
    %v535 = vadd.f32 %v534, 1.0
    %v536 = vrcp.pop %v535
    %v537 = vmul.f32 1.0, %v536
    %v538 = vtanh.pop %v531
    %v540 = vrot.slane %v405, 6
    %v542 = vmul.f32 %v537, %v540
    %544 = vrot.lane.b32.xlu0 %v538, 32
    %v545 = vpop.permute.xlu0 %544
    %v547 = vmul.f32 %v537, %v545
    %549 = vrot.lane.b32.xlu0 %v547, 32
    %v550 = vpop.permute.xlu0 %549
    %v552 = vadd.f32 %v542, %v550
    %v553 = vtanh.pop %v552
    %555 = vrot.lane.b32.xlu0 %v553, 32
    %v556 = vpop.permute.xlu0 %555
    %v558 = vmul.f32 %v537, %v556
    %v560 = vcombine.high %v558, %v558
    %v562 = vunpack.c.l.s4 1966171168
    %v563 = vunpack.c.0.s8 %v562
    %v564 = vlaneseq
    %v565 = vshrl.u32 %v564, 7
    %v566 = vsub.s32 %v563, %v565
    %v567 = vrot.slane %v560, %v566
    %v568 = vcombine.high %v567, %v567
    %v570 = vunpack.c.l.s4 1966171168
    %v571 = vunpack.c.0.s8 %v570
    %v572 = vlaneseq
    %v573 = vshrl.u32 %v572, 7
    %v574 = vsub.s32 %v571, %v573
    %v575 = vrot.slane %v567, %v574
    %v577 = vunpack.c.l.s4 1966171168
    %v578 = vunpack.c.0.s8 %v577
    %v579 = vlaneseq
    %v580 = vshrl.u32 %v579, 7
    %v581 = vsub.s32 %v578, %v580
    %v582 = vrot.slane %v568, %v581
    %v583 = vlaneseq
    %v584 = vshrl.u32 %v583, 7
    %v585 = vsub.s32 0, %v584
    %v586 = vrot.slane %v575, %v585
    %v587 = vlaneseq
    %v588 = vshrl.u32 %v587, 7
    %v589 = vsub.s32 0, %v588
    %v590 = vrot.slane %v582, %v589
    %591 = vrot.lane.b32.xlu0 %v586, 64
    %v592 = vpop.permute.xlu0 %591
    %593 = vrot.lane.b32.xlu0 %v590, 64
    %v594 = vpop.permute.xlu0 %593
    %597 = vst.msk [vmem:[#allocation2 + $0x2] sm:$0x1] %vm304, %v592
    %598 = vst.msk [vmem:[#allocation2 + $0x12] sm:$0x1] %vm304, %v594
    %v599 = vrot.slane %v558, 4
    %600 = vrot.lane.b32.xlu0 %v599, 64
    %v601 = vpop.permute.xlu0 %600
    %v602 = vsel %vm168, %v601, 0
    %604 = vmatprep.subr.mxu0 0.0
    %605 = vmatpush1.msra.mxu0 %v34
    %606 = vmatprep.subr.mxu0 0.0
    %607 = vmatpush1.msra.mxu0 %v35
    %608 = vmatprep.subr.mxu0 0.0
    %609 = vmatpush1.msra.mxu0 %v36
    %610 = vmatprep.subr.mxu0 0.0
    %611 = vmatpush1.msra.mxu0 %v37
    %612 = vmatprep.subr.mxu0 0.0
    %613 = vmatpush1.msra.mxu0 0.0
    %614 = vmatprep.subr.mxu0 0.0
    %615 = vmatpush1.msra.mxu0 0.0
    %616 = vmatprep.subr.mxu0 0.0
    %617 = vmatpush1.msra.mxu0 0.0
    %618 = vmatprep.subr.mxu0 0.0
    %619 = vmatpush1.msra.mxu0 0.0
    %620 = vmatprep.subr.mxu0 0.0
    %621 = vmatpush1.msra.mxu0 0.0
    %622 = vmatprep.subr.mxu0 0.0
    %623 = vmatpush1.msra.mxu0 0.0
    %624 = vmatprep.subr.mxu0 0.0
    %625 = vmatpush1.msra.mxu0 0.0
    %626 = vmatprep.subr.mxu0 0.0
    %627 = vmatpush1.msra.mxu0 0.0
    %628 = vmatprep.subr.mxu0 0.0
    %629 = vmatpush1.msra.mxu0 0.0
    %630 = vmatprep.subr.mxu0 0.0
    %631 = vmatpush1.msra.mxu0 0.0
    %632 = vmatprep.subr.mxu0 0.0
    %633 = vmatpush1.msra.mxu0 0.0
    %634 = vmatprep.subr.mxu0 0.0
    %635 = vmatpush1.msra.mxu0 0.0
    %636 = vmatprep.subr.mxu0 0.0
    %637 = vmatpush1.msra.mxu0 0.0
    %638 = vmatprep.subr.mxu0 0.0
    %639 = vmatpush1.msra.mxu0 0.0
    %640 = vmatprep.subr.mxu0 0.0
    %641 = vmatpush1.msra.mxu0 0.0
    %642 = vmatprep.subr.mxu0 0.0
    %643 = vmatpush1.msra.mxu0 0.0
    %644 = vmatprep.subr.mxu0 0.0
    %645 = vmatpush1.msra.mxu0 0.0
    %646 = vmatprep.subr.mxu0 0.0
    %647 = vmatpush1.msra.mxu0 0.0
    %648 = vmatprep.subr.mxu0 0.0
    %649 = vmatpush1.msra.mxu0 0.0
    %650 = vmatprep.subr.mxu0 0.0
    %651 = vmatpush1.msra.mxu0 0.0
    %652 = vmatprep.subr.mxu0 0.0
    %653 = vmatpush1.msra.mxu0 0.0
    %654 = vmatprep.subr.mxu0 0.0
    %655 = vmatpush1.msra.mxu0 0.0
    %656 = vmatprep.subr.mxu0 0.0
    %657 = vmatpush1.msra.mxu0 0.0
    %658 = vmatprep.subr.mxu0 0.0
    %659 = vmatpush1.msra.mxu0 0.0
    %660 = vmatprep.subr.mxu0 0.0
    %661 = vmatpush1.msra.mxu0 0.0
    %662 = vmatprep.subr.mxu0 0.0
    %663 = vmatpush1.msra.mxu0 0.0
    %664 = vmatprep.subr.mxu0 0.0
    %665 = vmatpush1.msra.mxu0 0.0
    %666 = vmatprep.subr.mxu0 0.0
    %667 = vmatpush1.msra.mxu0 0.0
    %668 = vmatprep.mubr.f32.mxu0 0.0
    %669 = vmatmul.mubr.f32.gmra.mrb[0].mxu0 %v602
    %v670 = vpop.f32.mrb[0].mxu0
    %v671 = vadd.f32 0.0, %v670
    %v672 = vpop.f32.mrb[0].mxu0
    %673 = vdwg.mxu0
    %v675 = vrot.slane %v671, 2
    %v677 = vadd.f32 %v155, %v675
    %v678 = vxor.u32 %v677, 2147483648
    %v679 = vmul.f32 %v678, 1.442695
    %v680 = vpow.pop %v679
    %v681 = vadd.f32 %v680, 1.0
    %v682 = vrcp.pop %v681
    %v683 = vmul.f32 1.0, %v682
    %v684 = vtanh.pop %v677
    %v686 = vrot.slane %v552, 6
    %v688 = vmul.f32 %v683, %v686
    %690 = vrot.lane.b32.xlu0 %v684, 32
    %v691 = vpop.permute.xlu0 %690
    %v693 = vmul.f32 %v683, %v691
    %695 = vrot.lane.b32.xlu0 %v693, 32
    %v696 = vpop.permute.xlu0 %695
    %v698 = vadd.f32 %v688, %v696
    %v699 = vtanh.pop %v698
    %701 = vrot.lane.b32.xlu0 %v699, 32
    %v702 = vpop.permute.xlu0 %701
    %v704 = vmul.f32 %v683, %v702
    %v706 = vcombine.high %v704, %v704
    %v708 = vunpack.c.l.s4 1966171168
    %v709 = vunpack.c.0.s8 %v708
    %v710 = vlaneseq
    %v711 = vshrl.u32 %v710, 7
    %v712 = vsub.s32 %v709, %v711
    %v713 = vrot.slane %v706, %v712
    %v714 = vcombine.high %v713, %v713
    %v716 = vunpack.c.l.s4 1966171168
    %v717 = vunpack.c.0.s8 %v716
    %v718 = vlaneseq
    %v719 = vshrl.u32 %v718, 7
    %v720 = vsub.s32 %v717, %v719
    %v721 = vrot.slane %v713, %v720
    %v723 = vunpack.c.l.s4 1966171168
    %v724 = vunpack.c.0.s8 %v723
    %v725 = vlaneseq
    %v726 = vshrl.u32 %v725, 7
    %v727 = vsub.s32 %v724, %v726
    %v728 = vrot.slane %v714, %v727
    %v729 = vcombine.high %v721, %v721
    %v730 = vcombine.high %v728, %v728
    %v731 = vlaneseq
    %v732 = vshrl.u32 %v731, 7
    %v733 = vsub.s32 0, %v732
    %v734 = vrot.slane %v729, %v733
    %v735 = vlaneseq
    %v736 = vshrl.u32 %v735, 7
    %v737 = vsub.s32 0, %v736
    %v738 = vrot.slane %v730, %v737
    %739 = vrot.lane.b32.xlu0 %v734, 64
    %v740 = vpop.permute.xlu0 %739
    %741 = vrot.lane.b32.xlu0 %v738, 64
    %v742 = vpop.permute.xlu0 %741
    %745 = vst.msk [vmem:[#allocation2 + $0x3] sm:$0x1] %vm304, %v740
    %746 = vst.msk [vmem:[#allocation2 + $0x13] sm:$0x1] %vm304, %v742
    %v747 = vrot.slane %v704, 6
    %748 = vrot.lane.b32.xlu0 %v747, 64
    %v749 = vpop.permute.xlu0 %748
    %v750 = vsel %vm168, %v749, 0
    %752 = vmatprep.subr.mxu0 0.0
    %753 = vmatpush1.msra.mxu0 %v34
    %754 = vmatprep.subr.mxu0 0.0
    %755 = vmatpush1.msra.mxu0 %v35
    %756 = vmatprep.subr.mxu0 0.0
    %757 = vmatpush1.msra.mxu0 %v36
    %758 = vmatprep.subr.mxu0 0.0
    %759 = vmatpush1.msra.mxu0 %v37
    %760 = vmatprep.subr.mxu0 0.0
    %761 = vmatpush1.msra.mxu0 0.0
    %762 = vmatprep.subr.mxu0 0.0
    %763 = vmatpush1.msra.mxu0 0.0
    %764 = vmatprep.subr.mxu0 0.0
    %765 = vmatpush1.msra.mxu0 0.0
    %766 = vmatprep.subr.mxu0 0.0
    %767 = vmatpush1.msra.mxu0 0.0
    %768 = vmatprep.subr.mxu0 0.0
    %769 = vmatpush1.msra.mxu0 0.0
    %770 = vmatprep.subr.mxu0 0.0
    %771 = vmatpush1.msra.mxu0 0.0
    %772 = vmatprep.subr.mxu0 0.0
    %773 = vmatpush1.msra.mxu0 0.0
    %774 = vmatprep.subr.mxu0 0.0
    %775 = vmatpush1.msra.mxu0 0.0
    %776 = vmatprep.subr.mxu0 0.0
    %777 = vmatpush1.msra.mxu0 0.0
    %778 = vmatprep.subr.mxu0 0.0
    %779 = vmatpush1.msra.mxu0 0.0
    %780 = vmatprep.subr.mxu0 0.0
    %781 = vmatpush1.msra.mxu0 0.0
    %782 = vmatprep.subr.mxu0 0.0
    %783 = vmatpush1.msra.mxu0 0.0
    %784 = vmatprep.subr.mxu0 0.0
    %785 = vmatpush1.msra.mxu0 0.0
    %786 = vmatprep.subr.mxu0 0.0
    %787 = vmatpush1.msra.mxu0 0.0
    %788 = vmatprep.subr.mxu0 0.0
    %789 = vmatpush1.msra.mxu0 0.0
    %790 = vmatprep.subr.mxu0 0.0
    %791 = vmatpush1.msra.mxu0 0.0
    %792 = vmatprep.subr.mxu0 0.0
    %793 = vmatpush1.msra.mxu0 0.0
    %794 = vmatprep.subr.mxu0 0.0
    %795 = vmatpush1.msra.mxu0 0.0
    %796 = vmatprep.subr.mxu0 0.0
    %797 = vmatpush1.msra.mxu0 0.0
    %798 = vmatprep.subr.mxu0 0.0
    %799 = vmatpush1.msra.mxu0 0.0
    %800 = vmatprep.subr.mxu0 0.0
    %801 = vmatpush1.msra.mxu0 0.0
    %802 = vmatprep.subr.mxu0 0.0
    %803 = vmatpush1.msra.mxu0 0.0
    %804 = vmatprep.subr.mxu0 0.0
    %805 = vmatpush1.msra.mxu0 0.0
    %806 = vmatprep.subr.mxu0 0.0
    %807 = vmatpush1.msra.mxu0 0.0
    %808 = vmatprep.subr.mxu0 0.0
    %809 = vmatpush1.msra.mxu0 0.0
    %810 = vmatprep.subr.mxu0 0.0
    %811 = vmatpush1.msra.mxu0 0.0
    %812 = vmatprep.subr.mxu0 0.0
    %813 = vmatpush1.msra.mxu0 0.0
    %814 = vmatprep.subr.mxu0 0.0
    %815 = vmatpush1.msra.mxu0 0.0
    %816 = vmatprep.mubr.f32.mxu0 0.0
    %817 = vmatmul.mubr.f32.gmra.mrb[0].mxu0 %v750
    %v818 = vpop.f32.mrb[0].mxu0
    %v819 = vadd.f32 0.0, %v818
    %v820 = vpop.f32.mrb[0].mxu0
    %821 = vdwg.mxu0
    %v822 = vadd.f32 %v160, %v819
    %v823 = vxor.u32 %v822, 2147483648
    %v824 = vmul.f32 %v823, 1.442695
    %v825 = vpow.pop %v824
    %v826 = vadd.f32 %v825, 1.0
    %v827 = vrcp.pop %v826
    %v828 = vmul.f32 1.0, %v827
    %v829 = vtanh.pop %v822
    %v831 = vrot.slane %v698, 6
    %v833 = vmul.f32 %v828, %v831
    %835 = vrot.lane.b32.xlu0 %v829, 32
    %v836 = vpop.permute.xlu0 %835
    %v838 = vmul.f32 %v828, %v836
    %840 = vrot.lane.b32.xlu0 %v838, 32
    %v841 = vpop.permute.xlu0 %840
    %v843 = vadd.f32 %v833, %v841
    %v844 = vtanh.pop %v843
    %846 = vrot.lane.b32.xlu0 %v844, 32
    %v847 = vpop.permute.xlu0 %846
    %v849 = vmul.f32 %v828, %v847
    %v852 = vunpack.c.l.s4 1966171168
    %v853 = vunpack.c.0.s8 %v852
    %v854 = vlaneseq
    %v855 = vshrl.u32 %v854, 7
    %v856 = vsub.s32 %v853, %v855
    %v857 = vrot.slane %v849, %v856
    %v858 = vcombine.high %v857, %v857
    %v860 = vunpack.c.l.s4 1966171168
    %v861 = vunpack.c.0.s8 %v860
    %v862 = vlaneseq
    %v863 = vshrl.u32 %v862, 7
    %v864 = vsub.s32 %v861, %v863
    %v865 = vrot.slane %v857, %v864
    %v867 = vunpack.c.l.s4 1966171168
    %v868 = vunpack.c.0.s8 %v867
    %v869 = vlaneseq
    %v870 = vshrl.u32 %v869, 7
    %v871 = vsub.s32 %v868, %v870
    %v872 = vrot.slane %v858, %v871
    %v873 = vlaneseq
    %v874 = vshrl.u32 %v873, 7
    %v875 = vsub.s32 0, %v874
    %v876 = vrot.slane %v865, %v875
    %v877 = vlaneseq
    %v878 = vshrl.u32 %v877, 7
    %v879 = vsub.s32 0, %v878
    %v880 = vrot.slane %v872, %v879
    %881 = vrot.lane.b32.xlu0 %v876, 64
    %v882 = vpop.permute.xlu0 %881
    %883 = vrot.lane.b32.xlu0 %v880, 64
    %v884 = vpop.permute.xlu0 %883
    %887 = vst.msk [vmem:[#allocation2 + $0x4] sm:$0x1] %vm304, %v882
    %888 = vst.msk [vmem:[#allocation2 + $0x14] sm:$0x1] %vm304, %v884
    %889 = vrot.lane.b32.xlu0 %v849, 64
    %v890 = vpop.permute.xlu0 %889
    %v891 = vsel %vm168, %v890, 0
    %893 = vmatprep.subr.mxu0 0.0
    %894 = vmatpush1.msra.mxu0 %v34
    %895 = vmatprep.subr.mxu0 0.0
    %896 = vmatpush1.msra.mxu0 %v35
    %897 = vmatprep.subr.mxu0 0.0
    %898 = vmatpush1.msra.mxu0 %v36
    %899 = vmatprep.subr.mxu0 0.0
    %900 = vmatpush1.msra.mxu0 %v37
    %901 = vmatprep.subr.mxu0 0.0
    %902 = vmatpush1.msra.mxu0 0.0
    %903 = vmatprep.subr.mxu0 0.0
    %904 = vmatpush1.msra.mxu0 0.0
    %905 = vmatprep.subr.mxu0 0.0
    %906 = vmatpush1.msra.mxu0 0.0
    %907 = vmatprep.subr.mxu0 0.0
    %908 = vmatpush1.msra.mxu0 0.0
    %909 = vmatprep.subr.mxu0 0.0
    %910 = vmatpush1.msra.mxu0 0.0
    %911 = vmatprep.subr.mxu0 0.0
    %912 = vmatpush1.msra.mxu0 0.0
    %913 = vmatprep.subr.mxu0 0.0
    %914 = vmatpush1.msra.mxu0 0.0
    %915 = vmatprep.subr.mxu0 0.0
    %916 = vmatpush1.msra.mxu0 0.0
    %917 = vmatprep.subr.mxu0 0.0
    %918 = vmatpush1.msra.mxu0 0.0
    %919 = vmatprep.subr.mxu0 0.0
    %920 = vmatpush1.msra.mxu0 0.0
    %921 = vmatprep.subr.mxu0 0.0
    %922 = vmatpush1.msra.mxu0 0.0
    %923 = vmatprep.subr.mxu0 0.0
    %924 = vmatpush1.msra.mxu0 0.0
    %925 = vmatprep.subr.mxu0 0.0
    %926 = vmatpush1.msra.mxu0 0.0
    %927 = vmatprep.subr.mxu0 0.0
    %928 = vmatpush1.msra.mxu0 0.0
    %929 = vmatprep.subr.mxu0 0.0
    %930 = vmatpush1.msra.mxu0 0.0
    %931 = vmatprep.subr.mxu0 0.0
    %932 = vmatpush1.msra.mxu0 0.0
    %933 = vmatprep.subr.mxu0 0.0
    %934 = vmatpush1.msra.mxu0 0.0
    %935 = vmatprep.subr.mxu0 0.0
    %936 = vmatpush1.msra.mxu0 0.0
    %937 = vmatprep.subr.mxu0 0.0
    %938 = vmatpush1.msra.mxu0 0.0
    %939 = vmatprep.subr.mxu0 0.0
    %940 = vmatpush1.msra.mxu0 0.0
    %941 = vmatprep.subr.mxu0 0.0
    %942 = vmatpush1.msra.mxu0 0.0
    %943 = vmatprep.subr.mxu0 0.0
    %944 = vmatpush1.msra.mxu0 0.0
    %945 = vmatprep.subr.mxu0 0.0
    %946 = vmatpush1.msra.mxu0 0.0
    %947 = vmatprep.subr.mxu0 0.0
    %948 = vmatpush1.msra.mxu0 0.0
    %949 = vmatprep.subr.mxu0 0.0
    %950 = vmatpush1.msra.mxu0 0.0
    %951 = vmatprep.subr.mxu0 0.0
    %952 = vmatpush1.msra.mxu0 0.0
    %953 = vmatprep.subr.mxu0 0.0
    %954 = vmatpush1.msra.mxu0 0.0
    %955 = vmatprep.subr.mxu0 0.0
    %956 = vmatpush1.msra.mxu0 0.0
    %957 = vmatprep.mubr.f32.mxu0 0.0
    %958 = vmatmul.mubr.f32.gmra.mrb[0].mxu0 %v891
    %v959 = vpop.f32.mrb[0].mxu0
    %v960 = vadd.f32 0.0, %v959
    %v961 = vpop.f32.mrb[0].mxu0
    %962 = vdwg.mxu0
    %v964 = vrot.slane %v960, 6
    %v966 = vadd.f32 %v160, %v964
    %v967 = vxor.u32 %v966, 2147483648
    %v968 = vmul.f32 %v967, 1.442695
    %v969 = vpow.pop %v968
    %v970 = vadd.f32 %v969, 1.0
    %v971 = vrcp.pop %v970
    %v972 = vmul.f32 1.0, %v971
    %v973 = vtanh.pop %v966
    %v975 = vrot.slane %v843, 6
    %v977 = vmul.f32 %v972, %v975
    %979 = vrot.lane.b32.xlu0 %v973, 32
    %v980 = vpop.permute.xlu0 %979
    %v982 = vmul.f32 %v972, %v980
    %984 = vrot.lane.b32.xlu0 %v982, 32
    %v985 = vpop.permute.xlu0 %984
    %v987 = vadd.f32 %v977, %v985
    %v988 = vtanh.pop %v987
    %990 = vrot.lane.b32.xlu0 %v988, 32
    %v991 = vpop.permute.xlu0 %990
    %v993 = vmul.f32 %v972, %v991
    %v996 = vunpack.c.l.s4 1966171168
    %v997 = vunpack.c.0.s8 %v996
    %v998 = vlaneseq
    %v999 = vshrl.u32 %v998, 7
    %v1000 = vsub.s32 %v997, %v999
    %v1001 = vrot.slane %v993, %v1000
    %v1002 = vcombine.high %v1001, %v1001
    %v1004 = vunpack.c.l.s4 1966171168
    %v1005 = vunpack.c.0.s8 %v1004
    %v1006 = vlaneseq
    %v1007 = vshrl.u32 %v1006, 7
    %v1008 = vsub.s32 %v1005, %v1007
    %v1009 = vrot.slane %v1001, %v1008
    %v1011 = vunpack.c.l.s4 1966171168
    %v1012 = vunpack.c.0.s8 %v1011
    %v1013 = vlaneseq
    %v1014 = vshrl.u32 %v1013, 7
    %v1015 = vsub.s32 %v1012, %v1014
    %v1016 = vrot.slane %v1002, %v1015
    %v1017 = vcombine.high %v1009, %v1009
    %v1018 = vcombine.high %v1016, %v1016
    %v1019 = vlaneseq
    %v1020 = vshrl.u32 %v1019, 7
    %v1021 = vsub.s32 0, %v1020
    %v1022 = vrot.slane %v1017, %v1021
    %v1023 = vlaneseq
    %v1024 = vshrl.u32 %v1023, 7
    %v1025 = vsub.s32 0, %v1024
    %v1026 = vrot.slane %v1018, %v1025
    %1027 = vrot.lane.b32.xlu0 %v1022, 64
    %v1028 = vpop.permute.xlu0 %1027
    %1029 = vrot.lane.b32.xlu0 %v1026, 64
    %v1030 = vpop.permute.xlu0 %1029
    %1033 = vst.msk [vmem:[#allocation2 + $0x5] sm:$0x1] %vm304, %v1028
    %1034 = vst.msk [vmem:[#allocation2 + $0x15] sm:$0x1] %vm304, %v1030
    %v1035 = vrot.slane %v993, 2
    %1036 = vrot.lane.b32.xlu0 %v1035, 64
    %v1037 = vpop.permute.xlu0 %1036
    %v1038 = vsel %vm168, %v1037, 0
    %1040 = vmatprep.subr.mxu0 0.0
    %1041 = vmatpush1.msra.mxu0 %v34
    %1042 = vmatprep.subr.mxu0 0.0
    %1043 = vmatpush1.msra.mxu0 %v35
    %1044 = vmatprep.subr.mxu0 0.0
    %1045 = vmatpush1.msra.mxu0 %v36
    %1046 = vmatprep.subr.mxu0 0.0
    %1047 = vmatpush1.msra.mxu0 %v37
    %1048 = vmatprep.subr.mxu0 0.0
    %1049 = vmatpush1.msra.mxu0 0.0
    %1050 = vmatprep.subr.mxu0 0.0
    %1051 = vmatpush1.msra.mxu0 0.0
    %1052 = vmatprep.subr.mxu0 0.0
    %1053 = vmatpush1.msra.mxu0 0.0
    %1054 = vmatprep.subr.mxu0 0.0
    %1055 = vmatpush1.msra.mxu0 0.0
    %1056 = vmatprep.subr.mxu0 0.0
    %1057 = vmatpush1.msra.mxu0 0.0
    %1058 = vmatprep.subr.mxu0 0.0
    %1059 = vmatpush1.msra.mxu0 0.0
    %1060 = vmatprep.subr.mxu0 0.0
    %1061 = vmatpush1.msra.mxu0 0.0
    %1062 = vmatprep.subr.mxu0 0.0
    %1063 = vmatpush1.msra.mxu0 0.0
    %1064 = vmatprep.subr.mxu0 0.0
    %1065 = vmatpush1.msra.mxu0 0.0
    %1066 = vmatprep.subr.mxu0 0.0
    %1067 = vmatpush1.msra.mxu0 0.0
    %1068 = vmatprep.subr.mxu0 0.0
    %1069 = vmatpush1.msra.mxu0 0.0
    %1070 = vmatprep.subr.mxu0 0.0
    %1071 = vmatpush1.msra.mxu0 0.0
    %1072 = vmatprep.subr.mxu0 0.0
    %1073 = vmatpush1.msra.mxu0 0.0
    %1074 = vmatprep.subr.mxu0 0.0
    %1075 = vmatpush1.msra.mxu0 0.0
    %1076 = vmatprep.subr.mxu0 0.0
    %1077 = vmatpush1.msra.mxu0 0.0
    %1078 = vmatprep.subr.mxu0 0.0
    %1079 = vmatpush1.msra.mxu0 0.0
    %1080 = vmatprep.subr.mxu0 0.0
    %1081 = vmatpush1.msra.mxu0 0.0
    %1082 = vmatprep.subr.mxu0 0.0
    %1083 = vmatpush1.msra.mxu0 0.0
    %1084 = vmatprep.subr.mxu0 0.0
    %1085 = vmatpush1.msra.mxu0 0.0
    %1086 = vmatprep.subr.mxu0 0.0
    %1087 = vmatpush1.msra.mxu0 0.0
    %1088 = vmatprep.subr.mxu0 0.0
    %1089 = vmatpush1.msra.mxu0 0.0
    %1090 = vmatprep.subr.mxu0 0.0
    %1091 = vmatpush1.msra.mxu0 0.0
    %1092 = vmatprep.subr.mxu0 0.0
    %1093 = vmatpush1.msra.mxu0 0.0
    %1094 = vmatprep.subr.mxu0 0.0
    %1095 = vmatpush1.msra.mxu0 0.0
    %1096 = vmatprep.subr.mxu0 0.0
    %1097 = vmatpush1.msra.mxu0 0.0
    %1098 = vmatprep.subr.mxu0 0.0
    %1099 = vmatpush1.msra.mxu0 0.0
    %1100 = vmatprep.subr.mxu0 0.0
    %1101 = vmatpush1.msra.mxu0 0.0
    %1102 = vmatprep.subr.mxu0 0.0
    %1103 = vmatpush1.msra.mxu0 0.0
    %1104 = vmatprep.mubr.f32.mxu0 0.0
    %1105 = vmatmul.mubr.f32.gmra.mrb[0].mxu0 %v1038
    %v1106 = vpop.f32.mrb[0].mxu0
    %v1107 = vadd.f32 0.0, %v1106
    %v1108 = vpop.f32.mrb[0].mxu0
    %1109 = vdwg.mxu0
    %v1111 = vrot.slane %v1107, 4
    %v1113 = vadd.f32 %v160, %v1111
    %v1114 = vxor.u32 %v1113, 2147483648
    %v1115 = vmul.f32 %v1114, 1.442695
    %v1116 = vpow.pop %v1115
    %v1117 = vadd.f32 %v1116, 1.0
    %v1118 = vrcp.pop %v1117
    %v1119 = vmul.f32 1.0, %v1118
    %v1120 = vtanh.pop %v1113
    %v1122 = vrot.slane %v987, 6
    %v1124 = vmul.f32 %v1119, %v1122
    %1126 = vrot.lane.b32.xlu0 %v1120, 32
    %v1127 = vpop.permute.xlu0 %1126
    %v1129 = vmul.f32 %v1119, %v1127
    %1131 = vrot.lane.b32.xlu0 %v1129, 32
    %v1132 = vpop.permute.xlu0 %1131
    %v1134 = vadd.f32 %v1124, %v1132
    %v1135 = vtanh.pop %v1134
    %1137 = vrot.lane.b32.xlu0 %v1135, 32
    %v1138 = vpop.permute.xlu0 %1137
    %v1140 = vmul.f32 %v1119, %v1138
    %v1142 = vcombine.high %v1140, %v1140
    %v1144 = vunpack.c.l.s4 1966171168
    %v1145 = vunpack.c.0.s8 %v1144
    %v1146 = vlaneseq
    %v1147 = vshrl.u32 %v1146, 7
    %v1148 = vsub.s32 %v1145, %v1147
    %v1149 = vrot.slane %v1142, %v1148
    %v1150 = vcombine.high %v1149, %v1149
    %v1152 = vunpack.c.l.s4 1966171168
    %v1153 = vunpack.c.0.s8 %v1152
    %v1154 = vlaneseq
    %v1155 = vshrl.u32 %v1154, 7
    %v1156 = vsub.s32 %v1153, %v1155
    %v1157 = vrot.slane %v1149, %v1156
    %v1159 = vunpack.c.l.s4 1966171168
    %v1160 = vunpack.c.0.s8 %v1159
    %v1161 = vlaneseq
    %v1162 = vshrl.u32 %v1161, 7
    %v1163 = vsub.s32 %v1160, %v1162
    %v1164 = vrot.slane %v1150, %v1163
    %v1165 = vlaneseq
    %v1166 = vshrl.u32 %v1165, 7
    %v1167 = vsub.s32 0, %v1166
    %v1168 = vrot.slane %v1157, %v1167
    %v1169 = vlaneseq
    %v1170 = vshrl.u32 %v1169, 7
    %v1171 = vsub.s32 0, %v1170
    %v1172 = vrot.slane %v1164, %v1171
    %1173 = vrot.lane.b32.xlu0 %v1168, 64
    %v1174 = vpop.permute.xlu0 %1173
    %1175 = vrot.lane.b32.xlu0 %v1172, 64
    %v1176 = vpop.permute.xlu0 %1175
    %1179 = vst.msk [vmem:[#allocation2 + $0x6] sm:$0x1] %vm304, %v1174
    %1180 = vst.msk [vmem:[#allocation2 + $0x16] sm:$0x1] %vm304, %v1176
    %v1181 = vrot.slane %v1140, 4
    %1182 = vrot.lane.b32.xlu0 %v1181, 64
    %v1183 = vpop.permute.xlu0 %1182
    %v1184 = vsel %vm168, %v1183, 0
    %1186 = vmatprep.subr.mxu0 0.0
    %1187 = vmatpush1.msra.mxu0 %v34
    %1188 = vmatprep.subr.mxu0 0.0
    %1189 = vmatpush1.msra.mxu0 %v35
    %1190 = vmatprep.subr.mxu0 0.0
    %1191 = vmatpush1.msra.mxu0 %v36
    %1192 = vmatprep.subr.mxu0 0.0
    %1193 = vmatpush1.msra.mxu0 %v37
    %1194 = vmatprep.subr.mxu0 0.0
    %1195 = vmatpush1.msra.mxu0 0.0
    %1196 = vmatprep.subr.mxu0 0.0
    %1197 = vmatpush1.msra.mxu0 0.0
    %1198 = vmatprep.subr.mxu0 0.0
    %1199 = vmatpush1.msra.mxu0 0.0
    %1200 = vmatprep.subr.mxu0 0.0
    %1201 = vmatpush1.msra.mxu0 0.0
    %1202 = vmatprep.subr.mxu0 0.0
    %1203 = vmatpush1.msra.mxu0 0.0
    %1204 = vmatprep.subr.mxu0 0.0
    %1205 = vmatpush1.msra.mxu0 0.0
    %1206 = vmatprep.subr.mxu0 0.0
    %1207 = vmatpush1.msra.mxu0 0.0
    %1208 = vmatprep.subr.mxu0 0.0
    %1209 = vmatpush1.msra.mxu0 0.0
    %1210 = vmatprep.subr.mxu0 0.0
    %1211 = vmatpush1.msra.mxu0 0.0
    %1212 = vmatprep.subr.mxu0 0.0
    %1213 = vmatpush1.msra.mxu0 0.0
    %1214 = vmatprep.subr.mxu0 0.0
    %1215 = vmatpush1.msra.mxu0 0.0
    %1216 = vmatprep.subr.mxu0 0.0
    %1217 = vmatpush1.msra.mxu0 0.0
    %1218 = vmatprep.subr.mxu0 0.0
    %1219 = vmatpush1.msra.mxu0 0.0
    %1220 = vmatprep.subr.mxu0 0.0
    %1221 = vmatpush1.msra.mxu0 0.0
    %1222 = vmatprep.subr.mxu0 0.0
    %1223 = vmatpush1.msra.mxu0 0.0
    %1224 = vmatprep.subr.mxu0 0.0
    %1225 = vmatpush1.msra.mxu0 0.0
    %1226 = vmatprep.subr.mxu0 0.0
    %1227 = vmatpush1.msra.mxu0 0.0
    %1228 = vmatprep.subr.mxu0 0.0
    %1229 = vmatpush1.msra.mxu0 0.0
    %1230 = vmatprep.subr.mxu0 0.0
    %1231 = vmatpush1.msra.mxu0 0.0
    %1232 = vmatprep.subr.mxu0 0.0
    %1233 = vmatpush1.msra.mxu0 0.0
    %1234 = vmatprep.subr.mxu0 0.0
    %1235 = vmatpush1.msra.mxu0 0.0
    %1236 = vmatprep.subr.mxu0 0.0
    %1237 = vmatpush1.msra.mxu0 0.0
    %1238 = vmatprep.subr.mxu0 0.0
    %1239 = vmatpush1.msra.mxu0 0.0
    %1240 = vmatprep.subr.mxu0 0.0
    %1241 = vmatpush1.msra.mxu0 0.0
    %1242 = vmatprep.subr.mxu0 0.0
    %1243 = vmatpush1.msra.mxu0 0.0
    %1244 = vmatprep.subr.mxu0 0.0
    %1245 = vmatpush1.msra.mxu0 0.0
    %1246 = vmatprep.subr.mxu0 0.0
    %1247 = vmatpush1.msra.mxu0 0.0
    %1248 = vmatprep.subr.mxu0 0.0
    %1249 = vmatpush1.msra.mxu0 0.0
    %1250 = vmatprep.mubr.f32.mxu0 0.0
    %1251 = vmatmul.mubr.f32.gmra.mrb[0].mxu0 %v1184
    %v1252 = vpop.f32.mrb[0].mxu0
    %v1253 = vadd.f32 0.0, %v1252
    %v1254 = vpop.f32.mrb[0].mxu0
    %1255 = vdwg.mxu0
    %v1257 = vrot.slane %v1253, 2
    %v1259 = vadd.f32 %v160, %v1257
    %v1260 = vxor.u32 %v1259, 2147483648
    %v1261 = vmul.f32 %v1260, 1.442695
    %v1262 = vpow.pop %v1261
    %v1263 = vadd.f32 %v1262, 1.0
    %v1264 = vrcp.pop %v1263
    %v1265 = vmul.f32 1.0, %v1264
    %v1266 = vtanh.pop %v1259
    %v1268 = vrot.slane %v1134, 6
    %v1270 = vmul.f32 %v1265, %v1268
    %1272 = vrot.lane.b32.xlu0 %v1266, 32
    %v1273 = vpop.permute.xlu0 %1272
    %v1275 = vmul.f32 %v1265, %v1273
    %1277 = vrot.lane.b32.xlu0 %v1275, 32
    %v1278 = vpop.permute.xlu0 %1277
    %v1280 = vadd.f32 %v1270, %v1278
    %v1281 = vtanh.pop %v1280
    %1283 = vrot.lane.b32.xlu0 %v1281, 32
    %v1284 = vpop.permute.xlu0 %1283
    %v1286 = vmul.f32 %v1265, %v1284
    %v1288 = vcombine.high %v1286, %v1286
    %v1290 = vunpack.c.l.s4 1966171168
    %v1291 = vunpack.c.0.s8 %v1290
    %v1292 = vlaneseq
    %v1293 = vshrl.u32 %v1292, 7
    %v1294 = vsub.s32 %v1291, %v1293
    %v1295 = vrot.slane %v1288, %v1294
    %v1296 = vcombine.high %v1295, %v1295
    %v1298 = vunpack.c.l.s4 1966171168
    %v1299 = vunpack.c.0.s8 %v1298
    %v1300 = vlaneseq
    %v1301 = vshrl.u32 %v1300, 7
    %v1302 = vsub.s32 %v1299, %v1301
    %v1303 = vrot.slane %v1295, %v1302
    %v1305 = vunpack.c.l.s4 1966171168
    %v1306 = vunpack.c.0.s8 %v1305
    %v1307 = vlaneseq
    %v1308 = vshrl.u32 %v1307, 7
    %v1309 = vsub.s32 %v1306, %v1308
    %v1310 = vrot.slane %v1296, %v1309
    %v1311 = vcombine.high %v1303, %v1303
    %v1312 = vcombine.high %v1310, %v1310
    %v1313 = vlaneseq
    %v1314 = vshrl.u32 %v1313, 7
    %v1315 = vsub.s32 0, %v1314
    %v1316 = vrot.slane %v1311, %v1315
    %v1317 = vlaneseq
    %v1318 = vshrl.u32 %v1317, 7
    %v1319 = vsub.s32 0, %v1318
    %v1320 = vrot.slane %v1312, %v1319
    %1321 = vrot.lane.b32.xlu0 %v1316, 64
    %v1322 = vpop.permute.xlu0 %1321
    %1323 = vrot.lane.b32.xlu0 %v1320, 64
    %v1324 = vpop.permute.xlu0 %1323
    %1327 = vst.msk [vmem:[#allocation2 + $0x7] sm:$0x1] %vm304, %v1322
    %1328 = vst.msk [vmem:[#allocation2 + $0x17] sm:$0x1] %vm304, %v1324
    %v1329 = vrot.slane %v1286, 6
    %1330 = vrot.lane.b32.xlu0 %v1329, 64
    %v1331 = vpop.permute.xlu0 %1330
    %v1332 = vsel %vm168, %v1331, 0
    %1334 = vmatprep.subr.mxu0 0.0
    %1335 = vmatpush1.msra.mxu0 %v34
    %1336 = vmatprep.subr.mxu0 0.0
    %1337 = vmatpush1.msra.mxu0 %v35
    %1338 = vmatprep.subr.mxu0 0.0
    %1339 = vmatpush1.msra.mxu0 %v36
    %1340 = vmatprep.subr.mxu0 0.0
    %1341 = vmatpush1.msra.mxu0 %v37
    %1342 = vmatprep.subr.mxu0 0.0
    %1343 = vmatpush1.msra.mxu0 0.0
    %1344 = vmatprep.subr.mxu0 0.0
    %1345 = vmatpush1.msra.mxu0 0.0
    %1346 = vmatprep.subr.mxu0 0.0
    %1347 = vmatpush1.msra.mxu0 0.0
    %1348 = vmatprep.subr.mxu0 0.0
    %1349 = vmatpush1.msra.mxu0 0.0
    %1350 = vmatprep.subr.mxu0 0.0
    %1351 = vmatpush1.msra.mxu0 0.0
    %1352 = vmatprep.subr.mxu0 0.0
    %1353 = vmatpush1.msra.mxu0 0.0
    %1354 = vmatprep.subr.mxu0 0.0
    %1355 = vmatpush1.msra.mxu0 0.0
    %1356 = vmatprep.subr.mxu0 0.0
    %1357 = vmatpush1.msra.mxu0 0.0
    %1358 = vmatprep.subr.mxu0 0.0
    %1359 = vmatpush1.msra.mxu0 0.0
    %1360 = vmatprep.subr.mxu0 0.0
    %1361 = vmatpush1.msra.mxu0 0.0
    %1362 = vmatprep.subr.mxu0 0.0
    %1363 = vmatpush1.msra.mxu0 0.0
    %1364 = vmatprep.subr.mxu0 0.0
    %1365 = vmatpush1.msra.mxu0 0.0
    %1366 = vmatprep.subr.mxu0 0.0
    %1367 = vmatpush1.msra.mxu0 0.0
    %1368 = vmatprep.subr.mxu0 0.0
    %1369 = vmatpush1.msra.mxu0 0.0
    %1370 = vmatprep.subr.mxu0 0.0
    %1371 = vmatpush1.msra.mxu0 0.0
    %1372 = vmatprep.subr.mxu0 0.0
    %1373 = vmatpush1.msra.mxu0 0.0
    %1374 = vmatprep.subr.mxu0 0.0
    %1375 = vmatpush1.msra.mxu0 0.0
    %1376 = vmatprep.subr.mxu0 0.0
    %1377 = vmatpush1.msra.mxu0 0.0
    %1378 = vmatprep.subr.mxu0 0.0
    %1379 = vmatpush1.msra.mxu0 0.0
    %1380 = vmatprep.subr.mxu0 0.0
    %1381 = vmatpush1.msra.mxu0 0.0
    %1382 = vmatprep.subr.mxu0 0.0
    %1383 = vmatpush1.msra.mxu0 0.0
    %1384 = vmatprep.subr.mxu0 0.0
    %1385 = vmatpush1.msra.mxu0 0.0
    %1386 = vmatprep.subr.mxu0 0.0
    %1387 = vmatpush1.msra.mxu0 0.0
    %1388 = vmatprep.subr.mxu0 0.0
    %1389 = vmatpush1.msra.mxu0 0.0
    %1390 = vmatprep.subr.mxu0 0.0
    %1391 = vmatpush1.msra.mxu0 0.0
    %1392 = vmatprep.subr.mxu0 0.0
    %1393 = vmatpush1.msra.mxu0 0.0
    %1394 = vmatprep.subr.mxu0 0.0
    %1395 = vmatpush1.msra.mxu0 0.0
    %1396 = vmatprep.subr.mxu0 0.0
    %1397 = vmatpush1.msra.mxu0 0.0
    %1398 = vmatprep.mubr.f32.mxu0 0.0
    %1399 = vmatmul.mubr.f32.gmra.mrb[0].mxu0 %v1332
    %v1400 = vpop.f32.mrb[0].mxu0
    %v1401 = vadd.f32 0.0, %v1400
    %v1402 = vpop.f32.mrb[0].mxu0
    %1403 = vdwg.mxu0
    %v1404 = vadd.f32 %v165, %v1401
    %v1405 = vxor.u32 %v1404, 2147483648
    %v1406 = vmul.f32 %v1405, 1.442695
    %v1407 = vpow.pop %v1406
    %v1408 = vadd.f32 %v1407, 1.0
    %v1409 = vrcp.pop %v1408
    %v1410 = vmul.f32 1.0, %v1409
    %v1411 = vtanh.pop %v1404
    %v1413 = vrot.slane %v1280, 6
    %v1415 = vmul.f32 %v1410, %v1413
    %1417 = vrot.lane.b32.xlu0 %v1411, 32
    %v1418 = vpop.permute.xlu0 %1417
    %v1420 = vmul.f32 %v1410, %v1418
    %1422 = vrot.lane.b32.xlu0 %v1420, 32
    %v1423 = vpop.permute.xlu0 %1422
    %v1425 = vadd.f32 %v1415, %v1423
    %v1426 = vtanh.pop %v1425
    %1428 = vrot.lane.b32.xlu0 %v1426, 32
    %v1429 = vpop.permute.xlu0 %1428
    %v1431 = vmul.f32 %v1410, %v1429
    %v1434 = vunpack.c.l.s4 1966171168
    %v1435 = vunpack.c.0.s8 %v1434
    %v1436 = vlaneseq
    %v1437 = vshrl.u32 %v1436, 7
    %v1438 = vsub.s32 %v1435, %v1437
    %v1439 = vrot.slane %v1431, %v1438
    %v1440 = vcombine.high %v1439, %v1439
    %v1442 = vunpack.c.l.s4 1966171168
    %v1443 = vunpack.c.0.s8 %v1442
    %v1444 = vlaneseq
    %v1445 = vshrl.u32 %v1444, 7
    %v1446 = vsub.s32 %v1443, %v1445
    %v1447 = vrot.slane %v1439, %v1446
    %v1449 = vunpack.c.l.s4 1966171168
    %v1450 = vunpack.c.0.s8 %v1449
    %v1451 = vlaneseq
    %v1452 = vshrl.u32 %v1451, 7
    %v1453 = vsub.s32 %v1450, %v1452
    %v1454 = vrot.slane %v1440, %v1453
    %v1455 = vlaneseq
    %v1456 = vshrl.u32 %v1455, 7
    %v1457 = vsub.s32 0, %v1456
    %v1458 = vrot.slane %v1447, %v1457
    %v1459 = vlaneseq
    %v1460 = vshrl.u32 %v1459, 7
    %v1461 = vsub.s32 0, %v1460
    %v1462 = vrot.slane %v1454, %v1461
    %1463 = vrot.lane.b32.xlu0 %v1458, 64
    %v1464 = vpop.permute.xlu0 %1463
    %1465 = vrot.lane.b32.xlu0 %v1462, 64
    %v1466 = vpop.permute.xlu0 %1465
    %1469 = vst.msk [vmem:[#allocation2 + $0x8] sm:$0x1] %vm304, %v1464
    %1470 = vst.msk [vmem:[#allocation2 + $0x18] sm:$0x1] %vm304, %v1466
    %1471 = vrot.lane.b32.xlu0 %v1431, 64
    %v1472 = vpop.permute.xlu0 %1471
    %v1473 = vsel %vm168, %v1472, 0
    %1475 = vmatprep.subr.mxu0 0.0
    %1476 = vmatpush1.msra.mxu0 %v34
    %1477 = vmatprep.subr.mxu0 0.0
    %1478 = vmatpush1.msra.mxu0 %v35
    %1479 = vmatprep.subr.mxu0 0.0
    %1480 = vmatpush1.msra.mxu0 %v36
    %1481 = vmatprep.subr.mxu0 0.0
    %1482 = vmatpush1.msra.mxu0 %v37
    %1483 = vmatprep.subr.mxu0 0.0
    %1484 = vmatpush1.msra.mxu0 0.0
    %1485 = vmatprep.subr.mxu0 0.0
    %1486 = vmatpush1.msra.mxu0 0.0
    %1487 = vmatprep.subr.mxu0 0.0
    %1488 = vmatpush1.msra.mxu0 0.0
    %1489 = vmatprep.subr.mxu0 0.0
    %1490 = vmatpush1.msra.mxu0 0.0
    %1491 = vmatprep.subr.mxu0 0.0
    %1492 = vmatpush1.msra.mxu0 0.0
    %1493 = vmatprep.subr.mxu0 0.0
    %1494 = vmatpush1.msra.mxu0 0.0
    %1495 = vmatprep.subr.mxu0 0.0
    %1496 = vmatpush1.msra.mxu0 0.0
    %1497 = vmatprep.subr.mxu0 0.0
    %1498 = vmatpush1.msra.mxu0 0.0
    %1499 = vmatprep.subr.mxu0 0.0
    %1500 = vmatpush1.msra.mxu0 0.0
    %1501 = vmatprep.subr.mxu0 0.0
    %1502 = vmatpush1.msra.mxu0 0.0
    %1503 = vmatprep.subr.mxu0 0.0
    %1504 = vmatpush1.msra.mxu0 0.0
    %1505 = vmatprep.subr.mxu0 0.0
    %1506 = vmatpush1.msra.mxu0 0.0
    %1507 = vmatprep.subr.mxu0 0.0
    %1508 = vmatpush1.msra.mxu0 0.0
    %1509 = vmatprep.subr.mxu0 0.0
    %1510 = vmatpush1.msra.mxu0 0.0
    %1511 = vmatprep.subr.mxu0 0.0
    %1512 = vmatpush1.msra.mxu0 0.0
    %1513 = vmatprep.subr.mxu0 0.0
    %1514 = vmatpush1.msra.mxu0 0.0
    %1515 = vmatprep.subr.mxu0 0.0
    %1516 = vmatpush1.msra.mxu0 0.0
    %1517 = vmatprep.subr.mxu0 0.0
    %1518 = vmatpush1.msra.mxu0 0.0
    %1519 = vmatprep.subr.mxu0 0.0
    %1520 = vmatpush1.msra.mxu0 0.0
    %1521 = vmatprep.subr.mxu0 0.0
    %1522 = vmatpush1.msra.mxu0 0.0
    %1523 = vmatprep.subr.mxu0 0.0
    %1524 = vmatpush1.msra.mxu0 0.0
    %1525 = vmatprep.subr.mxu0 0.0
    %1526 = vmatpush1.msra.mxu0 0.0
    %1527 = vmatprep.subr.mxu0 0.0
    %1528 = vmatpush1.msra.mxu0 0.0
    %1529 = vmatprep.subr.mxu0 0.0
    %1530 = vmatpush1.msra.mxu0 0.0
    %1531 = vmatprep.subr.mxu0 0.0
    %1532 = vmatpush1.msra.mxu0 0.0
    %1533 = vmatprep.subr.mxu0 0.0
    %1534 = vmatpush1.msra.mxu0 0.0
    %1535 = vmatprep.subr.mxu0 0.0
    %1536 = vmatpush1.msra.mxu0 0.0
    %1537 = vmatprep.subr.mxu0 0.0
    %1538 = vmatpush1.msra.mxu0 0.0
    %1539 = vmatprep.mubr.f32.mxu0 0.0
    %1540 = vmatmul.mubr.f32.gmra.mrb[0].mxu0 %v1473
    %v1541 = vpop.f32.mrb[0].mxu0
    %v1542 = vadd.f32 0.0, %v1541
    %v1543 = vpop.f32.mrb[0].mxu0
    %1544 = vdwg.mxu0
    %v1546 = vrot.slane %v1542, 6
    %v1548 = vadd.f32 %v165, %v1546
    %v1549 = vxor.u32 %v1548, 2147483648
    %v1550 = vmul.f32 %v1549, 1.442695
    %v1551 = vpow.pop %v1550
    %v1552 = vadd.f32 %v1551, 1.0
    %v1553 = vrcp.pop %v1552
    %v1554 = vmul.f32 1.0, %v1553
    %v1555 = vtanh.pop %v1548
    %v1557 = vrot.slane %v1425, 6
    %v1559 = vmul.f32 %v1554, %v1557
    %1561 = vrot.lane.b32.xlu0 %v1555, 32
    %v1562 = vpop.permute.xlu0 %1561
    %v1564 = vmul.f32 %v1554, %v1562
    %1566 = vrot.lane.b32.xlu0 %v1564, 32
    %v1567 = vpop.permute.xlu0 %1566
    %v1569 = vadd.f32 %v1559, %v1567
    %v1570 = vtanh.pop %v1569
    %1572 = vrot.lane.b32.xlu0 %v1570, 32
    %v1573 = vpop.permute.xlu0 %1572
    %v1575 = vmul.f32 %v1554, %v1573
    %v1578 = vunpack.c.l.s4 1966171168
    %v1579 = vunpack.c.0.s8 %v1578
    %v1580 = vlaneseq
    %v1581 = vshrl.u32 %v1580, 7
    %v1582 = vsub.s32 %v1579, %v1581
    %v1583 = vrot.slane %v1575, %v1582
    %v1584 = vcombine.high %v1583, %v1583
    %v1586 = vunpack.c.l.s4 1966171168
    %v1587 = vunpack.c.0.s8 %v1586
    %v1588 = vlaneseq
    %v1589 = vshrl.u32 %v1588, 7
    %v1590 = vsub.s32 %v1587, %v1589
    %v1591 = vrot.slane %v1583, %v1590
    %v1593 = vunpack.c.l.s4 1966171168
    %v1594 = vunpack.c.0.s8 %v1593
    %v1595 = vlaneseq
    %v1596 = vshrl.u32 %v1595, 7
    %v1597 = vsub.s32 %v1594, %v1596
    %v1598 = vrot.slane %v1584, %v1597
    %v1599 = vcombine.high %v1591, %v1591
    %v1600 = vcombine.high %v1598, %v1598
    %v1601 = vlaneseq
    %v1602 = vshrl.u32 %v1601, 7
    %v1603 = vsub.s32 0, %v1602
    %v1604 = vrot.slane %v1599, %v1603
    %v1605 = vlaneseq
    %v1606 = vshrl.u32 %v1605, 7
    %v1607 = vsub.s32 0, %v1606
    %v1608 = vrot.slane %v1600, %v1607
    %1609 = vrot.lane.b32.xlu0 %v1604, 64
    %v1610 = vpop.permute.xlu0 %1609
    %1611 = vrot.lane.b32.xlu0 %v1608, 64
    %v1612 = vpop.permute.xlu0 %1611
    %1615 = vst.msk [vmem:[#allocation2 + $0x9] sm:$0x1] %vm304, %v1610
    %1616 = vst.msk [vmem:[#allocation2 + $0x19] sm:$0x1] %vm304, %v1612
    %v1617 = vld [vmem:[#allocation2] sm:$0xff]
    %v1618 = vld [vmem:[#allocation2 + $0x8] sm:$0x3]
    %v1619 = vld [vmem:[#allocation2 + $0x10] sm:$0xff]
    %v1620 = vld [vmem:[#allocation2 + $0x18] sm:$0x3]
    %vm1621 = vcmask 254976
    %1622 = vst.msk [vmem:[#allocation5] sm:$0x3] %vm1621, 0.0
    %v1623 = vlaneseq
    %v1624 = vand.u32 %v1623, 127
    %v1625 = vld [vmem:[%s2] sm:$0x3]
    %v1626 = vsel %vm168, %v1610, 0
    %v1629 = vsel %vm168, %v1617, 0
    %v1632 = vsel %vm168, %v1618, 0
    %1634 = vmatprep.subr.mxu0 0.0
    %1635 = vmatpush1.xpose.msra.mxu0 %v1629
    %1636 = vmatprep.subr.mxu0 0.0
    %1637 = vmatpush1.xpose.msra.mxu0 %v1632
    %1638 = vmatprep.subr.mxu0 0.0
    %1639 = vmatpush1.xpose.msra.mxu0 0.0
    %1640 = vmatprep.subr.mxu0 0.0
    %1641 = vmatpush1.xpose.msra.mxu0 0.0
    %1642 = vmatprep.subr.mxu0 0.0
    %1643 = vmatpush1.xpose.msra.mxu0 0.0
    %1644 = vmatprep.subr.mxu0 0.0
    %1645 = vmatpush1.xpose.msra.mxu0 0.0
    %1646 = vmatprep.subr.mxu0 0.0
    %1647 = vmatpush1.xpose.msra.mxu0 0.0
    %1648 = vmatprep.subr.mxu0 0.0
    %1649 = vmatpush1.xpose.msra.mxu0 0.0
    %1650 = vmatprep.subr.mxu0 0.0
    %1651 = vmatpush1.xpose.msra.mxu0 0.0
    %1652 = vmatprep.subr.mxu0 0.0
    %1653 = vmatpush1.xpose.msra.mxu0 0.0
    %1654 = vmatprep.subr.mxu0 0.0
    %1655 = vmatpush1.xpose.msra.mxu0 0.0
    %1656 = vmatprep.subr.mxu0 0.0
    %1657 = vmatpush1.xpose.msra.mxu0 0.0
    %1658 = vmatprep.subr.mxu0 0.0
    %1659 = vmatpush1.xpose.msra.mxu0 0.0
    %1660 = vmatprep.subr.mxu0 0.0
    %1661 = vmatpush1.xpose.msra.mxu0 0.0
    %1662 = vmatprep.subr.mxu0 0.0
    %1663 = vmatpush1.xpose.msra.mxu0 0.0
    %1664 = vmatprep.subr.mxu0 0.0
    %1665 = vmatpush1.xpose.msra.mxu0 0.0
    %1666 = vmatprep.subr.mxu0 0.0
    %1667 = vmatpush1.xpose.msra.mxu0 0.0
    %1668 = vmatprep.subr.mxu0 0.0
    %1669 = vmatpush1.xpose.msra.mxu0 0.0
    %1670 = vmatprep.subr.mxu0 0.0
    %1671 = vmatpush1.xpose.msra.mxu0 0.0
    %1672 = vmatprep.subr.mxu0 0.0
    %1673 = vmatpush1.xpose.msra.mxu0 0.0
    %1674 = vmatprep.subr.mxu0 0.0
    %1675 = vmatpush1.xpose.msra.mxu0 0.0
    %1676 = vmatprep.subr.mxu0 0.0
    %1677 = vmatpush1.xpose.msra.mxu0 0.0
    %1678 = vmatprep.subr.mxu0 0.0
    %1679 = vmatpush1.xpose.msra.mxu0 0.0
    %1680 = vmatprep.subr.mxu0 0.0
    %1681 = vmatpush1.xpose.msra.mxu0 0.0
    %1682 = vmatprep.subr.mxu0 0.0
    %1683 = vmatpush1.xpose.msra.mxu0 0.0
    %1684 = vmatprep.subr.mxu0 0.0
    %1685 = vmatpush1.xpose.msra.mxu0 0.0
    %1686 = vmatprep.subr.mxu0 0.0
    %1687 = vmatpush1.xpose.msra.mxu0 0.0
    %1688 = vmatprep.subr.mxu0 0.0
    %1689 = vmatpush1.xpose.msra.mxu0 0.0
    %1690 = vmatprep.subr.mxu0 0.0
    %1691 = vmatpush1.xpose.msra.mxu0 0.0
    %1692 = vmatprep.subr.mxu0 0.0
    %1693 = vmatpush1.xpose.msra.mxu0 0.0
    %1694 = vmatprep.subr.mxu0 0.0
    %1695 = vmatpush1.xpose.msra.mxu0 0.0
    %1696 = vmatprep.subr.mxu0 0.0
    %1697 = vmatpush1.xpose.msra.mxu0 0.0
    %1698 = vmatprep.mubr.f32.mxu0 0.0
    %1699 = vmatmul.mubr.f32.gmra.mrb[0].mxu0 %v1626
    %v1700 = vpop.f32.mrb[0].mxu0
    %v1701 = vadd.f32 0.0, %v1700
    %v1702 = vpop.f32.mrb[0].mxu0
    %1703 = vdwg.mxu0
    %v1704 = vsel %vm168, %v1612, 0
    %v1707 = vsel %vm168, %v1619, 0
    %v1710 = vsel %vm168, %v1620, 0
    %1712 = vmatprep.subr.mxu0 0.0
    %1713 = vmatpush1.xpose.msra.mxu0 %v1707
    %1714 = vmatprep.subr.mxu0 0.0
    %1715 = vmatpush1.xpose.msra.mxu0 %v1710
    %1716 = vmatprep.subr.mxu0 0.0
    %1717 = vmatpush1.xpose.msra.mxu0 0.0
    %1718 = vmatprep.subr.mxu0 0.0
    %1719 = vmatpush1.xpose.msra.mxu0 0.0
    %1720 = vmatprep.subr.mxu0 0.0
    %1721 = vmatpush1.xpose.msra.mxu0 0.0
    %1722 = vmatprep.subr.mxu0 0.0
    %1723 = vmatpush1.xpose.msra.mxu0 0.0
    %1724 = vmatprep.subr.mxu0 0.0
    %1725 = vmatpush1.xpose.msra.mxu0 0.0
    %1726 = vmatprep.subr.mxu0 0.0
    %1727 = vmatpush1.xpose.msra.mxu0 0.0
    %1728 = vmatprep.subr.mxu0 0.0
    %1729 = vmatpush1.xpose.msra.mxu0 0.0
    %1730 = vmatprep.subr.mxu0 0.0
    %1731 = vmatpush1.xpose.msra.mxu0 0.0
    %1732 = vmatprep.subr.mxu0 0.0
    %1733 = vmatpush1.xpose.msra.mxu0 0.0
    %1734 = vmatprep.subr.mxu0 0.0
    %1735 = vmatpush1.xpose.msra.mxu0 0.0
    %1736 = vmatprep.subr.mxu0 0.0
    %1737 = vmatpush1.xpose.msra.mxu0 0.0
    %1738 = vmatprep.subr.mxu0 0.0
    %1739 = vmatpush1.xpose.msra.mxu0 0.0
    %1740 = vmatprep.subr.mxu0 0.0
    %1741 = vmatpush1.xpose.msra.mxu0 0.0
    %1742 = vmatprep.subr.mxu0 0.0
    %1743 = vmatpush1.xpose.msra.mxu0 0.0
    %1744 = vmatprep.subr.mxu0 0.0
    %1745 = vmatpush1.xpose.msra.mxu0 0.0
    %1746 = vmatprep.subr.mxu0 0.0
    %1747 = vmatpush1.xpose.msra.mxu0 0.0
    %1748 = vmatprep.subr.mxu0 0.0
    %1749 = vmatpush1.xpose.msra.mxu0 0.0
    %1750 = vmatprep.subr.mxu0 0.0
    %1751 = vmatpush1.xpose.msra.mxu0 0.0
    %1752 = vmatprep.subr.mxu0 0.0
    %1753 = vmatpush1.xpose.msra.mxu0 0.0
    %1754 = vmatprep.subr.mxu0 0.0
    %1755 = vmatpush1.xpose.msra.mxu0 0.0
    %1756 = vmatprep.subr.mxu0 0.0
    %1757 = vmatpush1.xpose.msra.mxu0 0.0
    %1758 = vmatprep.subr.mxu0 0.0
    %1759 = vmatpush1.xpose.msra.mxu0 0.0
    %1760 = vmatprep.subr.mxu0 0.0
    %1761 = vmatpush1.xpose.msra.mxu0 0.0
    %1762 = vmatprep.subr.mxu0 0.0
    %1763 = vmatpush1.xpose.msra.mxu0 0.0
    %1764 = vmatprep.subr.mxu0 0.0
    %1765 = vmatpush1.xpose.msra.mxu0 0.0
    %1766 = vmatprep.subr.mxu0 0.0
    %1767 = vmatpush1.xpose.msra.mxu0 0.0
    %1768 = vmatprep.subr.mxu0 0.0
    %1769 = vmatpush1.xpose.msra.mxu0 0.0
    %1770 = vmatprep.subr.mxu0 0.0
    %1771 = vmatpush1.xpose.msra.mxu0 0.0
    %1772 = vmatprep.subr.mxu0 0.0
    %1773 = vmatpush1.xpose.msra.mxu0 0.0
    %1774 = vmatprep.subr.mxu0 0.0
    %1775 = vmatpush1.xpose.msra.mxu0 0.0
    %1776 = vmatprep.mubr.f32.mxu0 0.0
    %1777 = vmatmul.mubr.f32.gmra.mrb[0].mxu0 %v1704
    %v1778 = vpop.f32.mrb[0].mxu0
    %v1779 = vadd.f32 0.0, %v1778
    %v1780 = vpop.f32.mrb[0].mxu0
    %1781 = vdwg.mxu0
    %vm1782 = vcmask 73728
    %v1783 = vsel %vm1782, %v1701, -inf
    %1784 = vmax.xlane.f32.xlu0 %v1783
    %v1785 = vpop.xlane.xlu0 %1784
    %v1786 = vsel %vm1782, %v1779, -inf
    %1787 = vmax.xlane.f32.xlu0 %v1786
    %v1788 = vpop.xlane.xlu0 %1787
    %v1789 = vsub.f32 %v1701, %v1785
    %v1790 = vsub.f32 %v1779, %v1788
    %v1791 = vmul.f32 %v1789, 1.442695
    %v1792 = vpow.pop %v1791
    %v1793 = vmul.f32 %v1790, 1.442695
    %v1794 = vpow.pop %v1793
    %v1795 = vsel %vm1782, %v1792, 0.0
    %1796 = vadd.xlane.f32.xlu0 %v1795
    %v1797 = vpop.xlane.xlu0 %1796
    %v1798 = vsel %vm1782, %v1794, 0.0
    %1799 = vadd.xlane.f32.xlu0 %v1798
    %v1800 = vpop.xlane.xlu0 %1799
    %v1801 = vrcp.pop %v1797
    %v1802 = vmul.f32 %v1792, %v1801
    %v1803 = vrcp.pop %v1800
    %v1804 = vmul.f32 %v1794, %v1803
    %vm1805 = vcmask 80896
    %v1807 = vsel %vm1805, %v1802, 0
    %vm1809 = vcmask 1041408
    %v1810 = vsel %vm1809, %v1618, 0
    %1812 = vmatprep.subr.mxu0 0.0
    %1813 = vmatpush1.msra.mxu0 %v1617
    %1814 = vmatprep.subr.mxu0 0.0
    %1815 = vmatpush1.msra.mxu0 %v1810
    %1816 = vmatprep.subr.mxu0 0.0
    %1817 = vmatpush1.msra.mxu0 0.0
    %1818 = vmatprep.subr.mxu0 0.0
    %1819 = vmatpush1.msra.mxu0 0.0
    %1820 = vmatprep.subr.mxu0 0.0
    %1821 = vmatpush1.msra.mxu0 0.0
    %1822 = vmatprep.subr.mxu0 0.0
    %1823 = vmatpush1.msra.mxu0 0.0
    %1824 = vmatprep.subr.mxu0 0.0
    %1825 = vmatpush1.msra.mxu0 0.0
    %1826 = vmatprep.subr.mxu0 0.0
    %1827 = vmatpush1.msra.mxu0 0.0
    %1828 = vmatprep.subr.mxu0 0.0
    %1829 = vmatpush1.msra.mxu0 0.0
    %1830 = vmatprep.subr.mxu0 0.0
    %1831 = vmatpush1.msra.mxu0 0.0
    %1832 = vmatprep.subr.mxu0 0.0
    %1833 = vmatpush1.msra.mxu0 0.0
    %1834 = vmatprep.subr.mxu0 0.0
    %1835 = vmatpush1.msra.mxu0 0.0
    %1836 = vmatprep.subr.mxu0 0.0
    %1837 = vmatpush1.msra.mxu0 0.0
    %1838 = vmatprep.subr.mxu0 0.0
    %1839 = vmatpush1.msra.mxu0 0.0
    %1840 = vmatprep.subr.mxu0 0.0
    %1841 = vmatpush1.msra.mxu0 0.0
    %1842 = vmatprep.subr.mxu0 0.0
    %1843 = vmatpush1.msra.mxu0 0.0
    %1844 = vmatprep.subr.mxu0 0.0
    %1845 = vmatpush1.msra.mxu0 0.0
    %1846 = vmatprep.subr.mxu0 0.0
    %1847 = vmatpush1.msra.mxu0 0.0
    %1848 = vmatprep.subr.mxu0 0.0
    %1849 = vmatpush1.msra.mxu0 0.0
    %1850 = vmatprep.subr.mxu0 0.0
    %1851 = vmatpush1.msra.mxu0 0.0
    %1852 = vmatprep.subr.mxu0 0.0
    %1853 = vmatpush1.msra.mxu0 0.0
    %1854 = vmatprep.subr.mxu0 0.0
    %1855 = vmatpush1.msra.mxu0 0.0
    %1856 = vmatprep.subr.mxu0 0.0
    %1857 = vmatpush1.msra.mxu0 0.0
    %1858 = vmatprep.subr.mxu0 0.0
    %1859 = vmatpush1.msra.mxu0 0.0
    %1860 = vmatprep.subr.mxu0 0.0
    %1861 = vmatpush1.msra.mxu0 0.0
    %1862 = vmatprep.subr.mxu0 0.0
    %1863 = vmatpush1.msra.mxu0 0.0
    %1864 = vmatprep.subr.mxu0 0.0
    %1865 = vmatpush1.msra.mxu0 0.0
    %1866 = vmatprep.subr.mxu0 0.0
    %1867 = vmatpush1.msra.mxu0 0.0
    %1868 = vmatprep.subr.mxu0 0.0
    %1869 = vmatpush1.msra.mxu0 0.0
    %1870 = vmatprep.subr.mxu0 0.0
    %1871 = vmatpush1.msra.mxu0 0.0
    %1872 = vmatprep.subr.mxu0 0.0
    %1873 = vmatpush1.msra.mxu0 0.0
    %1874 = vmatprep.subr.mxu0 0.0
    %1875 = vmatpush1.msra.mxu0 0.0
    %1876 = vmatprep.mubr.f32.mxu0 0.0
    %1877 = vmatmul.mubr.f32.gmra.mrb[0].mxu0 %v1807
    %v1878 = vpop.f32.mrb[0].mxu0
    %v1879 = vadd.f32 0.0, %v1878
    %v1880 = vpop.f32.mrb[0].mxu0
    %1881 = vdwg.mxu0
    %v1883 = vsel %vm1805, %v1804, 0
    %v1885 = vsel %vm1809, %v1620, 0
    %1887 = vmatprep.subr.mxu0 0.0
    %1888 = vmatpush1.msra.mxu0 %v1619
    %1889 = vmatprep.subr.mxu0 0.0
    %1890 = vmatpush1.msra.mxu0 %v1885
    %1891 = vmatprep.subr.mxu0 0.0
    %1892 = vmatpush1.msra.mxu0 0.0
    %1893 = vmatprep.subr.mxu0 0.0
    %1894 = vmatpush1.msra.mxu0 0.0
    %1895 = vmatprep.subr.mxu0 0.0
    %1896 = vmatpush1.msra.mxu0 0.0
    %1897 = vmatprep.subr.mxu0 0.0
    %1898 = vmatpush1.msra.mxu0 0.0
    %1899 = vmatprep.subr.mxu0 0.0
    %1900 = vmatpush1.msra.mxu0 0.0
    %1901 = vmatprep.subr.mxu0 0.0
    %1902 = vmatpush1.msra.mxu0 0.0
    %1903 = vmatprep.subr.mxu0 0.0
    %1904 = vmatpush1.msra.mxu0 0.0
    %1905 = vmatprep.subr.mxu0 0.0
    %1906 = vmatpush1.msra.mxu0 0.0
    %1907 = vmatprep.subr.mxu0 0.0
    %1908 = vmatpush1.msra.mxu0 0.0
    %1909 = vmatprep.subr.mxu0 0.0
    %1910 = vmatpush1.msra.mxu0 0.0
    %1911 = vmatprep.subr.mxu0 0.0
    %1912 = vmatpush1.msra.mxu0 0.0
    %1913 = vmatprep.subr.mxu0 0.0
    %1914 = vmatpush1.msra.mxu0 0.0
    %1915 = vmatprep.subr.mxu0 0.0
    %1916 = vmatpush1.msra.mxu0 0.0
    %1917 = vmatprep.subr.mxu0 0.0
    %1918 = vmatpush1.msra.mxu0 0.0
    %1919 = vmatprep.subr.mxu0 0.0
    %1920 = vmatpush1.msra.mxu0 0.0
    %1921 = vmatprep.subr.mxu0 0.0
    %1922 = vmatpush1.msra.mxu0 0.0
    %1923 = vmatprep.subr.mxu0 0.0
    %1924 = vmatpush1.msra.mxu0 0.0
    %1925 = vmatprep.subr.mxu0 0.0
    %1926 = vmatpush1.msra.mxu0 0.0
    %1927 = vmatprep.subr.mxu0 0.0
    %1928 = vmatpush1.msra.mxu0 0.0
    %1929 = vmatprep.subr.mxu0 0.0
    %1930 = vmatpush1.msra.mxu0 0.0
    %1931 = vmatprep.subr.mxu0 0.0
    %1932 = vmatpush1.msra.mxu0 0.0
    %1933 = vmatprep.subr.mxu0 0.0
    %1934 = vmatpush1.msra.mxu0 0.0
    %1935 = vmatprep.subr.mxu0 0.0
    %1936 = vmatpush1.msra.mxu0 0.0
    %1937 = vmatprep.subr.mxu0 0.0
    %1938 = vmatpush1.msra.mxu0 0.0
    %1939 = vmatprep.subr.mxu0 0.0
    %1940 = vmatpush1.msra.mxu0 0.0
    %1941 = vmatprep.subr.mxu0 0.0
    %1942 = vmatpush1.msra.mxu0 0.0
    %1943 = vmatprep.subr.mxu0 0.0
    %1944 = vmatpush1.msra.mxu0 0.0
    %1945 = vmatprep.subr.mxu0 0.0
    %1946 = vmatpush1.msra.mxu0 0.0
    %1947 = vmatprep.subr.mxu0 0.0
    %1948 = vmatpush1.msra.mxu0 0.0
    %1949 = vmatprep.subr.mxu0 0.0
    %1950 = vmatpush1.msra.mxu0 0.0
    %1951 = vmatprep.mubr.f32.mxu0 0.0
    %1952 = vmatmul.mubr.f32.gmra.mrb[0].mxu0 %v1883
    %v1953 = vpop.f32.mrb[0].mxu0
    %v1954 = vadd.f32 0.0, %v1953
    %v1955 = vpop.f32.mrb[0].mxu0
    %1956 = vdwg.mxu0
    %v1959 = vrot.slane %v1954, 7
    %vm1960 = vcmask 1041409
    %v1961 = vsel %vm1960, %v1959, %v1879
    %1962 = vrot.lane.b32.xlu0 %v1961, 32
    %v1963 = vpop.permute.xlu0 %1962
    %v1965 = vrot.slane %v1575, 2
    %v1967 = vsel %vm168, %v1625, %v1963
    %vm1968 = vcmask 523264
    %v1969 = vsel %vm1968, %v1967, %v1965
    %vm1970 = vcmask 785408
    %v1972 = vsel %vm1970, %v1969, 0
    %1974 = vmatprep.subr.mxu0 %v39
    %1975 = vmatpush1.msra.mxu0 %v38
    %1976 = vmatprep.subr.mxu0 %v41
    %1977 = vmatpush1.msra.mxu0 %v40
    %1978 = vmatprep.subr.mxu0 %v43
    %1979 = vmatpush1.msra.mxu0 %v42
    %1980 = vmatprep.subr.mxu0 %v45
    %1981 = vmatpush1.msra.mxu0 %v44
    %1982 = vmatprep.subr.mxu0 %v47
    %1983 = vmatpush1.msra.mxu0 %v46
    %1984 = vmatprep.subr.mxu0 %v49
    %1985 = vmatpush1.msra.mxu0 %v48
    %1986 = vmatprep.subr.mxu0 %v51
    %1987 = vmatpush1.msra.mxu0 %v50
    %1988 = vmatprep.subr.mxu0 %v53
    %1989 = vmatpush1.msra.mxu0 %v52
    %1990 = vmatprep.subr.mxu0 %v55
    %1991 = vmatpush1.msra.mxu0 %v54
    %1992 = vmatprep.subr.mxu0 %v57
    %1993 = vmatpush1.msra.mxu0 %v56
    %1994 = vmatprep.subr.mxu0 %v59
    %1995 = vmatpush1.msra.mxu0 %v58
    %1996 = vmatprep.subr.mxu0 %v61
    %1997 = vmatpush1.msra.mxu0 %v60
    %1998 = vmatprep.subr.mxu0 0.0
    %1999 = vmatpush1.msra.mxu0 0.0
    %2000 = vmatprep.subr.mxu0 0.0
    %2001 = vmatpush1.msra.mxu0 0.0
    %2002 = vmatprep.subr.mxu0 0.0
    %2003 = vmatpush1.msra.mxu0 0.0
    %2004 = vmatprep.subr.mxu0 0.0
    %2005 = vmatpush1.msra.mxu0 0.0
    %2006 = vmatprep.subr.mxu0 0.0
    %2007 = vmatpush1.msra.mxu0 0.0
    %2008 = vmatprep.subr.mxu0 0.0
    %2009 = vmatpush1.msra.mxu0 0.0
    %2010 = vmatprep.subr.mxu0 0.0
    %2011 = vmatpush1.msra.mxu0 0.0
    %2012 = vmatprep.subr.mxu0 0.0
    %2013 = vmatpush1.msra.mxu0 0.0
    %2014 = vmatprep.subr.mxu0 0.0
    %2015 = vmatpush1.msra.mxu0 0.0
    %2016 = vmatprep.subr.mxu0 0.0
    %2017 = vmatpush1.msra.mxu0 0.0
    %2018 = vmatprep.subr.mxu0 0.0
    %2019 = vmatpush1.msra.mxu0 0.0
    %2020 = vmatprep.subr.mxu0 0.0
    %2021 = vmatpush1.msra.mxu0 0.0
    %2022 = vmatprep.subr.mxu0 0.0
    %2023 = vmatpush1.msra.mxu0 0.0
    %2024 = vmatprep.subr.mxu0 0.0
    %2025 = vmatpush1.msra.mxu0 0.0
    %2026 = vmatprep.subr.mxu0 0.0
    %2027 = vmatpush1.msra.mxu0 0.0
    %2028 = vmatprep.subr.mxu0 0.0
    %2029 = vmatpush1.msra.mxu0 0.0
    %2030 = vmatprep.subr.mxu0 0.0
    %2031 = vmatpush1.msra.mxu0 0.0
    %2032 = vmatprep.subr.mxu0 0.0
    %2033 = vmatpush1.msra.mxu0 0.0
    %2034 = vmatprep.subr.mxu0 0.0
    %2035 = vmatpush1.msra.mxu0 0.0
    %2036 = vmatprep.subr.mxu0 0.0
    %2037 = vmatpush1.msra.mxu0 0.0
    %2038 = vmatprep.mubr.f32.mxu0 0.0
    %2039 = vmatmul.mubr.f32.gmra.mrb[0].mxu0 %v1972
    %v2040 = vpop.f32.mrb[0].mxu0
    %v2041 = vadd.f32 0.0, %v2040
    %v2042 = vpop.f32.mrb[0].mxu0
    %v2043 = vadd.f32 0.0, %v2042
    %2044 = vdwg.mxu0
    %v2045 = vxor.u32 %v2041, 2147483648
    %v2046 = vmul.f32 %v2045, 1.442695
    %v2047 = vpow.pop %v2046
    %v2048 = vadd.f32 %v2047, 1.0
    %v2049 = vrcp.pop %v2048
    %v2050 = vmul.f32 1.0, %v2049
    %v2051 = vtanh.pop %v2041
    %v2053 = vrot.slane %v1569, 2
    %v2055 = vmul.f32 %v2050, %v2053
    %2057 = vrot.lane.b32.xlu0 %v2051, 32
    %v2058 = vpop.permute.xlu0 %2057
    %v2060 = vmul.f32 %v2050, %v2058
    %2062 = vrot.lane.b32.xlu0 %v2060, 32
    %v2063 = vpop.permute.xlu0 %2062
    %v2065 = vadd.f32 %v2055, %v2063
    %v2066 = vtanh.pop %v2065
    %2068 = vrot.lane.b32.xlu0 %v2066, 32
    %v2069 = vpop.permute.xlu0 %2068
    %v2071 = vmul.f32 %v2050, %v2069
    %2073 = vrot.lane.b32.xlu0 %v2071, 64
    %v2074 = vpop.permute.xlu0 %2073
    %v2075 = vsel %vm168, %v2074, 0
    %2077 = vmatprep.subr.mxu0 0.0
    %2078 = vmatpush1.msra.mxu0 %v62
    %2079 = vmatprep.subr.mxu0 0.0
    %2080 = vmatpush1.msra.mxu0 %v63
    %2081 = vmatprep.subr.mxu0 0.0
    %2082 = vmatpush1.msra.mxu0 %v64
    %2083 = vmatprep.subr.mxu0 0.0
    %2084 = vmatpush1.msra.mxu0 %v65
    %2085 = vmatprep.subr.mxu0 0.0
    %2086 = vmatpush1.msra.mxu0 0.0
    %2087 = vmatprep.subr.mxu0 0.0
    %2088 = vmatpush1.msra.mxu0 0.0
    %2089 = vmatprep.subr.mxu0 0.0
    %2090 = vmatpush1.msra.mxu0 0.0
    %2091 = vmatprep.subr.mxu0 0.0
    %2092 = vmatpush1.msra.mxu0 0.0
    %2093 = vmatprep.subr.mxu0 0.0
    %2094 = vmatpush1.msra.mxu0 0.0
    %2095 = vmatprep.subr.mxu0 0.0
    %2096 = vmatpush1.msra.mxu0 0.0
    %2097 = vmatprep.subr.mxu0 0.0
    %2098 = vmatpush1.msra.mxu0 0.0
    %2099 = vmatprep.subr.mxu0 0.0
    %2100 = vmatpush1.msra.mxu0 0.0
    %2101 = vmatprep.subr.mxu0 0.0
    %2102 = vmatpush1.msra.mxu0 0.0
    %2103 = vmatprep.subr.mxu0 0.0
    %2104 = vmatpush1.msra.mxu0 0.0
    %2105 = vmatprep.subr.mxu0 0.0
    %2106 = vmatpush1.msra.mxu0 0.0
    %2107 = vmatprep.subr.mxu0 0.0
    %2108 = vmatpush1.msra.mxu0 0.0
    %2109 = vmatprep.subr.mxu0 0.0
    %2110 = vmatpush1.msra.mxu0 0.0
    %2111 = vmatprep.subr.mxu0 0.0
    %2112 = vmatpush1.msra.mxu0 0.0
    %2113 = vmatprep.subr.mxu0 0.0
    %2114 = vmatpush1.msra.mxu0 0.0
    %2115 = vmatprep.subr.mxu0 0.0
    %2116 = vmatpush1.msra.mxu0 0.0
    %2117 = vmatprep.subr.mxu0 0.0
    %2118 = vmatpush1.msra.mxu0 0.0
    %2119 = vmatprep.subr.mxu0 0.0
    %2120 = vmatpush1.msra.mxu0 0.0
    %2121 = vmatprep.subr.mxu0 0.0
    %2122 = vmatpush1.msra.mxu0 0.0
    %2123 = vmatprep.subr.mxu0 0.0
    %2124 = vmatpush1.msra.mxu0 0.0
    %2125 = vmatprep.subr.mxu0 0.0
    %2126 = vmatpush1.msra.mxu0 0.0
    %2127 = vmatprep.subr.mxu0 0.0
    %2128 = vmatpush1.msra.mxu0 0.0
    %2129 = vmatprep.subr.mxu0 0.0
    %2130 = vmatpush1.msra.mxu0 0.0
    %2131 = vmatprep.subr.mxu0 0.0
    %2132 = vmatpush1.msra.mxu0 0.0
    %2133 = vmatprep.subr.mxu0 0.0
    %2134 = vmatpush1.msra.mxu0 0.0
    %2135 = vmatprep.subr.mxu0 0.0
    %2136 = vmatpush1.msra.mxu0 0.0
    %2137 = vmatprep.subr.mxu0 0.0
    %2138 = vmatpush1.msra.mxu0 0.0
    %2139 = vmatprep.subr.mxu0 0.0
    %2140 = vmatpush1.msra.mxu0 0.0
    %2141 = vmatprep.mubr.f32.mxu0 0.0
    %2142 = vmatmul.mubr.f32.gmra.mrb[0].mxu0 %v2075
    %v2143 = vpop.f32.mrb[0].mxu0
    %v2144 = vadd.f32 0.0, %v2143
    %v2145 = vpop.f32.mrb[0].mxu0
    %2146 = vdwg.mxu0
    %v2147 = vadd.f32 %v2043, %v2144
    %2148 = vst.msk [vmem:[#allocation5 + $0x2] sm:$0x3] %vm1621, %v2147
    %v2149 = vsel %vm1621, %v2147, -inf
    %2150 = vmax.xlane.f32.xlu0 %v2149
    %v2151 = vpop.xlane.xlu0 %2150
    %vm2152 = vcmp.eq.f32.partialorder %v2147, %v2151
    %v2153 = vsel %vm2152, %v1624, 32
    %v2154 = vsel %vm1621, %v2153, 2147483647
    %v2155 = vand.u32 %v2154, 65535
    %v2156 = vshra.s32 %v2154, 16
    %v2157 = vcvt.s32.f32 %v2155
    %v2158 = vcvt.s32.f32 %v2156
    %2159 = vmin.xlane.f32.xlu0 %v2158
    %v2160 = vpop.xlane.xlu0 %2159
    %vm2161 = vcmp.eq.f32.partialorder %v2158, %v2160
    %v2162 = vsel %vm2161, %v2157, inf
    %2163 = vmin.xlane.f32.xlu0 %v2162
    %v2164 = vpop.xlane.xlu0 %2163
    %v2165 = vcvt.f32.s32 %v2164
    %v2166 = vcvt.f32.s32 %v2160
    %v2167 = vshll.u32 %v2166, 16
    %v2168 = vadd.s32 %v2167, %v2165
    %vm2169 = vcmp.eq.s32.totalorder %v1624, %v2168
    %v2170 = vsel %vm2169, 1, 0
    %v2171 = vcvt.s32.f32 %v2170
    %v2172 = vld [vmem:[%s2 + $0x2] sm:$0x3]
    %s2173 = sld [smem:[#allocation4 + $0x1]]
    %p2174 = scmp.eq.s32.totalorder %s2173, 1
    %s2175 = scalar_select %p2174, 1, 0
    %v2176 = vstv %s2175
    %vm2177 = vcmp.eq.s32.totalorder %v2176, 1
    %v2178 = vsel %vm2177, %v2172, %v2171
    %v2180 = vunpack.c.l.s4 1966171168
    %v2181 = vunpack.c.0.s8 %v2180
    %v2182 = vlaneseq
    %v2183 = vshrl.u32 %v2182, 7
    %v2184 = vsub.s32 %v2181, %v2183
    %v2185 = vrot.slane %v2071, %v2184
    %v2186 = vcombine.high %v2185, %v2185
    %v2188 = vunpack.c.l.s4 1966171168
    %v2189 = vunpack.c.0.s8 %v2188
    %v2190 = vlaneseq
    %v2191 = vshrl.u32 %v2190, 7
    %v2192 = vsub.s32 %v2189, %v2191
    %v2193 = vrot.slane %v2185, %v2192
    %v2195 = vunpack.c.l.s4 1966171168
    %v2196 = vunpack.c.0.s8 %v2195
    %v2197 = vlaneseq
    %v2198 = vshrl.u32 %v2197, 7
    %v2199 = vsub.s32 %v2196, %v2198
    %v2200 = vrot.slane %v2186, %v2199
    %v2201 = vlaneseq
    %v2202 = vshrl.u32 %v2201, 7
    %v2203 = vsub.s32 0, %v2202
    %v2204 = vrot.slane %v2193, %v2203
    %2205 = vrot.lane.b32.xlu0 %v2204, 64
    %v2206 = vpop.permute.xlu0 %2205
    %v2207 = vsel %vm168, %v2206, 0
    %2209 = vmatprep.subr.mxu0 0.0
    %2210 = vmatpush1.xpose.msra.mxu0 %v1629
    %2211 = vmatprep.subr.mxu0 0.0
    %2212 = vmatpush1.xpose.msra.mxu0 %v1632
    %2213 = vmatprep.subr.mxu0 0.0
    %2214 = vmatpush1.xpose.msra.mxu0 0.0
    %2215 = vmatprep.subr.mxu0 0.0
    %2216 = vmatpush1.xpose.msra.mxu0 0.0
    %2217 = vmatprep.subr.mxu0 0.0
    %2218 = vmatpush1.xpose.msra.mxu0 0.0
    %2219 = vmatprep.subr.mxu0 0.0
    %2220 = vmatpush1.xpose.msra.mxu0 0.0
    %2221 = vmatprep.subr.mxu0 0.0
    %2222 = vmatpush1.xpose.msra.mxu0 0.0
    %2223 = vmatprep.subr.mxu0 0.0
    %2224 = vmatpush1.xpose.msra.mxu0 0.0
    %2225 = vmatprep.subr.mxu0 0.0
    %2226 = vmatpush1.xpose.msra.mxu0 0.0
    %2227 = vmatprep.subr.mxu0 0.0
    %2228 = vmatpush1.xpose.msra.mxu0 0.0
    %2229 = vmatprep.subr.mxu0 0.0
    %2230 = vmatpush1.xpose.msra.mxu0 0.0
    %2231 = vmatprep.subr.mxu0 0.0
    %2232 = vmatpush1.xpose.msra.mxu0 0.0
    %2233 = vmatprep.subr.mxu0 0.0
    %2234 = vmatpush1.xpose.msra.mxu0 0.0
    %2235 = vmatprep.subr.mxu0 0.0
    %2236 = vmatpush1.xpose.msra.mxu0 0.0
    %2237 = vmatprep.subr.mxu0 0.0
    %2238 = vmatpush1.xpose.msra.mxu0 0.0
    %2239 = vmatprep.subr.mxu0 0.0
    %2240 = vmatpush1.xpose.msra.mxu0 0.0
    %2241 = vmatprep.subr.mxu0 0.0
    %2242 = vmatpush1.xpose.msra.mxu0 0.0
    %2243 = vmatprep.subr.mxu0 0.0
    %2244 = vmatpush1.xpose.msra.mxu0 0.0
    %2245 = vmatprep.subr.mxu0 0.0
    %2246 = vmatpush1.xpose.msra.mxu0 0.0
    %2247 = vmatprep.subr.mxu0 0.0
    %2248 = vmatpush1.xpose.msra.mxu0 0.0
    %2249 = vmatprep.subr.mxu0 0.0
    %2250 = vmatpush1.xpose.msra.mxu0 0.0
    %2251 = vmatprep.subr.mxu0 0.0
    %2252 = vmatpush1.xpose.msra.mxu0 0.0
    %2253 = vmatprep.subr.mxu0 0.0
    %2254 = vmatpush1.xpose.msra.mxu0 0.0
    %2255 = vmatprep.subr.mxu0 0.0
    %2256 = vmatpush1.xpose.msra.mxu0 0.0
    %2257 = vmatprep.subr.mxu0 0.0
    %2258 = vmatpush1.xpose.msra.mxu0 0.0
    %2259 = vmatprep.subr.mxu0 0.0
    %2260 = vmatpush1.xpose.msra.mxu0 0.0
    %2261 = vmatprep.subr.mxu0 0.0
    %2262 = vmatpush1.xpose.msra.mxu0 0.0
    %2263 = vmatprep.subr.mxu0 0.0
    %2264 = vmatpush1.xpose.msra.mxu0 0.0
    %2265 = vmatprep.subr.mxu0 0.0
    %2266 = vmatpush1.xpose.msra.mxu0 0.0
    %2267 = vmatprep.subr.mxu0 0.0
    %2268 = vmatpush1.xpose.msra.mxu0 0.0
    %2269 = vmatprep.subr.mxu0 0.0
    %2270 = vmatpush1.xpose.msra.mxu0 0.0
    %2271 = vmatprep.subr.mxu0 0.0
    %2272 = vmatpush1.xpose.msra.mxu0 0.0
    %2273 = vmatprep.mubr.f32.mxu0 0.0
    %2274 = vmatmul.mubr.f32.gmra.mrb[0].mxu0 %v2207
    %v2275 = vpop.f32.mrb[0].mxu0
    %v2276 = vadd.f32 0.0, %v2275
    %v2277 = vpop.f32.mrb[0].mxu0
    %2278 = vdwg.mxu0
    %v2279 = vlaneseq
    %v2280 = vshrl.u32 %v2279, 7
    %v2281 = vsub.s32 0, %v2280
    %v2282 = vrot.slane %v2200, %v2281
    %2283 = vrot.lane.b32.xlu0 %v2282, 64
    %v2284 = vpop.permute.xlu0 %2283
    %v2285 = vsel %vm168, %v2284, 0
    %2287 = vmatprep.subr.mxu0 0.0
    %2288 = vmatpush1.xpose.msra.mxu0 %v1707
    %2289 = vmatprep.subr.mxu0 0.0
    %2290 = vmatpush1.xpose.msra.mxu0 %v1710
    %2291 = vmatprep.subr.mxu0 0.0
    %2292 = vmatpush1.xpose.msra.mxu0 0.0
    %2293 = vmatprep.subr.mxu0 0.0
    %2294 = vmatpush1.xpose.msra.mxu0 0.0
    %2295 = vmatprep.subr.mxu0 0.0
    %2296 = vmatpush1.xpose.msra.mxu0 0.0
    %2297 = vmatprep.subr.mxu0 0.0
    %2298 = vmatpush1.xpose.msra.mxu0 0.0
    %2299 = vmatprep.subr.mxu0 0.0
    %2300 = vmatpush1.xpose.msra.mxu0 0.0
    %2301 = vmatprep.subr.mxu0 0.0
    %2302 = vmatpush1.xpose.msra.mxu0 0.0
    %2303 = vmatprep.subr.mxu0 0.0
    %2304 = vmatpush1.xpose.msra.mxu0 0.0
    %2305 = vmatprep.subr.mxu0 0.0
    %2306 = vmatpush1.xpose.msra.mxu0 0.0
    %2307 = vmatprep.subr.mxu0 0.0
    %2308 = vmatpush1.xpose.msra.mxu0 0.0
    %2309 = vmatprep.subr.mxu0 0.0
    %2310 = vmatpush1.xpose.msra.mxu0 0.0
    %2311 = vmatprep.subr.mxu0 0.0
    %2312 = vmatpush1.xpose.msra.mxu0 0.0
    %2313 = vmatprep.subr.mxu0 0.0
    %2314 = vmatpush1.xpose.msra.mxu0 0.0
    %2315 = vmatprep.subr.mxu0 0.0
    %2316 = vmatpush1.xpose.msra.mxu0 0.0
    %2317 = vmatprep.subr.mxu0 0.0
    %2318 = vmatpush1.xpose.msra.mxu0 0.0
    %2319 = vmatprep.subr.mxu0 0.0
    %2320 = vmatpush1.xpose.msra.mxu0 0.0
    %2321 = vmatprep.subr.mxu0 0.0
    %2322 = vmatpush1.xpose.msra.mxu0 0.0
    %2323 = vmatprep.subr.mxu0 0.0
    %2324 = vmatpush1.xpose.msra.mxu0 0.0
    %2325 = vmatprep.subr.mxu0 0.0
    %2326 = vmatpush1.xpose.msra.mxu0 0.0
    %2327 = vmatprep.subr.mxu0 0.0
    %2328 = vmatpush1.xpose.msra.mxu0 0.0
    %2329 = vmatprep.subr.mxu0 0.0
    %2330 = vmatpush1.xpose.msra.mxu0 0.0
    %2331 = vmatprep.subr.mxu0 0.0
    %2332 = vmatpush1.xpose.msra.mxu0 0.0
    %2333 = vmatprep.subr.mxu0 0.0
    %2334 = vmatpush1.xpose.msra.mxu0 0.0
    %2335 = vmatprep.subr.mxu0 0.0
    %2336 = vmatpush1.xpose.msra.mxu0 0.0
    %2337 = vmatprep.subr.mxu0 0.0
    %2338 = vmatpush1.xpose.msra.mxu0 0.0
    %2339 = vmatprep.subr.mxu0 0.0
    %2340 = vmatpush1.xpose.msra.mxu0 0.0
    %2341 = vmatprep.subr.mxu0 0.0
    %2342 = vmatpush1.xpose.msra.mxu0 0.0
    %2343 = vmatprep.subr.mxu0 0.0
    %2344 = vmatpush1.xpose.msra.mxu0 0.0
    %2345 = vmatprep.subr.mxu0 0.0
    %2346 = vmatpush1.xpose.msra.mxu0 0.0
    %2347 = vmatprep.subr.mxu0 0.0
    %2348 = vmatpush1.xpose.msra.mxu0 0.0
    %2349 = vmatprep.subr.mxu0 0.0
    %2350 = vmatpush1.xpose.msra.mxu0 0.0
    %2351 = vmatprep.mubr.f32.mxu0 0.0
    %2352 = vmatmul.mubr.f32.gmra.mrb[0].mxu0 %v2285
    %v2353 = vpop.f32.mrb[0].mxu0
    %v2354 = vadd.f32 0.0, %v2353
    %v2355 = vpop.f32.mrb[0].mxu0
    %2356 = vdwg.mxu0
    %v2357 = vsel %vm1782, %v2276, -inf
    %2358 = vmax.xlane.f32.xlu0 %v2357
    %v2359 = vpop.xlane.xlu0 %2358
    %v2360 = vsel %vm1782, %v2354, -inf
    %2361 = vmax.xlane.f32.xlu0 %v2360
    %v2362 = vpop.xlane.xlu0 %2361
    %v2363 = vsub.f32 %v2276, %v2359
    %v2364 = vsub.f32 %v2354, %v2362
    %v2365 = vmul.f32 %v2363, 1.442695
    %v2366 = vpow.pop %v2365
    %v2367 = vmul.f32 %v2364, 1.442695
    %v2368 = vpow.pop %v2367
    %v2369 = vsel %vm1782, %v2366, 0.0
    %2370 = vadd.xlane.f32.xlu0 %v2369
    %v2371 = vpop.xlane.xlu0 %2370
    %v2372 = vsel %vm1782, %v2368, 0.0
    %2373 = vadd.xlane.f32.xlu0 %v2372
    %v2374 = vpop.xlane.xlu0 %2373
    %v2375 = vrcp.pop %v2371
    %v2376 = vmul.f32 %v2366, %v2375
    %v2377 = vrcp.pop %v2374
    %v2378 = vmul.f32 %v2368, %v2377
    %v2380 = vsel %vm1805, %v2376, 0
    %2382 = vmatprep.subr.mxu0 0.0
    %2383 = vmatpush1.msra.mxu0 %v1617
    %2384 = vmatprep.subr.mxu0 0.0
    %2385 = vmatpush1.msra.mxu0 %v1810
    %2386 = vmatprep.subr.mxu0 0.0
    %2387 = vmatpush1.msra.mxu0 0.0
    %2388 = vmatprep.subr.mxu0 0.0
    %2389 = vmatpush1.msra.mxu0 0.0
    %2390 = vmatprep.subr.mxu0 0.0
    %2391 = vmatpush1.msra.mxu0 0.0
    %2392 = vmatprep.subr.mxu0 0.0
    %2393 = vmatpush1.msra.mxu0 0.0
    %2394 = vmatprep.subr.mxu0 0.0
    %2395 = vmatpush1.msra.mxu0 0.0
    %2396 = vmatprep.subr.mxu0 0.0
    %2397 = vmatpush1.msra.mxu0 0.0
    %2398 = vmatprep.subr.mxu0 0.0
    %2399 = vmatpush1.msra.mxu0 0.0
    %2400 = vmatprep.subr.mxu0 0.0
    %2401 = vmatpush1.msra.mxu0 0.0
    %2402 = vmatprep.subr.mxu0 0.0
    %2403 = vmatpush1.msra.mxu0 0.0
    %2404 = vmatprep.subr.mxu0 0.0
    %2405 = vmatpush1.msra.mxu0 0.0
    %2406 = vmatprep.subr.mxu0 0.0
    %2407 = vmatpush1.msra.mxu0 0.0
    %2408 = vmatprep.subr.mxu0 0.0
    %2409 = vmatpush1.msra.mxu0 0.0
    %2410 = vmatprep.subr.mxu0 0.0
    %2411 = vmatpush1.msra.mxu0 0.0
    %2412 = vmatprep.subr.mxu0 0.0
    %2413 = vmatpush1.msra.mxu0 0.0
    %2414 = vmatprep.subr.mxu0 0.0
    %2415 = vmatpush1.msra.mxu0 0.0
    %2416 = vmatprep.subr.mxu0 0.0
    %2417 = vmatpush1.msra.mxu0 0.0
    %2418 = vmatprep.subr.mxu0 0.0
    %2419 = vmatpush1.msra.mxu0 0.0
    %2420 = vmatprep.subr.mxu0 0.0
    %2421 = vmatpush1.msra.mxu0 0.0
    %2422 = vmatprep.subr.mxu0 0.0
    %2423 = vmatpush1.msra.mxu0 0.0
    %2424 = vmatprep.subr.mxu0 0.0
    %2425 = vmatpush1.msra.mxu0 0.0
    %2426 = vmatprep.subr.mxu0 0.0
    %2427 = vmatpush1.msra.mxu0 0.0
    %2428 = vmatprep.subr.mxu0 0.0
    %2429 = vmatpush1.msra.mxu0 0.0
    %2430 = vmatprep.subr.mxu0 0.0
    %2431 = vmatpush1.msra.mxu0 0.0
    %2432 = vmatprep.subr.mxu0 0.0
    %2433 = vmatpush1.msra.mxu0 0.0
    %2434 = vmatprep.subr.mxu0 0.0
    %2435 = vmatpush1.msra.mxu0 0.0
    %2436 = vmatprep.subr.mxu0 0.0
    %2437 = vmatpush1.msra.mxu0 0.0
    %2438 = vmatprep.subr.mxu0 0.0
    %2439 = vmatpush1.msra.mxu0 0.0
    %2440 = vmatprep.subr.mxu0 0.0
    %2441 = vmatpush1.msra.mxu0 0.0
    %2442 = vmatprep.subr.mxu0 0.0
    %2443 = vmatpush1.msra.mxu0 0.0
    %2444 = vmatprep.subr.mxu0 0.0
    %2445 = vmatpush1.msra.mxu0 0.0
    %2446 = vmatprep.mubr.f32.mxu0 0.0
    %2447 = vmatmul.mubr.f32.gmra.mrb[0].mxu0 %v2380
    %v2448 = vpop.f32.mrb[0].mxu0
    %v2449 = vadd.f32 0.0, %v2448
    %v2450 = vpop.f32.mrb[0].mxu0
    %2451 = vdwg.mxu0
    %v2453 = vsel %vm1805, %v2378, 0
    %2455 = vmatprep.subr.mxu0 0.0
    %2456 = vmatpush1.msra.mxu0 %v1619
    %2457 = vmatprep.subr.mxu0 0.0
    %2458 = vmatpush1.msra.mxu0 %v1885
    %2459 = vmatprep.subr.mxu0 0.0
    %2460 = vmatpush1.msra.mxu0 0.0
    %2461 = vmatprep.subr.mxu0 0.0
    %2462 = vmatpush1.msra.mxu0 0.0
    %2463 = vmatprep.subr.mxu0 0.0
    %2464 = vmatpush1.msra.mxu0 0.0
    %2465 = vmatprep.subr.mxu0 0.0
    %2466 = vmatpush1.msra.mxu0 0.0
    %2467 = vmatprep.subr.mxu0 0.0
    %2468 = vmatpush1.msra.mxu0 0.0
    %2469 = vmatprep.subr.mxu0 0.0
    %2470 = vmatpush1.msra.mxu0 0.0
    %2471 = vmatprep.subr.mxu0 0.0
    %2472 = vmatpush1.msra.mxu0 0.0
    %2473 = vmatprep.subr.mxu0 0.0
    %2474 = vmatpush1.msra.mxu0 0.0
    %2475 = vmatprep.subr.mxu0 0.0
    %2476 = vmatpush1.msra.mxu0 0.0
    %2477 = vmatprep.subr.mxu0 0.0
    %2478 = vmatpush1.msra.mxu0 0.0
    %2479 = vmatprep.subr.mxu0 0.0
    %2480 = vmatpush1.msra.mxu0 0.0
    %2481 = vmatprep.subr.mxu0 0.0
    %2482 = vmatpush1.msra.mxu0 0.0
    %2483 = vmatprep.subr.mxu0 0.0
    %2484 = vmatpush1.msra.mxu0 0.0
    %2485 = vmatprep.subr.mxu0 0.0
    %2486 = vmatpush1.msra.mxu0 0.0
    %2487 = vmatprep.subr.mxu0 0.0
    %2488 = vmatpush1.msra.mxu0 0.0
    %2489 = vmatprep.subr.mxu0 0.0
    %2490 = vmatpush1.msra.mxu0 0.0
    %2491 = vmatprep.subr.mxu0 0.0
    %2492 = vmatpush1.msra.mxu0 0.0
    %2493 = vmatprep.subr.mxu0 0.0
    %2494 = vmatpush1.msra.mxu0 0.0
    %2495 = vmatprep.subr.mxu0 0.0
    %2496 = vmatpush1.msra.mxu0 0.0
    %2497 = vmatprep.subr.mxu0 0.0
    %2498 = vmatpush1.msra.mxu0 0.0
    %2499 = vmatprep.subr.mxu0 0.0
    %2500 = vmatpush1.msra.mxu0 0.0
    %2501 = vmatprep.subr.mxu0 0.0
    %2502 = vmatpush1.msra.mxu0 0.0
    %2503 = vmatprep.subr.mxu0 0.0
    %2504 = vmatpush1.msra.mxu0 0.0
    %2505 = vmatprep.subr.mxu0 0.0
    %2506 = vmatpush1.msra.mxu0 0.0
    %2507 = vmatprep.subr.mxu0 0.0
    %2508 = vmatpush1.msra.mxu0 0.0
    %2509 = vmatprep.subr.mxu0 0.0
    %2510 = vmatpush1.msra.mxu0 0.0
    %2511 = vmatprep.subr.mxu0 0.0
    %2512 = vmatpush1.msra.mxu0 0.0
    %2513 = vmatprep.subr.mxu0 0.0
    %2514 = vmatpush1.msra.mxu0 0.0
    %2515 = vmatprep.subr.mxu0 0.0
    %2516 = vmatpush1.msra.mxu0 0.0
    %2517 = vmatprep.subr.mxu0 0.0
    %2518 = vmatpush1.msra.mxu0 0.0
    %2519 = vmatprep.mubr.f32.mxu0 0.0
    %2520 = vmatmul.mubr.f32.gmra.mrb[0].mxu0 %v2453
    %v2521 = vpop.f32.mrb[0].mxu0
    %v2522 = vadd.f32 0.0, %v2521
    %v2523 = vpop.f32.mrb[0].mxu0
    %2524 = vdwg.mxu0
    %v2527 = vrot.slane %v2522, 7
    %v2528 = vsel %vm1960, %v2527, %v2449
    %2529 = vrot.lane.b32.xlu0 %v2528, 32
    %v2530 = vpop.permute.xlu0 %2529
    %v2532 = vsel %vm168, %v2178, %v2530
    %v2533 = vsel %vm1968, %v2532, %v2071
    %v2535 = vsel %vm1970, %v2533, 0
    %2537 = vmatprep.subr.mxu0 %v39
    %2538 = vmatpush1.msra.mxu0 %v38
    %2539 = vmatprep.subr.mxu0 %v41
    %2540 = vmatpush1.msra.mxu0 %v40
    %2541 = vmatprep.subr.mxu0 %v43
    %2542 = vmatpush1.msra.mxu0 %v42
    %2543 = vmatprep.subr.mxu0 %v45
    %2544 = vmatpush1.msra.mxu0 %v44
    %2545 = vmatprep.subr.mxu0 %v47
    %2546 = vmatpush1.msra.mxu0 %v46
    %2547 = vmatprep.subr.mxu0 %v49
    %2548 = vmatpush1.msra.mxu0 %v48
    %2549 = vmatprep.subr.mxu0 %v51
    %2550 = vmatpush1.msra.mxu0 %v50
    %2551 = vmatprep.subr.mxu0 %v53
    %2552 = vmatpush1.msra.mxu0 %v52
    %2553 = vmatprep.subr.mxu0 %v55
    %2554 = vmatpush1.msra.mxu0 %v54
    %2555 = vmatprep.subr.mxu0 %v57
    %2556 = vmatpush1.msra.mxu0 %v56
    %2557 = vmatprep.subr.mxu0 %v59
    %2558 = vmatpush1.msra.mxu0 %v58
    %2559 = vmatprep.subr.mxu0 %v61
    %2560 = vmatpush1.msra.mxu0 %v60
    %2561 = vmatprep.subr.mxu0 0.0
    %2562 = vmatpush1.msra.mxu0 0.0
    %2563 = vmatprep.subr.mxu0 0.0
    %2564 = vmatpush1.msra.mxu0 0.0
    %2565 = vmatprep.subr.mxu0 0.0
    %2566 = vmatpush1.msra.mxu0 0.0
    %2567 = vmatprep.subr.mxu0 0.0
    %2568 = vmatpush1.msra.mxu0 0.0
    %2569 = vmatprep.subr.mxu0 0.0
    %2570 = vmatpush1.msra.mxu0 0.0
    %2571 = vmatprep.subr.mxu0 0.0
    %2572 = vmatpush1.msra.mxu0 0.0
    %2573 = vmatprep.subr.mxu0 0.0
    %2574 = vmatpush1.msra.mxu0 0.0
    %2575 = vmatprep.subr.mxu0 0.0
    %2576 = vmatpush1.msra.mxu0 0.0
    %2577 = vmatprep.subr.mxu0 0.0
    %2578 = vmatpush1.msra.mxu0 0.0
    %2579 = vmatprep.subr.mxu0 0.0
    %2580 = vmatpush1.msra.mxu0 0.0
    %2581 = vmatprep.subr.mxu0 0.0
    %2582 = vmatpush1.msra.mxu0 0.0
    %2583 = vmatprep.subr.mxu0 0.0
    %2584 = vmatpush1.msra.mxu0 0.0
    %2585 = vmatprep.subr.mxu0 0.0
    %2586 = vmatpush1.msra.mxu0 0.0
    %2587 = vmatprep.subr.mxu0 0.0
    %2588 = vmatpush1.msra.mxu0 0.0
    %2589 = vmatprep.subr.mxu0 0.0
    %2590 = vmatpush1.msra.mxu0 0.0
    %2591 = vmatprep.subr.mxu0 0.0
    %2592 = vmatpush1.msra.mxu0 0.0
    %2593 = vmatprep.subr.mxu0 0.0
    %2594 = vmatpush1.msra.mxu0 0.0
    %2595 = vmatprep.subr.mxu0 0.0
    %2596 = vmatpush1.msra.mxu0 0.0
    %2597 = vmatprep.subr.mxu0 0.0
    %2598 = vmatpush1.msra.mxu0 0.0
    %2599 = vmatprep.subr.mxu0 0.0
    %2600 = vmatpush1.msra.mxu0 0.0
    %2601 = vmatprep.mubr.f32.mxu0 0.0
    %2602 = vmatmul.mubr.f32.gmra.mrb[0].mxu0 %v2535
    %v2603 = vpop.f32.mrb[0].mxu0
    %v2604 = vadd.f32 0.0, %v2603
    %v2605 = vpop.f32.mrb[0].mxu0
    %v2606 = vadd.f32 0.0, %v2605
    %2607 = vdwg.mxu0
    %v2608 = vxor.u32 %v2604, 2147483648
    %v2609 = vmul.f32 %v2608, 1.442695
    %v2610 = vpow.pop %v2609
    %v2611 = vadd.f32 %v2610, 1.0
    %v2612 = vrcp.pop %v2611
    %v2613 = vmul.f32 1.0, %v2612
    %v2614 = vtanh.pop %v2604
    %v2615 = vmul.f32 %v2613, %v2065
    %2617 = vrot.lane.b32.xlu0 %v2614, 32
    %v2618 = vpop.permute.xlu0 %2617
    %v2620 = vmul.f32 %v2613, %v2618
    %2622 = vrot.lane.b32.xlu0 %v2620, 32
    %v2623 = vpop.permute.xlu0 %2622
    %v2625 = vadd.f32 %v2615, %v2623
    %v2626 = vtanh.pop %v2625
    %2628 = vrot.lane.b32.xlu0 %v2626, 32
    %v2629 = vpop.permute.xlu0 %2628
    %v2631 = vmul.f32 %v2613, %v2629
    %2633 = vrot.lane.b32.xlu0 %v2631, 64
    %v2634 = vpop.permute.xlu0 %2633
    %v2635 = vsel %vm168, %v2634, 0
    %2637 = vmatprep.subr.mxu0 0.0
    %2638 = vmatpush1.msra.mxu0 %v62
    %2639 = vmatprep.subr.mxu0 0.0
    %2640 = vmatpush1.msra.mxu0 %v63
    %2641 = vmatprep.subr.mxu0 0.0
    %2642 = vmatpush1.msra.mxu0 %v64
    %2643 = vmatprep.subr.mxu0 0.0
    %2644 = vmatpush1.msra.mxu0 %v65
    %2645 = vmatprep.subr.mxu0 0.0
    %2646 = vmatpush1.msra.mxu0 0.0
    %2647 = vmatprep.subr.mxu0 0.0
    %2648 = vmatpush1.msra.mxu0 0.0
    %2649 = vmatprep.subr.mxu0 0.0
    %2650 = vmatpush1.msra.mxu0 0.0
    %2651 = vmatprep.subr.mxu0 0.0
    %2652 = vmatpush1.msra.mxu0 0.0
    %2653 = vmatprep.subr.mxu0 0.0
    %2654 = vmatpush1.msra.mxu0 0.0
    %2655 = vmatprep.subr.mxu0 0.0
    %2656 = vmatpush1.msra.mxu0 0.0
    %2657 = vmatprep.subr.mxu0 0.0
    %2658 = vmatpush1.msra.mxu0 0.0
    %2659 = vmatprep.subr.mxu0 0.0
    %2660 = vmatpush1.msra.mxu0 0.0
    %2661 = vmatprep.subr.mxu0 0.0
    %2662 = vmatpush1.msra.mxu0 0.0
    %2663 = vmatprep.subr.mxu0 0.0
    %2664 = vmatpush1.msra.mxu0 0.0
    %2665 = vmatprep.subr.mxu0 0.0
    %2666 = vmatpush1.msra.mxu0 0.0
    %2667 = vmatprep.subr.mxu0 0.0
    %2668 = vmatpush1.msra.mxu0 0.0
    %2669 = vmatprep.subr.mxu0 0.0
    %2670 = vmatpush1.msra.mxu0 0.0
    %2671 = vmatprep.subr.mxu0 0.0
    %2672 = vmatpush1.msra.mxu0 0.0
    %2673 = vmatprep.subr.mxu0 0.0
    %2674 = vmatpush1.msra.mxu0 0.0
    %2675 = vmatprep.subr.mxu0 0.0
    %2676 = vmatpush1.msra.mxu0 0.0
    %2677 = vmatprep.subr.mxu0 0.0
    %2678 = vmatpush1.msra.mxu0 0.0
    %2679 = vmatprep.subr.mxu0 0.0
    %2680 = vmatpush1.msra.mxu0 0.0
    %2681 = vmatprep.subr.mxu0 0.0
    %2682 = vmatpush1.msra.mxu0 0.0
    %2683 = vmatprep.subr.mxu0 0.0
    %2684 = vmatpush1.msra.mxu0 0.0
    %2685 = vmatprep.subr.mxu0 0.0
    %2686 = vmatpush1.msra.mxu0 0.0
    %2687 = vmatprep.subr.mxu0 0.0
    %2688 = vmatpush1.msra.mxu0 0.0
    %2689 = vmatprep.subr.mxu0 0.0
    %2690 = vmatpush1.msra.mxu0 0.0
    %2691 = vmatprep.subr.mxu0 0.0
    %2692 = vmatpush1.msra.mxu0 0.0
    %2693 = vmatprep.subr.mxu0 0.0
    %2694 = vmatpush1.msra.mxu0 0.0
    %2695 = vmatprep.subr.mxu0 0.0
    %2696 = vmatpush1.msra.mxu0 0.0
    %2697 = vmatprep.subr.mxu0 0.0
    %2698 = vmatpush1.msra.mxu0 0.0
    %2699 = vmatprep.subr.mxu0 0.0
    %2700 = vmatpush1.msra.mxu0 0.0
    %2701 = vmatprep.mubr.f32.mxu0 0.0
    %2702 = vmatmul.mubr.f32.gmra.mrb[0].mxu0 %v2635
    %v2703 = vpop.f32.mrb[0].mxu0
    %v2704 = vadd.f32 0.0, %v2703
    %v2705 = vpop.f32.mrb[0].mxu0
    %2706 = vdwg.mxu0
    %v2707 = vadd.f32 %v2606, %v2704
    %2708 = vst.msk [vmem:[#allocation5 + $0x4] sm:$0x3] %vm1621, %v2707
    %v2709 = vsel %vm1621, %v2707, -inf
    %2710 = vmax.xlane.f32.xlu0 %v2709
    %v2711 = vpop.xlane.xlu0 %2710
    %vm2712 = vcmp.eq.f32.partialorder %v2707, %v2711
    %v2713 = vsel %vm2712, %v1624, 32
    %v2714 = vsel %vm1621, %v2713, 2147483647
    %v2715 = vand.u32 %v2714, 65535
    %v2716 = vshra.s32 %v2714, 16
    %v2717 = vcvt.s32.f32 %v2715
    %v2718 = vcvt.s32.f32 %v2716
    %2719 = vmin.xlane.f32.xlu0 %v2718
    %v2720 = vpop.xlane.xlu0 %2719
    %vm2721 = vcmp.eq.f32.partialorder %v2718, %v2720
    %v2722 = vsel %vm2721, %v2717, inf
    %2723 = vmin.xlane.f32.xlu0 %v2722
    %v2724 = vpop.xlane.xlu0 %2723
    %v2725 = vcvt.f32.s32 %v2724
    %v2726 = vcvt.f32.s32 %v2720
    %v2727 = vshll.u32 %v2726, 16
    %v2728 = vadd.s32 %v2727, %v2725
    %vm2729 = vcmp.eq.s32.totalorder %v1624, %v2728
    %v2730 = vsel %vm2729, 1, 0
    %v2731 = vcvt.s32.f32 %v2730
    %v2732 = vld [vmem:[%s2 + $0x4] sm:$0x3]
    %s2733 = sld [smem:[#allocation4 + $0x2]]
    %p2734 = scmp.eq.s32.totalorder %s2733, 1
    %s2735 = scalar_select %p2734, 1, 0
    %v2736 = vstv %s2735
    %vm2737 = vcmp.eq.s32.totalorder %v2736, 1
    %v2738 = vsel %vm2737, %v2732, %v2731
    %v2740 = vunpack.c.l.s4 1966171168
    %v2741 = vunpack.c.0.s8 %v2740
    %v2742 = vlaneseq
    %v2743 = vshrl.u32 %v2742, 7
    %v2744 = vsub.s32 %v2741, %v2743
    %v2745 = vrot.slane %v2631, %v2744
    %v2746 = vcombine.high %v2745, %v2745
    %v2748 = vunpack.c.l.s4 1966171168
    %v2749 = vunpack.c.0.s8 %v2748
    %v2750 = vlaneseq
    %v2751 = vshrl.u32 %v2750, 7
    %v2752 = vsub.s32 %v2749, %v2751
    %v2753 = vrot.slane %v2745, %v2752
    %v2755 = vunpack.c.l.s4 1966171168
    %v2756 = vunpack.c.0.s8 %v2755
    %v2757 = vlaneseq
    %v2758 = vshrl.u32 %v2757, 7
    %v2759 = vsub.s32 %v2756, %v2758
    %v2760 = vrot.slane %v2746, %v2759
    %v2761 = vlaneseq
    %v2762 = vshrl.u32 %v2761, 7
    %v2763 = vsub.s32 0, %v2762
    %v2764 = vrot.slane %v2753, %v2763
    %2765 = vrot.lane.b32.xlu0 %v2764, 64
    %v2766 = vpop.permute.xlu0 %2765
    %v2767 = vsel %vm168, %v2766, 0
    %2769 = vmatprep.subr.mxu0 0.0
    %2770 = vmatpush1.xpose.msra.mxu0 %v1629
    %2771 = vmatprep.subr.mxu0 0.0
    %2772 = vmatpush1.xpose.msra.mxu0 %v1632
    %2773 = vmatprep.subr.mxu0 0.0
    %2774 = vmatpush1.xpose.msra.mxu0 0.0
    %2775 = vmatprep.subr.mxu0 0.0
    %2776 = vmatpush1.xpose.msra.mxu0 0.0
    %2777 = vmatprep.subr.mxu0 0.0
    %2778 = vmatpush1.xpose.msra.mxu0 0.0
    %2779 = vmatprep.subr.mxu0 0.0
    %2780 = vmatpush1.xpose.msra.mxu0 0.0
    %2781 = vmatprep.subr.mxu0 0.0
    %2782 = vmatpush1.xpose.msra.mxu0 0.0
    %2783 = vmatprep.subr.mxu0 0.0
    %2784 = vmatpush1.xpose.msra.mxu0 0.0
    %2785 = vmatprep.subr.mxu0 0.0
    %2786 = vmatpush1.xpose.msra.mxu0 0.0
    %2787 = vmatprep.subr.mxu0 0.0
    %2788 = vmatpush1.xpose.msra.mxu0 0.0
    %2789 = vmatprep.subr.mxu0 0.0
    %2790 = vmatpush1.xpose.msra.mxu0 0.0
    %2791 = vmatprep.subr.mxu0 0.0
    %2792 = vmatpush1.xpose.msra.mxu0 0.0
    %2793 = vmatprep.subr.mxu0 0.0
    %2794 = vmatpush1.xpose.msra.mxu0 0.0
    %2795 = vmatprep.subr.mxu0 0.0
    %2796 = vmatpush1.xpose.msra.mxu0 0.0
    %2797 = vmatprep.subr.mxu0 0.0
    %2798 = vmatpush1.xpose.msra.mxu0 0.0
    %2799 = vmatprep.subr.mxu0 0.0
    %2800 = vmatpush1.xpose.msra.mxu0 0.0
    %2801 = vmatprep.subr.mxu0 0.0
    %2802 = vmatpush1.xpose.msra.mxu0 0.0
    %2803 = vmatprep.subr.mxu0 0.0
    %2804 = vmatpush1.xpose.msra.mxu0 0.0
    %2805 = vmatprep.subr.mxu0 0.0
    %2806 = vmatpush1.xpose.msra.mxu0 0.0
    %2807 = vmatprep.subr.mxu0 0.0
    %2808 = vmatpush1.xpose.msra.mxu0 0.0
    %2809 = vmatprep.subr.mxu0 0.0
    %2810 = vmatpush1.xpose.msra.mxu0 0.0
    %2811 = vmatprep.subr.mxu0 0.0
    %2812 = vmatpush1.xpose.msra.mxu0 0.0
    %2813 = vmatprep.subr.mxu0 0.0
    %2814 = vmatpush1.xpose.msra.mxu0 0.0
    %2815 = vmatprep.subr.mxu0 0.0
    %2816 = vmatpush1.xpose.msra.mxu0 0.0
    %2817 = vmatprep.subr.mxu0 0.0
    %2818 = vmatpush1.xpose.msra.mxu0 0.0
    %2819 = vmatprep.subr.mxu0 0.0
    %2820 = vmatpush1.xpose.msra.mxu0 0.0
    %2821 = vmatprep.subr.mxu0 0.0
    %2822 = vmatpush1.xpose.msra.mxu0 0.0
    %2823 = vmatprep.subr.mxu0 0.0
    %2824 = vmatpush1.xpose.msra.mxu0 0.0
    %2825 = vmatprep.subr.mxu0 0.0
    %2826 = vmatpush1.xpose.msra.mxu0 0.0
    %2827 = vmatprep.subr.mxu0 0.0
    %2828 = vmatpush1.xpose.msra.mxu0 0.0
    %2829 = vmatprep.subr.mxu0 0.0
    %2830 = vmatpush1.xpose.msra.mxu0 0.0
    %2831 = vmatprep.subr.mxu0 0.0
    %2832 = vmatpush1.xpose.msra.mxu0 0.0
    %2833 = vmatprep.mubr.f32.mxu0 0.0
    %2834 = vmatmul.mubr.f32.gmra.mrb[0].mxu0 %v2767
    %v2835 = vpop.f32.mrb[0].mxu0
    %v2836 = vadd.f32 0.0, %v2835
    %v2837 = vpop.f32.mrb[0].mxu0
    %2838 = vdwg.mxu0
    %v2839 = vlaneseq
    %v2840 = vshrl.u32 %v2839, 7
    %v2841 = vsub.s32 0, %v2840
    %v2842 = vrot.slane %v2760, %v2841
    %2843 = vrot.lane.b32.xlu0 %v2842, 64
    %v2844 = vpop.permute.xlu0 %2843
    %v2845 = vsel %vm168, %v2844, 0
    %2847 = vmatprep.subr.mxu0 0.0
    %2848 = vmatpush1.xpose.msra.mxu0 %v1707
    %2849 = vmatprep.subr.mxu0 0.0
    %2850 = vmatpush1.xpose.msra.mxu0 %v1710
    %2851 = vmatprep.subr.mxu0 0.0
    %2852 = vmatpush1.xpose.msra.mxu0 0.0
    %2853 = vmatprep.subr.mxu0 0.0
    %2854 = vmatpush1.xpose.msra.mxu0 0.0
    %2855 = vmatprep.subr.mxu0 0.0
    %2856 = vmatpush1.xpose.msra.mxu0 0.0
    %2857 = vmatprep.subr.mxu0 0.0
    %2858 = vmatpush1.xpose.msra.mxu0 0.0
    %2859 = vmatprep.subr.mxu0 0.0
    %2860 = vmatpush1.xpose.msra.mxu0 0.0
    %2861 = vmatprep.subr.mxu0 0.0
    %2862 = vmatpush1.xpose.msra.mxu0 0.0
    %2863 = vmatprep.subr.mxu0 0.0
    %2864 = vmatpush1.xpose.msra.mxu0 0.0
    %2865 = vmatprep.subr.mxu0 0.0
    %2866 = vmatpush1.xpose.msra.mxu0 0.0
    %2867 = vmatprep.subr.mxu0 0.0
    %2868 = vmatpush1.xpose.msra.mxu0 0.0
    %2869 = vmatprep.subr.mxu0 0.0
    %2870 = vmatpush1.xpose.msra.mxu0 0.0
    %2871 = vmatprep.subr.mxu0 0.0
    %2872 = vmatpush1.xpose.msra.mxu0 0.0
    %2873 = vmatprep.subr.mxu0 0.0
    %2874 = vmatpush1.xpose.msra.mxu0 0.0
    %2875 = vmatprep.subr.mxu0 0.0
    %2876 = vmatpush1.xpose.msra.mxu0 0.0
    %2877 = vmatprep.subr.mxu0 0.0
    %2878 = vmatpush1.xpose.msra.mxu0 0.0
    %2879 = vmatprep.subr.mxu0 0.0
    %2880 = vmatpush1.xpose.msra.mxu0 0.0
    %2881 = vmatprep.subr.mxu0 0.0
    %2882 = vmatpush1.xpose.msra.mxu0 0.0
    %2883 = vmatprep.subr.mxu0 0.0
    %2884 = vmatpush1.xpose.msra.mxu0 0.0
    %2885 = vmatprep.subr.mxu0 0.0
    %2886 = vmatpush1.xpose.msra.mxu0 0.0
    %2887 = vmatprep.subr.mxu0 0.0
    %2888 = vmatpush1.xpose.msra.mxu0 0.0
    %2889 = vmatprep.subr.mxu0 0.0
    %2890 = vmatpush1.xpose.msra.mxu0 0.0
    %2891 = vmatprep.subr.mxu0 0.0
    %2892 = vmatpush1.xpose.msra.mxu0 0.0
    %2893 = vmatprep.subr.mxu0 0.0
    %2894 = vmatpush1.xpose.msra.mxu0 0.0
    %2895 = vmatprep.subr.mxu0 0.0
    %2896 = vmatpush1.xpose.msra.mxu0 0.0
    %2897 = vmatprep.subr.mxu0 0.0
    %2898 = vmatpush1.xpose.msra.mxu0 0.0
    %2899 = vmatprep.subr.mxu0 0.0
    %2900 = vmatpush1.xpose.msra.mxu0 0.0
    %2901 = vmatprep.subr.mxu0 0.0
    %2902 = vmatpush1.xpose.msra.mxu0 0.0
    %2903 = vmatprep.subr.mxu0 0.0
    %2904 = vmatpush1.xpose.msra.mxu0 0.0
    %2905 = vmatprep.subr.mxu0 0.0
    %2906 = vmatpush1.xpose.msra.mxu0 0.0
    %2907 = vmatprep.subr.mxu0 0.0
    %2908 = vmatpush1.xpose.msra.mxu0 0.0
    %2909 = vmatprep.subr.mxu0 0.0
    %2910 = vmatpush1.xpose.msra.mxu0 0.0
    %2911 = vmatprep.mubr.f32.mxu0 0.0
    %2912 = vmatmul.mubr.f32.gmra.mrb[0].mxu0 %v2845
    %v2913 = vpop.f32.mrb[0].mxu0
    %v2914 = vadd.f32 0.0, %v2913
    %v2915 = vpop.f32.mrb[0].mxu0
    %2916 = vdwg.mxu0
    %v2917 = vsel %vm1782, %v2836, -inf
    %2918 = vmax.xlane.f32.xlu0 %v2917
    %v2919 = vpop.xlane.xlu0 %2918
    %v2920 = vsel %vm1782, %v2914, -inf
    %2921 = vmax.xlane.f32.xlu0 %v2920
    %v2922 = vpop.xlane.xlu0 %2921
    %v2923 = vsub.f32 %v2836, %v2919
    %v2924 = vsub.f32 %v2914, %v2922
    %v2925 = vmul.f32 %v2923, 1.442695
    %v2926 = vpow.pop %v2925
    %v2927 = vmul.f32 %v2924, 1.442695
    %v2928 = vpow.pop %v2927
    %v2929 = vsel %vm1782, %v2926, 0.0
    %2930 = vadd.xlane.f32.xlu0 %v2929
    %v2931 = vpop.xlane.xlu0 %2930
    %v2932 = vsel %vm1782, %v2928, 0.0
    %2933 = vadd.xlane.f32.xlu0 %v2932
    %v2934 = vpop.xlane.xlu0 %2933
    %v2935 = vrcp.pop %v2931
    %v2936 = vmul.f32 %v2926, %v2935
    %v2937 = vrcp.pop %v2934
    %v2938 = vmul.f32 %v2928, %v2937
    %v2940 = vsel %vm1805, %v2936, 0
    %2942 = vmatprep.subr.mxu0 0.0
    %2943 = vmatpush1.msra.mxu0 %v1617
    %2944 = vmatprep.subr.mxu0 0.0
    %2945 = vmatpush1.msra.mxu0 %v1810
    %2946 = vmatprep.subr.mxu0 0.0
    %2947 = vmatpush1.msra.mxu0 0.0
    %2948 = vmatprep.subr.mxu0 0.0
    %2949 = vmatpush1.msra.mxu0 0.0
    %2950 = vmatprep.subr.mxu0 0.0
    %2951 = vmatpush1.msra.mxu0 0.0
    %2952 = vmatprep.subr.mxu0 0.0
    %2953 = vmatpush1.msra.mxu0 0.0
    %2954 = vmatprep.subr.mxu0 0.0
    %2955 = vmatpush1.msra.mxu0 0.0
    %2956 = vmatprep.subr.mxu0 0.0
    %2957 = vmatpush1.msra.mxu0 0.0
    %2958 = vmatprep.subr.mxu0 0.0
    %2959 = vmatpush1.msra.mxu0 0.0
    %2960 = vmatprep.subr.mxu0 0.0
    %2961 = vmatpush1.msra.mxu0 0.0
    %2962 = vmatprep.subr.mxu0 0.0
    %2963 = vmatpush1.msra.mxu0 0.0
    %2964 = vmatprep.subr.mxu0 0.0
    %2965 = vmatpush1.msra.mxu0 0.0
    %2966 = vmatprep.subr.mxu0 0.0
    %2967 = vmatpush1.msra.mxu0 0.0
    %2968 = vmatprep.subr.mxu0 0.0
    %2969 = vmatpush1.msra.mxu0 0.0
    %2970 = vmatprep.subr.mxu0 0.0
    %2971 = vmatpush1.msra.mxu0 0.0
    %2972 = vmatprep.subr.mxu0 0.0
    %2973 = vmatpush1.msra.mxu0 0.0
    %2974 = vmatprep.subr.mxu0 0.0
    %2975 = vmatpush1.msra.mxu0 0.0
    %2976 = vmatprep.subr.mxu0 0.0
    %2977 = vmatpush1.msra.mxu0 0.0
    %2978 = vmatprep.subr.mxu0 0.0
    %2979 = vmatpush1.msra.mxu0 0.0
    %2980 = vmatprep.subr.mxu0 0.0
    %2981 = vmatpush1.msra.mxu0 0.0
    %2982 = vmatprep.subr.mxu0 0.0
    %2983 = vmatpush1.msra.mxu0 0.0
    %2984 = vmatprep.subr.mxu0 0.0
    %2985 = vmatpush1.msra.mxu0 0.0
    %2986 = vmatprep.subr.mxu0 0.0
    %2987 = vmatpush1.msra.mxu0 0.0
    %2988 = vmatprep.subr.mxu0 0.0
    %2989 = vmatpush1.msra.mxu0 0.0
    %2990 = vmatprep.subr.mxu0 0.0
    %2991 = vmatpush1.msra.mxu0 0.0
    %2992 = vmatprep.subr.mxu0 0.0
    %2993 = vmatpush1.msra.mxu0 0.0
    %2994 = vmatprep.subr.mxu0 0.0
    %2995 = vmatpush1.msra.mxu0 0.0
    %2996 = vmatprep.subr.mxu0 0.0
    %2997 = vmatpush1.msra.mxu0 0.0
    %2998 = vmatprep.subr.mxu0 0.0
    %2999 = vmatpush1.msra.mxu0 0.0
    %3000 = vmatprep.subr.mxu0 0.0
    %3001 = vmatpush1.msra.mxu0 0.0
    %3002 = vmatprep.subr.mxu0 0.0
    %3003 = vmatpush1.msra.mxu0 0.0
    %3004 = vmatprep.subr.mxu0 0.0
    %3005 = vmatpush1.msra.mxu0 0.0
    %3006 = vmatprep.mubr.f32.mxu0 0.0
    %3007 = vmatmul.mubr.f32.gmra.mrb[0].mxu0 %v2940
    %v3008 = vpop.f32.mrb[0].mxu0
    %v3009 = vadd.f32 0.0, %v3008
    %v3010 = vpop.f32.mrb[0].mxu0
    %3011 = vdwg.mxu0
    %v3013 = vsel %vm1805, %v2938, 0
    %3015 = vmatprep.subr.mxu0 0.0
    %3016 = vmatpush1.msra.mxu0 %v1619
    %3017 = vmatprep.subr.mxu0 0.0
    %3018 = vmatpush1.msra.mxu0 %v1885
    %3019 = vmatprep.subr.mxu0 0.0
    %3020 = vmatpush1.msra.mxu0 0.0
    %3021 = vmatprep.subr.mxu0 0.0
    %3022 = vmatpush1.msra.mxu0 0.0
    %3023 = vmatprep.subr.mxu0 0.0
    %3024 = vmatpush1.msra.mxu0 0.0
    %3025 = vmatprep.subr.mxu0 0.0
    %3026 = vmatpush1.msra.mxu0 0.0
    %3027 = vmatprep.subr.mxu0 0.0
    %3028 = vmatpush1.msra.mxu0 0.0
    %3029 = vmatprep.subr.mxu0 0.0
    %3030 = vmatpush1.msra.mxu0 0.0
    %3031 = vmatprep.subr.mxu0 0.0
    %3032 = vmatpush1.msra.mxu0 0.0
    %3033 = vmatprep.subr.mxu0 0.0
    %3034 = vmatpush1.msra.mxu0 0.0
    %3035 = vmatprep.subr.mxu0 0.0
    %3036 = vmatpush1.msra.mxu0 0.0
    %3037 = vmatprep.subr.mxu0 0.0
    %3038 = vmatpush1.msra.mxu0 0.0
    %3039 = vmatprep.subr.mxu0 0.0
    %3040 = vmatpush1.msra.mxu0 0.0
    %3041 = vmatprep.subr.mxu0 0.0
    %3042 = vmatpush1.msra.mxu0 0.0
    %3043 = vmatprep.subr.mxu0 0.0
    %3044 = vmatpush1.msra.mxu0 0.0
    %3045 = vmatprep.subr.mxu0 0.0
    %3046 = vmatpush1.msra.mxu0 0.0
    %3047 = vmatprep.subr.mxu0 0.0
    %3048 = vmatpush1.msra.mxu0 0.0
    %3049 = vmatprep.subr.mxu0 0.0
    %3050 = vmatpush1.msra.mxu0 0.0
    %3051 = vmatprep.subr.mxu0 0.0
    %3052 = vmatpush1.msra.mxu0 0.0
    %3053 = vmatprep.subr.mxu0 0.0
    %3054 = vmatpush1.msra.mxu0 0.0
    %3055 = vmatprep.subr.mxu0 0.0
    %3056 = vmatpush1.msra.mxu0 0.0
    %3057 = vmatprep.subr.mxu0 0.0
    %3058 = vmatpush1.msra.mxu0 0.0
    %3059 = vmatprep.subr.mxu0 0.0
    %3060 = vmatpush1.msra.mxu0 0.0
    %3061 = vmatprep.subr.mxu0 0.0
    %3062 = vmatpush1.msra.mxu0 0.0
    %3063 = vmatprep.subr.mxu0 0.0
    %3064 = vmatpush1.msra.mxu0 0.0
    %3065 = vmatprep.subr.mxu0 0.0
    %3066 = vmatpush1.msra.mxu0 0.0
    %3067 = vmatprep.subr.mxu0 0.0
    %3068 = vmatpush1.msra.mxu0 0.0
    %3069 = vmatprep.subr.mxu0 0.0
    %3070 = vmatpush1.msra.mxu0 0.0
    %3071 = vmatprep.subr.mxu0 0.0
    %3072 = vmatpush1.msra.mxu0 0.0
    %3073 = vmatprep.subr.mxu0 0.0
    %3074 = vmatpush1.msra.mxu0 0.0
    %3075 = vmatprep.subr.mxu0 0.0
    %3076 = vmatpush1.msra.mxu0 0.0
    %3077 = vmatprep.subr.mxu0 0.0
    %3078 = vmatpush1.msra.mxu0 0.0
    %3079 = vmatprep.mubr.f32.mxu0 0.0
    %3080 = vmatmul.mubr.f32.gmra.mrb[0].mxu0 %v3013
    %v3081 = vpop.f32.mrb[0].mxu0
    %v3082 = vadd.f32 0.0, %v3081
    %v3083 = vpop.f32.mrb[0].mxu0
    %3084 = vdwg.mxu0
    %v3087 = vrot.slane %v3082, 7
    %v3088 = vsel %vm1960, %v3087, %v3009
    %3089 = vrot.lane.b32.xlu0 %v3088, 32
    %v3090 = vpop.permute.xlu0 %3089
    %v3092 = vsel %vm168, %v2738, %v3090
    %v3093 = vsel %vm1968, %v3092, %v2631
    %v3095 = vsel %vm1970, %v3093, 0
    %3097 = vmatprep.subr.mxu0 %v39
    %3098 = vmatpush1.msra.mxu0 %v38
    %3099 = vmatprep.subr.mxu0 %v41
    %3100 = vmatpush1.msra.mxu0 %v40
    %3101 = vmatprep.subr.mxu0 %v43
    %3102 = vmatpush1.msra.mxu0 %v42
    %3103 = vmatprep.subr.mxu0 %v45
    %3104 = vmatpush1.msra.mxu0 %v44
    %3105 = vmatprep.subr.mxu0 %v47
    %3106 = vmatpush1.msra.mxu0 %v46
    %3107 = vmatprep.subr.mxu0 %v49
    %3108 = vmatpush1.msra.mxu0 %v48
    %3109 = vmatprep.subr.mxu0 %v51
    %3110 = vmatpush1.msra.mxu0 %v50
    %3111 = vmatprep.subr.mxu0 %v53
    %3112 = vmatpush1.msra.mxu0 %v52
    %3113 = vmatprep.subr.mxu0 %v55
    %3114 = vmatpush1.msra.mxu0 %v54
    %3115 = vmatprep.subr.mxu0 %v57
    %3116 = vmatpush1.msra.mxu0 %v56
    %3117 = vmatprep.subr.mxu0 %v59
    %3118 = vmatpush1.msra.mxu0 %v58
    %3119 = vmatprep.subr.mxu0 %v61
    %3120 = vmatpush1.msra.mxu0 %v60
    %3121 = vmatprep.subr.mxu0 0.0
    %3122 = vmatpush1.msra.mxu0 0.0
    %3123 = vmatprep.subr.mxu0 0.0
    %3124 = vmatpush1.msra.mxu0 0.0
    %3125 = vmatprep.subr.mxu0 0.0
    %3126 = vmatpush1.msra.mxu0 0.0
    %3127 = vmatprep.subr.mxu0 0.0
    %3128 = vmatpush1.msra.mxu0 0.0
    %3129 = vmatprep.subr.mxu0 0.0
    %3130 = vmatpush1.msra.mxu0 0.0
    %3131 = vmatprep.subr.mxu0 0.0
    %3132 = vmatpush1.msra.mxu0 0.0
    %3133 = vmatprep.subr.mxu0 0.0
    %3134 = vmatpush1.msra.mxu0 0.0
    %3135 = vmatprep.subr.mxu0 0.0
    %3136 = vmatpush1.msra.mxu0 0.0
    %3137 = vmatprep.subr.mxu0 0.0
    %3138 = vmatpush1.msra.mxu0 0.0
    %3139 = vmatprep.subr.mxu0 0.0
    %3140 = vmatpush1.msra.mxu0 0.0
    %3141 = vmatprep.subr.mxu0 0.0
    %3142 = vmatpush1.msra.mxu0 0.0
    %3143 = vmatprep.subr.mxu0 0.0
    %3144 = vmatpush1.msra.mxu0 0.0
    %3145 = vmatprep.subr.mxu0 0.0
    %3146 = vmatpush1.msra.mxu0 0.0
    %3147 = vmatprep.subr.mxu0 0.0
    %3148 = vmatpush1.msra.mxu0 0.0
    %3149 = vmatprep.subr.mxu0 0.0
    %3150 = vmatpush1.msra.mxu0 0.0
    %3151 = vmatprep.subr.mxu0 0.0
    %3152 = vmatpush1.msra.mxu0 0.0
    %3153 = vmatprep.subr.mxu0 0.0
    %3154 = vmatpush1.msra.mxu0 0.0
    %3155 = vmatprep.subr.mxu0 0.0
    %3156 = vmatpush1.msra.mxu0 0.0
    %3157 = vmatprep.subr.mxu0 0.0
    %3158 = vmatpush1.msra.mxu0 0.0
    %3159 = vmatprep.subr.mxu0 0.0
    %3160 = vmatpush1.msra.mxu0 0.0
    %3161 = vmatprep.mubr.f32.mxu0 0.0
    %3162 = vmatmul.mubr.f32.gmra.mrb[0].mxu0 %v3095
    %v3163 = vpop.f32.mrb[0].mxu0
    %v3164 = vadd.f32 0.0, %v3163
    %v3165 = vpop.f32.mrb[0].mxu0
    %v3166 = vadd.f32 0.0, %v3165
    %3167 = vdwg.mxu0
    %v3168 = vxor.u32 %v3164, 2147483648
    %v3169 = vmul.f32 %v3168, 1.442695
    %v3170 = vpow.pop %v3169
    %v3171 = vadd.f32 %v3170, 1.0
    %v3172 = vrcp.pop %v3171
    %v3173 = vmul.f32 1.0, %v3172
    %v3174 = vtanh.pop %v3164
    %v3175 = vmul.f32 %v3173, %v2625
    %3177 = vrot.lane.b32.xlu0 %v3174, 32
    %v3178 = vpop.permute.xlu0 %3177
    %v3180 = vmul.f32 %v3173, %v3178
    %3182 = vrot.lane.b32.xlu0 %v3180, 32
    %v3183 = vpop.permute.xlu0 %3182
    %v3185 = vadd.f32 %v3175, %v3183
    %v3186 = vtanh.pop %v3185
    %3188 = vrot.lane.b32.xlu0 %v3186, 32
    %v3189 = vpop.permute.xlu0 %3188
    %v3191 = vmul.f32 %v3173, %v3189
    %3193 = vrot.lane.b32.xlu0 %v3191, 64
    %v3194 = vpop.permute.xlu0 %3193
    %v3195 = vsel %vm168, %v3194, 0
    %3197 = vmatprep.subr.mxu0 0.0
    %3198 = vmatpush1.msra.mxu0 %v62
    %3199 = vmatprep.subr.mxu0 0.0
    %3200 = vmatpush1.msra.mxu0 %v63
    %3201 = vmatprep.subr.mxu0 0.0
    %3202 = vmatpush1.msra.mxu0 %v64
    %3203 = vmatprep.subr.mxu0 0.0
    %3204 = vmatpush1.msra.mxu0 %v65
    %3205 = vmatprep.subr.mxu0 0.0
    %3206 = vmatpush1.msra.mxu0 0.0
    %3207 = vmatprep.subr.mxu0 0.0
    %3208 = vmatpush1.msra.mxu0 0.0
    %3209 = vmatprep.subr.mxu0 0.0
    %3210 = vmatpush1.msra.mxu0 0.0
    %3211 = vmatprep.subr.mxu0 0.0
    %3212 = vmatpush1.msra.mxu0 0.0
    %3213 = vmatprep.subr.mxu0 0.0
    %3214 = vmatpush1.msra.mxu0 0.0
    %3215 = vmatprep.subr.mxu0 0.0
    %3216 = vmatpush1.msra.mxu0 0.0
    %3217 = vmatprep.subr.mxu0 0.0
    %3218 = vmatpush1.msra.mxu0 0.0
    %3219 = vmatprep.subr.mxu0 0.0
    %3220 = vmatpush1.msra.mxu0 0.0
    %3221 = vmatprep.subr.mxu0 0.0
    %3222 = vmatpush1.msra.mxu0 0.0
    %3223 = vmatprep.subr.mxu0 0.0
    %3224 = vmatpush1.msra.mxu0 0.0
    %3225 = vmatprep.subr.mxu0 0.0
    %3226 = vmatpush1.msra.mxu0 0.0
    %3227 = vmatprep.subr.mxu0 0.0
    %3228 = vmatpush1.msra.mxu0 0.0
    %3229 = vmatprep.subr.mxu0 0.0
    %3230 = vmatpush1.msra.mxu0 0.0
    %3231 = vmatprep.subr.mxu0 0.0
    %3232 = vmatpush1.msra.mxu0 0.0
    %3233 = vmatprep.subr.mxu0 0.0
    %3234 = vmatpush1.msra.mxu0 0.0
    %3235 = vmatprep.subr.mxu0 0.0
    %3236 = vmatpush1.msra.mxu0 0.0
    %3237 = vmatprep.subr.mxu0 0.0
    %3238 = vmatpush1.msra.mxu0 0.0
    %3239 = vmatprep.subr.mxu0 0.0
    %3240 = vmatpush1.msra.mxu0 0.0
    %3241 = vmatprep.subr.mxu0 0.0
    %3242 = vmatpush1.msra.mxu0 0.0
    %3243 = vmatprep.subr.mxu0 0.0
    %3244 = vmatpush1.msra.mxu0 0.0
    %3245 = vmatprep.subr.mxu0 0.0
    %3246 = vmatpush1.msra.mxu0 0.0
    %3247 = vmatprep.subr.mxu0 0.0
    %3248 = vmatpush1.msra.mxu0 0.0
    %3249 = vmatprep.subr.mxu0 0.0
    %3250 = vmatpush1.msra.mxu0 0.0
    %3251 = vmatprep.subr.mxu0 0.0
    %3252 = vmatpush1.msra.mxu0 0.0
    %3253 = vmatprep.subr.mxu0 0.0
    %3254 = vmatpush1.msra.mxu0 0.0
    %3255 = vmatprep.subr.mxu0 0.0
    %3256 = vmatpush1.msra.mxu0 0.0
    %3257 = vmatprep.subr.mxu0 0.0
    %3258 = vmatpush1.msra.mxu0 0.0
    %3259 = vmatprep.subr.mxu0 0.0
    %3260 = vmatpush1.msra.mxu0 0.0
    %3261 = vmatprep.mubr.f32.mxu0 0.0
    %3262 = vmatmul.mubr.f32.gmra.mrb[0].mxu0 %v3195
    %v3263 = vpop.f32.mrb[0].mxu0
    %v3264 = vadd.f32 0.0, %v3263
    %v3265 = vpop.f32.mrb[0].mxu0
    %3266 = vdwg.mxu0
    %v3267 = vadd.f32 %v3166, %v3264
    %3268 = vst.msk [vmem:[#allocation5 + $0x6] sm:$0x3] %vm1621, %v3267
    %v3269 = vsel %vm1621, %v3267, -inf
    %3270 = vmax.xlane.f32.xlu0 %v3269
    %v3271 = vpop.xlane.xlu0 %3270
    %vm3272 = vcmp.eq.f32.partialorder %v3267, %v3271
    %v3273 = vsel %vm3272, %v1624, 32
    %v3274 = vsel %vm1621, %v3273, 2147483647
    %v3275 = vand.u32 %v3274, 65535
    %v3276 = vshra.s32 %v3274, 16
    %v3277 = vcvt.s32.f32 %v3275
    %v3278 = vcvt.s32.f32 %v3276
    %3279 = vmin.xlane.f32.xlu0 %v3278
    %v3280 = vpop.xlane.xlu0 %3279
    %vm3281 = vcmp.eq.f32.partialorder %v3278, %v3280
    %v3282 = vsel %vm3281, %v3277, inf
    %3283 = vmin.xlane.f32.xlu0 %v3282
    %v3284 = vpop.xlane.xlu0 %3283
    %v3285 = vcvt.f32.s32 %v3284
    %v3286 = vcvt.f32.s32 %v3280
    %v3287 = vshll.u32 %v3286, 16
    %v3288 = vadd.s32 %v3287, %v3285
    %vm3289 = vcmp.eq.s32.totalorder %v1624, %v3288
    %v3290 = vsel %vm3289, 1, 0
    %v3291 = vcvt.s32.f32 %v3290
    %v3292 = vld [vmem:[%s2 + $0x6] sm:$0x3]
    %s3293 = sld [smem:[#allocation4 + $0x3]]
    %p3294 = scmp.eq.s32.totalorder %s3293, 1
    %s3295 = scalar_select %p3294, 1, 0
    %v3296 = vstv %s3295
    %vm3297 = vcmp.eq.s32.totalorder %v3296, 1
    %v3298 = vsel %vm3297, %v3292, %v3291
    %v3300 = vunpack.c.l.s4 1966171168
    %v3301 = vunpack.c.0.s8 %v3300
    %v3302 = vlaneseq
    %v3303 = vshrl.u32 %v3302, 7
    %v3304 = vsub.s32 %v3301, %v3303
    %v3305 = vrot.slane %v3191, %v3304
    %v3306 = vcombine.high %v3305, %v3305
    %v3308 = vunpack.c.l.s4 1966171168
    %v3309 = vunpack.c.0.s8 %v3308
    %v3310 = vlaneseq
    %v3311 = vshrl.u32 %v3310, 7
    %v3312 = vsub.s32 %v3309, %v3311
    %v3313 = vrot.slane %v3305, %v3312
    %v3315 = vunpack.c.l.s4 1966171168
    %v3316 = vunpack.c.0.s8 %v3315
    %v3317 = vlaneseq
    %v3318 = vshrl.u32 %v3317, 7
    %v3319 = vsub.s32 %v3316, %v3318
    %v3320 = vrot.slane %v3306, %v3319
    %v3321 = vlaneseq
    %v3322 = vshrl.u32 %v3321, 7
    %v3323 = vsub.s32 0, %v3322
    %v3324 = vrot.slane %v3313, %v3323
    %3325 = vrot.lane.b32.xlu0 %v3324, 64
    %v3326 = vpop.permute.xlu0 %3325
    %v3327 = vsel %vm168, %v3326, 0
    %3329 = vmatprep.subr.mxu0 0.0
    %3330 = vmatpush1.xpose.msra.mxu0 %v1629
    %3331 = vmatprep.subr.mxu0 0.0
    %3332 = vmatpush1.xpose.msra.mxu0 %v1632
    %3333 = vmatprep.subr.mxu0 0.0
    %3334 = vmatpush1.xpose.msra.mxu0 0.0
    %3335 = vmatprep.subr.mxu0 0.0
    %3336 = vmatpush1.xpose.msra.mxu0 0.0
    %3337 = vmatprep.subr.mxu0 0.0
    %3338 = vmatpush1.xpose.msra.mxu0 0.0
    %3339 = vmatprep.subr.mxu0 0.0
    %3340 = vmatpush1.xpose.msra.mxu0 0.0
    %3341 = vmatprep.subr.mxu0 0.0
    %3342 = vmatpush1.xpose.msra.mxu0 0.0
    %3343 = vmatprep.subr.mxu0 0.0
    %3344 = vmatpush1.xpose.msra.mxu0 0.0
    %3345 = vmatprep.subr.mxu0 0.0
    %3346 = vmatpush1.xpose.msra.mxu0 0.0
    %3347 = vmatprep.subr.mxu0 0.0
    %3348 = vmatpush1.xpose.msra.mxu0 0.0
    %3349 = vmatprep.subr.mxu0 0.0
    %3350 = vmatpush1.xpose.msra.mxu0 0.0
    %3351 = vmatprep.subr.mxu0 0.0
    %3352 = vmatpush1.xpose.msra.mxu0 0.0
    %3353 = vmatprep.subr.mxu0 0.0
    %3354 = vmatpush1.xpose.msra.mxu0 0.0
    %3355 = vmatprep.subr.mxu0 0.0
    %3356 = vmatpush1.xpose.msra.mxu0 0.0
    %3357 = vmatprep.subr.mxu0 0.0
    %3358 = vmatpush1.xpose.msra.mxu0 0.0
    %3359 = vmatprep.subr.mxu0 0.0
    %3360 = vmatpush1.xpose.msra.mxu0 0.0
    %3361 = vmatprep.subr.mxu0 0.0
    %3362 = vmatpush1.xpose.msra.mxu0 0.0
    %3363 = vmatprep.subr.mxu0 0.0
    %3364 = vmatpush1.xpose.msra.mxu0 0.0
    %3365 = vmatprep.subr.mxu0 0.0
    %3366 = vmatpush1.xpose.msra.mxu0 0.0
    %3367 = vmatprep.subr.mxu0 0.0
    %3368 = vmatpush1.xpose.msra.mxu0 0.0
    %3369 = vmatprep.subr.mxu0 0.0
    %3370 = vmatpush1.xpose.msra.mxu0 0.0
    %3371 = vmatprep.subr.mxu0 0.0
    %3372 = vmatpush1.xpose.msra.mxu0 0.0
    %3373 = vmatprep.subr.mxu0 0.0
    %3374 = vmatpush1.xpose.msra.mxu0 0.0
    %3375 = vmatprep.subr.mxu0 0.0
    %3376 = vmatpush1.xpose.msra.mxu0 0.0
    %3377 = vmatprep.subr.mxu0 0.0
    %3378 = vmatpush1.xpose.msra.mxu0 0.0
    %3379 = vmatprep.subr.mxu0 0.0
    %3380 = vmatpush1.xpose.msra.mxu0 0.0
    %3381 = vmatprep.subr.mxu0 0.0
    %3382 = vmatpush1.xpose.msra.mxu0 0.0
    %3383 = vmatprep.subr.mxu0 0.0
    %3384 = vmatpush1.xpose.msra.mxu0 0.0
    %3385 = vmatprep.subr.mxu0 0.0
    %3386 = vmatpush1.xpose.msra.mxu0 0.0
    %3387 = vmatprep.subr.mxu0 0.0
    %3388 = vmatpush1.xpose.msra.mxu0 0.0
    %3389 = vmatprep.subr.mxu0 0.0
    %3390 = vmatpush1.xpose.msra.mxu0 0.0
    %3391 = vmatprep.subr.mxu0 0.0
    %3392 = vmatpush1.xpose.msra.mxu0 0.0
    %3393 = vmatprep.mubr.f32.mxu0 0.0
    %3394 = vmatmul.mubr.f32.gmra.mrb[0].mxu0 %v3327
    %v3395 = vpop.f32.mrb[0].mxu0
    %v3396 = vadd.f32 0.0, %v3395
    %v3397 = vpop.f32.mrb[0].mxu0
    %3398 = vdwg.mxu0
    %v3399 = vlaneseq
    %v3400 = vshrl.u32 %v3399, 7
    %v3401 = vsub.s32 0, %v3400
    %v3402 = vrot.slane %v3320, %v3401
    %3403 = vrot.lane.b32.xlu0 %v3402, 64
    %v3404 = vpop.permute.xlu0 %3403
    %v3405 = vsel %vm168, %v3404, 0
    %3407 = vmatprep.subr.mxu0 0.0
    %3408 = vmatpush1.xpose.msra.mxu0 %v1707
    %3409 = vmatprep.subr.mxu0 0.0
    %3410 = vmatpush1.xpose.msra.mxu0 %v1710
    %3411 = vmatprep.subr.mxu0 0.0
    %3412 = vmatpush1.xpose.msra.mxu0 0.0
    %3413 = vmatprep.subr.mxu0 0.0
    %3414 = vmatpush1.xpose.msra.mxu0 0.0
    %3415 = vmatprep.subr.mxu0 0.0
    %3416 = vmatpush1.xpose.msra.mxu0 0.0
    %3417 = vmatprep.subr.mxu0 0.0
    %3418 = vmatpush1.xpose.msra.mxu0 0.0
    %3419 = vmatprep.subr.mxu0 0.0
    %3420 = vmatpush1.xpose.msra.mxu0 0.0
    %3421 = vmatprep.subr.mxu0 0.0
    %3422 = vmatpush1.xpose.msra.mxu0 0.0
    %3423 = vmatprep.subr.mxu0 0.0
    %3424 = vmatpush1.xpose.msra.mxu0 0.0
    %3425 = vmatprep.subr.mxu0 0.0
    %3426 = vmatpush1.xpose.msra.mxu0 0.0
    %3427 = vmatprep.subr.mxu0 0.0
    %3428 = vmatpush1.xpose.msra.mxu0 0.0
    %3429 = vmatprep.subr.mxu0 0.0
    %3430 = vmatpush1.xpose.msra.mxu0 0.0
    %3431 = vmatprep.subr.mxu0 0.0
    %3432 = vmatpush1.xpose.msra.mxu0 0.0
    %3433 = vmatprep.subr.mxu0 0.0
    %3434 = vmatpush1.xpose.msra.mxu0 0.0
    %3435 = vmatprep.subr.mxu0 0.0
    %3436 = vmatpush1.xpose.msra.mxu0 0.0
    %3437 = vmatprep.subr.mxu0 0.0
    %3438 = vmatpush1.xpose.msra.mxu0 0.0
    %3439 = vmatprep.subr.mxu0 0.0
    %3440 = vmatpush1.xpose.msra.mxu0 0.0
    %3441 = vmatprep.subr.mxu0 0.0
    %3442 = vmatpush1.xpose.msra.mxu0 0.0
    %3443 = vmatprep.subr.mxu0 0.0
    %3444 = vmatpush1.xpose.msra.mxu0 0.0
    %3445 = vmatprep.subr.mxu0 0.0
    %3446 = vmatpush1.xpose.msra.mxu0 0.0
    %3447 = vmatprep.subr.mxu0 0.0
    %3448 = vmatpush1.xpose.msra.mxu0 0.0
    %3449 = vmatprep.subr.mxu0 0.0
    %3450 = vmatpush1.xpose.msra.mxu0 0.0
    %3451 = vmatprep.subr.mxu0 0.0
    %3452 = vmatpush1.xpose.msra.mxu0 0.0
    %3453 = vmatprep.subr.mxu0 0.0
    %3454 = vmatpush1.xpose.msra.mxu0 0.0
    %3455 = vmatprep.subr.mxu0 0.0
    %3456 = vmatpush1.xpose.msra.mxu0 0.0
    %3457 = vmatprep.subr.mxu0 0.0
    %3458 = vmatpush1.xpose.msra.mxu0 0.0
    %3459 = vmatprep.subr.mxu0 0.0
    %3460 = vmatpush1.xpose.msra.mxu0 0.0
    %3461 = vmatprep.subr.mxu0 0.0
    %3462 = vmatpush1.xpose.msra.mxu0 0.0
    %3463 = vmatprep.subr.mxu0 0.0
    %3464 = vmatpush1.xpose.msra.mxu0 0.0
    %3465 = vmatprep.subr.mxu0 0.0
    %3466 = vmatpush1.xpose.msra.mxu0 0.0
    %3467 = vmatprep.subr.mxu0 0.0
    %3468 = vmatpush1.xpose.msra.mxu0 0.0
    %3469 = vmatprep.subr.mxu0 0.0
    %3470 = vmatpush1.xpose.msra.mxu0 0.0
    %3471 = vmatprep.mubr.f32.mxu0 0.0
    %3472 = vmatmul.mubr.f32.gmra.mrb[0].mxu0 %v3405
    %v3473 = vpop.f32.mrb[0].mxu0
    %v3474 = vadd.f32 0.0, %v3473
    %v3475 = vpop.f32.mrb[0].mxu0
    %3476 = vdwg.mxu0
    %v3477 = vsel %vm1782, %v3396, -inf
    %3478 = vmax.xlane.f32.xlu0 %v3477
    %v3479 = vpop.xlane.xlu0 %3478
    %v3480 = vsel %vm1782, %v3474, -inf
    %3481 = vmax.xlane.f32.xlu0 %v3480
    %v3482 = vpop.xlane.xlu0 %3481
    %v3483 = vsub.f32 %v3396, %v3479
    %v3484 = vsub.f32 %v3474, %v3482
    %v3485 = vmul.f32 %v3483, 1.442695
    %v3486 = vpow.pop %v3485
    %v3487 = vmul.f32 %v3484, 1.442695
    %v3488 = vpow.pop %v3487
    %v3489 = vsel %vm1782, %v3486, 0.0
    %3490 = vadd.xlane.f32.xlu0 %v3489
    %v3491 = vpop.xlane.xlu0 %3490
    %v3492 = vsel %vm1782, %v3488, 0.0
    %3493 = vadd.xlane.f32.xlu0 %v3492
    %v3494 = vpop.xlane.xlu0 %3493
    %v3495 = vrcp.pop %v3491
    %v3496 = vmul.f32 %v3486, %v3495
    %v3497 = vrcp.pop %v3494
    %v3498 = vmul.f32 %v3488, %v3497
    %v3500 = vsel %vm1805, %v3496, 0
    %3502 = vmatprep.subr.mxu0 0.0
    %3503 = vmatpush1.msra.mxu0 %v1617
    %3504 = vmatprep.subr.mxu0 0.0
    %3505 = vmatpush1.msra.mxu0 %v1810
    %3506 = vmatprep.subr.mxu0 0.0
    %3507 = vmatpush1.msra.mxu0 0.0
    %3508 = vmatprep.subr.mxu0 0.0
    %3509 = vmatpush1.msra.mxu0 0.0
    %3510 = vmatprep.subr.mxu0 0.0
    %3511 = vmatpush1.msra.mxu0 0.0
    %3512 = vmatprep.subr.mxu0 0.0
    %3513 = vmatpush1.msra.mxu0 0.0
    %3514 = vmatprep.subr.mxu0 0.0
    %3515 = vmatpush1.msra.mxu0 0.0
    %3516 = vmatprep.subr.mxu0 0.0
    %3517 = vmatpush1.msra.mxu0 0.0
    %3518 = vmatprep.subr.mxu0 0.0
    %3519 = vmatpush1.msra.mxu0 0.0
    %3520 = vmatprep.subr.mxu0 0.0
    %3521 = vmatpush1.msra.mxu0 0.0
    %3522 = vmatprep.subr.mxu0 0.0
    %3523 = vmatpush1.msra.mxu0 0.0
    %3524 = vmatprep.subr.mxu0 0.0
    %3525 = vmatpush1.msra.mxu0 0.0
    %3526 = vmatprep.subr.mxu0 0.0
    %3527 = vmatpush1.msra.mxu0 0.0
    %3528 = vmatprep.subr.mxu0 0.0
    %3529 = vmatpush1.msra.mxu0 0.0
    %3530 = vmatprep.subr.mxu0 0.0
    %3531 = vmatpush1.msra.mxu0 0.0
    %3532 = vmatprep.subr.mxu0 0.0
    %3533 = vmatpush1.msra.mxu0 0.0
    %3534 = vmatprep.subr.mxu0 0.0
    %3535 = vmatpush1.msra.mxu0 0.0
    %3536 = vmatprep.subr.mxu0 0.0
    %3537 = vmatpush1.msra.mxu0 0.0
    %3538 = vmatprep.subr.mxu0 0.0
    %3539 = vmatpush1.msra.mxu0 0.0
    %3540 = vmatprep.subr.mxu0 0.0
    %3541 = vmatpush1.msra.mxu0 0.0
    %3542 = vmatprep.subr.mxu0 0.0
    %3543 = vmatpush1.msra.mxu0 0.0
    %3544 = vmatprep.subr.mxu0 0.0
    %3545 = vmatpush1.msra.mxu0 0.0
    %3546 = vmatprep.subr.mxu0 0.0
    %3547 = vmatpush1.msra.mxu0 0.0
    %3548 = vmatprep.subr.mxu0 0.0
    %3549 = vmatpush1.msra.mxu0 0.0
    %3550 = vmatprep.subr.mxu0 0.0
    %3551 = vmatpush1.msra.mxu0 0.0
    %3552 = vmatprep.subr.mxu0 0.0
    %3553 = vmatpush1.msra.mxu0 0.0
    %3554 = vmatprep.subr.mxu0 0.0
    %3555 = vmatpush1.msra.mxu0 0.0
    %3556 = vmatprep.subr.mxu0 0.0
    %3557 = vmatpush1.msra.mxu0 0.0
    %3558 = vmatprep.subr.mxu0 0.0
    %3559 = vmatpush1.msra.mxu0 0.0
    %3560 = vmatprep.subr.mxu0 0.0
    %3561 = vmatpush1.msra.mxu0 0.0
    %3562 = vmatprep.subr.mxu0 0.0
    %3563 = vmatpush1.msra.mxu0 0.0
    %3564 = vmatprep.subr.mxu0 0.0
    %3565 = vmatpush1.msra.mxu0 0.0
    %3566 = vmatprep.mubr.f32.mxu0 0.0
    %3567 = vmatmul.mubr.f32.gmra.mrb[0].mxu0 %v3500
    %v3568 = vpop.f32.mrb[0].mxu0
    %v3569 = vadd.f32 0.0, %v3568
    %v3570 = vpop.f32.mrb[0].mxu0
    %3571 = vdwg.mxu0
    %v3573 = vsel %vm1805, %v3498, 0
    %3575 = vmatprep.subr.mxu0 0.0
    %3576 = vmatpush1.msra.mxu0 %v1619
    %3577 = vmatprep.subr.mxu0 0.0
    %3578 = vmatpush1.msra.mxu0 %v1885
    %3579 = vmatprep.subr.mxu0 0.0
    %3580 = vmatpush1.msra.mxu0 0.0
    %3581 = vmatprep.subr.mxu0 0.0
    %3582 = vmatpush1.msra.mxu0 0.0
    %3583 = vmatprep.subr.mxu0 0.0
    %3584 = vmatpush1.msra.mxu0 0.0
    %3585 = vmatprep.subr.mxu0 0.0
    %3586 = vmatpush1.msra.mxu0 0.0
    %3587 = vmatprep.subr.mxu0 0.0
    %3588 = vmatpush1.msra.mxu0 0.0
    %3589 = vmatprep.subr.mxu0 0.0
    %3590 = vmatpush1.msra.mxu0 0.0
    %3591 = vmatprep.subr.mxu0 0.0
    %3592 = vmatpush1.msra.mxu0 0.0
    %3593 = vmatprep.subr.mxu0 0.0
    %3594 = vmatpush1.msra.mxu0 0.0
    %3595 = vmatprep.subr.mxu0 0.0
    %3596 = vmatpush1.msra.mxu0 0.0
    %3597 = vmatprep.subr.mxu0 0.0
    %3598 = vmatpush1.msra.mxu0 0.0
    %3599 = vmatprep.subr.mxu0 0.0
    %3600 = vmatpush1.msra.mxu0 0.0
    %3601 = vmatprep.subr.mxu0 0.0
    %3602 = vmatpush1.msra.mxu0 0.0
    %3603 = vmatprep.subr.mxu0 0.0
    %3604 = vmatpush1.msra.mxu0 0.0
    %3605 = vmatprep.subr.mxu0 0.0
    %3606 = vmatpush1.msra.mxu0 0.0
    %3607 = vmatprep.subr.mxu0 0.0
    %3608 = vmatpush1.msra.mxu0 0.0
    %3609 = vmatprep.subr.mxu0 0.0
    %3610 = vmatpush1.msra.mxu0 0.0
    %3611 = vmatprep.subr.mxu0 0.0
    %3612 = vmatpush1.msra.mxu0 0.0
    %3613 = vmatprep.subr.mxu0 0.0
    %3614 = vmatpush1.msra.mxu0 0.0
    %3615 = vmatprep.subr.mxu0 0.0
    %3616 = vmatpush1.msra.mxu0 0.0
    %3617 = vmatprep.subr.mxu0 0.0
    %3618 = vmatpush1.msra.mxu0 0.0
    %3619 = vmatprep.subr.mxu0 0.0
    %3620 = vmatpush1.msra.mxu0 0.0
    %3621 = vmatprep.subr.mxu0 0.0
    %3622 = vmatpush1.msra.mxu0 0.0
    %3623 = vmatprep.subr.mxu0 0.0
    %3624 = vmatpush1.msra.mxu0 0.0
    %3625 = vmatprep.subr.mxu0 0.0
    %3626 = vmatpush1.msra.mxu0 0.0
    %3627 = vmatprep.subr.mxu0 0.0
    %3628 = vmatpush1.msra.mxu0 0.0
    %3629 = vmatprep.subr.mxu0 0.0
    %3630 = vmatpush1.msra.mxu0 0.0
    %3631 = vmatprep.subr.mxu0 0.0
    %3632 = vmatpush1.msra.mxu0 0.0
    %3633 = vmatprep.subr.mxu0 0.0
    %3634 = vmatpush1.msra.mxu0 0.0
    %3635 = vmatprep.subr.mxu0 0.0
    %3636 = vmatpush1.msra.mxu0 0.0
    %3637 = vmatprep.subr.mxu0 0.0
    %3638 = vmatpush1.msra.mxu0 0.0
    %3639 = vmatprep.mubr.f32.mxu0 0.0
    %3640 = vmatmul.mubr.f32.gmra.mrb[0].mxu0 %v3573
    %v3641 = vpop.f32.mrb[0].mxu0
    %v3642 = vadd.f32 0.0, %v3641
    %v3643 = vpop.f32.mrb[0].mxu0
    %3644 = vdwg.mxu0
    %v3647 = vrot.slane %v3642, 7
    %v3648 = vsel %vm1960, %v3647, %v3569
    %3649 = vrot.lane.b32.xlu0 %v3648, 32
    %v3650 = vpop.permute.xlu0 %3649
    %v3652 = vsel %vm168, %v3298, %v3650
    %v3653 = vsel %vm1968, %v3652, %v3191
    %v3655 = vsel %vm1970, %v3653, 0
    %3657 = vmatprep.subr.mxu0 %v39
    %3658 = vmatpush1.msra.mxu0 %v38
    %3659 = vmatprep.subr.mxu0 %v41
    %3660 = vmatpush1.msra.mxu0 %v40
    %3661 = vmatprep.subr.mxu0 %v43
    %3662 = vmatpush1.msra.mxu0 %v42
    %3663 = vmatprep.subr.mxu0 %v45
    %3664 = vmatpush1.msra.mxu0 %v44
    %3665 = vmatprep.subr.mxu0 %v47
    %3666 = vmatpush1.msra.mxu0 %v46
    %3667 = vmatprep.subr.mxu0 %v49
    %3668 = vmatpush1.msra.mxu0 %v48
    %3669 = vmatprep.subr.mxu0 %v51
    %3670 = vmatpush1.msra.mxu0 %v50
    %3671 = vmatprep.subr.mxu0 %v53
    %3672 = vmatpush1.msra.mxu0 %v52
    %3673 = vmatprep.subr.mxu0 %v55
    %3674 = vmatpush1.msra.mxu0 %v54
    %3675 = vmatprep.subr.mxu0 %v57
    %3676 = vmatpush1.msra.mxu0 %v56
    %3677 = vmatprep.subr.mxu0 %v59
    %3678 = vmatpush1.msra.mxu0 %v58
    %3679 = vmatprep.subr.mxu0 %v61
    %3680 = vmatpush1.msra.mxu0 %v60
    %3681 = vmatprep.subr.mxu0 0.0
    %3682 = vmatpush1.msra.mxu0 0.0
    %3683 = vmatprep.subr.mxu0 0.0
    %3684 = vmatpush1.msra.mxu0 0.0
    %3685 = vmatprep.subr.mxu0 0.0
    %3686 = vmatpush1.msra.mxu0 0.0
    %3687 = vmatprep.subr.mxu0 0.0
    %3688 = vmatpush1.msra.mxu0 0.0
    %3689 = vmatprep.subr.mxu0 0.0
    %3690 = vmatpush1.msra.mxu0 0.0
    %3691 = vmatprep.subr.mxu0 0.0
    %3692 = vmatpush1.msra.mxu0 0.0
    %3693 = vmatprep.subr.mxu0 0.0
    %3694 = vmatpush1.msra.mxu0 0.0
    %3695 = vmatprep.subr.mxu0 0.0
    %3696 = vmatpush1.msra.mxu0 0.0
    %3697 = vmatprep.subr.mxu0 0.0
    %3698 = vmatpush1.msra.mxu0 0.0
    %3699 = vmatprep.subr.mxu0 0.0
    %3700 = vmatpush1.msra.mxu0 0.0
    %3701 = vmatprep.subr.mxu0 0.0
    %3702 = vmatpush1.msra.mxu0 0.0
    %3703 = vmatprep.subr.mxu0 0.0
    %3704 = vmatpush1.msra.mxu0 0.0
    %3705 = vmatprep.subr.mxu0 0.0
    %3706 = vmatpush1.msra.mxu0 0.0
    %3707 = vmatprep.subr.mxu0 0.0
    %3708 = vmatpush1.msra.mxu0 0.0
    %3709 = vmatprep.subr.mxu0 0.0
    %3710 = vmatpush1.msra.mxu0 0.0
    %3711 = vmatprep.subr.mxu0 0.0
    %3712 = vmatpush1.msra.mxu0 0.0
    %3713 = vmatprep.subr.mxu0 0.0
    %3714 = vmatpush1.msra.mxu0 0.0
    %3715 = vmatprep.subr.mxu0 0.0
    %3716 = vmatpush1.msra.mxu0 0.0
    %3717 = vmatprep.subr.mxu0 0.0
    %3718 = vmatpush1.msra.mxu0 0.0
    %3719 = vmatprep.subr.mxu0 0.0
    %3720 = vmatpush1.msra.mxu0 0.0
    %3721 = vmatprep.mubr.f32.mxu0 0.0
    %3722 = vmatmul.mubr.f32.gmra.mrb[0].mxu0 %v3655
    %v3723 = vpop.f32.mrb[0].mxu0
    %v3724 = vadd.f32 0.0, %v3723
    %v3725 = vpop.f32.mrb[0].mxu0
    %v3726 = vadd.f32 0.0, %v3725
    %3727 = vdwg.mxu0
    %v3728 = vxor.u32 %v3724, 2147483648
    %v3729 = vmul.f32 %v3728, 1.442695
    %v3730 = vpow.pop %v3729
    %v3731 = vadd.f32 %v3730, 1.0
    %v3732 = vrcp.pop %v3731
    %v3733 = vmul.f32 1.0, %v3732
    %v3734 = vtanh.pop %v3724
    %v3735 = vmul.f32 %v3733, %v3185
    %3737 = vrot.lane.b32.xlu0 %v3734, 32
    %v3738 = vpop.permute.xlu0 %3737
    %v3740 = vmul.f32 %v3733, %v3738
    %3742 = vrot.lane.b32.xlu0 %v3740, 32
    %v3743 = vpop.permute.xlu0 %3742
    %v3745 = vadd.f32 %v3735, %v3743
    %v3746 = vtanh.pop %v3745
    %3748 = vrot.lane.b32.xlu0 %v3746, 32
    %v3749 = vpop.permute.xlu0 %3748
    %v3751 = vmul.f32 %v3733, %v3749
    %3753 = vrot.lane.b32.xlu0 %v3751, 64
    %v3754 = vpop.permute.xlu0 %3753
    %v3755 = vsel %vm168, %v3754, 0
    %3757 = vmatprep.subr.mxu0 0.0
    %3758 = vmatpush1.msra.mxu0 %v62
    %3759 = vmatprep.subr.mxu0 0.0
    %3760 = vmatpush1.msra.mxu0 %v63
    %3761 = vmatprep.subr.mxu0 0.0
    %3762 = vmatpush1.msra.mxu0 %v64
    %3763 = vmatprep.subr.mxu0 0.0
    %3764 = vmatpush1.msra.mxu0 %v65
    %3765 = vmatprep.subr.mxu0 0.0
    %3766 = vmatpush1.msra.mxu0 0.0
    %3767 = vmatprep.subr.mxu0 0.0
    %3768 = vmatpush1.msra.mxu0 0.0
    %3769 = vmatprep.subr.mxu0 0.0
    %3770 = vmatpush1.msra.mxu0 0.0
    %3771 = vmatprep.subr.mxu0 0.0
    %3772 = vmatpush1.msra.mxu0 0.0
    %3773 = vmatprep.subr.mxu0 0.0
    %3774 = vmatpush1.msra.mxu0 0.0
    %3775 = vmatprep.subr.mxu0 0.0
    %3776 = vmatpush1.msra.mxu0 0.0
    %3777 = vmatprep.subr.mxu0 0.0
    %3778 = vmatpush1.msra.mxu0 0.0
    %3779 = vmatprep.subr.mxu0 0.0
    %3780 = vmatpush1.msra.mxu0 0.0
    %3781 = vmatprep.subr.mxu0 0.0
    %3782 = vmatpush1.msra.mxu0 0.0
    %3783 = vmatprep.subr.mxu0 0.0
    %3784 = vmatpush1.msra.mxu0 0.0
    %3785 = vmatprep.subr.mxu0 0.0
    %3786 = vmatpush1.msra.mxu0 0.0
    %3787 = vmatprep.subr.mxu0 0.0
    %3788 = vmatpush1.msra.mxu0 0.0
    %3789 = vmatprep.subr.mxu0 0.0
    %3790 = vmatpush1.msra.mxu0 0.0
    %3791 = vmatprep.subr.mxu0 0.0
    %3792 = vmatpush1.msra.mxu0 0.0
    %3793 = vmatprep.subr.mxu0 0.0
    %3794 = vmatpush1.msra.mxu0 0.0
    %3795 = vmatprep.subr.mxu0 0.0
    %3796 = vmatpush1.msra.mxu0 0.0
    %3797 = vmatprep.subr.mxu0 0.0
    %3798 = vmatpush1.msra.mxu0 0.0
    %3799 = vmatprep.subr.mxu0 0.0
    %3800 = vmatpush1.msra.mxu0 0.0
    %3801 = vmatprep.subr.mxu0 0.0
    %3802 = vmatpush1.msra.mxu0 0.0
    %3803 = vmatprep.subr.mxu0 0.0
    %3804 = vmatpush1.msra.mxu0 0.0
    %3805 = vmatprep.subr.mxu0 0.0
    %3806 = vmatpush1.msra.mxu0 0.0
    %3807 = vmatprep.subr.mxu0 0.0
    %3808 = vmatpush1.msra.mxu0 0.0
    %3809 = vmatprep.subr.mxu0 0.0
    %3810 = vmatpush1.msra.mxu0 0.0
    %3811 = vmatprep.subr.mxu0 0.0
    %3812 = vmatpush1.msra.mxu0 0.0
    %3813 = vmatprep.subr.mxu0 0.0
    %3814 = vmatpush1.msra.mxu0 0.0
    %3815 = vmatprep.subr.mxu0 0.0
    %3816 = vmatpush1.msra.mxu0 0.0
    %3817 = vmatprep.subr.mxu0 0.0
    %3818 = vmatpush1.msra.mxu0 0.0
    %3819 = vmatprep.subr.mxu0 0.0
    %3820 = vmatpush1.msra.mxu0 0.0
    %3821 = vmatprep.mubr.f32.mxu0 0.0
    %3822 = vmatmul.mubr.f32.gmra.mrb[0].mxu0 %v3755
    %v3823 = vpop.f32.mrb[0].mxu0
    %v3824 = vadd.f32 0.0, %v3823
    %v3825 = vpop.f32.mrb[0].mxu0
    %3826 = vdwg.mxu0
    %v3827 = vadd.f32 %v3726, %v3824
    %3828 = vst.msk [vmem:[#allocation5 + $0x8] sm:$0x3] %vm1621, %v3827
    %v3829 = vsel %vm1621, %v3827, -inf
    %3830 = vmax.xlane.f32.xlu0 %v3829
    %v3831 = vpop.xlane.xlu0 %3830
    %vm3832 = vcmp.eq.f32.partialorder %v3827, %v3831
    %v3833 = vsel %vm3832, %v1624, 32
    %v3834 = vsel %vm1621, %v3833, 2147483647
    %v3835 = vand.u32 %v3834, 65535
    %v3836 = vshra.s32 %v3834, 16
    %v3837 = vcvt.s32.f32 %v3835
    %v3838 = vcvt.s32.f32 %v3836
    %3839 = vmin.xlane.f32.xlu0 %v3838
    %v3840 = vpop.xlane.xlu0 %3839
    %vm3841 = vcmp.eq.f32.partialorder %v3838, %v3840
    %v3842 = vsel %vm3841, %v3837, inf
    %3843 = vmin.xlane.f32.xlu0 %v3842
    %v3844 = vpop.xlane.xlu0 %3843
    %v3845 = vcvt.f32.s32 %v3844
    %v3846 = vcvt.f32.s32 %v3840
    %v3847 = vshll.u32 %v3846, 16
    %v3848 = vadd.s32 %v3847, %v3845
    %vm3849 = vcmp.eq.s32.totalorder %v1624, %v3848
    %v3850 = vsel %vm3849, 1, 0
    %v3851 = vcvt.s32.f32 %v3850
    %v3852 = vld [vmem:[%s2 + $0x8] sm:$0x3]
    %s3853 = sld [smem:[#allocation4 + $0x4]]
    %p3854 = scmp.eq.s32.totalorder %s3853, 1
    %s3855 = scalar_select %p3854, 1, 0
    %v3856 = vstv %s3855
    %vm3857 = vcmp.eq.s32.totalorder %v3856, 1
    %v3858 = vsel %vm3857, %v3852, %v3851
    %v3860 = vunpack.c.l.s4 1966171168
    %v3861 = vunpack.c.0.s8 %v3860
    %v3862 = vlaneseq
    %v3863 = vshrl.u32 %v3862, 7
    %v3864 = vsub.s32 %v3861, %v3863
    %v3865 = vrot.slane %v3751, %v3864
    %v3866 = vcombine.high %v3865, %v3865
    %v3868 = vunpack.c.l.s4 1966171168
    %v3869 = vunpack.c.0.s8 %v3868
    %v3870 = vlaneseq
    %v3871 = vshrl.u32 %v3870, 7
    %v3872 = vsub.s32 %v3869, %v3871
    %v3873 = vrot.slane %v3865, %v3872
    %v3875 = vunpack.c.l.s4 1966171168
    %v3876 = vunpack.c.0.s8 %v3875
    %v3877 = vlaneseq
    %v3878 = vshrl.u32 %v3877, 7
    %v3879 = vsub.s32 %v3876, %v3878
    %v3880 = vrot.slane %v3866, %v3879
    %v3881 = vlaneseq
    %v3882 = vshrl.u32 %v3881, 7
    %v3883 = vsub.s32 0, %v3882
    %v3884 = vrot.slane %v3873, %v3883
    %3885 = vrot.lane.b32.xlu0 %v3884, 64
    %v3886 = vpop.permute.xlu0 %3885
    %v3887 = vsel %vm168, %v3886, 0
    %3889 = vmatprep.subr.mxu0 0.0
    %3890 = vmatpush1.xpose.msra.mxu0 %v1629
    %3891 = vmatprep.subr.mxu0 0.0
    %3892 = vmatpush1.xpose.msra.mxu0 %v1632
    %3893 = vmatprep.subr.mxu0 0.0
    %3894 = vmatpush1.xpose.msra.mxu0 0.0
    %3895 = vmatprep.subr.mxu0 0.0
    %3896 = vmatpush1.xpose.msra.mxu0 0.0
    %3897 = vmatprep.subr.mxu0 0.0
    %3898 = vmatpush1.xpose.msra.mxu0 0.0
    %3899 = vmatprep.subr.mxu0 0.0
    %3900 = vmatpush1.xpose.msra.mxu0 0.0
    %3901 = vmatprep.subr.mxu0 0.0
    %3902 = vmatpush1.xpose.msra.mxu0 0.0
    %3903 = vmatprep.subr.mxu0 0.0
    %3904 = vmatpush1.xpose.msra.mxu0 0.0
    %3905 = vmatprep.subr.mxu0 0.0
    %3906 = vmatpush1.xpose.msra.mxu0 0.0
    %3907 = vmatprep.subr.mxu0 0.0
    %3908 = vmatpush1.xpose.msra.mxu0 0.0
    %3909 = vmatprep.subr.mxu0 0.0
    %3910 = vmatpush1.xpose.msra.mxu0 0.0
    %3911 = vmatprep.subr.mxu0 0.0
    %3912 = vmatpush1.xpose.msra.mxu0 0.0
    %3913 = vmatprep.subr.mxu0 0.0
    %3914 = vmatpush1.xpose.msra.mxu0 0.0
    %3915 = vmatprep.subr.mxu0 0.0
    %3916 = vmatpush1.xpose.msra.mxu0 0.0
    %3917 = vmatprep.subr.mxu0 0.0
    %3918 = vmatpush1.xpose.msra.mxu0 0.0
    %3919 = vmatprep.subr.mxu0 0.0
    %3920 = vmatpush1.xpose.msra.mxu0 0.0
    %3921 = vmatprep.subr.mxu0 0.0
    %3922 = vmatpush1.xpose.msra.mxu0 0.0
    %3923 = vmatprep.subr.mxu0 0.0
    %3924 = vmatpush1.xpose.msra.mxu0 0.0
    %3925 = vmatprep.subr.mxu0 0.0
    %3926 = vmatpush1.xpose.msra.mxu0 0.0
    %3927 = vmatprep.subr.mxu0 0.0
    %3928 = vmatpush1.xpose.msra.mxu0 0.0
    %3929 = vmatprep.subr.mxu0 0.0
    %3930 = vmatpush1.xpose.msra.mxu0 0.0
    %3931 = vmatprep.subr.mxu0 0.0
    %3932 = vmatpush1.xpose.msra.mxu0 0.0
    %3933 = vmatprep.subr.mxu0 0.0
    %3934 = vmatpush1.xpose.msra.mxu0 0.0
    %3935 = vmatprep.subr.mxu0 0.0
    %3936 = vmatpush1.xpose.msra.mxu0 0.0
    %3937 = vmatprep.subr.mxu0 0.0
    %3938 = vmatpush1.xpose.msra.mxu0 0.0
    %3939 = vmatprep.subr.mxu0 0.0
    %3940 = vmatpush1.xpose.msra.mxu0 0.0
    %3941 = vmatprep.subr.mxu0 0.0
    %3942 = vmatpush1.xpose.msra.mxu0 0.0
    %3943 = vmatprep.subr.mxu0 0.0
    %3944 = vmatpush1.xpose.msra.mxu0 0.0
    %3945 = vmatprep.subr.mxu0 0.0
    %3946 = vmatpush1.xpose.msra.mxu0 0.0
    %3947 = vmatprep.subr.mxu0 0.0
    %3948 = vmatpush1.xpose.msra.mxu0 0.0
    %3949 = vmatprep.subr.mxu0 0.0
    %3950 = vmatpush1.xpose.msra.mxu0 0.0
    %3951 = vmatprep.subr.mxu0 0.0
    %3952 = vmatpush1.xpose.msra.mxu0 0.0
    %3953 = vmatprep.mubr.f32.mxu0 0.0
    %3954 = vmatmul.mubr.f32.gmra.mrb[0].mxu0 %v3887
    %v3955 = vpop.f32.mrb[0].mxu0
    %v3956 = vadd.f32 0.0, %v3955
    %v3957 = vpop.f32.mrb[0].mxu0
    %3958 = vdwg.mxu0
    %v3959 = vlaneseq
    %v3960 = vshrl.u32 %v3959, 7
    %v3961 = vsub.s32 0, %v3960
    %v3962 = vrot.slane %v3880, %v3961
    %3963 = vrot.lane.b32.xlu0 %v3962, 64
    %v3964 = vpop.permute.xlu0 %3963
    %v3965 = vsel %vm168, %v3964, 0
    %3967 = vmatprep.subr.mxu0 0.0
    %3968 = vmatpush1.xpose.msra.mxu0 %v1707
    %3969 = vmatprep.subr.mxu0 0.0
    %3970 = vmatpush1.xpose.msra.mxu0 %v1710
    %3971 = vmatprep.subr.mxu0 0.0
    %3972 = vmatpush1.xpose.msra.mxu0 0.0
    %3973 = vmatprep.subr.mxu0 0.0
    %3974 = vmatpush1.xpose.msra.mxu0 0.0
    %3975 = vmatprep.subr.mxu0 0.0
    %3976 = vmatpush1.xpose.msra.mxu0 0.0
    %3977 = vmatprep.subr.mxu0 0.0
    %3978 = vmatpush1.xpose.msra.mxu0 0.0
    %3979 = vmatprep.subr.mxu0 0.0
    %3980 = vmatpush1.xpose.msra.mxu0 0.0
    %3981 = vmatprep.subr.mxu0 0.0
    %3982 = vmatpush1.xpose.msra.mxu0 0.0
    %3983 = vmatprep.subr.mxu0 0.0
    %3984 = vmatpush1.xpose.msra.mxu0 0.0
    %3985 = vmatprep.subr.mxu0 0.0
    %3986 = vmatpush1.xpose.msra.mxu0 0.0
    %3987 = vmatprep.subr.mxu0 0.0
    %3988 = vmatpush1.xpose.msra.mxu0 0.0
    %3989 = vmatprep.subr.mxu0 0.0
    %3990 = vmatpush1.xpose.msra.mxu0 0.0
    %3991 = vmatprep.subr.mxu0 0.0
    %3992 = vmatpush1.xpose.msra.mxu0 0.0
    %3993 = vmatprep.subr.mxu0 0.0
    %3994 = vmatpush1.xpose.msra.mxu0 0.0
    %3995 = vmatprep.subr.mxu0 0.0
    %3996 = vmatpush1.xpose.msra.mxu0 0.0
    %3997 = vmatprep.subr.mxu0 0.0
    %3998 = vmatpush1.xpose.msra.mxu0 0.0
    %3999 = vmatprep.subr.mxu0 0.0
    %4000 = vmatpush1.xpose.msra.mxu0 0.0
    %4001 = vmatprep.subr.mxu0 0.0
    %4002 = vmatpush1.xpose.msra.mxu0 0.0
    %4003 = vmatprep.subr.mxu0 0.0
    %4004 = vmatpush1.xpose.msra.mxu0 0.0
    %4005 = vmatprep.subr.mxu0 0.0
    %4006 = vmatpush1.xpose.msra.mxu0 0.0
    %4007 = vmatprep.subr.mxu0 0.0
    %4008 = vmatpush1.xpose.msra.mxu0 0.0
    %4009 = vmatprep.subr.mxu0 0.0
    %4010 = vmatpush1.xpose.msra.mxu0 0.0
    %4011 = vmatprep.subr.mxu0 0.0
    %4012 = vmatpush1.xpose.msra.mxu0 0.0
    %4013 = vmatprep.subr.mxu0 0.0
    %4014 = vmatpush1.xpose.msra.mxu0 0.0
    %4015 = vmatprep.subr.mxu0 0.0
    %4016 = vmatpush1.xpose.msra.mxu0 0.0
    %4017 = vmatprep.subr.mxu0 0.0
    %4018 = vmatpush1.xpose.msra.mxu0 0.0
    %4019 = vmatprep.subr.mxu0 0.0
    %4020 = vmatpush1.xpose.msra.mxu0 0.0
    %4021 = vmatprep.subr.mxu0 0.0
    %4022 = vmatpush1.xpose.msra.mxu0 0.0
    %4023 = vmatprep.subr.mxu0 0.0
    %4024 = vmatpush1.xpose.msra.mxu0 0.0
    %4025 = vmatprep.subr.mxu0 0.0
    %4026 = vmatpush1.xpose.msra.mxu0 0.0
    %4027 = vmatprep.subr.mxu0 0.0
    %4028 = vmatpush1.xpose.msra.mxu0 0.0
    %4029 = vmatprep.subr.mxu0 0.0
    %4030 = vmatpush1.xpose.msra.mxu0 0.0
    %4031 = vmatprep.mubr.f32.mxu0 0.0
    %4032 = vmatmul.mubr.f32.gmra.mrb[0].mxu0 %v3965
    %v4033 = vpop.f32.mrb[0].mxu0
    %v4034 = vadd.f32 0.0, %v4033
    %v4035 = vpop.f32.mrb[0].mxu0
    %4036 = vdwg.mxu0
    %v4037 = vsel %vm1782, %v3956, -inf
    %4038 = vmax.xlane.f32.xlu0 %v4037
    %v4039 = vpop.xlane.xlu0 %4038
    %v4040 = vsel %vm1782, %v4034, -inf
    %4041 = vmax.xlane.f32.xlu0 %v4040
    %v4042 = vpop.xlane.xlu0 %4041
    %v4043 = vsub.f32 %v3956, %v4039
    %v4044 = vsub.f32 %v4034, %v4042
    %v4045 = vmul.f32 %v4043, 1.442695
    %v4046 = vpow.pop %v4045
    %v4047 = vmul.f32 %v4044, 1.442695
    %v4048 = vpow.pop %v4047
    %v4049 = vsel %vm1782, %v4046, 0.0
    %4050 = vadd.xlane.f32.xlu0 %v4049
    %v4051 = vpop.xlane.xlu0 %4050
    %v4052 = vsel %vm1782, %v4048, 0.0
    %4053 = vadd.xlane.f32.xlu0 %v4052
    %v4054 = vpop.xlane.xlu0 %4053
    %v4055 = vrcp.pop %v4051
    %v4056 = vmul.f32 %v4046, %v4055
    %v4057 = vrcp.pop %v4054
    %v4058 = vmul.f32 %v4048, %v4057
    %v4060 = vsel %vm1805, %v4056, 0
    %4062 = vmatprep.subr.mxu0 0.0
    %4063 = vmatpush1.msra.mxu0 %v1617
    %4064 = vmatprep.subr.mxu0 0.0
    %4065 = vmatpush1.msra.mxu0 %v1810
    %4066 = vmatprep.subr.mxu0 0.0
    %4067 = vmatpush1.msra.mxu0 0.0
    %4068 = vmatprep.subr.mxu0 0.0
    %4069 = vmatpush1.msra.mxu0 0.0
    %4070 = vmatprep.subr.mxu0 0.0
    %4071 = vmatpush1.msra.mxu0 0.0
    %4072 = vmatprep.subr.mxu0 0.0
    %4073 = vmatpush1.msra.mxu0 0.0
    %4074 = vmatprep.subr.mxu0 0.0
    %4075 = vmatpush1.msra.mxu0 0.0
    %4076 = vmatprep.subr.mxu0 0.0
    %4077 = vmatpush1.msra.mxu0 0.0
    %4078 = vmatprep.subr.mxu0 0.0
    %4079 = vmatpush1.msra.mxu0 0.0
    %4080 = vmatprep.subr.mxu0 0.0
    %4081 = vmatpush1.msra.mxu0 0.0
    %4082 = vmatprep.subr.mxu0 0.0
    %4083 = vmatpush1.msra.mxu0 0.0
    %4084 = vmatprep.subr.mxu0 0.0
    %4085 = vmatpush1.msra.mxu0 0.0
    %4086 = vmatprep.subr.mxu0 0.0
    %4087 = vmatpush1.msra.mxu0 0.0
    %4088 = vmatprep.subr.mxu0 0.0
    %4089 = vmatpush1.msra.mxu0 0.0
    %4090 = vmatprep.subr.mxu0 0.0
    %4091 = vmatpush1.msra.mxu0 0.0
    %4092 = vmatprep.subr.mxu0 0.0
    %4093 = vmatpush1.msra.mxu0 0.0
    %4094 = vmatprep.subr.mxu0 0.0
    %4095 = vmatpush1.msra.mxu0 0.0
    %4096 = vmatprep.subr.mxu0 0.0
    %4097 = vmatpush1.msra.mxu0 0.0
    %4098 = vmatprep.subr.mxu0 0.0
    %4099 = vmatpush1.msra.mxu0 0.0
    %4100 = vmatprep.subr.mxu0 0.0
    %4101 = vmatpush1.msra.mxu0 0.0
    %4102 = vmatprep.subr.mxu0 0.0
    %4103 = vmatpush1.msra.mxu0 0.0
    %4104 = vmatprep.subr.mxu0 0.0
    %4105 = vmatpush1.msra.mxu0 0.0
    %4106 = vmatprep.subr.mxu0 0.0
    %4107 = vmatpush1.msra.mxu0 0.0
    %4108 = vmatprep.subr.mxu0 0.0
    %4109 = vmatpush1.msra.mxu0 0.0
    %4110 = vmatprep.subr.mxu0 0.0
    %4111 = vmatpush1.msra.mxu0 0.0
    %4112 = vmatprep.subr.mxu0 0.0
    %4113 = vmatpush1.msra.mxu0 0.0
    %4114 = vmatprep.subr.mxu0 0.0
    %4115 = vmatpush1.msra.mxu0 0.0
    %4116 = vmatprep.subr.mxu0 0.0
    %4117 = vmatpush1.msra.mxu0 0.0
    %4118 = vmatprep.subr.mxu0 0.0
    %4119 = vmatpush1.msra.mxu0 0.0
    %4120 = vmatprep.subr.mxu0 0.0
    %4121 = vmatpush1.msra.mxu0 0.0
    %4122 = vmatprep.subr.mxu0 0.0
    %4123 = vmatpush1.msra.mxu0 0.0
    %4124 = vmatprep.subr.mxu0 0.0
    %4125 = vmatpush1.msra.mxu0 0.0
    %4126 = vmatprep.mubr.f32.mxu0 0.0
    %4127 = vmatmul.mubr.f32.gmra.mrb[0].mxu0 %v4060
    %v4128 = vpop.f32.mrb[0].mxu0
    %v4129 = vadd.f32 0.0, %v4128
    %v4130 = vpop.f32.mrb[0].mxu0
    %4131 = vdwg.mxu0
    %v4133 = vsel %vm1805, %v4058, 0
    %4135 = vmatprep.subr.mxu0 0.0
    %4136 = vmatpush1.msra.mxu0 %v1619
    %4137 = vmatprep.subr.mxu0 0.0
    %4138 = vmatpush1.msra.mxu0 %v1885
    %4139 = vmatprep.subr.mxu0 0.0
    %4140 = vmatpush1.msra.mxu0 0.0
    %4141 = vmatprep.subr.mxu0 0.0
    %4142 = vmatpush1.msra.mxu0 0.0
    %4143 = vmatprep.subr.mxu0 0.0
    %4144 = vmatpush1.msra.mxu0 0.0
    %4145 = vmatprep.subr.mxu0 0.0
    %4146 = vmatpush1.msra.mxu0 0.0
    %4147 = vmatprep.subr.mxu0 0.0
    %4148 = vmatpush1.msra.mxu0 0.0
    %4149 = vmatprep.subr.mxu0 0.0
    %4150 = vmatpush1.msra.mxu0 0.0
    %4151 = vmatprep.subr.mxu0 0.0
    %4152 = vmatpush1.msra.mxu0 0.0
    %4153 = vmatprep.subr.mxu0 0.0
    %4154 = vmatpush1.msra.mxu0 0.0
    %4155 = vmatprep.subr.mxu0 0.0
    %4156 = vmatpush1.msra.mxu0 0.0
    %4157 = vmatprep.subr.mxu0 0.0
    %4158 = vmatpush1.msra.mxu0 0.0
    %4159 = vmatprep.subr.mxu0 0.0
    %4160 = vmatpush1.msra.mxu0 0.0
    %4161 = vmatprep.subr.mxu0 0.0
    %4162 = vmatpush1.msra.mxu0 0.0
    %4163 = vmatprep.subr.mxu0 0.0
    %4164 = vmatpush1.msra.mxu0 0.0
    %4165 = vmatprep.subr.mxu0 0.0
    %4166 = vmatpush1.msra.mxu0 0.0
    %4167 = vmatprep.subr.mxu0 0.0
    %4168 = vmatpush1.msra.mxu0 0.0
    %4169 = vmatprep.subr.mxu0 0.0
    %4170 = vmatpush1.msra.mxu0 0.0
    %4171 = vmatprep.subr.mxu0 0.0
    %4172 = vmatpush1.msra.mxu0 0.0
    %4173 = vmatprep.subr.mxu0 0.0
    %4174 = vmatpush1.msra.mxu0 0.0
    %4175 = vmatprep.subr.mxu0 0.0
    %4176 = vmatpush1.msra.mxu0 0.0
    %4177 = vmatprep.subr.mxu0 0.0
    %4178 = vmatpush1.msra.mxu0 0.0
    %4179 = vmatprep.subr.mxu0 0.0
    %4180 = vmatpush1.msra.mxu0 0.0
    %4181 = vmatprep.subr.mxu0 0.0
    %4182 = vmatpush1.msra.mxu0 0.0
    %4183 = vmatprep.subr.mxu0 0.0
    %4184 = vmatpush1.msra.mxu0 0.0
    %4185 = vmatprep.subr.mxu0 0.0
    %4186 = vmatpush1.msra.mxu0 0.0
    %4187 = vmatprep.subr.mxu0 0.0
    %4188 = vmatpush1.msra.mxu0 0.0
    %4189 = vmatprep.subr.mxu0 0.0
    %4190 = vmatpush1.msra.mxu0 0.0
    %4191 = vmatprep.subr.mxu0 0.0
    %4192 = vmatpush1.msra.mxu0 0.0
    %4193 = vmatprep.subr.mxu0 0.0
    %4194 = vmatpush1.msra.mxu0 0.0
    %4195 = vmatprep.subr.mxu0 0.0
    %4196 = vmatpush1.msra.mxu0 0.0
    %4197 = vmatprep.subr.mxu0 0.0
    %4198 = vmatpush1.msra.mxu0 0.0
    %4199 = vmatprep.mubr.f32.mxu0 0.0
    %4200 = vmatmul.mubr.f32.gmra.mrb[0].mxu0 %v4133
    %v4201 = vpop.f32.mrb[0].mxu0
    %v4202 = vadd.f32 0.0, %v4201
    %v4203 = vpop.f32.mrb[0].mxu0
    %4204 = vdwg.mxu0
    %v4207 = vrot.slane %v4202, 7
    %v4208 = vsel %vm1960, %v4207, %v4129
    %4209 = vrot.lane.b32.xlu0 %v4208, 32
    %v4210 = vpop.permute.xlu0 %4209
    %v4212 = vsel %vm168, %v3858, %v4210
    %v4213 = vsel %vm1968, %v4212, %v3751
    %v4215 = vsel %vm1970, %v4213, 0
    %4217 = vmatprep.subr.mxu0 %v39
    %4218 = vmatpush1.msra.mxu0 %v38
    %4219 = vmatprep.subr.mxu0 %v41
    %4220 = vmatpush1.msra.mxu0 %v40
    %4221 = vmatprep.subr.mxu0 %v43
    %4222 = vmatpush1.msra.mxu0 %v42
    %4223 = vmatprep.subr.mxu0 %v45
    %4224 = vmatpush1.msra.mxu0 %v44
    %4225 = vmatprep.subr.mxu0 %v47
    %4226 = vmatpush1.msra.mxu0 %v46
    %4227 = vmatprep.subr.mxu0 %v49
    %4228 = vmatpush1.msra.mxu0 %v48
    %4229 = vmatprep.subr.mxu0 %v51
    %4230 = vmatpush1.msra.mxu0 %v50
    %4231 = vmatprep.subr.mxu0 %v53
    %4232 = vmatpush1.msra.mxu0 %v52
    %4233 = vmatprep.subr.mxu0 %v55
    %4234 = vmatpush1.msra.mxu0 %v54
    %4235 = vmatprep.subr.mxu0 %v57
    %4236 = vmatpush1.msra.mxu0 %v56
    %4237 = vmatprep.subr.mxu0 %v59
    %4238 = vmatpush1.msra.mxu0 %v58
    %4239 = vmatprep.subr.mxu0 %v61
    %4240 = vmatpush1.msra.mxu0 %v60
    %4241 = vmatprep.subr.mxu0 0.0
    %4242 = vmatpush1.msra.mxu0 0.0
    %4243 = vmatprep.subr.mxu0 0.0
    %4244 = vmatpush1.msra.mxu0 0.0
    %4245 = vmatprep.subr.mxu0 0.0
    %4246 = vmatpush1.msra.mxu0 0.0
    %4247 = vmatprep.subr.mxu0 0.0
    %4248 = vmatpush1.msra.mxu0 0.0
    %4249 = vmatprep.subr.mxu0 0.0
    %4250 = vmatpush1.msra.mxu0 0.0
    %4251 = vmatprep.subr.mxu0 0.0
    %4252 = vmatpush1.msra.mxu0 0.0
    %4253 = vmatprep.subr.mxu0 0.0
    %4254 = vmatpush1.msra.mxu0 0.0
    %4255 = vmatprep.subr.mxu0 0.0
    %4256 = vmatpush1.msra.mxu0 0.0
    %4257 = vmatprep.subr.mxu0 0.0
    %4258 = vmatpush1.msra.mxu0 0.0
    %4259 = vmatprep.subr.mxu0 0.0
    %4260 = vmatpush1.msra.mxu0 0.0
    %4261 = vmatprep.subr.mxu0 0.0
    %4262 = vmatpush1.msra.mxu0 0.0
    %4263 = vmatprep.subr.mxu0 0.0
    %4264 = vmatpush1.msra.mxu0 0.0
    %4265 = vmatprep.subr.mxu0 0.0
    %4266 = vmatpush1.msra.mxu0 0.0
    %4267 = vmatprep.subr.mxu0 0.0
    %4268 = vmatpush1.msra.mxu0 0.0
    %4269 = vmatprep.subr.mxu0 0.0
    %4270 = vmatpush1.msra.mxu0 0.0
    %4271 = vmatprep.subr.mxu0 0.0
    %4272 = vmatpush1.msra.mxu0 0.0
    %4273 = vmatprep.subr.mxu0 0.0
    %4274 = vmatpush1.msra.mxu0 0.0
    %4275 = vmatprep.subr.mxu0 0.0
    %4276 = vmatpush1.msra.mxu0 0.0
    %4277 = vmatprep.subr.mxu0 0.0
    %4278 = vmatpush1.msra.mxu0 0.0
    %4279 = vmatprep.subr.mxu0 0.0
    %4280 = vmatpush1.msra.mxu0 0.0
    %4281 = vmatprep.mubr.f32.mxu0 0.0
    %4282 = vmatmul.mubr.f32.gmra.mrb[0].mxu0 %v4215
    %v4283 = vpop.f32.mrb[0].mxu0
    %v4284 = vadd.f32 0.0, %v4283
    %v4285 = vpop.f32.mrb[0].mxu0
    %v4286 = vadd.f32 0.0, %v4285
    %4287 = vdwg.mxu0
    %v4288 = vxor.u32 %v4284, 2147483648
    %v4289 = vmul.f32 %v4288, 1.442695
    %v4290 = vpow.pop %v4289
    %v4291 = vadd.f32 %v4290, 1.0
    %v4292 = vrcp.pop %v4291
    %v4293 = vmul.f32 1.0, %v4292
    %v4294 = vtanh.pop %v4284
    %v4295 = vmul.f32 %v4293, %v3745
    %4297 = vrot.lane.b32.xlu0 %v4294, 32
    %v4298 = vpop.permute.xlu0 %4297
    %v4300 = vmul.f32 %v4293, %v4298
    %4302 = vrot.lane.b32.xlu0 %v4300, 32
    %v4303 = vpop.permute.xlu0 %4302
    %v4305 = vadd.f32 %v4295, %v4303
    %v4306 = vtanh.pop %v4305
    %4308 = vrot.lane.b32.xlu0 %v4306, 32
    %v4309 = vpop.permute.xlu0 %4308
    %v4311 = vmul.f32 %v4293, %v4309
    %4313 = vrot.lane.b32.xlu0 %v4311, 64
    %v4314 = vpop.permute.xlu0 %4313
    %v4315 = vsel %vm168, %v4314, 0
    %4317 = vmatprep.subr.mxu0 0.0
    %4318 = vmatpush1.msra.mxu0 %v62
    %4319 = vmatprep.subr.mxu0 0.0
    %4320 = vmatpush1.msra.mxu0 %v63
    %4321 = vmatprep.subr.mxu0 0.0
    %4322 = vmatpush1.msra.mxu0 %v64
    %4323 = vmatprep.subr.mxu0 0.0
    %4324 = vmatpush1.msra.mxu0 %v65
    %4325 = vmatprep.subr.mxu0 0.0
    %4326 = vmatpush1.msra.mxu0 0.0
    %4327 = vmatprep.subr.mxu0 0.0
    %4328 = vmatpush1.msra.mxu0 0.0
    %4329 = vmatprep.subr.mxu0 0.0
    %4330 = vmatpush1.msra.mxu0 0.0
    %4331 = vmatprep.subr.mxu0 0.0
    %4332 = vmatpush1.msra.mxu0 0.0
    %4333 = vmatprep.subr.mxu0 0.0
    %4334 = vmatpush1.msra.mxu0 0.0
    %4335 = vmatprep.subr.mxu0 0.0
    %4336 = vmatpush1.msra.mxu0 0.0
    %4337 = vmatprep.subr.mxu0 0.0
    %4338 = vmatpush1.msra.mxu0 0.0
    %4339 = vmatprep.subr.mxu0 0.0
    %4340 = vmatpush1.msra.mxu0 0.0
    %4341 = vmatprep.subr.mxu0 0.0
    %4342 = vmatpush1.msra.mxu0 0.0
    %4343 = vmatprep.subr.mxu0 0.0
    %4344 = vmatpush1.msra.mxu0 0.0
    %4345 = vmatprep.subr.mxu0 0.0
    %4346 = vmatpush1.msra.mxu0 0.0
    %4347 = vmatprep.subr.mxu0 0.0
    %4348 = vmatpush1.msra.mxu0 0.0
    %4349 = vmatprep.subr.mxu0 0.0
    %4350 = vmatpush1.msra.mxu0 0.0
    %4351 = vmatprep.subr.mxu0 0.0
    %4352 = vmatpush1.msra.mxu0 0.0
    %4353 = vmatprep.subr.mxu0 0.0
    %4354 = vmatpush1.msra.mxu0 0.0
    %4355 = vmatprep.subr.mxu0 0.0
    %4356 = vmatpush1.msra.mxu0 0.0
    %4357 = vmatprep.subr.mxu0 0.0
    %4358 = vmatpush1.msra.mxu0 0.0
    %4359 = vmatprep.subr.mxu0 0.0
    %4360 = vmatpush1.msra.mxu0 0.0
    %4361 = vmatprep.subr.mxu0 0.0
    %4362 = vmatpush1.msra.mxu0 0.0
    %4363 = vmatprep.subr.mxu0 0.0
    %4364 = vmatpush1.msra.mxu0 0.0
    %4365 = vmatprep.subr.mxu0 0.0
    %4366 = vmatpush1.msra.mxu0 0.0
    %4367 = vmatprep.subr.mxu0 0.0
    %4368 = vmatpush1.msra.mxu0 0.0
    %4369 = vmatprep.subr.mxu0 0.0
    %4370 = vmatpush1.msra.mxu0 0.0
    %4371 = vmatprep.subr.mxu0 0.0
    %4372 = vmatpush1.msra.mxu0 0.0
    %4373 = vmatprep.subr.mxu0 0.0
    %4374 = vmatpush1.msra.mxu0 0.0
    %4375 = vmatprep.subr.mxu0 0.0
    %4376 = vmatpush1.msra.mxu0 0.0
    %4377 = vmatprep.subr.mxu0 0.0
    %4378 = vmatpush1.msra.mxu0 0.0
    %4379 = vmatprep.subr.mxu0 0.0
    %4380 = vmatpush1.msra.mxu0 0.0
    %4381 = vmatprep.mubr.f32.mxu0 0.0
    %4382 = vmatmul.mubr.f32.gmra.mrb[0].mxu0 %v4315
    %v4383 = vpop.f32.mrb[0].mxu0
    %v4384 = vadd.f32 0.0, %v4383
    %v4385 = vpop.f32.mrb[0].mxu0
    %4386 = vdwg.mxu0
    %v4387 = vadd.f32 %v4286, %v4384
    %4388 = vst.msk [vmem:[#allocation5 + $0xa] sm:$0x3] %vm1621, %v4387
    %v4389 = vsel %vm1621, %v4387, -inf
    %4390 = vmax.xlane.f32.xlu0 %v4389
    %v4391 = vpop.xlane.xlu0 %4390
    %vm4392 = vcmp.eq.f32.partialorder %v4387, %v4391
    %v4393 = vsel %vm4392, %v1624, 32
    %v4394 = vsel %vm1621, %v4393, 2147483647
    %v4395 = vand.u32 %v4394, 65535
    %v4396 = vshra.s32 %v4394, 16
    %v4397 = vcvt.s32.f32 %v4395
    %v4398 = vcvt.s32.f32 %v4396
    %4399 = vmin.xlane.f32.xlu0 %v4398
    %v4400 = vpop.xlane.xlu0 %4399
    %vm4401 = vcmp.eq.f32.partialorder %v4398, %v4400
    %v4402 = vsel %vm4401, %v4397, inf
    %4403 = vmin.xlane.f32.xlu0 %v4402
    %v4404 = vpop.xlane.xlu0 %4403
    %v4405 = vcvt.f32.s32 %v4404
    %v4406 = vcvt.f32.s32 %v4400
    %v4407 = vshll.u32 %v4406, 16
    %v4408 = vadd.s32 %v4407, %v4405
    %vm4409 = vcmp.eq.s32.totalorder %v1624, %v4408
    %v4410 = vsel %vm4409, 1, 0
    %v4411 = vcvt.s32.f32 %v4410
    %v4412 = vld [vmem:[%s2 + $0xa] sm:$0x3]
    %s4413 = sld [smem:[#allocation4 + $0x5]]
    %p4414 = scmp.eq.s32.totalorder %s4413, 1
    %s4415 = scalar_select %p4414, 1, 0
    %v4416 = vstv %s4415
    %vm4417 = vcmp.eq.s32.totalorder %v4416, 1
    %v4418 = vsel %vm4417, %v4412, %v4411
    %v4420 = vunpack.c.l.s4 1966171168
    %v4421 = vunpack.c.0.s8 %v4420
    %v4422 = vlaneseq
    %v4423 = vshrl.u32 %v4422, 7
    %v4424 = vsub.s32 %v4421, %v4423
    %v4425 = vrot.slane %v4311, %v4424
    %v4426 = vcombine.high %v4425, %v4425
    %v4428 = vunpack.c.l.s4 1966171168
    %v4429 = vunpack.c.0.s8 %v4428
    %v4430 = vlaneseq
    %v4431 = vshrl.u32 %v4430, 7
    %v4432 = vsub.s32 %v4429, %v4431
    %v4433 = vrot.slane %v4425, %v4432
    %v4435 = vunpack.c.l.s4 1966171168
    %v4436 = vunpack.c.0.s8 %v4435
    %v4437 = vlaneseq
    %v4438 = vshrl.u32 %v4437, 7
    %v4439 = vsub.s32 %v4436, %v4438
    %v4440 = vrot.slane %v4426, %v4439
    %v4441 = vlaneseq
    %v4442 = vshrl.u32 %v4441, 7
    %v4443 = vsub.s32 0, %v4442
    %v4444 = vrot.slane %v4433, %v4443
    %4445 = vrot.lane.b32.xlu0 %v4444, 64
    %v4446 = vpop.permute.xlu0 %4445
    %v4447 = vsel %vm168, %v4446, 0
    %4449 = vmatprep.subr.mxu0 0.0
    %4450 = vmatpush1.xpose.msra.mxu0 %v1629
    %4451 = vmatprep.subr.mxu0 0.0
    %4452 = vmatpush1.xpose.msra.mxu0 %v1632
    %4453 = vmatprep.subr.mxu0 0.0
    %4454 = vmatpush1.xpose.msra.mxu0 0.0
    %4455 = vmatprep.subr.mxu0 0.0
    %4456 = vmatpush1.xpose.msra.mxu0 0.0
    %4457 = vmatprep.subr.mxu0 0.0
    %4458 = vmatpush1.xpose.msra.mxu0 0.0
    %4459 = vmatprep.subr.mxu0 0.0
    %4460 = vmatpush1.xpose.msra.mxu0 0.0
    %4461 = vmatprep.subr.mxu0 0.0
    %4462 = vmatpush1.xpose.msra.mxu0 0.0
    %4463 = vmatprep.subr.mxu0 0.0
    %4464 = vmatpush1.xpose.msra.mxu0 0.0
    %4465 = vmatprep.subr.mxu0 0.0
    %4466 = vmatpush1.xpose.msra.mxu0 0.0
    %4467 = vmatprep.subr.mxu0 0.0
    %4468 = vmatpush1.xpose.msra.mxu0 0.0
    %4469 = vmatprep.subr.mxu0 0.0
    %4470 = vmatpush1.xpose.msra.mxu0 0.0
    %4471 = vmatprep.subr.mxu0 0.0
    %4472 = vmatpush1.xpose.msra.mxu0 0.0
    %4473 = vmatprep.subr.mxu0 0.0
    %4474 = vmatpush1.xpose.msra.mxu0 0.0
    %4475 = vmatprep.subr.mxu0 0.0
    %4476 = vmatpush1.xpose.msra.mxu0 0.0
    %4477 = vmatprep.subr.mxu0 0.0
    %4478 = vmatpush1.xpose.msra.mxu0 0.0
    %4479 = vmatprep.subr.mxu0 0.0
    %4480 = vmatpush1.xpose.msra.mxu0 0.0
    %4481 = vmatprep.subr.mxu0 0.0
    %4482 = vmatpush1.xpose.msra.mxu0 0.0
    %4483 = vmatprep.subr.mxu0 0.0
    %4484 = vmatpush1.xpose.msra.mxu0 0.0
    %4485 = vmatprep.subr.mxu0 0.0
    %4486 = vmatpush1.xpose.msra.mxu0 0.0
    %4487 = vmatprep.subr.mxu0 0.0
    %4488 = vmatpush1.xpose.msra.mxu0 0.0
    %4489 = vmatprep.subr.mxu0 0.0
    %4490 = vmatpush1.xpose.msra.mxu0 0.0
    %4491 = vmatprep.subr.mxu0 0.0
    %4492 = vmatpush1.xpose.msra.mxu0 0.0
    %4493 = vmatprep.subr.mxu0 0.0
    %4494 = vmatpush1.xpose.msra.mxu0 0.0
    %4495 = vmatprep.subr.mxu0 0.0
    %4496 = vmatpush1.xpose.msra.mxu0 0.0
    %4497 = vmatprep.subr.mxu0 0.0
    %4498 = vmatpush1.xpose.msra.mxu0 0.0
    %4499 = vmatprep.subr.mxu0 0.0
    %4500 = vmatpush1.xpose.msra.mxu0 0.0
    %4501 = vmatprep.subr.mxu0 0.0
    %4502 = vmatpush1.xpose.msra.mxu0 0.0
    %4503 = vmatprep.subr.mxu0 0.0
    %4504 = vmatpush1.xpose.msra.mxu0 0.0
    %4505 = vmatprep.subr.mxu0 0.0
    %4506 = vmatpush1.xpose.msra.mxu0 0.0
    %4507 = vmatprep.subr.mxu0 0.0
    %4508 = vmatpush1.xpose.msra.mxu0 0.0
    %4509 = vmatprep.subr.mxu0 0.0
    %4510 = vmatpush1.xpose.msra.mxu0 0.0
    %4511 = vmatprep.subr.mxu0 0.0
    %4512 = vmatpush1.xpose.msra.mxu0 0.0
    %4513 = vmatprep.mubr.f32.mxu0 0.0
    %4514 = vmatmul.mubr.f32.gmra.mrb[0].mxu0 %v4447
    %v4515 = vpop.f32.mrb[0].mxu0
    %v4516 = vadd.f32 0.0, %v4515
    %v4517 = vpop.f32.mrb[0].mxu0
    %4518 = vdwg.mxu0
    %v4519 = vlaneseq
    %v4520 = vshrl.u32 %v4519, 7
    %v4521 = vsub.s32 0, %v4520
    %v4522 = vrot.slane %v4440, %v4521
    %4523 = vrot.lane.b32.xlu0 %v4522, 64
    %v4524 = vpop.permute.xlu0 %4523
    %v4525 = vsel %vm168, %v4524, 0
    %4527 = vmatprep.subr.mxu0 0.0
    %4528 = vmatpush1.xpose.msra.mxu0 %v1707
    %4529 = vmatprep.subr.mxu0 0.0
    %4530 = vmatpush1.xpose.msra.mxu0 %v1710
    %4531 = vmatprep.subr.mxu0 0.0
    %4532 = vmatpush1.xpose.msra.mxu0 0.0
    %4533 = vmatprep.subr.mxu0 0.0
    %4534 = vmatpush1.xpose.msra.mxu0 0.0
    %4535 = vmatprep.subr.mxu0 0.0
    %4536 = vmatpush1.xpose.msra.mxu0 0.0
    %4537 = vmatprep.subr.mxu0 0.0
    %4538 = vmatpush1.xpose.msra.mxu0 0.0
    %4539 = vmatprep.subr.mxu0 0.0
    %4540 = vmatpush1.xpose.msra.mxu0 0.0
    %4541 = vmatprep.subr.mxu0 0.0
    %4542 = vmatpush1.xpose.msra.mxu0 0.0
    %4543 = vmatprep.subr.mxu0 0.0
    %4544 = vmatpush1.xpose.msra.mxu0 0.0
    %4545 = vmatprep.subr.mxu0 0.0
    %4546 = vmatpush1.xpose.msra.mxu0 0.0
    %4547 = vmatprep.subr.mxu0 0.0
    %4548 = vmatpush1.xpose.msra.mxu0 0.0
    %4549 = vmatprep.subr.mxu0 0.0
    %4550 = vmatpush1.xpose.msra.mxu0 0.0
    %4551 = vmatprep.subr.mxu0 0.0
    %4552 = vmatpush1.xpose.msra.mxu0 0.0
    %4553 = vmatprep.subr.mxu0 0.0
    %4554 = vmatpush1.xpose.msra.mxu0 0.0
    %4555 = vmatprep.subr.mxu0 0.0
    %4556 = vmatpush1.xpose.msra.mxu0 0.0
    %4557 = vmatprep.subr.mxu0 0.0
    %4558 = vmatpush1.xpose.msra.mxu0 0.0
    %4559 = vmatprep.subr.mxu0 0.0
    %4560 = vmatpush1.xpose.msra.mxu0 0.0
    %4561 = vmatprep.subr.mxu0 0.0
    %4562 = vmatpush1.xpose.msra.mxu0 0.0
    %4563 = vmatprep.subr.mxu0 0.0
    %4564 = vmatpush1.xpose.msra.mxu0 0.0
    %4565 = vmatprep.subr.mxu0 0.0
    %4566 = vmatpush1.xpose.msra.mxu0 0.0
    %4567 = vmatprep.subr.mxu0 0.0
    %4568 = vmatpush1.xpose.msra.mxu0 0.0
    %4569 = vmatprep.subr.mxu0 0.0
    %4570 = vmatpush1.xpose.msra.mxu0 0.0
    %4571 = vmatprep.subr.mxu0 0.0
    %4572 = vmatpush1.xpose.msra.mxu0 0.0
    %4573 = vmatprep.subr.mxu0 0.0
    %4574 = vmatpush1.xpose.msra.mxu0 0.0
    %4575 = vmatprep.subr.mxu0 0.0
    %4576 = vmatpush1.xpose.msra.mxu0 0.0
    %4577 = vmatprep.subr.mxu0 0.0
    %4578 = vmatpush1.xpose.msra.mxu0 0.0
    %4579 = vmatprep.subr.mxu0 0.0
    %4580 = vmatpush1.xpose.msra.mxu0 0.0
    %4581 = vmatprep.subr.mxu0 0.0
    %4582 = vmatpush1.xpose.msra.mxu0 0.0
    %4583 = vmatprep.subr.mxu0 0.0
    %4584 = vmatpush1.xpose.msra.mxu0 0.0
    %4585 = vmatprep.subr.mxu0 0.0
    %4586 = vmatpush1.xpose.msra.mxu0 0.0
    %4587 = vmatprep.subr.mxu0 0.0
    %4588 = vmatpush1.xpose.msra.mxu0 0.0
    %4589 = vmatprep.subr.mxu0 0.0
    %4590 = vmatpush1.xpose.msra.mxu0 0.0
    %4591 = vmatprep.mubr.f32.mxu0 0.0
    %4592 = vmatmul.mubr.f32.gmra.mrb[0].mxu0 %v4525
    %v4593 = vpop.f32.mrb[0].mxu0
    %v4594 = vadd.f32 0.0, %v4593
    %v4595 = vpop.f32.mrb[0].mxu0
    %4596 = vdwg.mxu0
    %v4597 = vsel %vm1782, %v4516, -inf
    %4598 = vmax.xlane.f32.xlu0 %v4597
    %v4599 = vpop.xlane.xlu0 %4598
    %v4600 = vsel %vm1782, %v4594, -inf
    %4601 = vmax.xlane.f32.xlu0 %v4600
    %v4602 = vpop.xlane.xlu0 %4601
    %v4603 = vsub.f32 %v4516, %v4599
    %v4604 = vsub.f32 %v4594, %v4602
    %v4605 = vmul.f32 %v4603, 1.442695
    %v4606 = vpow.pop %v4605
    %v4607 = vmul.f32 %v4604, 1.442695
    %v4608 = vpow.pop %v4607
    %v4609 = vsel %vm1782, %v4606, 0.0
    %4610 = vadd.xlane.f32.xlu0 %v4609
    %v4611 = vpop.xlane.xlu0 %4610
    %v4612 = vsel %vm1782, %v4608, 0.0
    %4613 = vadd.xlane.f32.xlu0 %v4612
    %v4614 = vpop.xlane.xlu0 %4613
    %v4615 = vrcp.pop %v4611
    %v4616 = vmul.f32 %v4606, %v4615
    %v4617 = vrcp.pop %v4614
    %v4618 = vmul.f32 %v4608, %v4617
    %v4620 = vsel %vm1805, %v4616, 0
    %4622 = vmatprep.subr.mxu0 0.0
    %4623 = vmatpush1.msra.mxu0 %v1617
    %4624 = vmatprep.subr.mxu0 0.0
    %4625 = vmatpush1.msra.mxu0 %v1810
    %4626 = vmatprep.subr.mxu0 0.0
    %4627 = vmatpush1.msra.mxu0 0.0
    %4628 = vmatprep.subr.mxu0 0.0
    %4629 = vmatpush1.msra.mxu0 0.0
    %4630 = vmatprep.subr.mxu0 0.0
    %4631 = vmatpush1.msra.mxu0 0.0
    %4632 = vmatprep.subr.mxu0 0.0
    %4633 = vmatpush1.msra.mxu0 0.0
    %4634 = vmatprep.subr.mxu0 0.0
    %4635 = vmatpush1.msra.mxu0 0.0
    %4636 = vmatprep.subr.mxu0 0.0
    %4637 = vmatpush1.msra.mxu0 0.0
    %4638 = vmatprep.subr.mxu0 0.0
    %4639 = vmatpush1.msra.mxu0 0.0
    %4640 = vmatprep.subr.mxu0 0.0
    %4641 = vmatpush1.msra.mxu0 0.0
    %4642 = vmatprep.subr.mxu0 0.0
    %4643 = vmatpush1.msra.mxu0 0.0
    %4644 = vmatprep.subr.mxu0 0.0
    %4645 = vmatpush1.msra.mxu0 0.0
    %4646 = vmatprep.subr.mxu0 0.0
    %4647 = vmatpush1.msra.mxu0 0.0
    %4648 = vmatprep.subr.mxu0 0.0
    %4649 = vmatpush1.msra.mxu0 0.0
    %4650 = vmatprep.subr.mxu0 0.0
    %4651 = vmatpush1.msra.mxu0 0.0
    %4652 = vmatprep.subr.mxu0 0.0
    %4653 = vmatpush1.msra.mxu0 0.0
    %4654 = vmatprep.subr.mxu0 0.0
    %4655 = vmatpush1.msra.mxu0 0.0
    %4656 = vmatprep.subr.mxu0 0.0
    %4657 = vmatpush1.msra.mxu0 0.0
    %4658 = vmatprep.subr.mxu0 0.0
    %4659 = vmatpush1.msra.mxu0 0.0
    %4660 = vmatprep.subr.mxu0 0.0
    %4661 = vmatpush1.msra.mxu0 0.0
    %4662 = vmatprep.subr.mxu0 0.0
    %4663 = vmatpush1.msra.mxu0 0.0
    %4664 = vmatprep.subr.mxu0 0.0
    %4665 = vmatpush1.msra.mxu0 0.0
    %4666 = vmatprep.subr.mxu0 0.0
    %4667 = vmatpush1.msra.mxu0 0.0
    %4668 = vmatprep.subr.mxu0 0.0
    %4669 = vmatpush1.msra.mxu0 0.0
    %4670 = vmatprep.subr.mxu0 0.0
    %4671 = vmatpush1.msra.mxu0 0.0
    %4672 = vmatprep.subr.mxu0 0.0
    %4673 = vmatpush1.msra.mxu0 0.0
    %4674 = vmatprep.subr.mxu0 0.0
    %4675 = vmatpush1.msra.mxu0 0.0
    %4676 = vmatprep.subr.mxu0 0.0
    %4677 = vmatpush1.msra.mxu0 0.0
    %4678 = vmatprep.subr.mxu0 0.0
    %4679 = vmatpush1.msra.mxu0 0.0
    %4680 = vmatprep.subr.mxu0 0.0
    %4681 = vmatpush1.msra.mxu0 0.0
    %4682 = vmatprep.subr.mxu0 0.0
    %4683 = vmatpush1.msra.mxu0 0.0
    %4684 = vmatprep.subr.mxu0 0.0
    %4685 = vmatpush1.msra.mxu0 0.0
    %4686 = vmatprep.mubr.f32.mxu0 0.0
    %4687 = vmatmul.mubr.f32.gmra.mrb[0].mxu0 %v4620
    %v4688 = vpop.f32.mrb[0].mxu0
    %v4689 = vadd.f32 0.0, %v4688
    %v4690 = vpop.f32.mrb[0].mxu0
    %4691 = vdwg.mxu0
    %v4693 = vsel %vm1805, %v4618, 0
    %4695 = vmatprep.subr.mxu0 0.0
    %4696 = vmatpush1.msra.mxu0 %v1619
    %4697 = vmatprep.subr.mxu0 0.0
    %4698 = vmatpush1.msra.mxu0 %v1885
    %4699 = vmatprep.subr.mxu0 0.0
    %4700 = vmatpush1.msra.mxu0 0.0
    %4701 = vmatprep.subr.mxu0 0.0
    %4702 = vmatpush1.msra.mxu0 0.0
    %4703 = vmatprep.subr.mxu0 0.0
    %4704 = vmatpush1.msra.mxu0 0.0
    %4705 = vmatprep.subr.mxu0 0.0
    %4706 = vmatpush1.msra.mxu0 0.0
    %4707 = vmatprep.subr.mxu0 0.0
    %4708 = vmatpush1.msra.mxu0 0.0
    %4709 = vmatprep.subr.mxu0 0.0
    %4710 = vmatpush1.msra.mxu0 0.0
    %4711 = vmatprep.subr.mxu0 0.0
    %4712 = vmatpush1.msra.mxu0 0.0
    %4713 = vmatprep.subr.mxu0 0.0
    %4714 = vmatpush1.msra.mxu0 0.0
    %4715 = vmatprep.subr.mxu0 0.0
    %4716 = vmatpush1.msra.mxu0 0.0
    %4717 = vmatprep.subr.mxu0 0.0
    %4718 = vmatpush1.msra.mxu0 0.0
    %4719 = vmatprep.subr.mxu0 0.0
    %4720 = vmatpush1.msra.mxu0 0.0
    %4721 = vmatprep.subr.mxu0 0.0
    %4722 = vmatpush1.msra.mxu0 0.0
    %4723 = vmatprep.subr.mxu0 0.0
    %4724 = vmatpush1.msra.mxu0 0.0
    %4725 = vmatprep.subr.mxu0 0.0
    %4726 = vmatpush1.msra.mxu0 0.0
    %4727 = vmatprep.subr.mxu0 0.0
    %4728 = vmatpush1.msra.mxu0 0.0
    %4729 = vmatprep.subr.mxu0 0.0
    %4730 = vmatpush1.msra.mxu0 0.0
    %4731 = vmatprep.subr.mxu0 0.0
    %4732 = vmatpush1.msra.mxu0 0.0
    %4733 = vmatprep.subr.mxu0 0.0
    %4734 = vmatpush1.msra.mxu0 0.0
    %4735 = vmatprep.subr.mxu0 0.0
    %4736 = vmatpush1.msra.mxu0 0.0
    %4737 = vmatprep.subr.mxu0 0.0
    %4738 = vmatpush1.msra.mxu0 0.0
    %4739 = vmatprep.subr.mxu0 0.0
    %4740 = vmatpush1.msra.mxu0 0.0
    %4741 = vmatprep.subr.mxu0 0.0
    %4742 = vmatpush1.msra.mxu0 0.0
    %4743 = vmatprep.subr.mxu0 0.0
    %4744 = vmatpush1.msra.mxu0 0.0
    %4745 = vmatprep.subr.mxu0 0.0
    %4746 = vmatpush1.msra.mxu0 0.0
    %4747 = vmatprep.subr.mxu0 0.0
    %4748 = vmatpush1.msra.mxu0 0.0
    %4749 = vmatprep.subr.mxu0 0.0
    %4750 = vmatpush1.msra.mxu0 0.0
    %4751 = vmatprep.subr.mxu0 0.0
    %4752 = vmatpush1.msra.mxu0 0.0
    %4753 = vmatprep.subr.mxu0 0.0
    %4754 = vmatpush1.msra.mxu0 0.0
    %4755 = vmatprep.subr.mxu0 0.0
    %4756 = vmatpush1.msra.mxu0 0.0
    %4757 = vmatprep.subr.mxu0 0.0
    %4758 = vmatpush1.msra.mxu0 0.0
    %4759 = vmatprep.mubr.f32.mxu0 0.0
    %4760 = vmatmul.mubr.f32.gmra.mrb[0].mxu0 %v4693
    %v4761 = vpop.f32.mrb[0].mxu0
    %v4762 = vadd.f32 0.0, %v4761
    %v4763 = vpop.f32.mrb[0].mxu0
    %4764 = vdwg.mxu0
    %v4767 = vrot.slane %v4762, 7
    %v4768 = vsel %vm1960, %v4767, %v4689
    %4769 = vrot.lane.b32.xlu0 %v4768, 32
    %v4770 = vpop.permute.xlu0 %4769
    %v4772 = vsel %vm168, %v4418, %v4770
    %v4773 = vsel %vm1968, %v4772, %v4311
    %v4775 = vsel %vm1970, %v4773, 0
    %4777 = vmatprep.subr.mxu0 %v39
    %4778 = vmatpush1.msra.mxu0 %v38
    %4779 = vmatprep.subr.mxu0 %v41
    %4780 = vmatpush1.msra.mxu0 %v40
    %4781 = vmatprep.subr.mxu0 %v43
    %4782 = vmatpush1.msra.mxu0 %v42
    %4783 = vmatprep.subr.mxu0 %v45
    %4784 = vmatpush1.msra.mxu0 %v44
    %4785 = vmatprep.subr.mxu0 %v47
    %4786 = vmatpush1.msra.mxu0 %v46
    %4787 = vmatprep.subr.mxu0 %v49
    %4788 = vmatpush1.msra.mxu0 %v48
    %4789 = vmatprep.subr.mxu0 %v51
    %4790 = vmatpush1.msra.mxu0 %v50
    %4791 = vmatprep.subr.mxu0 %v53
    %4792 = vmatpush1.msra.mxu0 %v52
    %4793 = vmatprep.subr.mxu0 %v55
    %4794 = vmatpush1.msra.mxu0 %v54
    %4795 = vmatprep.subr.mxu0 %v57
    %4796 = vmatpush1.msra.mxu0 %v56
    %4797 = vmatprep.subr.mxu0 %v59
    %4798 = vmatpush1.msra.mxu0 %v58
    %4799 = vmatprep.subr.mxu0 %v61
    %4800 = vmatpush1.msra.mxu0 %v60
    %4801 = vmatprep.subr.mxu0 0.0
    %4802 = vmatpush1.msra.mxu0 0.0
    %4803 = vmatprep.subr.mxu0 0.0
    %4804 = vmatpush1.msra.mxu0 0.0
    %4805 = vmatprep.subr.mxu0 0.0
    %4806 = vmatpush1.msra.mxu0 0.0
    %4807 = vmatprep.subr.mxu0 0.0
    %4808 = vmatpush1.msra.mxu0 0.0
    %4809 = vmatprep.subr.mxu0 0.0
    %4810 = vmatpush1.msra.mxu0 0.0
    %4811 = vmatprep.subr.mxu0 0.0
    %4812 = vmatpush1.msra.mxu0 0.0
    %4813 = vmatprep.subr.mxu0 0.0
    %4814 = vmatpush1.msra.mxu0 0.0
    %4815 = vmatprep.subr.mxu0 0.0
    %4816 = vmatpush1.msra.mxu0 0.0
    %4817 = vmatprep.subr.mxu0 0.0
    %4818 = vmatpush1.msra.mxu0 0.0
    %4819 = vmatprep.subr.mxu0 0.0
    %4820 = vmatpush1.msra.mxu0 0.0
    %4821 = vmatprep.subr.mxu0 0.0
    %4822 = vmatpush1.msra.mxu0 0.0
    %4823 = vmatprep.subr.mxu0 0.0
    %4824 = vmatpush1.msra.mxu0 0.0
    %4825 = vmatprep.subr.mxu0 0.0
    %4826 = vmatpush1.msra.mxu0 0.0
    %4827 = vmatprep.subr.mxu0 0.0
    %4828 = vmatpush1.msra.mxu0 0.0
    %4829 = vmatprep.subr.mxu0 0.0
    %4830 = vmatpush1.msra.mxu0 0.0
    %4831 = vmatprep.subr.mxu0 0.0
    %4832 = vmatpush1.msra.mxu0 0.0
    %4833 = vmatprep.subr.mxu0 0.0
    %4834 = vmatpush1.msra.mxu0 0.0
    %4835 = vmatprep.subr.mxu0 0.0
    %4836 = vmatpush1.msra.mxu0 0.0
    %4837 = vmatprep.subr.mxu0 0.0
    %4838 = vmatpush1.msra.mxu0 0.0
    %4839 = vmatprep.subr.mxu0 0.0
    %4840 = vmatpush1.msra.mxu0 0.0
    %4841 = vmatprep.mubr.f32.mxu0 0.0
    %4842 = vmatmul.mubr.f32.gmra.mrb[0].mxu0 %v4775
    %v4843 = vpop.f32.mrb[0].mxu0
    %v4844 = vadd.f32 0.0, %v4843
    %v4845 = vpop.f32.mrb[0].mxu0
    %v4846 = vadd.f32 0.0, %v4845
    %4847 = vdwg.mxu0
    %v4848 = vxor.u32 %v4844, 2147483648
    %v4849 = vmul.f32 %v4848, 1.442695
    %v4850 = vpow.pop %v4849
    %v4851 = vadd.f32 %v4850, 1.0
    %v4852 = vrcp.pop %v4851
    %v4853 = vmul.f32 1.0, %v4852
    %v4854 = vtanh.pop %v4844
    %v4855 = vmul.f32 %v4853, %v4305
    %4857 = vrot.lane.b32.xlu0 %v4854, 32
    %v4858 = vpop.permute.xlu0 %4857
    %v4860 = vmul.f32 %v4853, %v4858
    %4862 = vrot.lane.b32.xlu0 %v4860, 32
    %v4863 = vpop.permute.xlu0 %4862
    %v4865 = vadd.f32 %v4855, %v4863
    %v4866 = vtanh.pop %v4865
    %4868 = vrot.lane.b32.xlu0 %v4866, 32
    %v4869 = vpop.permute.xlu0 %4868
    %v4871 = vmul.f32 %v4853, %v4869
    %4873 = vrot.lane.b32.xlu0 %v4871, 64
    %v4874 = vpop.permute.xlu0 %4873
    %v4875 = vsel %vm168, %v4874, 0
    %4877 = vmatprep.subr.mxu0 0.0
    %4878 = vmatpush1.msra.mxu0 %v62
    %4879 = vmatprep.subr.mxu0 0.0
    %4880 = vmatpush1.msra.mxu0 %v63
    %4881 = vmatprep.subr.mxu0 0.0
    %4882 = vmatpush1.msra.mxu0 %v64
    %4883 = vmatprep.subr.mxu0 0.0
    %4884 = vmatpush1.msra.mxu0 %v65
    %4885 = vmatprep.subr.mxu0 0.0
    %4886 = vmatpush1.msra.mxu0 0.0
    %4887 = vmatprep.subr.mxu0 0.0
    %4888 = vmatpush1.msra.mxu0 0.0
    %4889 = vmatprep.subr.mxu0 0.0
    %4890 = vmatpush1.msra.mxu0 0.0
    %4891 = vmatprep.subr.mxu0 0.0
    %4892 = vmatpush1.msra.mxu0 0.0
    %4893 = vmatprep.subr.mxu0 0.0
    %4894 = vmatpush1.msra.mxu0 0.0
    %4895 = vmatprep.subr.mxu0 0.0
    %4896 = vmatpush1.msra.mxu0 0.0
    %4897 = vmatprep.subr.mxu0 0.0
    %4898 = vmatpush1.msra.mxu0 0.0
    %4899 = vmatprep.subr.mxu0 0.0
    %4900 = vmatpush1.msra.mxu0 0.0
    %4901 = vmatprep.subr.mxu0 0.0
    %4902 = vmatpush1.msra.mxu0 0.0
    %4903 = vmatprep.subr.mxu0 0.0
    %4904 = vmatpush1.msra.mxu0 0.0
    %4905 = vmatprep.subr.mxu0 0.0
    %4906 = vmatpush1.msra.mxu0 0.0
    %4907 = vmatprep.subr.mxu0 0.0
    %4908 = vmatpush1.msra.mxu0 0.0
    %4909 = vmatprep.subr.mxu0 0.0
    %4910 = vmatpush1.msra.mxu0 0.0
    %4911 = vmatprep.subr.mxu0 0.0
    %4912 = vmatpush1.msra.mxu0 0.0
    %4913 = vmatprep.subr.mxu0 0.0
    %4914 = vmatpush1.msra.mxu0 0.0
    %4915 = vmatprep.subr.mxu0 0.0
    %4916 = vmatpush1.msra.mxu0 0.0
    %4917 = vmatprep.subr.mxu0 0.0
    %4918 = vmatpush1.msra.mxu0 0.0
    %4919 = vmatprep.subr.mxu0 0.0
    %4920 = vmatpush1.msra.mxu0 0.0
    %4921 = vmatprep.subr.mxu0 0.0
    %4922 = vmatpush1.msra.mxu0 0.0
    %4923 = vmatprep.subr.mxu0 0.0
    %4924 = vmatpush1.msra.mxu0 0.0
    %4925 = vmatprep.subr.mxu0 0.0
    %4926 = vmatpush1.msra.mxu0 0.0
    %4927 = vmatprep.subr.mxu0 0.0
    %4928 = vmatpush1.msra.mxu0 0.0
    %4929 = vmatprep.subr.mxu0 0.0
    %4930 = vmatpush1.msra.mxu0 0.0
    %4931 = vmatprep.subr.mxu0 0.0
    %4932 = vmatpush1.msra.mxu0 0.0
    %4933 = vmatprep.subr.mxu0 0.0
    %4934 = vmatpush1.msra.mxu0 0.0
    %4935 = vmatprep.subr.mxu0 0.0
    %4936 = vmatpush1.msra.mxu0 0.0
    %4937 = vmatprep.subr.mxu0 0.0
    %4938 = vmatpush1.msra.mxu0 0.0
    %4939 = vmatprep.subr.mxu0 0.0
    %4940 = vmatpush1.msra.mxu0 0.0
    %4941 = vmatprep.mubr.f32.mxu0 0.0
    %4942 = vmatmul.mubr.f32.gmra.mrb[0].mxu0 %v4875
    %v4943 = vpop.f32.mrb[0].mxu0
    %v4944 = vadd.f32 0.0, %v4943
    %v4945 = vpop.f32.mrb[0].mxu0
    %4946 = vdwg.mxu0
    %v4947 = vadd.f32 %v4846, %v4944
    %4948 = vst.msk [vmem:[#allocation5 + $0xc] sm:$0x3] %vm1621, %v4947
    %v4949 = vsel %vm1621, %v4947, -inf
    %4950 = vmax.xlane.f32.xlu0 %v4949
    %v4951 = vpop.xlane.xlu0 %4950
    %vm4952 = vcmp.eq.f32.partialorder %v4947, %v4951
    %v4953 = vsel %vm4952, %v1624, 32
    %v4954 = vsel %vm1621, %v4953, 2147483647
    %v4955 = vand.u32 %v4954, 65535
    %v4956 = vshra.s32 %v4954, 16
    %v4957 = vcvt.s32.f32 %v4955
    %v4958 = vcvt.s32.f32 %v4956
    %4959 = vmin.xlane.f32.xlu0 %v4958
    %v4960 = vpop.xlane.xlu0 %4959
    %vm4961 = vcmp.eq.f32.partialorder %v4958, %v4960
    %v4962 = vsel %vm4961, %v4957, inf
    %4963 = vmin.xlane.f32.xlu0 %v4962
    %v4964 = vpop.xlane.xlu0 %4963
    %v4965 = vcvt.f32.s32 %v4964
    %v4966 = vcvt.f32.s32 %v4960
    %v4967 = vshll.u32 %v4966, 16
    %v4968 = vadd.s32 %v4967, %v4965
    %vm4969 = vcmp.eq.s32.totalorder %v1624, %v4968
    %v4970 = vsel %vm4969, 1, 0
    %v4971 = vcvt.s32.f32 %v4970
    %v4972 = vld [vmem:[%s2 + $0xc] sm:$0x3]
    %s4973 = sld [smem:[#allocation4 + $0x6]]
    %p4974 = scmp.eq.s32.totalorder %s4973, 1
    %s4975 = scalar_select %p4974, 1, 0
    %v4976 = vstv %s4975
    %vm4977 = vcmp.eq.s32.totalorder %v4976, 1
    %v4978 = vsel %vm4977, %v4972, %v4971
    %v4980 = vunpack.c.l.s4 1966171168
    %v4981 = vunpack.c.0.s8 %v4980
    %v4982 = vlaneseq
    %v4983 = vshrl.u32 %v4982, 7
    %v4984 = vsub.s32 %v4981, %v4983
    %v4985 = vrot.slane %v4871, %v4984
    %v4986 = vcombine.high %v4985, %v4985
    %v4988 = vunpack.c.l.s4 1966171168
    %v4989 = vunpack.c.0.s8 %v4988
    %v4990 = vlaneseq
    %v4991 = vshrl.u32 %v4990, 7
    %v4992 = vsub.s32 %v4989, %v4991
    %v4993 = vrot.slane %v4985, %v4992
    %v4995 = vunpack.c.l.s4 1966171168
    %v4996 = vunpack.c.0.s8 %v4995
    %v4997 = vlaneseq
    %v4998 = vshrl.u32 %v4997, 7
    %v4999 = vsub.s32 %v4996, %v4998
    %v5000 = vrot.slane %v4986, %v4999
    %v5001 = vlaneseq
    %v5002 = vshrl.u32 %v5001, 7
    %v5003 = vsub.s32 0, %v5002
    %v5004 = vrot.slane %v4993, %v5003
    %5005 = vrot.lane.b32.xlu0 %v5004, 64
    %v5006 = vpop.permute.xlu0 %5005
    %v5007 = vsel %vm168, %v5006, 0
    %5009 = vmatprep.subr.mxu0 0.0
    %5010 = vmatpush1.xpose.msra.mxu0 %v1629
    %5011 = vmatprep.subr.mxu0 0.0
    %5012 = vmatpush1.xpose.msra.mxu0 %v1632
    %5013 = vmatprep.subr.mxu0 0.0
    %5014 = vmatpush1.xpose.msra.mxu0 0.0
    %5015 = vmatprep.subr.mxu0 0.0
    %5016 = vmatpush1.xpose.msra.mxu0 0.0
    %5017 = vmatprep.subr.mxu0 0.0
    %5018 = vmatpush1.xpose.msra.mxu0 0.0
    %5019 = vmatprep.subr.mxu0 0.0
    %5020 = vmatpush1.xpose.msra.mxu0 0.0
    %5021 = vmatprep.subr.mxu0 0.0
    %5022 = vmatpush1.xpose.msra.mxu0 0.0
    %5023 = vmatprep.subr.mxu0 0.0
    %5024 = vmatpush1.xpose.msra.mxu0 0.0
    %5025 = vmatprep.subr.mxu0 0.0
    %5026 = vmatpush1.xpose.msra.mxu0 0.0
    %5027 = vmatprep.subr.mxu0 0.0
    %5028 = vmatpush1.xpose.msra.mxu0 0.0
    %5029 = vmatprep.subr.mxu0 0.0
    %5030 = vmatpush1.xpose.msra.mxu0 0.0
    %5031 = vmatprep.subr.mxu0 0.0
    %5032 = vmatpush1.xpose.msra.mxu0 0.0
    %5033 = vmatprep.subr.mxu0 0.0
    %5034 = vmatpush1.xpose.msra.mxu0 0.0
    %5035 = vmatprep.subr.mxu0 0.0
    %5036 = vmatpush1.xpose.msra.mxu0 0.0
    %5037 = vmatprep.subr.mxu0 0.0
    %5038 = vmatpush1.xpose.msra.mxu0 0.0
    %5039 = vmatprep.subr.mxu0 0.0
    %5040 = vmatpush1.xpose.msra.mxu0 0.0
    %5041 = vmatprep.subr.mxu0 0.0
    %5042 = vmatpush1.xpose.msra.mxu0 0.0
    %5043 = vmatprep.subr.mxu0 0.0
    %5044 = vmatpush1.xpose.msra.mxu0 0.0
    %5045 = vmatprep.subr.mxu0 0.0
    %5046 = vmatpush1.xpose.msra.mxu0 0.0
    %5047 = vmatprep.subr.mxu0 0.0
    %5048 = vmatpush1.xpose.msra.mxu0 0.0
    %5049 = vmatprep.subr.mxu0 0.0
    %5050 = vmatpush1.xpose.msra.mxu0 0.0
    %5051 = vmatprep.subr.mxu0 0.0
    %5052 = vmatpush1.xpose.msra.mxu0 0.0
    %5053 = vmatprep.subr.mxu0 0.0
    %5054 = vmatpush1.xpose.msra.mxu0 0.0
    %5055 = vmatprep.subr.mxu0 0.0
    %5056 = vmatpush1.xpose.msra.mxu0 0.0
    %5057 = vmatprep.subr.mxu0 0.0
    %5058 = vmatpush1.xpose.msra.mxu0 0.0
    %5059 = vmatprep.subr.mxu0 0.0
    %5060 = vmatpush1.xpose.msra.mxu0 0.0
    %5061 = vmatprep.subr.mxu0 0.0
    %5062 = vmatpush1.xpose.msra.mxu0 0.0
    %5063 = vmatprep.subr.mxu0 0.0
    %5064 = vmatpush1.xpose.msra.mxu0 0.0
    %5065 = vmatprep.subr.mxu0 0.0
    %5066 = vmatpush1.xpose.msra.mxu0 0.0
    %5067 = vmatprep.subr.mxu0 0.0
    %5068 = vmatpush1.xpose.msra.mxu0 0.0
    %5069 = vmatprep.subr.mxu0 0.0
    %5070 = vmatpush1.xpose.msra.mxu0 0.0
    %5071 = vmatprep.subr.mxu0 0.0
    %5072 = vmatpush1.xpose.msra.mxu0 0.0
    %5073 = vmatprep.mubr.f32.mxu0 0.0
    %5074 = vmatmul.mubr.f32.gmra.mrb[0].mxu0 %v5007
    %v5075 = vpop.f32.mrb[0].mxu0
    %v5076 = vadd.f32 0.0, %v5075
    %v5077 = vpop.f32.mrb[0].mxu0
    %5078 = vdwg.mxu0
    %v5079 = vlaneseq
    %v5080 = vshrl.u32 %v5079, 7
    %v5081 = vsub.s32 0, %v5080
    %v5082 = vrot.slane %v5000, %v5081
    %5083 = vrot.lane.b32.xlu0 %v5082, 64
    %v5084 = vpop.permute.xlu0 %5083
    %v5085 = vsel %vm168, %v5084, 0
    %5087 = vmatprep.subr.mxu0 0.0
    %5088 = vmatpush1.xpose.msra.mxu0 %v1707
    %5089 = vmatprep.subr.mxu0 0.0
    %5090 = vmatpush1.xpose.msra.mxu0 %v1710
    %5091 = vmatprep.subr.mxu0 0.0
    %5092 = vmatpush1.xpose.msra.mxu0 0.0
    %5093 = vmatprep.subr.mxu0 0.0
    %5094 = vmatpush1.xpose.msra.mxu0 0.0
    %5095 = vmatprep.subr.mxu0 0.0
    %5096 = vmatpush1.xpose.msra.mxu0 0.0
    %5097 = vmatprep.subr.mxu0 0.0
    %5098 = vmatpush1.xpose.msra.mxu0 0.0
    %5099 = vmatprep.subr.mxu0 0.0
    %5100 = vmatpush1.xpose.msra.mxu0 0.0
    %5101 = vmatprep.subr.mxu0 0.0
    %5102 = vmatpush1.xpose.msra.mxu0 0.0
    %5103 = vmatprep.subr.mxu0 0.0
    %5104 = vmatpush1.xpose.msra.mxu0 0.0
    %5105 = vmatprep.subr.mxu0 0.0
    %5106 = vmatpush1.xpose.msra.mxu0 0.0
    %5107 = vmatprep.subr.mxu0 0.0
    %5108 = vmatpush1.xpose.msra.mxu0 0.0
    %5109 = vmatprep.subr.mxu0 0.0
    %5110 = vmatpush1.xpose.msra.mxu0 0.0
    %5111 = vmatprep.subr.mxu0 0.0
    %5112 = vmatpush1.xpose.msra.mxu0 0.0
    %5113 = vmatprep.subr.mxu0 0.0
    %5114 = vmatpush1.xpose.msra.mxu0 0.0
    %5115 = vmatprep.subr.mxu0 0.0
    %5116 = vmatpush1.xpose.msra.mxu0 0.0
    %5117 = vmatprep.subr.mxu0 0.0
    %5118 = vmatpush1.xpose.msra.mxu0 0.0
    %5119 = vmatprep.subr.mxu0 0.0
    %5120 = vmatpush1.xpose.msra.mxu0 0.0
    %5121 = vmatprep.subr.mxu0 0.0
    %5122 = vmatpush1.xpose.msra.mxu0 0.0
    %5123 = vmatprep.subr.mxu0 0.0
    %5124 = vmatpush1.xpose.msra.mxu0 0.0
    %5125 = vmatprep.subr.mxu0 0.0
    %5126 = vmatpush1.xpose.msra.mxu0 0.0
    %5127 = vmatprep.subr.mxu0 0.0
    %5128 = vmatpush1.xpose.msra.mxu0 0.0
    %5129 = vmatprep.subr.mxu0 0.0
    %5130 = vmatpush1.xpose.msra.mxu0 0.0
    %5131 = vmatprep.subr.mxu0 0.0
    %5132 = vmatpush1.xpose.msra.mxu0 0.0
    %5133 = vmatprep.subr.mxu0 0.0
    %5134 = vmatpush1.xpose.msra.mxu0 0.0
    %5135 = vmatprep.subr.mxu0 0.0
    %5136 = vmatpush1.xpose.msra.mxu0 0.0
    %5137 = vmatprep.subr.mxu0 0.0
    %5138 = vmatpush1.xpose.msra.mxu0 0.0
    %5139 = vmatprep.subr.mxu0 0.0
    %5140 = vmatpush1.xpose.msra.mxu0 0.0
    %5141 = vmatprep.subr.mxu0 0.0
    %5142 = vmatpush1.xpose.msra.mxu0 0.0
    %5143 = vmatprep.subr.mxu0 0.0
    %5144 = vmatpush1.xpose.msra.mxu0 0.0
    %5145 = vmatprep.subr.mxu0 0.0
    %5146 = vmatpush1.xpose.msra.mxu0 0.0
    %5147 = vmatprep.subr.mxu0 0.0
    %5148 = vmatpush1.xpose.msra.mxu0 0.0
    %5149 = vmatprep.subr.mxu0 0.0
    %5150 = vmatpush1.xpose.msra.mxu0 0.0
    %5151 = vmatprep.mubr.f32.mxu0 0.0
    %5152 = vmatmul.mubr.f32.gmra.mrb[0].mxu0 %v5085
    %v5153 = vpop.f32.mrb[0].mxu0
    %v5154 = vadd.f32 0.0, %v5153
    %v5155 = vpop.f32.mrb[0].mxu0
    %5156 = vdwg.mxu0
    %v5157 = vsel %vm1782, %v5076, -inf
    %5158 = vmax.xlane.f32.xlu0 %v5157
    %v5159 = vpop.xlane.xlu0 %5158
    %v5160 = vsel %vm1782, %v5154, -inf
    %5161 = vmax.xlane.f32.xlu0 %v5160
    %v5162 = vpop.xlane.xlu0 %5161
    %v5163 = vsub.f32 %v5076, %v5159
    %v5164 = vsub.f32 %v5154, %v5162
    %v5165 = vmul.f32 %v5163, 1.442695
    %v5166 = vpow.pop %v5165
    %v5167 = vmul.f32 %v5164, 1.442695
    %v5168 = vpow.pop %v5167
    %v5169 = vsel %vm1782, %v5166, 0.0
    %5170 = vadd.xlane.f32.xlu0 %v5169
    %v5171 = vpop.xlane.xlu0 %5170
    %v5172 = vsel %vm1782, %v5168, 0.0
    %5173 = vadd.xlane.f32.xlu0 %v5172
    %v5174 = vpop.xlane.xlu0 %5173
    %v5175 = vrcp.pop %v5171
    %v5176 = vmul.f32 %v5166, %v5175
    %v5177 = vrcp.pop %v5174
    %v5178 = vmul.f32 %v5168, %v5177
    %v5180 = vsel %vm1805, %v5176, 0
    %5182 = vmatprep.subr.mxu0 0.0
    %5183 = vmatpush1.msra.mxu0 %v1617
    %5184 = vmatprep.subr.mxu0 0.0
    %5185 = vmatpush1.msra.mxu0 %v1810
    %5186 = vmatprep.subr.mxu0 0.0
    %5187 = vmatpush1.msra.mxu0 0.0
    %5188 = vmatprep.subr.mxu0 0.0
    %5189 = vmatpush1.msra.mxu0 0.0
    %5190 = vmatprep.subr.mxu0 0.0
    %5191 = vmatpush1.msra.mxu0 0.0
    %5192 = vmatprep.subr.mxu0 0.0
    %5193 = vmatpush1.msra.mxu0 0.0
    %5194 = vmatprep.subr.mxu0 0.0
    %5195 = vmatpush1.msra.mxu0 0.0
    %5196 = vmatprep.subr.mxu0 0.0
    %5197 = vmatpush1.msra.mxu0 0.0
    %5198 = vmatprep.subr.mxu0 0.0
    %5199 = vmatpush1.msra.mxu0 0.0
    %5200 = vmatprep.subr.mxu0 0.0
    %5201 = vmatpush1.msra.mxu0 0.0
    %5202 = vmatprep.subr.mxu0 0.0
    %5203 = vmatpush1.msra.mxu0 0.0
    %5204 = vmatprep.subr.mxu0 0.0
    %5205 = vmatpush1.msra.mxu0 0.0
    %5206 = vmatprep.subr.mxu0 0.0
    %5207 = vmatpush1.msra.mxu0 0.0
    %5208 = vmatprep.subr.mxu0 0.0
    %5209 = vmatpush1.msra.mxu0 0.0
    %5210 = vmatprep.subr.mxu0 0.0
    %5211 = vmatpush1.msra.mxu0 0.0
    %5212 = vmatprep.subr.mxu0 0.0
    %5213 = vmatpush1.msra.mxu0 0.0
    %5214 = vmatprep.subr.mxu0 0.0
    %5215 = vmatpush1.msra.mxu0 0.0
    %5216 = vmatprep.subr.mxu0 0.0
    %5217 = vmatpush1.msra.mxu0 0.0
    %5218 = vmatprep.subr.mxu0 0.0
    %5219 = vmatpush1.msra.mxu0 0.0
    %5220 = vmatprep.subr.mxu0 0.0
    %5221 = vmatpush1.msra.mxu0 0.0
    %5222 = vmatprep.subr.mxu0 0.0
    %5223 = vmatpush1.msra.mxu0 0.0
    %5224 = vmatprep.subr.mxu0 0.0
    %5225 = vmatpush1.msra.mxu0 0.0
    %5226 = vmatprep.subr.mxu0 0.0
    %5227 = vmatpush1.msra.mxu0 0.0
    %5228 = vmatprep.subr.mxu0 0.0
    %5229 = vmatpush1.msra.mxu0 0.0
    %5230 = vmatprep.subr.mxu0 0.0
    %5231 = vmatpush1.msra.mxu0 0.0
    %5232 = vmatprep.subr.mxu0 0.0
    %5233 = vmatpush1.msra.mxu0 0.0
    %5234 = vmatprep.subr.mxu0 0.0
    %5235 = vmatpush1.msra.mxu0 0.0
    %5236 = vmatprep.subr.mxu0 0.0
    %5237 = vmatpush1.msra.mxu0 0.0
    %5238 = vmatprep.subr.mxu0 0.0
    %5239 = vmatpush1.msra.mxu0 0.0
    %5240 = vmatprep.subr.mxu0 0.0
    %5241 = vmatpush1.msra.mxu0 0.0
    %5242 = vmatprep.subr.mxu0 0.0
    %5243 = vmatpush1.msra.mxu0 0.0
    %5244 = vmatprep.subr.mxu0 0.0
    %5245 = vmatpush1.msra.mxu0 0.0
    %5246 = vmatprep.mubr.f32.mxu0 0.0
    %5247 = vmatmul.mubr.f32.gmra.mrb[0].mxu0 %v5180
    %v5248 = vpop.f32.mrb[0].mxu0
    %v5249 = vadd.f32 0.0, %v5248
    %v5250 = vpop.f32.mrb[0].mxu0
    %5251 = vdwg.mxu0
    %v5253 = vsel %vm1805, %v5178, 0
    %5255 = vmatprep.subr.mxu0 0.0
    %5256 = vmatpush1.msra.mxu0 %v1619
    %5257 = vmatprep.subr.mxu0 0.0
    %5258 = vmatpush1.msra.mxu0 %v1885
    %5259 = vmatprep.subr.mxu0 0.0
    %5260 = vmatpush1.msra.mxu0 0.0
    %5261 = vmatprep.subr.mxu0 0.0
    %5262 = vmatpush1.msra.mxu0 0.0
    %5263 = vmatprep.subr.mxu0 0.0
    %5264 = vmatpush1.msra.mxu0 0.0
    %5265 = vmatprep.subr.mxu0 0.0
    %5266 = vmatpush1.msra.mxu0 0.0
    %5267 = vmatprep.subr.mxu0 0.0
    %5268 = vmatpush1.msra.mxu0 0.0
    %5269 = vmatprep.subr.mxu0 0.0
    %5270 = vmatpush1.msra.mxu0 0.0
    %5271 = vmatprep.subr.mxu0 0.0
    %5272 = vmatpush1.msra.mxu0 0.0
    %5273 = vmatprep.subr.mxu0 0.0
    %5274 = vmatpush1.msra.mxu0 0.0
    %5275 = vmatprep.subr.mxu0 0.0
    %5276 = vmatpush1.msra.mxu0 0.0
    %5277 = vmatprep.subr.mxu0 0.0
    %5278 = vmatpush1.msra.mxu0 0.0
    %5279 = vmatprep.subr.mxu0 0.0
    %5280 = vmatpush1.msra.mxu0 0.0
    %5281 = vmatprep.subr.mxu0 0.0
    %5282 = vmatpush1.msra.mxu0 0.0
    %5283 = vmatprep.subr.mxu0 0.0
    %5284 = vmatpush1.msra.mxu0 0.0
    %5285 = vmatprep.subr.mxu0 0.0
    %5286 = vmatpush1.msra.mxu0 0.0
    %5287 = vmatprep.subr.mxu0 0.0
    %5288 = vmatpush1.msra.mxu0 0.0
    %5289 = vmatprep.subr.mxu0 0.0
    %5290 = vmatpush1.msra.mxu0 0.0
    %5291 = vmatprep.subr.mxu0 0.0
    %5292 = vmatpush1.msra.mxu0 0.0
    %5293 = vmatprep.subr.mxu0 0.0
    %5294 = vmatpush1.msra.mxu0 0.0
    %5295 = vmatprep.subr.mxu0 0.0
    %5296 = vmatpush1.msra.mxu0 0.0
    %5297 = vmatprep.subr.mxu0 0.0
    %5298 = vmatpush1.msra.mxu0 0.0
    %5299 = vmatprep.subr.mxu0 0.0
    %5300 = vmatpush1.msra.mxu0 0.0
    %5301 = vmatprep.subr.mxu0 0.0
    %5302 = vmatpush1.msra.mxu0 0.0
    %5303 = vmatprep.subr.mxu0 0.0
    %5304 = vmatpush1.msra.mxu0 0.0
    %5305 = vmatprep.subr.mxu0 0.0
    %5306 = vmatpush1.msra.mxu0 0.0
    %5307 = vmatprep.subr.mxu0 0.0
    %5308 = vmatpush1.msra.mxu0 0.0
    %5309 = vmatprep.subr.mxu0 0.0
    %5310 = vmatpush1.msra.mxu0 0.0
    %5311 = vmatprep.subr.mxu0 0.0
    %5312 = vmatpush1.msra.mxu0 0.0
    %5313 = vmatprep.subr.mxu0 0.0
    %5314 = vmatpush1.msra.mxu0 0.0
    %5315 = vmatprep.subr.mxu0 0.0
    %5316 = vmatpush1.msra.mxu0 0.0
    %5317 = vmatprep.subr.mxu0 0.0
    %5318 = vmatpush1.msra.mxu0 0.0
    %5319 = vmatprep.mubr.f32.mxu0 0.0
    %5320 = vmatmul.mubr.f32.gmra.mrb[0].mxu0 %v5253
    %v5321 = vpop.f32.mrb[0].mxu0
    %v5322 = vadd.f32 0.0, %v5321
    %v5323 = vpop.f32.mrb[0].mxu0
    %5324 = vdwg.mxu0
    %v5327 = vrot.slane %v5322, 7
    %v5328 = vsel %vm1960, %v5327, %v5249
    %5329 = vrot.lane.b32.xlu0 %v5328, 32
    %v5330 = vpop.permute.xlu0 %5329
    %v5332 = vsel %vm168, %v4978, %v5330
    %v5333 = vsel %vm1968, %v5332, %v4871
    %v5335 = vsel %vm1970, %v5333, 0
    %5337 = vmatprep.subr.mxu0 %v39
    %5338 = vmatpush1.msra.mxu0 %v38
    %5339 = vmatprep.subr.mxu0 %v41
    %5340 = vmatpush1.msra.mxu0 %v40
    %5341 = vmatprep.subr.mxu0 %v43
    %5342 = vmatpush1.msra.mxu0 %v42
    %5343 = vmatprep.subr.mxu0 %v45
    %5344 = vmatpush1.msra.mxu0 %v44
    %5345 = vmatprep.subr.mxu0 %v47
    %5346 = vmatpush1.msra.mxu0 %v46
    %5347 = vmatprep.subr.mxu0 %v49
    %5348 = vmatpush1.msra.mxu0 %v48
    %5349 = vmatprep.subr.mxu0 %v51
    %5350 = vmatpush1.msra.mxu0 %v50
    %5351 = vmatprep.subr.mxu0 %v53
    %5352 = vmatpush1.msra.mxu0 %v52
    %5353 = vmatprep.subr.mxu0 %v55
    %5354 = vmatpush1.msra.mxu0 %v54
    %5355 = vmatprep.subr.mxu0 %v57
    %5356 = vmatpush1.msra.mxu0 %v56
    %5357 = vmatprep.subr.mxu0 %v59
    %5358 = vmatpush1.msra.mxu0 %v58
    %5359 = vmatprep.subr.mxu0 %v61
    %5360 = vmatpush1.msra.mxu0 %v60
    %5361 = vmatprep.subr.mxu0 0.0
    %5362 = vmatpush1.msra.mxu0 0.0
    %5363 = vmatprep.subr.mxu0 0.0
    %5364 = vmatpush1.msra.mxu0 0.0
    %5365 = vmatprep.subr.mxu0 0.0
    %5366 = vmatpush1.msra.mxu0 0.0
    %5367 = vmatprep.subr.mxu0 0.0
    %5368 = vmatpush1.msra.mxu0 0.0
    %5369 = vmatprep.subr.mxu0 0.0
    %5370 = vmatpush1.msra.mxu0 0.0
    %5371 = vmatprep.subr.mxu0 0.0
    %5372 = vmatpush1.msra.mxu0 0.0
    %5373 = vmatprep.subr.mxu0 0.0
    %5374 = vmatpush1.msra.mxu0 0.0
    %5375 = vmatprep.subr.mxu0 0.0
    %5376 = vmatpush1.msra.mxu0 0.0
    %5377 = vmatprep.subr.mxu0 0.0
    %5378 = vmatpush1.msra.mxu0 0.0
    %5379 = vmatprep.subr.mxu0 0.0
    %5380 = vmatpush1.msra.mxu0 0.0
    %5381 = vmatprep.subr.mxu0 0.0
    %5382 = vmatpush1.msra.mxu0 0.0
    %5383 = vmatprep.subr.mxu0 0.0
    %5384 = vmatpush1.msra.mxu0 0.0
    %5385 = vmatprep.subr.mxu0 0.0
    %5386 = vmatpush1.msra.mxu0 0.0
    %5387 = vmatprep.subr.mxu0 0.0
    %5388 = vmatpush1.msra.mxu0 0.0
    %5389 = vmatprep.subr.mxu0 0.0
    %5390 = vmatpush1.msra.mxu0 0.0
    %5391 = vmatprep.subr.mxu0 0.0
    %5392 = vmatpush1.msra.mxu0 0.0
    %5393 = vmatprep.subr.mxu0 0.0
    %5394 = vmatpush1.msra.mxu0 0.0
    %5395 = vmatprep.subr.mxu0 0.0
    %5396 = vmatpush1.msra.mxu0 0.0
    %5397 = vmatprep.subr.mxu0 0.0
    %5398 = vmatpush1.msra.mxu0 0.0
    %5399 = vmatprep.subr.mxu0 0.0
    %5400 = vmatpush1.msra.mxu0 0.0
    %5401 = vmatprep.mubr.f32.mxu0 0.0
    %5402 = vmatmul.mubr.f32.gmra.mrb[0].mxu0 %v5335
    %v5403 = vpop.f32.mrb[0].mxu0
    %v5404 = vadd.f32 0.0, %v5403
    %v5405 = vpop.f32.mrb[0].mxu0
    %v5406 = vadd.f32 0.0, %v5405
    %5407 = vdwg.mxu0
    %v5408 = vxor.u32 %v5404, 2147483648
    %v5409 = vmul.f32 %v5408, 1.442695
    %v5410 = vpow.pop %v5409
    %v5411 = vadd.f32 %v5410, 1.0
    %v5412 = vrcp.pop %v5411
    %v5413 = vmul.f32 1.0, %v5412
    %v5414 = vtanh.pop %v5404
    %v5415 = vmul.f32 %v5413, %v4865
    %5417 = vrot.lane.b32.xlu0 %v5414, 32
    %v5418 = vpop.permute.xlu0 %5417
    %v5420 = vmul.f32 %v5413, %v5418
    %5422 = vrot.lane.b32.xlu0 %v5420, 32
    %v5423 = vpop.permute.xlu0 %5422
    %v5425 = vadd.f32 %v5415, %v5423
    %v5426 = vtanh.pop %v5425
    %5428 = vrot.lane.b32.xlu0 %v5426, 32
    %v5429 = vpop.permute.xlu0 %5428
    %v5431 = vmul.f32 %v5413, %v5429
    %5433 = vrot.lane.b32.xlu0 %v5431, 64
    %v5434 = vpop.permute.xlu0 %5433
    %v5435 = vsel %vm168, %v5434, 0
    %5437 = vmatprep.subr.mxu0 0.0
    %5438 = vmatpush1.msra.mxu0 %v62
    %5439 = vmatprep.subr.mxu0 0.0
    %5440 = vmatpush1.msra.mxu0 %v63
    %5441 = vmatprep.subr.mxu0 0.0
    %5442 = vmatpush1.msra.mxu0 %v64
    %5443 = vmatprep.subr.mxu0 0.0
    %5444 = vmatpush1.msra.mxu0 %v65
    %5445 = vmatprep.subr.mxu0 0.0
    %5446 = vmatpush1.msra.mxu0 0.0
    %5447 = vmatprep.subr.mxu0 0.0
    %5448 = vmatpush1.msra.mxu0 0.0
    %5449 = vmatprep.subr.mxu0 0.0
    %5450 = vmatpush1.msra.mxu0 0.0
    %5451 = vmatprep.subr.mxu0 0.0
    %5452 = vmatpush1.msra.mxu0 0.0
    %5453 = vmatprep.subr.mxu0 0.0
    %5454 = vmatpush1.msra.mxu0 0.0
    %5455 = vmatprep.subr.mxu0 0.0
    %5456 = vmatpush1.msra.mxu0 0.0
    %5457 = vmatprep.subr.mxu0 0.0
    %5458 = vmatpush1.msra.mxu0 0.0
    %5459 = vmatprep.subr.mxu0 0.0
    %5460 = vmatpush1.msra.mxu0 0.0
    %5461 = vmatprep.subr.mxu0 0.0
    %5462 = vmatpush1.msra.mxu0 0.0
    %5463 = vmatprep.subr.mxu0 0.0
    %5464 = vmatpush1.msra.mxu0 0.0
    %5465 = vmatprep.subr.mxu0 0.0
    %5466 = vmatpush1.msra.mxu0 0.0
    %5467 = vmatprep.subr.mxu0 0.0
    %5468 = vmatpush1.msra.mxu0 0.0
    %5469 = vmatprep.subr.mxu0 0.0
    %5470 = vmatpush1.msra.mxu0 0.0
    %5471 = vmatprep.subr.mxu0 0.0
    %5472 = vmatpush1.msra.mxu0 0.0
    %5473 = vmatprep.subr.mxu0 0.0
    %5474 = vmatpush1.msra.mxu0 0.0
    %5475 = vmatprep.subr.mxu0 0.0
    %5476 = vmatpush1.msra.mxu0 0.0
    %5477 = vmatprep.subr.mxu0 0.0
    %5478 = vmatpush1.msra.mxu0 0.0
    %5479 = vmatprep.subr.mxu0 0.0
    %5480 = vmatpush1.msra.mxu0 0.0
    %5481 = vmatprep.subr.mxu0 0.0
    %5482 = vmatpush1.msra.mxu0 0.0
    %5483 = vmatprep.subr.mxu0 0.0
    %5484 = vmatpush1.msra.mxu0 0.0
    %5485 = vmatprep.subr.mxu0 0.0
    %5486 = vmatpush1.msra.mxu0 0.0
    %5487 = vmatprep.subr.mxu0 0.0
    %5488 = vmatpush1.msra.mxu0 0.0
    %5489 = vmatprep.subr.mxu0 0.0
    %5490 = vmatpush1.msra.mxu0 0.0
    %5491 = vmatprep.subr.mxu0 0.0
    %5492 = vmatpush1.msra.mxu0 0.0
    %5493 = vmatprep.subr.mxu0 0.0
    %5494 = vmatpush1.msra.mxu0 0.0
    %5495 = vmatprep.subr.mxu0 0.0
    %5496 = vmatpush1.msra.mxu0 0.0
    %5497 = vmatprep.subr.mxu0 0.0
    %5498 = vmatpush1.msra.mxu0 0.0
    %5499 = vmatprep.subr.mxu0 0.0
    %5500 = vmatpush1.msra.mxu0 0.0
    %5501 = vmatprep.mubr.f32.mxu0 0.0
    %5502 = vmatmul.mubr.f32.gmra.mrb[0].mxu0 %v5435
    %v5503 = vpop.f32.mrb[0].mxu0
    %v5504 = vadd.f32 0.0, %v5503
    %v5505 = vpop.f32.mrb[0].mxu0
    %5506 = vdwg.mxu0
    %v5507 = vadd.f32 %v5406, %v5504
    %5508 = vst.msk [vmem:[#allocation5 + $0xe] sm:$0x3] %vm1621, %v5507
    // Predicated region
    $region30: #{tpu_custom_call.1} parent=1 // pred_check
      _
    $region31: #{tpu_custom_call.1} parent=1 // pred_check_branch
      %5510 = sbr.rel (0) target = $region33
    $region32: #{tpu_custom_call.1} parent=1 // pred_region
      %s5512 = ssub.s32 256, 256
      %5513 = vsyncadd [#allocation6], %s5512
      %s5514 = sshll.u32 [#allocation5], 4
      %s5515 = int_to_ptr.vmem [resolvable:$true] %s5514
      %5520 = dma.vmem_to_hbm [thread:$0]  %s5515, 256, %s8, [#allocation6], 128, 128, 8
    $region33: #{tpu_custom_call.1} parent=1 // pred_fallthru
      _
    // Predicated region
    $region34: #{tpu_custom_call.1} parent=1 // pred_check
      _
    $region35: #{tpu_custom_call.1} parent=1 // pred_check_branch
      %5522 = sbr.rel (0) target = $region37
    $region36: #{tpu_custom_call.1} parent=1 // pred_region
      %5523 = dma.done [#allocation6], 256
    $region37: #{tpu_custom_call.1} parent=1 // pred_fallthru
      _
    %5524 = vsyncpa [#allocation6], 1

</llo_original>
